<compile_context>
chip_gen: v7x
topology: tpu7x:2x2x1
jax: 0.10.0
libtpu: 0.0.40
codegen_flags: <defaults>
</compile_context>

<pallas_src>
import jax
import jax.numpy as jnp
from jax.experimental import pallas as pl
from jax.experimental.pallas import tpu as pltpu

# ----------------------------------------------------------------------------
# Model dimensions (fixed by the PyTorch module: GCNConv(16,8), GCNConv(8,8),
# 7 nodes -> 56 flattened features, KAN inner dim 32, line hidden 24).
# ----------------------------------------------------------------------------
N_NODES, F_IN, F_GCN = 7, 16, 8
S = N_NODES * F_GCN            # 56 flattened per-batch features
KAN = 32
LINE_H = 24
GROUP_FEATS = 4                # phi features per MXU block
GROUPS = S // GROUP_FEATS      # 14
BLK = GROUP_FEATS * KAN        # 128  (block-diagonal phi layer-2 tile)


# ----------------------------------------------------------------------------
# Fused kernel. All activations carry batch on the lane axis.
#   xt     : [112, tb]  bf16   (x transposed: row = n*16 + f, col = batch)
#   m1     : [56, 112]  bf16   kron(A_hat, W1.T)
#   m2     : [56, 56]   bf16   kron(A_hat, W2.T)
#   b1t/b2t: [56, 1]    f32    tiled GCN biases
#   lw1t   : [24, 56]   bf16 ; lb1t [24,1] f32 ; lw2t [1,24] bf16 ; lb2 [1,1] f32
#   p1     : [1792, 56] bf16   block-diag phi layer-1 weights
#   pb1f   : [1792, 1]  f32
#   pw2b   : [14,128,128] bf16 block-diag (4 feats/blk) phi layer-2 weights
#   pb2g   : [14,128,1] f32
#   wpg    : [32, 1792] bf16   fused (phi layer-3 . g layer-1) weights
#   bg1    : [32, 1]    f32    fused bias (gw1.T @ pb3 + gb1)
#   gw2t   : [32, 32]   bf16 ; gb2t [32,1] f32 ; gw3t [1,32] bf16 ; gb3 [1,1] f32
#   out    : [1, tb]    f32    lane-dense 0.5*(line + kan), transposed
# ----------------------------------------------------------------------------
def _gcn_gkan_kernel(xt_ref, m1_ref, m2_ref, b1t_ref, b2t_ref,
                     lw1t_ref, lb1t_ref, lw2t_ref, lb2_ref,
                     p1_ref, pb1f_ref, pw2b_ref, pb2g_ref,
                     wpg_ref, bg1_ref, gw2t_ref, gb2t_ref, gw3t_ref, gb3_ref,
                     o_ref):
    f32, bf16 = jnp.float32, jnp.bfloat16

    xt = xt_ref[...]                                           # [112, tb] bf16
    tb = xt.shape[1]

    # ---- two GCNConv layers: each a single MXU matmul (kron(A_hat, W.T)) ----
    h = jnp.maximum(
        jnp.dot(m1_ref[...], xt, preferred_element_type=f32) + b1t_ref[...], 0.0)
    xf = jnp.maximum(
        jnp.dot(m2_ref[...], h.astype(bf16), preferred_element_type=f32)
        + b2t_ref[...], 0.0)                                   # [56, tb] f32
    xf_bf = xf.astype(bf16)

    # ---- "line" head: Flatten -> Linear(56,24) -> ReLU -> Linear(24,1) ----
    l1 = jnp.maximum(
        jnp.dot(lw1t_ref[...], xf_bf, preferred_element_type=f32)
        + lb1t_ref[...], 0.0)                                  # [24, tb]
    line_t = (jnp.dot(lw2t_ref[...], l1.astype(bf16), preferred_element_type=f32)
              + lb2_ref[...])                                  # [1, tb]

    # ---- 56 phi MLPs + first g-layer, grouped 4 features per 128x128 block ----
    # All three phi stages are MXU matmuls; every slice below is 128-aligned.
    g1_acc = jnp.zeros((KAN, tb), f32)
    for g in range(GROUPS):                                    # 14 unrolled steps
        r0 = g * BLK
        ph1 = jnp.maximum(
            jnp.dot(p1_ref[r0:r0 + BLK, :], xf_bf, preferred_element_type=f32)
            + pb1f_ref[r0:r0 + BLK, :], 0.0)                   # [128, tb]
        ph2 = jnp.maximum(
            jnp.dot(pw2b_ref[g], ph1.astype(bf16), preferred_element_type=f32)
            + pb2g_ref[g], 0.0)                                # [128, tb]
        g1_acc = g1_acc + jnp.dot(wpg_ref[:, r0:r0 + BLK], ph2.astype(bf16),
                                  preferred_element_type=f32)  # [32, tb]
    g1 = jnp.maximum(g1_acc + bg1_ref[...], 0.0)               # [32, tb]

    # ---- rest of the g network ----
    g2 = jnp.maximum(
        jnp.dot(gw2t_ref[...], g1.astype(bf16), preferred_element_type=f32)
        + gb2t_ref[...], 0.0)                                  # [32, tb]
    kan_t = (jnp.dot(gw3t_ref[...], g2.astype(bf16), preferred_element_type=f32)
             + gb3_ref[...])                                   # [1, tb]

    o_ref[...] = (0.5 * (line_t + kan_t)).astype(o_ref.dtype)


# ----------------------------------------------------------------------------
# pallas_call wrapper: one fused call, batch tiled on the lane axis.
# ----------------------------------------------------------------------------
def _const_spec(shape):
    nd = len(shape)
    return pl.BlockSpec(shape, lambda i, _nd=nd: (0,) * _nd)


def _gcn_gkan_pallas(xt, params, tb):
    nf, bp = xt.shape
    grid = (bp // tb,)
    in_specs = [pl.BlockSpec((nf, tb), lambda i: (0, i))]      # batch tile
    in_specs += [_const_spec(p.shape) for p in params]         # resident params
    return pl.pallas_call(
        _gcn_gkan_kernel,
        out_shape=jax.ShapeDtypeStruct((1, bp), jnp.float32),
        grid=grid,
        in_specs=in_specs,
        out_specs=pl.BlockSpec((1, tb), lambda i: (0, i)),      # lane-dense out
        compiler_params=pltpu.CompilerParams(
            dimension_semantics=("parallel",),                  # shards over TCs
            vmem_limit_bytes=32 * 1024 * 1024),
    )(xt, *params)


# ----------------------------------------------------------------------------
# Host-side glue: adjacency, parameter packing (done ONCE), forward.
# ----------------------------------------------------------------------------
def normalized_adjacency(edge_index, num_nodes):
    src, dst = edge_index[0], edge_index[1]
    a = jnp.zeros((num_nodes, num_nodes), jnp.float32).at[src, dst].set(1.0)
    a_hat = a + jnp.eye(num_nodes, dtype=jnp.float32)           # self loops
    deg = jnp.sum(a_hat, axis=1)
    d_inv_sqrt = 1.0 / jnp.sqrt(deg)
    return d_inv_sqrt[:, None] * a_hat * d_inv_sqrt[None, :]    # D^-1/2 (A+I) D^-1/2


def pack_params(a_hat, p):
    """Precompute fused/block-diagonal operators (bf16 weights, f32 biases)."""
    f32, bf16 = jnp.float32, jnp.bfloat16
    n = a_hat.shape[0]

    # relu(A @ X @ W + b)  ==  relu(kron(A, W.T) @ X_t + b_t)
    m1 = jnp.kron(a_hat, p["gcn1_w"].T).astype(bf16)                    # [56, 112]
    m2 = jnp.kron(a_hat, p["gcn2_w"].T).astype(bf16)                    # [56, 56]
    b1t = jnp.tile(p["gcn1_b"].reshape(-1), n).reshape(S, 1).astype(f32)
    b2t = jnp.tile(p["gcn2_b"].reshape(-1), n).reshape(S, 1).astype(f32)

    lw1t = p["lw1"].T.astype(bf16)                                      # [24, 56]
    lb1t = p["lb1"].reshape(LINE_H, 1).astype(f32)                      # [24, 1]
    lw2t = p["lw2"].T.astype(bf16)                                      # [1, 24]
    lb2 = p["lb2"].astype(f32)                                          # [1, 1]

    # phi layer-1: P1[s*32+j, t] = pw1[s, j] * delta(s, t)
    eye_s = jnp.eye(S, dtype=f32)
    p1 = jnp.einsum("sj,st->sjt", p["pw1"], eye_s).reshape(S * KAN, S).astype(bf16)
    pb1f = p["pb1"].reshape(S * KAN, 1).astype(f32)

    # phi layer-2: block-diagonal, 4 features per [128,128] block
    # pw2b[g, k*32+j, l*32+i] = pw2[4g+k, i, j] * delta(k, l)
    eye_k = jnp.eye(GROUP_FEATS, dtype=f32)
    pw2_r = p["pw2"].reshape(GROUPS, GROUP_FEATS, KAN, KAN)             # [g,k,i,j]
    pw2b = jnp.einsum("gkij,kl->gkjli", pw2_r, eye_k).reshape(
        GROUPS, BLK, BLK).astype(bf16)
    pb2g = p["pb2"].reshape(GROUPS, BLK, 1).astype(f32)

    # phi layer-3 folded into g layer-1:
    # wpg[h, s*32+j] = gw1[s, h] * pw3[s, j];  bg1 = gw1.T @ pb3 + gb1
    wpg = jnp.einsum("sh,sj->hsj", p["gw1"], p["pw3"]).reshape(KAN, S * KAN).astype(bf16)
    bg1 = (p["gw1"].T @ p["pb3"].reshape(S, 1) + p["gb1"].reshape(KAN, 1)).astype(f32)

    gw2t = p["gw2"].T.astype(bf16)                                      # [32, 32]
    gb2t = p["gb2"].reshape(KAN, 1).astype(f32)                         # [32, 1]
    gw3t = p["gw3"].T.astype(bf16)                                      # [1, 32]
    gb3 = p["gb3"].astype(f32)                                          # [1, 1]

    return (m1, m2, b1t, b2t, lw1t, lb1t, lw2t, lb2,
            p1, pb1f, pw2b, pb2g, wpg, bg1, gw2t, gb2t, gw3t, gb3)


def gcn_gkan_forward(x, packed, *, batch_tile=512):
    """x: [B, N, F_IN] -> [B, 1]."""
    b, n, f = x.shape
    # transposed layout: row = n*F_IN + f, col = batch  ->  batch on lanes.
    # Ship xt as bf16 (halves per-sample HBM traffic; dots are bf16 anyway).
    xt = jnp.transpose(x, (1, 2, 0)).reshape(n * f, b).astype(jnp.bfloat16)
    if b <= batch_tile:
        tb, bp = b, b
    else:
        tb = batch_tile
        bp = pl.cdiv(b, tb) * tb
        xt = jnp.pad(xt, ((0, 0), (0, bp - b)))
    out_t = _gcn_gkan_pallas(xt, packed, tb)        # [1, bp] lane-dense
    return out_t[:, :b].T                           # [B, 1]


def init_params(key):
    ks = jax.random.split(key, 32)
    n = lambda k, s: (0.1 * jax.random.normal(k, s)).astype(jnp.float32)
    return {
        # GCNConv(16, 8) / GCNConv(8, 8)
        "gcn1_w": n(ks[0], (16, 8)), "gcn1_b": n(ks[1], (1, 8)),
        "gcn2_w": n(ks[2], (8, 8)),  "gcn2_b": n(ks[3], (1, 8)),
        # line: Linear(56, 24) -> ReLU -> Linear(24, 1)
        "lw1": n(ks[4], (56, 24)), "lb1": n(ks[5], (1, 24)),
        "lw2": n(ks[6], (24, 1)),  "lb2": n(ks[7], (1, 1)),
        # 56 phi networks: Linear(1,32) -> ReLU -> Linear(32,32) -> ReLU -> Linear(32,1)
        "pw1": n(ks[8], (56, 32)),      "pb1": n(ks[9], (56, 32)),
        "pw2": n(ks[10], (56, 32, 32)), "pb2": n(ks[11], (56, 32)),
        "pw3": n(ks[12], (56, 32)),     "pb3": n(ks[13], (1, 56)),
        # g network: Linear(56,32) -> ReLU -> Linear(32,32) -> ReLU -> Linear(32,1)
        "gw1": n(ks[14], (56, 32)), "gb1": n(ks[15], (1, 32)),
        "gw2": n(ks[16], (32, 32)), "gb2": n(ks[17], (1, 32)),
        "gw3": n(ks[18], (32, 1)),  "gb3": n(ks[19], (1, 1)),
        # miu_w / sigma_w exist in the module but are unused in forward()
        "miu_w": jax.random.uniform(ks[20], (1,), minval=1.5, maxval=2.0),
        "sigma_w": jax.random.uniform(ks[21], (1,), minval=0.0, maxval=1.0),
    }


def reference_forward(x, edge_index, p):
    """Pure-JAX f32 reference of the PyTorch forward (numeric sanity check)."""
    b, n, _ = x.shape
    a = normalized_adjacency(edge_index, n)
    h = jax.nn.relu(jnp.einsum("nm,bmf->bnf", a, x @ p["gcn1_w"]) + p["gcn1_b"])
    h = jax.nn.relu(jnp.einsum("nm,bmf->bnf", a, h @ p["gcn2_w"]) + p["gcn2_b"])
    xf = h.reshape(b, -1)
    line_out = jax.nn.relu(xf @ p["lw1"] + p["lb1"]) @ p["lw2"] + p["lb2"]
    h1 = jax.nn.relu(xf[:, :, None] * p["pw1"][None] + p["pb1"][None])
    h2 = jax.nn.relu(jnp.einsum("bsi,sij->bsj", h1, p["pw2"]) + p["pb2"][None])
    phi = jnp.sum(h2 * p["pw3"][None], axis=-1) + p["pb3"]
    g = jax.nn.relu(phi @ p["gw1"] + p["gb1"])
    g = jax.nn.relu(g @ p["gw2"] + p["gb2"])
    kan_out = g @ p["gw3"] + p["gb3"]
    return 0.5 * (line_out + kan_out)


if __name__ == "__main__":
    key = jax.random.PRNGKey(0)
    k_x, k_p = jax.random.split(key)

    B = 2
    x = jax.random.normal(k_x, (B, N_NODES, F_IN), dtype=jnp.float32)

    # deterministic 7-node cycle graph, edges in both directions
    src = jnp.array([i for i in range(N_NODES)]
                    + [(i + 1) % N_NODES for i in range(N_NODES)], jnp.int32)
    dst = jnp.array([(i + 1) % N_NODES for i in range(N_NODES)]
                    + [i for i in range(N_NODES)], jnp.int32)
    edge_index = jnp.stack([src, dst], axis=0)                 # [2, 14]

    params = init_params(k_p)

    # hoisted out of the hot path: adjacency + operator packing run once
    a_hat = normalized_adjacency(edge_index, N_NODES)
    packed = pack_params(a_hat, params)

    out = gcn_gkan_forward(x, packed)
    out = jax.block_until_ready(out)
    assert out.shape == (B, 1)

    # bf16 matmul operands + fused/reassociated operators loosen agreement vs
    # the pure-f32 reference (as anticipated in the review); keep a modest tol.
    ref = reference_forward(x, edge_index, params)
    assert jnp.allclose(out, ref, rtol=3e-2, atol=5e-3), (out, ref)

    print("KERNEL_OK")
</pallas_src>

<mosaic_0001>
module attributes {stable_mosaic.version = 11 : i64} {
  func.func @_gcn_gkan_kernel(%arg0: i32, %arg1: memref<112x2xbf16, #tpu.memory_space<vmem>>, %arg2: memref<56x112xbf16, #tpu.memory_space<vmem>>, %arg3: memref<56x56xbf16, #tpu.memory_space<vmem>>, %arg4: memref<56x1xf32, #tpu.memory_space<vmem>>, %arg5: memref<56x1xf32, #tpu.memory_space<vmem>>, %arg6: memref<24x56xbf16, #tpu.memory_space<vmem>>, %arg7: memref<24x1xf32, #tpu.memory_space<vmem>>, %arg8: memref<1x24xbf16, #tpu.memory_space<vmem>>, %arg9: memref<1x1xf32, #tpu.memory_space<vmem>>, %arg10: memref<1792x56xbf16, #tpu.memory_space<vmem>>, %arg11: memref<1792x1xf32, #tpu.memory_space<vmem>>, %arg12: memref<14x128x128xbf16, #tpu.memory_space<vmem>>, %arg13: memref<14x128x1xf32, #tpu.memory_space<vmem>>, %arg14: memref<32x1792xbf16, #tpu.memory_space<vmem>>, %arg15: memref<32x1xf32, #tpu.memory_space<vmem>>, %arg16: memref<32x32xbf16, #tpu.memory_space<vmem>>, %arg17: memref<32x1xf32, #tpu.memory_space<vmem>>, %arg18: memref<1x32xbf16, #tpu.memory_space<vmem>>, %arg19: memref<1x1xf32, #tpu.memory_space<vmem>>, %arg20: memref<1x2xf32, #tpu.memory_space<vmem>>) attributes {dimension_semantics = [#tpu.dimension_semantics<parallel>], iteration_bounds = array<i64: 1>, scalar_prefetch = 0 : i64, scratch_operands = 0 : i64, tpu.core_type = #tpu.core_type<tc>, window_params = [{transform_indices = @transform_0, window_bounds = array<i64: 112, 2>}, {pipeline_mode = #tpu.pipeline_mode<synchronous>, transform_indices = @transform_1, window_bounds = array<i64: 56, 112>}, {pipeline_mode = #tpu.pipeline_mode<synchronous>, transform_indices = @transform_2, window_bounds = array<i64: 56, 56>}, {pipeline_mode = #tpu.pipeline_mode<synchronous>, transform_indices = @transform_3, window_bounds = array<i64: 56, 1>}, {pipeline_mode = #tpu.pipeline_mode<synchronous>, transform_indices = @transform_4, window_bounds = array<i64: 56, 1>}, {pipeline_mode = #tpu.pipeline_mode<synchronous>, transform_indices = @transform_5, window_bounds = array<i64: 24, 56>}, {pipeline_mode = #tpu.pipeline_mode<synchronous>, transform_indices = @transform_6, window_bounds = array<i64: 24, 1>}, {pipeline_mode = #tpu.pipeline_mode<synchronous>, transform_indices = @transform_7, window_bounds = array<i64: 1, 24>}, {pipeline_mode = #tpu.pipeline_mode<synchronous>, transform_indices = @transform_8, window_bounds = array<i64: 1, 1>}, {pipeline_mode = #tpu.pipeline_mode<synchronous>, transform_indices = @transform_9, window_bounds = array<i64: 1792, 56>}, {pipeline_mode = #tpu.pipeline_mode<synchronous>, transform_indices = @transform_10, window_bounds = array<i64: 1792, 1>}, {pipeline_mode = #tpu.pipeline_mode<synchronous>, transform_indices = @transform_11, window_bounds = array<i64: 14, 128, 128>}, {pipeline_mode = #tpu.pipeline_mode<synchronous>, transform_indices = @transform_12, window_bounds = array<i64: 14, 128, 1>}, {pipeline_mode = #tpu.pipeline_mode<synchronous>, transform_indices = @transform_13, window_bounds = array<i64: 32, 1792>}, {pipeline_mode = #tpu.pipeline_mode<synchronous>, transform_indices = @transform_14, window_bounds = array<i64: 32, 1>}, {pipeline_mode = #tpu.pipeline_mode<synchronous>, transform_indices = @transform_15, window_bounds = array<i64: 32, 32>}, {pipeline_mode = #tpu.pipeline_mode<synchronous>, transform_indices = @transform_16, window_bounds = array<i64: 32, 1>}, {pipeline_mode = #tpu.pipeline_mode<synchronous>, transform_indices = @transform_17, window_bounds = array<i64: 1, 32>}, {pipeline_mode = #tpu.pipeline_mode<synchronous>, transform_indices = @transform_18, window_bounds = array<i64: 1, 1>}, {transform_indices = @transform_19, window_bounds = array<i64: 1, 2>}]} {
    %c0 = arith.constant 0 : index
    %c0_0 = arith.constant 0 : index
    %0 = vector.load %arg1[%c0, %c0_0] : memref<112x2xbf16, #tpu.memory_space<vmem>>, vector<112x2xbf16>
    %c0_1 = arith.constant 0 : index
    %c0_2 = arith.constant 0 : index
    %1 = vector.load %arg2[%c0_1, %c0_2] : memref<56x112xbf16, #tpu.memory_space<vmem>>, vector<56x112xbf16>
    %cst = arith.constant dense<0.000000e+00> : vector<56x2xf32>
    %2 = tpu.matmul %1, %0, %cst {dimension_numbers = #tpu.dot_dimension_numbers<[1], [0], [0], [1], [0, 0, 1, 1], [], []>} : vector<56x112xbf16>, vector<112x2xbf16>, vector<56x2xf32> -> vector<56x2xf32>
    %c0_3 = arith.constant 0 : index
    %c0_4 = arith.constant 0 : index
    %3 = vector.load %arg4[%c0_3, %c0_4] : memref<56x1xf32, #tpu.memory_space<vmem>>, vector<56x1xf32>
    %4 = vector.broadcast %3 : vector<56x1xf32> to vector<56x2xf32>
    %5 = arith.addf %2, %4 : vector<56x2xf32>
    %cst_5 = arith.constant 0.000000e+00 : f32
    %6 = vector.broadcast %cst_5 : f32 to vector<56x2xf32>
    %7 = arith.maximumf %5, %6 : vector<56x2xf32>
    %c0_6 = arith.constant 0 : index
    %c0_7 = arith.constant 0 : index
    %8 = vector.load %arg3[%c0_6, %c0_7] : memref<56x56xbf16, #tpu.memory_space<vmem>>, vector<56x56xbf16>
    %9 = arith.truncf %7 : vector<56x2xf32> to vector<56x2xbf16>
    %cst_8 = arith.constant dense<0.000000e+00> : vector<56x2xf32>
    %10 = tpu.matmul %8, %9, %cst_8 {dimension_numbers = #tpu.dot_dimension_numbers<[1], [0], [0], [1], [0, 0, 1, 1], [], []>} : vector<56x56xbf16>, vector<56x2xbf16>, vector<56x2xf32> -> vector<56x2xf32>
    %c0_9 = arith.constant 0 : index
    %c0_10 = arith.constant 0 : index
    %11 = vector.load %arg5[%c0_9, %c0_10] : memref<56x1xf32, #tpu.memory_space<vmem>>, vector<56x1xf32>
    %12 = vector.broadcast %11 : vector<56x1xf32> to vector<56x2xf32>
    %13 = arith.addf %10, %12 : vector<56x2xf32>
    %cst_11 = arith.constant 0.000000e+00 : f32
    %14 = vector.broadcast %cst_11 : f32 to vector<56x2xf32>
    %15 = arith.maximumf %13, %14 : vector<56x2xf32>
    %16 = arith.truncf %15 : vector<56x2xf32> to vector<56x2xbf16>
    %c0_12 = arith.constant 0 : index
    %c0_13 = arith.constant 0 : index
    %17 = vector.load %arg6[%c0_12, %c0_13] : memref<24x56xbf16, #tpu.memory_space<vmem>>, vector<24x56xbf16>
    %cst_14 = arith.constant dense<0.000000e+00> : vector<24x2xf32>
    %18 = tpu.matmul %17, %16, %cst_14 {dimension_numbers = #tpu.dot_dimension_numbers<[1], [0], [0], [1], [0, 0, 1, 1], [], []>} : vector<24x56xbf16>, vector<56x2xbf16>, vector<24x2xf32> -> vector<24x2xf32>
    %c0_15 = arith.constant 0 : index
    %c0_16 = arith.constant 0 : index
    %19 = vector.load %arg7[%c0_15, %c0_16] : memref<24x1xf32, #tpu.memory_space<vmem>>, vector<24x1xf32>
    %20 = vector.broadcast %19 : vector<24x1xf32> to vector<24x2xf32>
    %21 = arith.addf %18, %20 : vector<24x2xf32>
    %cst_17 = arith.constant 0.000000e+00 : f32
    %22 = vector.broadcast %cst_17 : f32 to vector<24x2xf32>
    %23 = arith.maximumf %21, %22 : vector<24x2xf32>
    %c0_18 = arith.constant 0 : index
    %c0_19 = arith.constant 0 : index
    %24 = vector.load %arg8[%c0_18, %c0_19] : memref<1x24xbf16, #tpu.memory_space<vmem>>, vector<1x24xbf16>
    %25 = arith.truncf %23 : vector<24x2xf32> to vector<24x2xbf16>
    %cst_20 = arith.constant dense<0.000000e+00> : vector<1x2xf32>
    %26 = tpu.matmul %24, %25, %cst_20 {dimension_numbers = #tpu.dot_dimension_numbers<[1], [0], [0], [1], [0, 0, 1, 1], [], []>} : vector<1x24xbf16>, vector<24x2xbf16>, vector<1x2xf32> -> vector<1x2xf32>
    %c0_21 = arith.constant 0 : index
    %c0_22 = arith.constant 0 : index
    %27 = vector.load %arg9[%c0_21, %c0_22] : memref<1x1xf32, #tpu.memory_space<vmem>>, vector<1x1xf32>
    %28 = vector.broadcast %27 : vector<1x1xf32> to vector<1x2xf32>
    %29 = arith.addf %26, %28 : vector<1x2xf32>
    %cst_23 = arith.constant 0.000000e+00 : f32
    %30 = vector.broadcast %cst_23 : f32 to vector<32x2xf32>
    %c0_24 = arith.constant 0 : index
    %c0_25 = arith.constant 0 : index
    %31 = vector.load %arg10[%c0_24, %c0_25] : memref<1792x56xbf16, #tpu.memory_space<vmem>>, vector<128x56xbf16>
    %cst_26 = arith.constant dense<0.000000e+00> : vector<128x2xf32>
    %32 = tpu.matmul %31, %16, %cst_26 {dimension_numbers = #tpu.dot_dimension_numbers<[1], [0], [0], [1], [0, 0, 1, 1], [], []>} : vector<128x56xbf16>, vector<56x2xbf16>, vector<128x2xf32> -> vector<128x2xf32>
    %c0_27 = arith.constant 0 : index
    %c0_28 = arith.constant 0 : index
    %33 = vector.load %arg11[%c0_27, %c0_28] : memref<1792x1xf32, #tpu.memory_space<vmem>>, vector<128x1xf32>
    %34 = vector.broadcast %33 : vector<128x1xf32> to vector<128x2xf32>
    %35 = arith.addf %32, %34 : vector<128x2xf32>
    %cst_29 = arith.constant 0.000000e+00 : f32
    %36 = vector.broadcast %cst_29 : f32 to vector<128x2xf32>
    %37 = arith.maximumf %35, %36 : vector<128x2xf32>
    %c0_30 = arith.constant 0 : index
    %c0_31 = arith.constant 0 : index
    %c0_32 = arith.constant 0 : index
    %38 = vector.load %arg12[%c0_30, %c0_31, %c0_32] : memref<14x128x128xbf16, #tpu.memory_space<vmem>>, vector<1x128x128xbf16>
    %39 = vector.shape_cast %38 : vector<1x128x128xbf16> to vector<128x128xbf16>
    %40 = arith.truncf %37 : vector<128x2xf32> to vector<128x2xbf16>
    %cst_33 = arith.constant dense<0.000000e+00> : vector<128x2xf32>
    %41 = tpu.matmul %39, %40, %cst_33 {dimension_numbers = #tpu.dot_dimension_numbers<[1], [0], [0], [1], [0, 0, 1, 1], [], []>} : vector<128x128xbf16>, vector<128x2xbf16>, vector<128x2xf32> -> vector<128x2xf32>
    %c0_34 = arith.constant 0 : index
    %c0_35 = arith.constant 0 : index
    %c0_36 = arith.constant 0 : index
    %42 = vector.load %arg13[%c0_34, %c0_35, %c0_36] : memref<14x128x1xf32, #tpu.memory_space<vmem>>, vector<1x128x1xf32>
    %43 = vector.shape_cast %42 : vector<1x128x1xf32> to vector<128x1xf32>
    %44 = vector.broadcast %43 : vector<128x1xf32> to vector<128x2xf32>
    %45 = arith.addf %41, %44 : vector<128x2xf32>
    %cst_37 = arith.constant 0.000000e+00 : f32
    %46 = vector.broadcast %cst_37 : f32 to vector<128x2xf32>
    %47 = arith.maximumf %45, %46 : vector<128x2xf32>
    %c0_38 = arith.constant 0 : index
    %c0_39 = arith.constant 0 : index
    %48 = vector.load %arg14[%c0_38, %c0_39] : memref<32x1792xbf16, #tpu.memory_space<vmem>>, vector<32x128xbf16>
    %49 = arith.truncf %47 : vector<128x2xf32> to vector<128x2xbf16>
    %cst_40 = arith.constant dense<0.000000e+00> : vector<32x2xf32>
    %50 = tpu.matmul %48, %49, %cst_40 {dimension_numbers = #tpu.dot_dimension_numbers<[1], [0], [0], [1], [0, 0, 1, 1], [], []>} : vector<32x128xbf16>, vector<128x2xbf16>, vector<32x2xf32> -> vector<32x2xf32>
    %51 = arith.addf %30, %50 : vector<32x2xf32>
    %c128 = arith.constant 128 : index
    %c0_41 = arith.constant 0 : index
    %52 = vector.load %arg10[%c128, %c0_41] : memref<1792x56xbf16, #tpu.memory_space<vmem>>, vector<128x56xbf16>
    %cst_42 = arith.constant dense<0.000000e+00> : vector<128x2xf32>
    %53 = tpu.matmul %52, %16, %cst_42 {dimension_numbers = #tpu.dot_dimension_numbers<[1], [0], [0], [1], [0, 0, 1, 1], [], []>} : vector<128x56xbf16>, vector<56x2xbf16>, vector<128x2xf32> -> vector<128x2xf32>
    %c128_43 = arith.constant 128 : index
    %c0_44 = arith.constant 0 : index
    %54 = vector.load %arg11[%c128_43, %c0_44] : memref<1792x1xf32, #tpu.memory_space<vmem>>, vector<128x1xf32>
    %55 = vector.broadcast %54 : vector<128x1xf32> to vector<128x2xf32>
    %56 = arith.addf %53, %55 : vector<128x2xf32>
    %cst_45 = arith.constant 0.000000e+00 : f32
    %57 = vector.broadcast %cst_45 : f32 to vector<128x2xf32>
    %58 = arith.maximumf %56, %57 : vector<128x2xf32>
    %c1 = arith.constant 1 : index
    %c0_46 = arith.constant 0 : index
    %c0_47 = arith.constant 0 : index
    %59 = vector.load %arg12[%c1, %c0_46, %c0_47] : memref<14x128x128xbf16, #tpu.memory_space<vmem>>, vector<1x128x128xbf16>
    %60 = vector.shape_cast %59 : vector<1x128x128xbf16> to vector<128x128xbf16>
    %61 = arith.truncf %58 : vector<128x2xf32> to vector<128x2xbf16>
    %cst_48 = arith.constant dense<0.000000e+00> : vector<128x2xf32>
    %62 = tpu.matmul %60, %61, %cst_48 {dimension_numbers = #tpu.dot_dimension_numbers<[1], [0], [0], [1], [0, 0, 1, 1], [], []>} : vector<128x128xbf16>, vector<128x2xbf16>, vector<128x2xf32> -> vector<128x2xf32>
    %c1_49 = arith.constant 1 : index
    %c0_50 = arith.constant 0 : index
    %c0_51 = arith.constant 0 : index
    %63 = vector.load %arg13[%c1_49, %c0_50, %c0_51] : memref<14x128x1xf32, #tpu.memory_space<vmem>>, vector<1x128x1xf32>
    %64 = vector.shape_cast %63 : vector<1x128x1xf32> to vector<128x1xf32>
    %65 = vector.broadcast %64 : vector<128x1xf32> to vector<128x2xf32>
    %66 = arith.addf %62, %65 : vector<128x2xf32>
    %cst_52 = arith.constant 0.000000e+00 : f32
    %67 = vector.broadcast %cst_52 : f32 to vector<128x2xf32>
    %68 = arith.maximumf %66, %67 : vector<128x2xf32>
    %c0_53 = arith.constant 0 : index
    %c128_54 = arith.constant 128 : index
    %69 = vector.load %arg14[%c0_53, %c128_54] : memref<32x1792xbf16, #tpu.memory_space<vmem>>, vector<32x128xbf16>
    %70 = arith.truncf %68 : vector<128x2xf32> to vector<128x2xbf16>
    %cst_55 = arith.constant dense<0.000000e+00> : vector<32x2xf32>
    %71 = tpu.matmul %69, %70, %cst_55 {dimension_numbers = #tpu.dot_dimension_numbers<[1], [0], [0], [1], [0, 0, 1, 1], [], []>} : vector<32x128xbf16>, vector<128x2xbf16>, vector<32x2xf32> -> vector<32x2xf32>
    %72 = arith.addf %51, %71 : vector<32x2xf32>
    %c256 = arith.constant 256 : index
    %c0_56 = arith.constant 0 : index
    %73 = vector.load %arg10[%c256, %c0_56] : memref<1792x56xbf16, #tpu.memory_space<vmem>>, vector<128x56xbf16>
    %cst_57 = arith.constant dense<0.000000e+00> : vector<128x2xf32>
    %74 = tpu.matmul %73, %16, %cst_57 {dimension_numbers = #tpu.dot_dimension_numbers<[1], [0], [0], [1], [0, 0, 1, 1], [], []>} : vector<128x56xbf16>, vector<56x2xbf16>, vector<128x2xf32> -> vector<128x2xf32>
    %c256_58 = arith.constant 256 : index
    %c0_59 = arith.constant 0 : index
    %75 = vector.load %arg11[%c256_58, %c0_59] : memref<1792x1xf32, #tpu.memory_space<vmem>>, vector<128x1xf32>
    %76 = vector.broadcast %75 : vector<128x1xf32> to vector<128x2xf32>
    %77 = arith.addf %74, %76 : vector<128x2xf32>
    %cst_60 = arith.constant 0.000000e+00 : f32
    %78 = vector.broadcast %cst_60 : f32 to vector<128x2xf32>
    %79 = arith.maximumf %77, %78 : vector<128x2xf32>
    %c2 = arith.constant 2 : index
    %c0_61 = arith.constant 0 : index
    %c0_62 = arith.constant 0 : index
    %80 = vector.load %arg12[%c2, %c0_61, %c0_62] : memref<14x128x128xbf16, #tpu.memory_space<vmem>>, vector<1x128x128xbf16>
    %81 = vector.shape_cast %80 : vector<1x128x128xbf16> to vector<128x128xbf16>
    %82 = arith.truncf %79 : vector<128x2xf32> to vector<128x2xbf16>
    %cst_63 = arith.constant dense<0.000000e+00> : vector<128x2xf32>
    %83 = tpu.matmul %81, %82, %cst_63 {dimension_numbers = #tpu.dot_dimension_numbers<[1], [0], [0], [1], [0, 0, 1, 1], [], []>} : vector<128x128xbf16>, vector<128x2xbf16>, vector<128x2xf32> -> vector<128x2xf32>
    %c2_64 = arith.constant 2 : index
    %c0_65 = arith.constant 0 : index
    %c0_66 = arith.constant 0 : index
    %84 = vector.load %arg13[%c2_64, %c0_65, %c0_66] : memref<14x128x1xf32, #tpu.memory_space<vmem>>, vector<1x128x1xf32>
    %85 = vector.shape_cast %84 : vector<1x128x1xf32> to vector<128x1xf32>
    %86 = vector.broadcast %85 : vector<128x1xf32> to vector<128x2xf32>
    %87 = arith.addf %83, %86 : vector<128x2xf32>
    %cst_67 = arith.constant 0.000000e+00 : f32
    %88 = vector.broadcast %cst_67 : f32 to vector<128x2xf32>
    %89 = arith.maximumf %87, %88 : vector<128x2xf32>
    %c0_68 = arith.constant 0 : index
    %c256_69 = arith.constant 256 : index
    %90 = vector.load %arg14[%c0_68, %c256_69] : memref<32x1792xbf16, #tpu.memory_space<vmem>>, vector<32x128xbf16>
    %91 = arith.truncf %89 : vector<128x2xf32> to vector<128x2xbf16>
    %cst_70 = arith.constant dense<0.000000e+00> : vector<32x2xf32>
    %92 = tpu.matmul %90, %91, %cst_70 {dimension_numbers = #tpu.dot_dimension_numbers<[1], [0], [0], [1], [0, 0, 1, 1], [], []>} : vector<32x128xbf16>, vector<128x2xbf16>, vector<32x2xf32> -> vector<32x2xf32>
    %93 = arith.addf %72, %92 : vector<32x2xf32>
    %c384 = arith.constant 384 : index
    %c0_71 = arith.constant 0 : index
    %94 = vector.load %arg10[%c384, %c0_71] : memref<1792x56xbf16, #tpu.memory_space<vmem>>, vector<128x56xbf16>
    %cst_72 = arith.constant dense<0.000000e+00> : vector<128x2xf32>
    %95 = tpu.matmul %94, %16, %cst_72 {dimension_numbers = #tpu.dot_dimension_numbers<[1], [0], [0], [1], [0, 0, 1, 1], [], []>} : vector<128x56xbf16>, vector<56x2xbf16>, vector<128x2xf32> -> vector<128x2xf32>
    %c384_73 = arith.constant 384 : index
    %c0_74 = arith.constant 0 : index
    %96 = vector.load %arg11[%c384_73, %c0_74] : memref<1792x1xf32, #tpu.memory_space<vmem>>, vector<128x1xf32>
    %97 = vector.broadcast %96 : vector<128x1xf32> to vector<128x2xf32>
    %98 = arith.addf %95, %97 : vector<128x2xf32>
    %cst_75 = arith.constant 0.000000e+00 : f32
    %99 = vector.broadcast %cst_75 : f32 to vector<128x2xf32>
    %100 = arith.maximumf %98, %99 : vector<128x2xf32>
    %c3 = arith.constant 3 : index
    %c0_76 = arith.constant 0 : index
    %c0_77 = arith.constant 0 : index
    %101 = vector.load %arg12[%c3, %c0_76, %c0_77] : memref<14x128x128xbf16, #tpu.memory_space<vmem>>, vector<1x128x128xbf16>
    %102 = vector.shape_cast %101 : vector<1x128x128xbf16> to vector<128x128xbf16>
    %103 = arith.truncf %100 : vector<128x2xf32> to vector<128x2xbf16>
    %cst_78 = arith.constant dense<0.000000e+00> : vector<128x2xf32>
    %104 = tpu.matmul %102, %103, %cst_78 {dimension_numbers = #tpu.dot_dimension_numbers<[1], [0], [0], [1], [0, 0, 1, 1], [], []>} : vector<128x128xbf16>, vector<128x2xbf16>, vector<128x2xf32> -> vector<128x2xf32>
    %c3_79 = arith.constant 3 : index
    %c0_80 = arith.constant 0 : index
    %c0_81 = arith.constant 0 : index
    %105 = vector.load %arg13[%c3_79, %c0_80, %c0_81] : memref<14x128x1xf32, #tpu.memory_space<vmem>>, vector<1x128x1xf32>
    %106 = vector.shape_cast %105 : vector<1x128x1xf32> to vector<128x1xf32>
    %107 = vector.broadcast %106 : vector<128x1xf32> to vector<128x2xf32>
    %108 = arith.addf %104, %107 : vector<128x2xf32>
    %cst_82 = arith.constant 0.000000e+00 : f32
    %109 = vector.broadcast %cst_82 : f32 to vector<128x2xf32>
    %110 = arith.maximumf %108, %109 : vector<128x2xf32>
    %c0_83 = arith.constant 0 : index
    %c384_84 = arith.constant 384 : index
    %111 = vector.load %arg14[%c0_83, %c384_84] : memref<32x1792xbf16, #tpu.memory_space<vmem>>, vector<32x128xbf16>
    %112 = arith.truncf %110 : vector<128x2xf32> to vector<128x2xbf16>
    %cst_85 = arith.constant dense<0.000000e+00> : vector<32x2xf32>
    %113 = tpu.matmul %111, %112, %cst_85 {dimension_numbers = #tpu.dot_dimension_numbers<[1], [0], [0], [1], [0, 0, 1, 1], [], []>} : vector<32x128xbf16>, vector<128x2xbf16>, vector<32x2xf32> -> vector<32x2xf32>
    %114 = arith.addf %93, %113 : vector<32x2xf32>
    %c512 = arith.constant 512 : index
    %c0_86 = arith.constant 0 : index
    %115 = vector.load %arg10[%c512, %c0_86] : memref<1792x56xbf16, #tpu.memory_space<vmem>>, vector<128x56xbf16>
    %cst_87 = arith.constant dense<0.000000e+00> : vector<128x2xf32>
    %116 = tpu.matmul %115, %16, %cst_87 {dimension_numbers = #tpu.dot_dimension_numbers<[1], [0], [0], [1], [0, 0, 1, 1], [], []>} : vector<128x56xbf16>, vector<56x2xbf16>, vector<128x2xf32> -> vector<128x2xf32>
    %c512_88 = arith.constant 512 : index
    %c0_89 = arith.constant 0 : index
    %117 = vector.load %arg11[%c512_88, %c0_89] : memref<1792x1xf32, #tpu.memory_space<vmem>>, vector<128x1xf32>
    %118 = vector.broadcast %117 : vector<128x1xf32> to vector<128x2xf32>
    %119 = arith.addf %116, %118 : vector<128x2xf32>
    %cst_90 = arith.constant 0.000000e+00 : f32
    %120 = vector.broadcast %cst_90 : f32 to vector<128x2xf32>
    %121 = arith.maximumf %119, %120 : vector<128x2xf32>
    %c4 = arith.constant 4 : index
    %c0_91 = arith.constant 0 : index
    %c0_92 = arith.constant 0 : index
    %122 = vector.load %arg12[%c4, %c0_91, %c0_92] : memref<14x128x128xbf16, #tpu.memory_space<vmem>>, vector<1x128x128xbf16>
    %123 = vector.shape_cast %122 : vector<1x128x128xbf16> to vector<128x128xbf16>
    %124 = arith.truncf %121 : vector<128x2xf32> to vector<128x2xbf16>
    %cst_93 = arith.constant dense<0.000000e+00> : vector<128x2xf32>
    %125 = tpu.matmul %123, %124, %cst_93 {dimension_numbers = #tpu.dot_dimension_numbers<[1], [0], [0], [1], [0, 0, 1, 1], [], []>} : vector<128x128xbf16>, vector<128x2xbf16>, vector<128x2xf32> -> vector<128x2xf32>
    %c4_94 = arith.constant 4 : index
    %c0_95 = arith.constant 0 : index
    %c0_96 = arith.constant 0 : index
    %126 = vector.load %arg13[%c4_94, %c0_95, %c0_96] : memref<14x128x1xf32, #tpu.memory_space<vmem>>, vector<1x128x1xf32>
    %127 = vector.shape_cast %126 : vector<1x128x1xf32> to vector<128x1xf32>
    %128 = vector.broadcast %127 : vector<128x1xf32> to vector<128x2xf32>
    %129 = arith.addf %125, %128 : vector<128x2xf32>
    %cst_97 = arith.constant 0.000000e+00 : f32
    %130 = vector.broadcast %cst_97 : f32 to vector<128x2xf32>
    %131 = arith.maximumf %129, %130 : vector<128x2xf32>
    %c0_98 = arith.constant 0 : index
    %c512_99 = arith.constant 512 : index
    %132 = vector.load %arg14[%c0_98, %c512_99] : memref<32x1792xbf16, #tpu.memory_space<vmem>>, vector<32x128xbf16>
    %133 = arith.truncf %131 : vector<128x2xf32> to vector<128x2xbf16>
    %cst_100 = arith.constant dense<0.000000e+00> : vector<32x2xf32>
    %134 = tpu.matmul %132, %133, %cst_100 {dimension_numbers = #tpu.dot_dimension_numbers<[1], [0], [0], [1], [0, 0, 1, 1], [], []>} : vector<32x128xbf16>, vector<128x2xbf16>, vector<32x2xf32> -> vector<32x2xf32>
    %135 = arith.addf %114, %134 : vector<32x2xf32>
    %c640 = arith.constant 640 : index
    %c0_101 = arith.constant 0 : index
    %136 = vector.load %arg10[%c640, %c0_101] : memref<1792x56xbf16, #tpu.memory_space<vmem>>, vector<128x56xbf16>
    %cst_102 = arith.constant dense<0.000000e+00> : vector<128x2xf32>
    %137 = tpu.matmul %136, %16, %cst_102 {dimension_numbers = #tpu.dot_dimension_numbers<[1], [0], [0], [1], [0, 0, 1, 1], [], []>} : vector<128x56xbf16>, vector<56x2xbf16>, vector<128x2xf32> -> vector<128x2xf32>
    %c640_103 = arith.constant 640 : index
    %c0_104 = arith.constant 0 : index
    %138 = vector.load %arg11[%c640_103, %c0_104] : memref<1792x1xf32, #tpu.memory_space<vmem>>, vector<128x1xf32>
    %139 = vector.broadcast %138 : vector<128x1xf32> to vector<128x2xf32>
    %140 = arith.addf %137, %139 : vector<128x2xf32>
    %cst_105 = arith.constant 0.000000e+00 : f32
    %141 = vector.broadcast %cst_105 : f32 to vector<128x2xf32>
    %142 = arith.maximumf %140, %141 : vector<128x2xf32>
    %c5 = arith.constant 5 : index
    %c0_106 = arith.constant 0 : index
    %c0_107 = arith.constant 0 : index
    %143 = vector.load %arg12[%c5, %c0_106, %c0_107] : memref<14x128x128xbf16, #tpu.memory_space<vmem>>, vector<1x128x128xbf16>
    %144 = vector.shape_cast %143 : vector<1x128x128xbf16> to vector<128x128xbf16>
    %145 = arith.truncf %142 : vector<128x2xf32> to vector<128x2xbf16>
    %cst_108 = arith.constant dense<0.000000e+00> : vector<128x2xf32>
    %146 = tpu.matmul %144, %145, %cst_108 {dimension_numbers = #tpu.dot_dimension_numbers<[1], [0], [0], [1], [0, 0, 1, 1], [], []>} : vector<128x128xbf16>, vector<128x2xbf16>, vector<128x2xf32> -> vector<128x2xf32>
    %c5_109 = arith.constant 5 : index
    %c0_110 = arith.constant 0 : index
    %c0_111 = arith.constant 0 : index
    %147 = vector.load %arg13[%c5_109, %c0_110, %c0_111] : memref<14x128x1xf32, #tpu.memory_space<vmem>>, vector<1x128x1xf32>
    %148 = vector.shape_cast %147 : vector<1x128x1xf32> to vector<128x1xf32>
    %149 = vector.broadcast %148 : vector<128x1xf32> to vector<128x2xf32>
    %150 = arith.addf %146, %149 : vector<128x2xf32>
    %cst_112 = arith.constant 0.000000e+00 : f32
    %151 = vector.broadcast %cst_112 : f32 to vector<128x2xf32>
    %152 = arith.maximumf %150, %151 : vector<128x2xf32>
    %c0_113 = arith.constant 0 : index
    %c640_114 = arith.constant 640 : index
    %153 = vector.load %arg14[%c0_113, %c640_114] : memref<32x1792xbf16, #tpu.memory_space<vmem>>, vector<32x128xbf16>
    %154 = arith.truncf %152 : vector<128x2xf32> to vector<128x2xbf16>
    %cst_115 = arith.constant dense<0.000000e+00> : vector<32x2xf32>
    %155 = tpu.matmul %153, %154, %cst_115 {dimension_numbers = #tpu.dot_dimension_numbers<[1], [0], [0], [1], [0, 0, 1, 1], [], []>} : vector<32x128xbf16>, vector<128x2xbf16>, vector<32x2xf32> -> vector<32x2xf32>
    %156 = arith.addf %135, %155 : vector<32x2xf32>
    %c768 = arith.constant 768 : index
    %c0_116 = arith.constant 0 : index
    %157 = vector.load %arg10[%c768, %c0_116] : memref<1792x56xbf16, #tpu.memory_space<vmem>>, vector<128x56xbf16>
    %cst_117 = arith.constant dense<0.000000e+00> : vector<128x2xf32>
    %158 = tpu.matmul %157, %16, %cst_117 {dimension_numbers = #tpu.dot_dimension_numbers<[1], [0], [0], [1], [0, 0, 1, 1], [], []>} : vector<128x56xbf16>, vector<56x2xbf16>, vector<128x2xf32> -> vector<128x2xf32>
    %c768_118 = arith.constant 768 : index
    %c0_119 = arith.constant 0 : index
    %159 = vector.load %arg11[%c768_118, %c0_119] : memref<1792x1xf32, #tpu.memory_space<vmem>>, vector<128x1xf32>
    %160 = vector.broadcast %159 : vector<128x1xf32> to vector<128x2xf32>
    %161 = arith.addf %158, %160 : vector<128x2xf32>
    %cst_120 = arith.constant 0.000000e+00 : f32
    %162 = vector.broadcast %cst_120 : f32 to vector<128x2xf32>
    %163 = arith.maximumf %161, %162 : vector<128x2xf32>
    %c6 = arith.constant 6 : index
    %c0_121 = arith.constant 0 : index
    %c0_122 = arith.constant 0 : index
    %164 = vector.load %arg12[%c6, %c0_121, %c0_122] : memref<14x128x128xbf16, #tpu.memory_space<vmem>>, vector<1x128x128xbf16>
    %165 = vector.shape_cast %164 : vector<1x128x128xbf16> to vector<128x128xbf16>
    %166 = arith.truncf %163 : vector<128x2xf32> to vector<128x2xbf16>
    %cst_123 = arith.constant dense<0.000000e+00> : vector<128x2xf32>
    %167 = tpu.matmul %165, %166, %cst_123 {dimension_numbers = #tpu.dot_dimension_numbers<[1], [0], [0], [1], [0, 0, 1, 1], [], []>} : vector<128x128xbf16>, vector<128x2xbf16>, vector<128x2xf32> -> vector<128x2xf32>
    %c6_124 = arith.constant 6 : index
    %c0_125 = arith.constant 0 : index
    %c0_126 = arith.constant 0 : index
    %168 = vector.load %arg13[%c6_124, %c0_125, %c0_126] : memref<14x128x1xf32, #tpu.memory_space<vmem>>, vector<1x128x1xf32>
    %169 = vector.shape_cast %168 : vector<1x128x1xf32> to vector<128x1xf32>
    %170 = vector.broadcast %169 : vector<128x1xf32> to vector<128x2xf32>
    %171 = arith.addf %167, %170 : vector<128x2xf32>
    %cst_127 = arith.constant 0.000000e+00 : f32
    %172 = vector.broadcast %cst_127 : f32 to vector<128x2xf32>
    %173 = arith.maximumf %171, %172 : vector<128x2xf32>
    %c0_128 = arith.constant 0 : index
    %c768_129 = arith.constant 768 : index
    %174 = vector.load %arg14[%c0_128, %c768_129] : memref<32x1792xbf16, #tpu.memory_space<vmem>>, vector<32x128xbf16>
    %175 = arith.truncf %173 : vector<128x2xf32> to vector<128x2xbf16>
    %cst_130 = arith.constant dense<0.000000e+00> : vector<32x2xf32>
    %176 = tpu.matmul %174, %175, %cst_130 {dimension_numbers = #tpu.dot_dimension_numbers<[1], [0], [0], [1], [0, 0, 1, 1], [], []>} : vector<32x128xbf16>, vector<128x2xbf16>, vector<32x2xf32> -> vector<32x2xf32>
    %177 = arith.addf %156, %176 : vector<32x2xf32>
    %c896 = arith.constant 896 : index
    %c0_131 = arith.constant 0 : index
    %178 = vector.load %arg10[%c896, %c0_131] : memref<1792x56xbf16, #tpu.memory_space<vmem>>, vector<128x56xbf16>
    %cst_132 = arith.constant dense<0.000000e+00> : vector<128x2xf32>
    %179 = tpu.matmul %178, %16, %cst_132 {dimension_numbers = #tpu.dot_dimension_numbers<[1], [0], [0], [1], [0, 0, 1, 1], [], []>} : vector<128x56xbf16>, vector<56x2xbf16>, vector<128x2xf32> -> vector<128x2xf32>
    %c896_133 = arith.constant 896 : index
    %c0_134 = arith.constant 0 : index
    %180 = vector.load %arg11[%c896_133, %c0_134] : memref<1792x1xf32, #tpu.memory_space<vmem>>, vector<128x1xf32>
    %181 = vector.broadcast %180 : vector<128x1xf32> to vector<128x2xf32>
    %182 = arith.addf %179, %181 : vector<128x2xf32>
    %cst_135 = arith.constant 0.000000e+00 : f32
    %183 = vector.broadcast %cst_135 : f32 to vector<128x2xf32>
    %184 = arith.maximumf %182, %183 : vector<128x2xf32>
    %c7 = arith.constant 7 : index
    %c0_136 = arith.constant 0 : index
    %c0_137 = arith.constant 0 : index
    %185 = vector.load %arg12[%c7, %c0_136, %c0_137] : memref<14x128x128xbf16, #tpu.memory_space<vmem>>, vector<1x128x128xbf16>
    %186 = vector.shape_cast %185 : vector<1x128x128xbf16> to vector<128x128xbf16>
    %187 = arith.truncf %184 : vector<128x2xf32> to vector<128x2xbf16>
    %cst_138 = arith.constant dense<0.000000e+00> : vector<128x2xf32>
    %188 = tpu.matmul %186, %187, %cst_138 {dimension_numbers = #tpu.dot_dimension_numbers<[1], [0], [0], [1], [0, 0, 1, 1], [], []>} : vector<128x128xbf16>, vector<128x2xbf16>, vector<128x2xf32> -> vector<128x2xf32>
    %c7_139 = arith.constant 7 : index
    %c0_140 = arith.constant 0 : index
    %c0_141 = arith.constant 0 : index
    %189 = vector.load %arg13[%c7_139, %c0_140, %c0_141] : memref<14x128x1xf32, #tpu.memory_space<vmem>>, vector<1x128x1xf32>
    %190 = vector.shape_cast %189 : vector<1x128x1xf32> to vector<128x1xf32>
    %191 = vector.broadcast %190 : vector<128x1xf32> to vector<128x2xf32>
    %192 = arith.addf %188, %191 : vector<128x2xf32>
    %cst_142 = arith.constant 0.000000e+00 : f32
    %193 = vector.broadcast %cst_142 : f32 to vector<128x2xf32>
    %194 = arith.maximumf %192, %193 : vector<128x2xf32>
    %c0_143 = arith.constant 0 : index
    %c896_144 = arith.constant 896 : index
    %195 = vector.load %arg14[%c0_143, %c896_144] : memref<32x1792xbf16, #tpu.memory_space<vmem>>, vector<32x128xbf16>
    %196 = arith.truncf %194 : vector<128x2xf32> to vector<128x2xbf16>
    %cst_145 = arith.constant dense<0.000000e+00> : vector<32x2xf32>
    %197 = tpu.matmul %195, %196, %cst_145 {dimension_numbers = #tpu.dot_dimension_numbers<[1], [0], [0], [1], [0, 0, 1, 1], [], []>} : vector<32x128xbf16>, vector<128x2xbf16>, vector<32x2xf32> -> vector<32x2xf32>
    %198 = arith.addf %177, %197 : vector<32x2xf32>
    %c1024 = arith.constant 1024 : index
    %c0_146 = arith.constant 0 : index
    %199 = vector.load %arg10[%c1024, %c0_146] : memref<1792x56xbf16, #tpu.memory_space<vmem>>, vector<128x56xbf16>
    %cst_147 = arith.constant dense<0.000000e+00> : vector<128x2xf32>
    %200 = tpu.matmul %199, %16, %cst_147 {dimension_numbers = #tpu.dot_dimension_numbers<[1], [0], [0], [1], [0, 0, 1, 1], [], []>} : vector<128x56xbf16>, vector<56x2xbf16>, vector<128x2xf32> -> vector<128x2xf32>
    %c1024_148 = arith.constant 1024 : index
    %c0_149 = arith.constant 0 : index
    %201 = vector.load %arg11[%c1024_148, %c0_149] : memref<1792x1xf32, #tpu.memory_space<vmem>>, vector<128x1xf32>
    %202 = vector.broadcast %201 : vector<128x1xf32> to vector<128x2xf32>
    %203 = arith.addf %200, %202 : vector<128x2xf32>
    %cst_150 = arith.constant 0.000000e+00 : f32
    %204 = vector.broadcast %cst_150 : f32 to vector<128x2xf32>
    %205 = arith.maximumf %203, %204 : vector<128x2xf32>
    %c8 = arith.constant 8 : index
    %c0_151 = arith.constant 0 : index
    %c0_152 = arith.constant 0 : index
    %206 = vector.load %arg12[%c8, %c0_151, %c0_152] : memref<14x128x128xbf16, #tpu.memory_space<vmem>>, vector<1x128x128xbf16>
    %207 = vector.shape_cast %206 : vector<1x128x128xbf16> to vector<128x128xbf16>
    %208 = arith.truncf %205 : vector<128x2xf32> to vector<128x2xbf16>
    %cst_153 = arith.constant dense<0.000000e+00> : vector<128x2xf32>
    %209 = tpu.matmul %207, %208, %cst_153 {dimension_numbers = #tpu.dot_dimension_numbers<[1], [0], [0], [1], [0, 0, 1, 1], [], []>} : vector<128x128xbf16>, vector<128x2xbf16>, vector<128x2xf32> -> vector<128x2xf32>
    %c8_154 = arith.constant 8 : index
    %c0_155 = arith.constant 0 : index
    %c0_156 = arith.constant 0 : index
    %210 = vector.load %arg13[%c8_154, %c0_155, %c0_156] : memref<14x128x1xf32, #tpu.memory_space<vmem>>, vector<1x128x1xf32>
    %211 = vector.shape_cast %210 : vector<1x128x1xf32> to vector<128x1xf32>
    %212 = vector.broadcast %211 : vector<128x1xf32> to vector<128x2xf32>
    %213 = arith.addf %209, %212 : vector<128x2xf32>
    %cst_157 = arith.constant 0.000000e+00 : f32
    %214 = vector.broadcast %cst_157 : f32 to vector<128x2xf32>
    %215 = arith.maximumf %213, %214 : vector<128x2xf32>
    %c0_158 = arith.constant 0 : index
    %c1024_159 = arith.constant 1024 : index
    %216 = vector.load %arg14[%c0_158, %c1024_159] : memref<32x1792xbf16, #tpu.memory_space<vmem>>, vector<32x128xbf16>
    %217 = arith.truncf %215 : vector<128x2xf32> to vector<128x2xbf16>
    %cst_160 = arith.constant dense<0.000000e+00> : vector<32x2xf32>
    %218 = tpu.matmul %216, %217, %cst_160 {dimension_numbers = #tpu.dot_dimension_numbers<[1], [0], [0], [1], [0, 0, 1, 1], [], []>} : vector<32x128xbf16>, vector<128x2xbf16>, vector<32x2xf32> -> vector<32x2xf32>
    %219 = arith.addf %198, %218 : vector<32x2xf32>
    %c1152 = arith.constant 1152 : index
    %c0_161 = arith.constant 0 : index
    %220 = vector.load %arg10[%c1152, %c0_161] : memref<1792x56xbf16, #tpu.memory_space<vmem>>, vector<128x56xbf16>
    %cst_162 = arith.constant dense<0.000000e+00> : vector<128x2xf32>
    %221 = tpu.matmul %220, %16, %cst_162 {dimension_numbers = #tpu.dot_dimension_numbers<[1], [0], [0], [1], [0, 0, 1, 1], [], []>} : vector<128x56xbf16>, vector<56x2xbf16>, vector<128x2xf32> -> vector<128x2xf32>
    %c1152_163 = arith.constant 1152 : index
    %c0_164 = arith.constant 0 : index
    %222 = vector.load %arg11[%c1152_163, %c0_164] : memref<1792x1xf32, #tpu.memory_space<vmem>>, vector<128x1xf32>
    %223 = vector.broadcast %222 : vector<128x1xf32> to vector<128x2xf32>
    %224 = arith.addf %221, %223 : vector<128x2xf32>
    %cst_165 = arith.constant 0.000000e+00 : f32
    %225 = vector.broadcast %cst_165 : f32 to vector<128x2xf32>
    %226 = arith.maximumf %224, %225 : vector<128x2xf32>
    %c9 = arith.constant 9 : index
    %c0_166 = arith.constant 0 : index
    %c0_167 = arith.constant 0 : index
    %227 = vector.load %arg12[%c9, %c0_166, %c0_167] : memref<14x128x128xbf16, #tpu.memory_space<vmem>>, vector<1x128x128xbf16>
    %228 = vector.shape_cast %227 : vector<1x128x128xbf16> to vector<128x128xbf16>
    %229 = arith.truncf %226 : vector<128x2xf32> to vector<128x2xbf16>
    %cst_168 = arith.constant dense<0.000000e+00> : vector<128x2xf32>
    %230 = tpu.matmul %228, %229, %cst_168 {dimension_numbers = #tpu.dot_dimension_numbers<[1], [0], [0], [1], [0, 0, 1, 1], [], []>} : vector<128x128xbf16>, vector<128x2xbf16>, vector<128x2xf32> -> vector<128x2xf32>
    %c9_169 = arith.constant 9 : index
    %c0_170 = arith.constant 0 : index
    %c0_171 = arith.constant 0 : index
    %231 = vector.load %arg13[%c9_169, %c0_170, %c0_171] : memref<14x128x1xf32, #tpu.memory_space<vmem>>, vector<1x128x1xf32>
    %232 = vector.shape_cast %231 : vector<1x128x1xf32> to vector<128x1xf32>
    %233 = vector.broadcast %232 : vector<128x1xf32> to vector<128x2xf32>
    %234 = arith.addf %230, %233 : vector<128x2xf32>
    %cst_172 = arith.constant 0.000000e+00 : f32
    %235 = vector.broadcast %cst_172 : f32 to vector<128x2xf32>
    %236 = arith.maximumf %234, %235 : vector<128x2xf32>
    %c0_173 = arith.constant 0 : index
    %c1152_174 = arith.constant 1152 : index
    %237 = vector.load %arg14[%c0_173, %c1152_174] : memref<32x1792xbf16, #tpu.memory_space<vmem>>, vector<32x128xbf16>
    %238 = arith.truncf %236 : vector<128x2xf32> to vector<128x2xbf16>
    %cst_175 = arith.constant dense<0.000000e+00> : vector<32x2xf32>
    %239 = tpu.matmul %237, %238, %cst_175 {dimension_numbers = #tpu.dot_dimension_numbers<[1], [0], [0], [1], [0, 0, 1, 1], [], []>} : vector<32x128xbf16>, vector<128x2xbf16>, vector<32x2xf32> -> vector<32x2xf32>
    %240 = arith.addf %219, %239 : vector<32x2xf32>
    %c1280 = arith.constant 1280 : index
    %c0_176 = arith.constant 0 : index
    %241 = vector.load %arg10[%c1280, %c0_176] : memref<1792x56xbf16, #tpu.memory_space<vmem>>, vector<128x56xbf16>
    %cst_177 = arith.constant dense<0.000000e+00> : vector<128x2xf32>
    %242 = tpu.matmul %241, %16, %cst_177 {dimension_numbers = #tpu.dot_dimension_numbers<[1], [0], [0], [1], [0, 0, 1, 1], [], []>} : vector<128x56xbf16>, vector<56x2xbf16>, vector<128x2xf32> -> vector<128x2xf32>
    %c1280_178 = arith.constant 1280 : index
    %c0_179 = arith.constant 0 : index
    %243 = vector.load %arg11[%c1280_178, %c0_179] : memref<1792x1xf32, #tpu.memory_space<vmem>>, vector<128x1xf32>
    %244 = vector.broadcast %243 : vector<128x1xf32> to vector<128x2xf32>
    %245 = arith.addf %242, %244 : vector<128x2xf32>
    %cst_180 = arith.constant 0.000000e+00 : f32
    %246 = vector.broadcast %cst_180 : f32 to vector<128x2xf32>
    %247 = arith.maximumf %245, %246 : vector<128x2xf32>
    %c10 = arith.constant 10 : index
    %c0_181 = arith.constant 0 : index
    %c0_182 = arith.constant 0 : index
    %248 = vector.load %arg12[%c10, %c0_181, %c0_182] : memref<14x128x128xbf16, #tpu.memory_space<vmem>>, vector<1x128x128xbf16>
    %249 = vector.shape_cast %248 : vector<1x128x128xbf16> to vector<128x128xbf16>
    %250 = arith.truncf %247 : vector<128x2xf32> to vector<128x2xbf16>
    %cst_183 = arith.constant dense<0.000000e+00> : vector<128x2xf32>
    %251 = tpu.matmul %249, %250, %cst_183 {dimension_numbers = #tpu.dot_dimension_numbers<[1], [0], [0], [1], [0, 0, 1, 1], [], []>} : vector<128x128xbf16>, vector<128x2xbf16>, vector<128x2xf32> -> vector<128x2xf32>
    %c10_184 = arith.constant 10 : index
    %c0_185 = arith.constant 0 : index
    %c0_186 = arith.constant 0 : index
    %252 = vector.load %arg13[%c10_184, %c0_185, %c0_186] : memref<14x128x1xf32, #tpu.memory_space<vmem>>, vector<1x128x1xf32>
    %253 = vector.shape_cast %252 : vector<1x128x1xf32> to vector<128x1xf32>
    %254 = vector.broadcast %253 : vector<128x1xf32> to vector<128x2xf32>
    %255 = arith.addf %251, %254 : vector<128x2xf32>
    %cst_187 = arith.constant 0.000000e+00 : f32
    %256 = vector.broadcast %cst_187 : f32 to vector<128x2xf32>
    %257 = arith.maximumf %255, %256 : vector<128x2xf32>
    %c0_188 = arith.constant 0 : index
    %c1280_189 = arith.constant 1280 : index
    %258 = vector.load %arg14[%c0_188, %c1280_189] : memref<32x1792xbf16, #tpu.memory_space<vmem>>, vector<32x128xbf16>
    %259 = arith.truncf %257 : vector<128x2xf32> to vector<128x2xbf16>
    %cst_190 = arith.constant dense<0.000000e+00> : vector<32x2xf32>
    %260 = tpu.matmul %258, %259, %cst_190 {dimension_numbers = #tpu.dot_dimension_numbers<[1], [0], [0], [1], [0, 0, 1, 1], [], []>} : vector<32x128xbf16>, vector<128x2xbf16>, vector<32x2xf32> -> vector<32x2xf32>
    %261 = arith.addf %240, %260 : vector<32x2xf32>
    %c1408 = arith.constant 1408 : index
    %c0_191 = arith.constant 0 : index
    %262 = vector.load %arg10[%c1408, %c0_191] : memref<1792x56xbf16, #tpu.memory_space<vmem>>, vector<128x56xbf16>
    %cst_192 = arith.constant dense<0.000000e+00> : vector<128x2xf32>
    %263 = tpu.matmul %262, %16, %cst_192 {dimension_numbers = #tpu.dot_dimension_numbers<[1], [0], [0], [1], [0, 0, 1, 1], [], []>} : vector<128x56xbf16>, vector<56x2xbf16>, vector<128x2xf32> -> vector<128x2xf32>
    %c1408_193 = arith.constant 1408 : index
    %c0_194 = arith.constant 0 : index
    %264 = vector.load %arg11[%c1408_193, %c0_194] : memref<1792x1xf32, #tpu.memory_space<vmem>>, vector<128x1xf32>
    %265 = vector.broadcast %264 : vector<128x1xf32> to vector<128x2xf32>
    %266 = arith.addf %263, %265 : vector<128x2xf32>
    %cst_195 = arith.constant 0.000000e+00 : f32
    %267 = vector.broadcast %cst_195 : f32 to vector<128x2xf32>
    %268 = arith.maximumf %266, %267 : vector<128x2xf32>
    %c11 = arith.constant 11 : index
    %c0_196 = arith.constant 0 : index
    %c0_197 = arith.constant 0 : index
    %269 = vector.load %arg12[%c11, %c0_196, %c0_197] : memref<14x128x128xbf16, #tpu.memory_space<vmem>>, vector<1x128x128xbf16>
    %270 = vector.shape_cast %269 : vector<1x128x128xbf16> to vector<128x128xbf16>
    %271 = arith.truncf %268 : vector<128x2xf32> to vector<128x2xbf16>
    %cst_198 = arith.constant dense<0.000000e+00> : vector<128x2xf32>
    %272 = tpu.matmul %270, %271, %cst_198 {dimension_numbers = #tpu.dot_dimension_numbers<[1], [0], [0], [1], [0, 0, 1, 1], [], []>} : vector<128x128xbf16>, vector<128x2xbf16>, vector<128x2xf32> -> vector<128x2xf32>
    %c11_199 = arith.constant 11 : index
    %c0_200 = arith.constant 0 : index
    %c0_201 = arith.constant 0 : index
    %273 = vector.load %arg13[%c11_199, %c0_200, %c0_201] : memref<14x128x1xf32, #tpu.memory_space<vmem>>, vector<1x128x1xf32>
    %274 = vector.shape_cast %273 : vector<1x128x1xf32> to vector<128x1xf32>
    %275 = vector.broadcast %274 : vector<128x1xf32> to vector<128x2xf32>
    %276 = arith.addf %272, %275 : vector<128x2xf32>
    %cst_202 = arith.constant 0.000000e+00 : f32
    %277 = vector.broadcast %cst_202 : f32 to vector<128x2xf32>
    %278 = arith.maximumf %276, %277 : vector<128x2xf32>
    %c0_203 = arith.constant 0 : index
    %c1408_204 = arith.constant 1408 : index
    %279 = vector.load %arg14[%c0_203, %c1408_204] : memref<32x1792xbf16, #tpu.memory_space<vmem>>, vector<32x128xbf16>
    %280 = arith.truncf %278 : vector<128x2xf32> to vector<128x2xbf16>
    %cst_205 = arith.constant dense<0.000000e+00> : vector<32x2xf32>
    %281 = tpu.matmul %279, %280, %cst_205 {dimension_numbers = #tpu.dot_dimension_numbers<[1], [0], [0], [1], [0, 0, 1, 1], [], []>} : vector<32x128xbf16>, vector<128x2xbf16>, vector<32x2xf32> -> vector<32x2xf32>
    %282 = arith.addf %261, %281 : vector<32x2xf32>
    %c1536 = arith.constant 1536 : index
    %c0_206 = arith.constant 0 : index
    %283 = vector.load %arg10[%c1536, %c0_206] : memref<1792x56xbf16, #tpu.memory_space<vmem>>, vector<128x56xbf16>
    %cst_207 = arith.constant dense<0.000000e+00> : vector<128x2xf32>
    %284 = tpu.matmul %283, %16, %cst_207 {dimension_numbers = #tpu.dot_dimension_numbers<[1], [0], [0], [1], [0, 0, 1, 1], [], []>} : vector<128x56xbf16>, vector<56x2xbf16>, vector<128x2xf32> -> vector<128x2xf32>
    %c1536_208 = arith.constant 1536 : index
    %c0_209 = arith.constant 0 : index
    %285 = vector.load %arg11[%c1536_208, %c0_209] : memref<1792x1xf32, #tpu.memory_space<vmem>>, vector<128x1xf32>
    %286 = vector.broadcast %285 : vector<128x1xf32> to vector<128x2xf32>
    %287 = arith.addf %284, %286 : vector<128x2xf32>
    %cst_210 = arith.constant 0.000000e+00 : f32
    %288 = vector.broadcast %cst_210 : f32 to vector<128x2xf32>
    %289 = arith.maximumf %287, %288 : vector<128x2xf32>
    %c12 = arith.constant 12 : index
    %c0_211 = arith.constant 0 : index
    %c0_212 = arith.constant 0 : index
    %290 = vector.load %arg12[%c12, %c0_211, %c0_212] : memref<14x128x128xbf16, #tpu.memory_space<vmem>>, vector<1x128x128xbf16>
    %291 = vector.shape_cast %290 : vector<1x128x128xbf16> to vector<128x128xbf16>
    %292 = arith.truncf %289 : vector<128x2xf32> to vector<128x2xbf16>
    %cst_213 = arith.constant dense<0.000000e+00> : vector<128x2xf32>
    %293 = tpu.matmul %291, %292, %cst_213 {dimension_numbers = #tpu.dot_dimension_numbers<[1], [0], [0], [1], [0, 0, 1, 1], [], []>} : vector<128x128xbf16>, vector<128x2xbf16>, vector<128x2xf32> -> vector<128x2xf32>
    %c12_214 = arith.constant 12 : index
    %c0_215 = arith.constant 0 : index
    %c0_216 = arith.constant 0 : index
    %294 = vector.load %arg13[%c12_214, %c0_215, %c0_216] : memref<14x128x1xf32, #tpu.memory_space<vmem>>, vector<1x128x1xf32>
    %295 = vector.shape_cast %294 : vector<1x128x1xf32> to vector<128x1xf32>
    %296 = vector.broadcast %295 : vector<128x1xf32> to vector<128x2xf32>
    %297 = arith.addf %293, %296 : vector<128x2xf32>
    %cst_217 = arith.constant 0.000000e+00 : f32
    %298 = vector.broadcast %cst_217 : f32 to vector<128x2xf32>
    %299 = arith.maximumf %297, %298 : vector<128x2xf32>
    %c0_218 = arith.constant 0 : index
    %c1536_219 = arith.constant 1536 : index
    %300 = vector.load %arg14[%c0_218, %c1536_219] : memref<32x1792xbf16, #tpu.memory_space<vmem>>, vector<32x128xbf16>
    %301 = arith.truncf %299 : vector<128x2xf32> to vector<128x2xbf16>
    %cst_220 = arith.constant dense<0.000000e+00> : vector<32x2xf32>
    %302 = tpu.matmul %300, %301, %cst_220 {dimension_numbers = #tpu.dot_dimension_numbers<[1], [0], [0], [1], [0, 0, 1, 1], [], []>} : vector<32x128xbf16>, vector<128x2xbf16>, vector<32x2xf32> -> vector<32x2xf32>
    %303 = arith.addf %282, %302 : vector<32x2xf32>
    %c1664 = arith.constant 1664 : index
    %c0_221 = arith.constant 0 : index
    %304 = vector.load %arg10[%c1664, %c0_221] : memref<1792x56xbf16, #tpu.memory_space<vmem>>, vector<128x56xbf16>
    %cst_222 = arith.constant dense<0.000000e+00> : vector<128x2xf32>
    %305 = tpu.matmul %304, %16, %cst_222 {dimension_numbers = #tpu.dot_dimension_numbers<[1], [0], [0], [1], [0, 0, 1, 1], [], []>} : vector<128x56xbf16>, vector<56x2xbf16>, vector<128x2xf32> -> vector<128x2xf32>
    %c1664_223 = arith.constant 1664 : index
    %c0_224 = arith.constant 0 : index
    %306 = vector.load %arg11[%c1664_223, %c0_224] : memref<1792x1xf32, #tpu.memory_space<vmem>>, vector<128x1xf32>
    %307 = vector.broadcast %306 : vector<128x1xf32> to vector<128x2xf32>
    %308 = arith.addf %305, %307 : vector<128x2xf32>
    %cst_225 = arith.constant 0.000000e+00 : f32
    %309 = vector.broadcast %cst_225 : f32 to vector<128x2xf32>
    %310 = arith.maximumf %308, %309 : vector<128x2xf32>
    %c13 = arith.constant 13 : index
    %c0_226 = arith.constant 0 : index
    %c0_227 = arith.constant 0 : index
    %311 = vector.load %arg12[%c13, %c0_226, %c0_227] : memref<14x128x128xbf16, #tpu.memory_space<vmem>>, vector<1x128x128xbf16>
    %312 = vector.shape_cast %311 : vector<1x128x128xbf16> to vector<128x128xbf16>
    %313 = arith.truncf %310 : vector<128x2xf32> to vector<128x2xbf16>
    %cst_228 = arith.constant dense<0.000000e+00> : vector<128x2xf32>
    %314 = tpu.matmul %312, %313, %cst_228 {dimension_numbers = #tpu.dot_dimension_numbers<[1], [0], [0], [1], [0, 0, 1, 1], [], []>} : vector<128x128xbf16>, vector<128x2xbf16>, vector<128x2xf32> -> vector<128x2xf32>
    %c13_229 = arith.constant 13 : index
    %c0_230 = arith.constant 0 : index
    %c0_231 = arith.constant 0 : index
    %315 = vector.load %arg13[%c13_229, %c0_230, %c0_231] : memref<14x128x1xf32, #tpu.memory_space<vmem>>, vector<1x128x1xf32>
    %316 = vector.shape_cast %315 : vector<1x128x1xf32> to vector<128x1xf32>
    %317 = vector.broadcast %316 : vector<128x1xf32> to vector<128x2xf32>
    %318 = arith.addf %314, %317 : vector<128x2xf32>
    %cst_232 = arith.constant 0.000000e+00 : f32
    %319 = vector.broadcast %cst_232 : f32 to vector<128x2xf32>
    %320 = arith.maximumf %318, %319 : vector<128x2xf32>
    %c0_233 = arith.constant 0 : index
    %c1664_234 = arith.constant 1664 : index
    %321 = vector.load %arg14[%c0_233, %c1664_234] : memref<32x1792xbf16, #tpu.memory_space<vmem>>, vector<32x128xbf16>
    %322 = arith.truncf %320 : vector<128x2xf32> to vector<128x2xbf16>
    %cst_235 = arith.constant dense<0.000000e+00> : vector<32x2xf32>
    %323 = tpu.matmul %321, %322, %cst_235 {dimension_numbers = #tpu.dot_dimension_numbers<[1], [0], [0], [1], [0, 0, 1, 1], [], []>} : vector<32x128xbf16>, vector<128x2xbf16>, vector<32x2xf32> -> vector<32x2xf32>
    %324 = arith.addf %303, %323 : vector<32x2xf32>
    %c0_236 = arith.constant 0 : index
    %c0_237 = arith.constant 0 : index
    %325 = vector.load %arg15[%c0_236, %c0_237] : memref<32x1xf32, #tpu.memory_space<vmem>>, vector<32x1xf32>
    %326 = vector.broadcast %325 : vector<32x1xf32> to vector<32x2xf32>
    %327 = arith.addf %324, %326 : vector<32x2xf32>
    %cst_238 = arith.constant 0.000000e+00 : f32
    %328 = vector.broadcast %cst_238 : f32 to vector<32x2xf32>
    %329 = arith.maximumf %327, %328 : vector<32x2xf32>
    %c0_239 = arith.constant 0 : index
    %c0_240 = arith.constant 0 : index
    %330 = vector.load %arg16[%c0_239, %c0_240] : memref<32x32xbf16, #tpu.memory_space<vmem>>, vector<32x32xbf16>
    %331 = arith.truncf %329 : vector<32x2xf32> to vector<32x2xbf16>
    %cst_241 = arith.constant dense<0.000000e+00> : vector<32x2xf32>
    %332 = tpu.matmul %330, %331, %cst_241 {dimension_numbers = #tpu.dot_dimension_numbers<[1], [0], [0], [1], [0, 0, 1, 1], [], []>} : vector<32x32xbf16>, vector<32x2xbf16>, vector<32x2xf32> -> vector<32x2xf32>
    %c0_242 = arith.constant 0 : index
    %c0_243 = arith.constant 0 : index
    %333 = vector.load %arg17[%c0_242, %c0_243] : memref<32x1xf32, #tpu.memory_space<vmem>>, vector<32x1xf32>
    %334 = vector.broadcast %333 : vector<32x1xf32> to vector<32x2xf32>
    %335 = arith.addf %332, %334 : vector<32x2xf32>
    %cst_244 = arith.constant 0.000000e+00 : f32
    %336 = vector.broadcast %cst_244 : f32 to vector<32x2xf32>
    %337 = arith.maximumf %335, %336 : vector<32x2xf32>
    %c0_245 = arith.constant 0 : index
    %c0_246 = arith.constant 0 : index
    %338 = vector.load %arg18[%c0_245, %c0_246] : memref<1x32xbf16, #tpu.memory_space<vmem>>, vector<1x32xbf16>
    %339 = arith.truncf %337 : vector<32x2xf32> to vector<32x2xbf16>
    %cst_247 = arith.constant dense<0.000000e+00> : vector<1x2xf32>
    %340 = tpu.matmul %338, %339, %cst_247 {dimension_numbers = #tpu.dot_dimension_numbers<[1], [0], [0], [1], [0, 0, 1, 1], [], []>} : vector<1x32xbf16>, vector<32x2xbf16>, vector<1x2xf32> -> vector<1x2xf32>
    %c0_248 = arith.constant 0 : index
    %c0_249 = arith.constant 0 : index
    %341 = vector.load %arg19[%c0_248, %c0_249] : memref<1x1xf32, #tpu.memory_space<vmem>>, vector<1x1xf32>
    %342 = vector.broadcast %341 : vector<1x1xf32> to vector<1x2xf32>
    %343 = arith.addf %340, %342 : vector<1x2xf32>
    %344 = arith.addf %29, %343 : vector<1x2xf32>
    %cst_250 = arith.constant 5.000000e-01 : f32
    %345 = vector.broadcast %cst_250 : f32 to vector<1x2xf32>
    %346 = arith.mulf %345, %344 : vector<1x2xf32>
    %c0_251 = arith.constant 0 : index
    %c0_252 = arith.constant 0 : index
    %347 = vector.load %arg20[%c0_251, %c0_252] : memref<1x2xf32, #tpu.memory_space<vmem>>, vector<1x2xf32>
    tpu.vector_store %arg20[%c0_251, %c0_252], %346 {strides = array<i32>} : memref<1x2xf32, #tpu.memory_space<vmem>>, vector<1x2xf32>,
    return
  }
  func.func @transform_0(%arg0: i32) -> (i32, i32) {
    %c0_i32 = arith.constant 0 : i32
    %c0_i32_0 = arith.constant 0 : i32
    return %c0_i32, %arg0 : i32, i32
  }
  func.func @transform_1(%arg0: i32) -> (i32, i32) {
    %c0_i32 = arith.constant 0 : i32
    %c0_i32_0 = arith.constant 0 : i32
    %c0_i32_1 = arith.constant 0 : i32
    return %c0_i32, %c0_i32_0 : i32, i32
  }
  func.func @transform_2(%arg0: i32) -> (i32, i32) {
    %c0_i32 = arith.constant 0 : i32
    %c0_i32_0 = arith.constant 0 : i32
    %c0_i32_1 = arith.constant 0 : i32
    return %c0_i32, %c0_i32_0 : i32, i32
  }
  func.func @transform_3(%arg0: i32) -> (i32, i32) {
    %c0_i32 = arith.constant 0 : i32
    %c0_i32_0 = arith.constant 0 : i32
    %c0_i32_1 = arith.constant 0 : i32
    return %c0_i32, %c0_i32_0 : i32, i32
  }
  func.func @transform_4(%arg0: i32) -> (i32, i32) {
    %c0_i32 = arith.constant 0 : i32
    %c0_i32_0 = arith.constant 0 : i32
    %c0_i32_1 = arith.constant 0 : i32
    return %c0_i32, %c0_i32_0 : i32, i32
  }
  func.func @transform_5(%arg0: i32) -> (i32, i32) {
    %c0_i32 = arith.constant 0 : i32
    %c0_i32_0 = arith.constant 0 : i32
    %c0_i32_1 = arith.constant 0 : i32
    return %c0_i32, %c0_i32_0 : i32, i32
  }
  func.func @transform_6(%arg0: i32) -> (i32, i32) {
    %c0_i32 = arith.constant 0 : i32
    %c0_i32_0 = arith.constant 0 : i32
    %c0_i32_1 = arith.constant 0 : i32
    return %c0_i32, %c0_i32_0 : i32, i32
  }
  func.func @transform_7(%arg0: i32) -> (i32, i32) {
    %c0_i32 = arith.constant 0 : i32
    %c0_i32_0 = arith.constant 0 : i32
    %c0_i32_1 = arith.constant 0 : i32
    return %c0_i32, %c0_i32_0 : i32, i32
  }
  func.func @transform_8(%arg0: i32) -> (i32, i32) {
    %c0_i32 = arith.constant 0 : i32
    %c0_i32_0 = arith.constant 0 : i32
    %c0_i32_1 = arith.constant 0 : i32
    return %c0_i32, %c0_i32_0 : i32, i32
  }
  func.func @transform_9(%arg0: i32) -> (i32, i32) {
    %c0_i32 = arith.constant 0 : i32
    %c0_i32_0 = arith.constant 0 : i32
    %c0_i32_1 = arith.constant 0 : i32
    return %c0_i32, %c0_i32_0 : i32, i32
  }
  func.func @transform_10(%arg0: i32) -> (i32, i32) {
    %c0_i32 = arith.constant 0 : i32
    %c0_i32_0 = arith.constant 0 : i32
    %c0_i32_1 = arith.constant 0 : i32
    return %c0_i32, %c0_i32_0 : i32, i32
  }
  func.func @transform_11(%arg0: i32) -> (i32, i32, i32) {
    %c0_i32 = arith.constant 0 : i32
    %c0_i32_0 = arith.constant 0 : i32
    %c0_i32_1 = arith.constant 0 : i32
    %c0_i32_2 = arith.constant 0 : i32
    return %c0_i32, %c0_i32_0, %c0_i32_1 : i32, i32, i32
  }
  func.func @transform_12(%arg0: i32) -> (i32, i32, i32) {
    %c0_i32 = arith.constant 0 : i32
    %c0_i32_0 = arith.constant 0 : i32
    %c0_i32_1 = arith.constant 0 : i32
    %c0_i32_2 = arith.constant 0 : i32
    return %c0_i32, %c0_i32_0, %c0_i32_1 : i32, i32, i32
  }
  func.func @transform_13(%arg0: i32) -> (i32, i32) {
    %c0_i32 = arith.constant 0 : i32
    %c0_i32_0 = arith.constant 0 : i32
    %c0_i32_1 = arith.constant 0 : i32
    return %c0_i32, %c0_i32_0 : i32, i32
  }
  func.func @transform_14(%arg0: i32) -> (i32, i32) {
    %c0_i32 = arith.constant 0 : i32
    %c0_i32_0 = arith.constant 0 : i32
    %c0_i32_1 = arith.constant 0 : i32
    return %c0_i32, %c0_i32_0 : i32, i32
  }
  func.func @transform_15(%arg0: i32) -> (i32, i32) {
    %c0_i32 = arith.constant 0 : i32
    %c0_i32_0 = arith.constant 0 : i32
    %c0_i32_1 = arith.constant 0 : i32
    return %c0_i32, %c0_i32_0 : i32, i32
  }
  func.func @transform_16(%arg0: i32) -> (i32, i32) {
    %c0_i32 = arith.constant 0 : i32
    %c0_i32_0 = arith.constant 0 : i32
    %c0_i32_1 = arith.constant 0 : i32
    return %c0_i32, %c0_i32_0 : i32, i32
  }
  func.func @transform_17(%arg0: i32) -> (i32, i32) {
    %c0_i32 = arith.constant 0 : i32
    %c0_i32_0 = arith.constant 0 : i32
    %c0_i32_1 = arith.constant 0 : i32
    return %c0_i32, %c0_i32_0 : i32, i32
  }
  func.func @transform_18(%arg0: i32) -> (i32, i32) {
    %c0_i32 = arith.constant 0 : i32
    %c0_i32_0 = arith.constant 0 : i32
    %c0_i32_1 = arith.constant 0 : i32
    return %c0_i32, %c0_i32_0 : i32, i32
  }
  func.func @transform_19(%arg0: i32) -> (i32, i32) {
    %c0_i32 = arith.constant 0 : i32
    %c0_i32_0 = arith.constant 0 : i32
    return %c0_i32, %arg0 : i32, i32
  }
}

</mosaic_0001>

<llo_original>
// kernel: tpu_custom_call.1
$region0: #{tpu_custom_call.1}
  #allocation0 [shape = 'u32[]', space=smem, size = 0x4, offset = 0x4, fixed_abs, tag = 'smem constant byte address 0x4 - core index']
  #allocation1 [shape = 'u32[144,128]{1,0:T(1,128)}', space=vmem, size = 0x12000, scoped, tag = 'internal scratch']
  #allocation2 [shape = 'f32[1,1]{1,0:T(1,128)S(1)}', space=vmem, size = 0x200, scoped, tag = 'scoped memory for tpu_custom_call.1']
  #allocation3 [shape = 'f32[1,1]{1,0:T(1,128)S(1)}', space=vmem, size = 0x200, scoped, tag = 'scoped memory for tpu_custom_call.1']
  %s0 = inlined_call_operand.vmem [shape: bf16[112,2], index: 0, kind: input, shape index: {}]
  %s1 = inlined_call_operand.vmem [shape: bf16[56,112], index: 1, kind: input, shape index: {}]
  %s2 = inlined_call_operand.vmem [shape: bf16[56,56], index: 2, kind: input, shape index: {}]
  %s3 = inlined_call_operand.vmem [shape: f32[56,1], index: 3, kind: input, shape index: {}]
  %s4 = inlined_call_operand.vmem [shape: f32[56,1], index: 4, kind: input, shape index: {}]
  %s5 = inlined_call_operand.vmem [shape: bf16[24,56], index: 5, kind: input, shape index: {}]
  %s6 = inlined_call_operand.vmem [shape: f32[24,1], index: 6, kind: input, shape index: {}]
  %s7 = inlined_call_operand.vmem [shape: bf16[1,24], index: 7, kind: input, shape index: {}]
  %s8 = inlined_call_operand.<no memory space> [shape: f32[1,1], index: 8, kind: input, shape index: {}]
  %s9 = inlined_call_operand.vmem [shape: bf16[1792,56], index: 9, kind: input, shape index: {}]
  %s10 = inlined_call_operand.vmem [shape: f32[1792,1], index: 10, kind: input, shape index: {}]
  %s11 = inlined_call_operand.vmem [shape: bf16[14,128,128], index: 11, kind: input, shape index: {}]
  %s12 = inlined_call_operand.vmem [shape: f32[14,128,1], index: 12, kind: input, shape index: {}]
  %s13 = inlined_call_operand.vmem [shape: bf16[32,1792], index: 13, kind: input, shape index: {}]
  %s14 = inlined_call_operand.vmem [shape: f32[32,1], index: 14, kind: input, shape index: {}]
  %s15 = inlined_call_operand.vmem [shape: bf16[32,32], index: 15, kind: input, shape index: {}]
  %s16 = inlined_call_operand.vmem [shape: f32[32,1], index: 16, kind: input, shape index: {}]
  %s17 = inlined_call_operand.vmem [shape: bf16[1,32], index: 17, kind: input, shape index: {}]
  %s18 = inlined_call_operand.<no memory space> [shape: f32[1,1], index: 18, kind: input, shape index: {}]
  %s19 = inlined_call_operand.hbm [shape: f32[1,2], index: 19, kind: output, shape index: {}]
  %s20 = sld [smem:[#allocation0]]
  $region86: #{tpu_custom_call.1} parent=0
    _
  %s22 = ssub.s32 1, %s20
  %s23 = scalar_select 0, %s22, %s20
  %v24 = vstv %s8
  %25 = vst [vmem:[#allocation2] sm:$0x1] %v24
  %v26 = vstv %s18
  %27 = vst [vmem:[#allocation3] sm:$0x1] %v26
  $region1: #{tpu_custom_call.1} parent=0
    #allocation4 [shape = 'u8[512]{0}', space=vmem, size = 0x400, scoped, tag = 'output window, operand 0, single buffered']
    #allocation5 [shape = 's32[1]{0}', space=sflag, size = 0x4, scoped, tag = 'scoped memory for tpu_custom_call.1']
    %28 = vsyncpa [#allocation5], 0
    // Predicated region
    $region2: #{tpu_custom_call.1} parent=1 // pred_check
      _
    $region3: #{tpu_custom_call.1} parent=1 // pred_check_branch
      %30 = sbr.rel (0) target = $region5
    $region4: #{tpu_custom_call.1} parent=1 // pred_region
      _
    $region5: #{tpu_custom_call.1} parent=1 // pred_fallthru
      _
    // Predicated region
    $region6: #{tpu_custom_call.1} parent=1 // pred_check
      _
    $region7: #{tpu_custom_call.1} parent=1 // pred_check_branch
      %32 = sbr.rel (0) target = $region9
    $region8: #{tpu_custom_call.1} parent=1 // pred_region
      _
    $region9: #{tpu_custom_call.1} parent=1 // pred_fallthru
      _
    // Predicated region
    $region10: #{tpu_custom_call.1} parent=1 // pred_check
      _
    $region11: #{tpu_custom_call.1} parent=1 // pred_check_branch
      %34 = sbr.rel (0) target = $region13
    $region12: #{tpu_custom_call.1} parent=1 // pred_region
      _
    $region13: #{tpu_custom_call.1} parent=1 // pred_fallthru
      _
    // Predicated region
    $region14: #{tpu_custom_call.1} parent=1 // pred_check
      _
    $region15: #{tpu_custom_call.1} parent=1 // pred_check_branch
      %36 = sbr.rel (0) target = $region17
    $region16: #{tpu_custom_call.1} parent=1 // pred_region
      _
    $region17: #{tpu_custom_call.1} parent=1 // pred_fallthru
      _
    // Predicated region
    $region18: #{tpu_custom_call.1} parent=1 // pred_check
      _
    $region19: #{tpu_custom_call.1} parent=1 // pred_check_branch
      %38 = sbr.rel (0) target = $region21
    $region20: #{tpu_custom_call.1} parent=1 // pred_region
      _
    $region21: #{tpu_custom_call.1} parent=1 // pred_fallthru
      _
    // Predicated region
    $region22: #{tpu_custom_call.1} parent=1 // pred_check
      _
    $region23: #{tpu_custom_call.1} parent=1 // pred_check_branch
      %40 = sbr.rel (0) target = $region25
    $region24: #{tpu_custom_call.1} parent=1 // pred_region
      _
    $region25: #{tpu_custom_call.1} parent=1 // pred_fallthru
      _
    // Predicated region
    $region26: #{tpu_custom_call.1} parent=1 // pred_check
      _
    $region27: #{tpu_custom_call.1} parent=1 // pred_check_branch
      %42 = sbr.rel (0) target = $region29
    $region28: #{tpu_custom_call.1} parent=1 // pred_region
      _
    $region29: #{tpu_custom_call.1} parent=1 // pred_fallthru
      _
    // Predicated region
    $region30: #{tpu_custom_call.1} parent=1 // pred_check
      _
    $region31: #{tpu_custom_call.1} parent=1 // pred_check_branch
      %44 = sbr.rel (0) target = $region33
    $region32: #{tpu_custom_call.1} parent=1 // pred_region
      _
    $region33: #{tpu_custom_call.1} parent=1 // pred_fallthru
      _
    // Predicated region
    $region34: #{tpu_custom_call.1} parent=1 // pred_check
      _
    $region35: #{tpu_custom_call.1} parent=1 // pred_check_branch
      %46 = sbr.rel (0) target = $region37
    $region36: #{tpu_custom_call.1} parent=1 // pred_region
      _
    $region37: #{tpu_custom_call.1} parent=1 // pred_fallthru
      _
    // Predicated region
    $region38: #{tpu_custom_call.1} parent=1 // pred_check
      _
    $region39: #{tpu_custom_call.1} parent=1 // pred_check_branch
      %48 = sbr.rel (0) target = $region41
    $region40: #{tpu_custom_call.1} parent=1 // pred_region
      _
    $region41: #{tpu_custom_call.1} parent=1 // pred_fallthru
      _
    // Predicated region
    $region42: #{tpu_custom_call.1} parent=1 // pred_check
      _
    $region43: #{tpu_custom_call.1} parent=1 // pred_check_branch
      %50 = sbr.rel (0) target = $region45
    $region44: #{tpu_custom_call.1} parent=1 // pred_region
      _
    $region45: #{tpu_custom_call.1} parent=1 // pred_fallthru
      _
    // Predicated region
    $region46: #{tpu_custom_call.1} parent=1 // pred_check
      _
    $region47: #{tpu_custom_call.1} parent=1 // pred_check_branch
      %52 = sbr.rel (0) target = $region49
    $region48: #{tpu_custom_call.1} parent=1 // pred_region
      _
    $region49: #{tpu_custom_call.1} parent=1 // pred_fallthru
      _
    // Predicated region
    $region50: #{tpu_custom_call.1} parent=1 // pred_check
      _
    $region51: #{tpu_custom_call.1} parent=1 // pred_check_branch
      %54 = sbr.rel (0) target = $region53
    $region52: #{tpu_custom_call.1} parent=1 // pred_region
      _
    $region53: #{tpu_custom_call.1} parent=1 // pred_fallthru
      _
    // Predicated region
    $region54: #{tpu_custom_call.1} parent=1 // pred_check
      _
    $region55: #{tpu_custom_call.1} parent=1 // pred_check_branch
      %56 = sbr.rel (0) target = $region57
    $region56: #{tpu_custom_call.1} parent=1 // pred_region
      _
    $region57: #{tpu_custom_call.1} parent=1 // pred_fallthru
      _
    // Predicated region
    $region58: #{tpu_custom_call.1} parent=1 // pred_check
      _
    $region59: #{tpu_custom_call.1} parent=1 // pred_check_branch
      %58 = sbr.rel (0) target = $region61
    $region60: #{tpu_custom_call.1} parent=1 // pred_region
      _
    $region61: #{tpu_custom_call.1} parent=1 // pred_fallthru
      _
    // Predicated region
    $region62: #{tpu_custom_call.1} parent=1 // pred_check
      _
    $region63: #{tpu_custom_call.1} parent=1 // pred_check_branch
      %60 = sbr.rel (0) target = $region65
    $region64: #{tpu_custom_call.1} parent=1 // pred_region
      _
    $region65: #{tpu_custom_call.1} parent=1 // pred_fallthru
      _
    // Predicated region
    $region66: #{tpu_custom_call.1} parent=1 // pred_check
      _
    $region67: #{tpu_custom_call.1} parent=1 // pred_check_branch
      %62 = sbr.rel (0) target = $region69
    $region68: #{tpu_custom_call.1} parent=1 // pred_region
      _
    $region69: #{tpu_custom_call.1} parent=1 // pred_fallthru
      _
    // Predicated region
    $region70: #{tpu_custom_call.1} parent=1 // pred_check
      _
    $region71: #{tpu_custom_call.1} parent=1 // pred_check_branch
      %64 = sbr.rel (0) target = $region73
    $region72: #{tpu_custom_call.1} parent=1 // pred_region
      _
    $region73: #{tpu_custom_call.1} parent=1 // pred_fallthru
      _
    // Predicated region
    $region74: #{tpu_custom_call.1} parent=1 // pred_check
      _
    $region75: #{tpu_custom_call.1} parent=1 // pred_check_branch
      %66 = sbr.rel (0) target = $region77
    $region76: #{tpu_custom_call.1} parent=1 // pred_region
      _
    $region77: #{tpu_custom_call.1} parent=1 // pred_fallthru
      _
    %v68 = vld [vmem:[%s0] sm:$0xf]
    %v69 = vld [vmem:[%s0 + $0x4] sm:$0xf]
    %v70 = vld [vmem:[%s0 + $0x8] sm:$0xf]
    %v71 = vld [vmem:[%s0 + $0xc] sm:$0xf]
    %v72 = vld [vmem:[%s0 + $0x10] sm:$0xf]
    %v73 = vld [vmem:[%s0 + $0x14] sm:$0xf]
    %v74 = vld [vmem:[%s0 + $0x18] sm:$0xf]
    %v75 = vld [vmem:[%s0 + $0x1c] sm:$0xf]
    %v76 = vld [vmem:[%s0 + $0x20] sm:$0xf]
    %v77 = vld [vmem:[%s0 + $0x24] sm:$0xf]
    %v78 = vld [vmem:[%s0 + $0x28] sm:$0xf]
    %v79 = vld [vmem:[%s0 + $0x2c] sm:$0xf]
    %v80 = vld [vmem:[%s0 + $0x30] sm:$0xf]
    %v81 = vld [vmem:[%s0 + $0x34] sm:$0xf]
    %v82 = vld [vmem:[%s1] sm:$0xf]
    %v83 = vld [vmem:[%s1 + $0x4] sm:$0xf]
    %v84 = vld [vmem:[%s1 + $0x8] sm:$0xf]
    %v85 = vld [vmem:[%s1 + $0xc] sm:$0xf]
    %v86 = vld [vmem:[%s1 + $0x10] sm:$0xf]
    %v87 = vld [vmem:[%s1 + $0x14] sm:$0xf]
    %v88 = vld [vmem:[%s1 + $0x18] sm:$0xf]
    %v89 = vld [vmem:[%s3] sm:$0xff]
    %v90 = vld [vmem:[%s3 + $0x8] sm:$0xff]
    %v91 = vld [vmem:[%s3 + $0x10] sm:$0xff]
    %v92 = vld [vmem:[%s3 + $0x18] sm:$0xff]
    %v93 = vld [vmem:[%s3 + $0x20] sm:$0xff]
    %v94 = vld [vmem:[%s3 + $0x28] sm:$0xff]
    %v95 = vld [vmem:[%s3 + $0x30] sm:$0xff]
    %97 = vset.pattern.permute.xlu0 0
    %98 = vperm.xlu0 %97, %v89
    %v99 = vpop.permute.xlu0 %98
    %102 = vset.pattern.permute.xlu0 0
    %103 = vperm.xlu0 %102, %v90
    %v104 = vpop.permute.xlu0 %103
    %107 = vset.pattern.permute.xlu0 0
    %108 = vperm.xlu0 %107, %v91
    %v109 = vpop.permute.xlu0 %108
    %112 = vset.pattern.permute.xlu0 0
    %113 = vperm.xlu0 %112, %v92
    %v114 = vpop.permute.xlu0 %113
    %117 = vset.pattern.permute.xlu0 0
    %118 = vperm.xlu0 %117, %v93
    %v119 = vpop.permute.xlu0 %118
    %122 = vset.pattern.permute.xlu0 0
    %123 = vperm.xlu0 %122, %v94
    %v124 = vpop.permute.xlu0 %123
    %127 = vset.pattern.permute.xlu0 0
    %128 = vperm.xlu0 %127, %v95
    %v129 = vpop.permute.xlu0 %128
    %v138 = vunpack.c.l.b16 %v82
    %v139 = vunpack.c.l.b16 %v83
    %v140 = vunpack.c.l.b16 %v84
    %v141 = vunpack.c.l.b16 %v85
    %v142 = vunpack.c.l.b16 %v86
    %v143 = vunpack.c.l.b16 %v87
    %v144 = vunpack.c.l.b16 %v88
    %v145 = vpack.c.b16 %v139, %v138
    %v146 = vpack.c.b16 %v141, %v140
    %v147 = vpack.c.b16 %v143, %v142
    %v148 = vpack.c.b16 %v144, %v144
    %v163 = vunpack.c.l.b16 %v68
    %v164 = vunpack.c.l.b16 %v69
    %v165 = vunpack.c.l.b16 %v70
    %v166 = vunpack.c.l.b16 %v71
    %v167 = vunpack.c.l.b16 %v72
    %v168 = vunpack.c.l.b16 %v73
    %v169 = vunpack.c.l.b16 %v74
    %v170 = vunpack.c.l.b16 %v75
    %v171 = vunpack.c.l.b16 %v76
    %v172 = vunpack.c.l.b16 %v77
    %v173 = vunpack.c.l.b16 %v78
    %v174 = vunpack.c.l.b16 %v79
    %v175 = vunpack.c.l.b16 %v80
    %v176 = vunpack.c.l.b16 %v81
    %v177 = vpack.c.b16 %v164, %v163
    %v178 = vpack.c.b16 %v166, %v165
    %v179 = vpack.c.b16 %v168, %v167
    %v180 = vpack.c.b16 %v170, %v169
    %v181 = vpack.c.b16 %v172, %v171
    %v182 = vpack.c.b16 %v174, %v173
    %v183 = vpack.c.b16 %v176, %v175
    %vm191 = vcmask 916480
    %v193 = vsel %vm191, %v145, 0
    %v196 = vsel %vm191, %v146, 0
    %v199 = vsel %vm191, %v147, 0
    %v202 = vsel %vm191, %v148, 0
    %204 = vmatprep.subr.bf16.mxu0 0
    %205 = vmatpush1.bf16.msra.mxu0 %v177
    %206 = vmatprep.subr.bf16.mxu0 0
    %207 = vmatpush1.bf16.msra.mxu0 %v178
    %208 = vmatprep.subr.bf16.mxu0 0
    %209 = vmatpush1.bf16.msra.mxu0 %v179
    %210 = vmatprep.subr.bf16.mxu0 0
    %211 = vmatpush1.bf16.msra.mxu0 %v180
    %212 = vmatprep.subr.bf16.mxu0 0
    %213 = vmatpush1.bf16.msra.mxu0 %v181
    %214 = vmatprep.subr.bf16.mxu0 0
    %215 = vmatpush1.bf16.msra.mxu0 %v182
    %216 = vmatprep.subr.bf16.mxu0 0
    %217 = vmatpush1.bf16.msra.mxu0 %v183
    %218 = vmatprep.subr.bf16.mxu0 0
    %219 = vmatpush1.bf16.msra.mxu0 0
    %220 = vmatprep.subr.bf16.mxu0 0
    %221 = vmatpush1.bf16.msra.mxu0 0
    %222 = vmatprep.subr.bf16.mxu0 0
    %223 = vmatpush1.bf16.msra.mxu0 0
    %224 = vmatprep.subr.bf16.mxu0 0
    %225 = vmatpush1.bf16.msra.mxu0 0
    %226 = vmatprep.subr.bf16.mxu0 0
    %227 = vmatpush1.bf16.msra.mxu0 0
    %228 = vmatprep.subr.bf16.mxu0 0
    %229 = vmatpush1.bf16.msra.mxu0 0
    %230 = vmatprep.subr.bf16.mxu0 0
    %231 = vmatpush1.bf16.msra.mxu0 0
    %232 = vmatprep.subr.bf16.mxu0 0
    %233 = vmatpush1.bf16.msra.mxu0 0
    %234 = vmatprep.subr.bf16.mxu0 0
    %235 = vmatpush1.bf16.msra.mxu0 0
    %236 = vmatprep.mubr.bf16.mxu0 0
    %237 = vmatmul.mubr.bf16.gmra.mrb[0].mxu0 %v193
    %v238 = vpop.f32.mrb[0].mxu0
    %v239 = vadd.f32 %v99, %v238
    %v240 = vpop.f32.mrb[0].mxu0
    %v241 = vpop.f32.mrb[0].mxu0
    %v242 = vadd.f32 %v104, %v241
    %v243 = vpop.f32.mrb[0].mxu0
    %244 = vmatprep.mubr.bf16.mxu0 0
    %245 = vmatmul.mubr.bf16.gmra.mrb[0].mxu0 %v196
    %v246 = vpop.f32.mrb[0].mxu0
    %v247 = vadd.f32 %v109, %v246
    %v248 = vpop.f32.mrb[0].mxu0
    %v249 = vpop.f32.mrb[0].mxu0
    %v250 = vadd.f32 %v114, %v249
    %v251 = vpop.f32.mrb[0].mxu0
    %252 = vmatprep.mubr.bf16.mxu0 0
    %253 = vmatmul.mubr.bf16.gmra.mrb[0].mxu0 %v199
    %v254 = vpop.f32.mrb[0].mxu0
    %v255 = vadd.f32 %v119, %v254
    %v256 = vpop.f32.mrb[0].mxu0
    %v257 = vpop.f32.mrb[0].mxu0
    %v258 = vadd.f32 %v124, %v257
    %v259 = vpop.f32.mrb[0].mxu0
    %260 = vmatprep.mubr.bf16.mxu0 0
    %261 = vmatmul.mubr.bf16.gmra.mrb[0].mxu0 %v202
    %v262 = vpop.f32.mrb[0].mxu0
    %v263 = vadd.f32 %v129, %v262
    %v264 = vpop.f32.mrb[0].mxu0
    %v265 = vpop.f32.mrb[0].mxu0
    %v266 = vpop.f32.mrb[0].mxu0
    %267 = vdwg.mxu0
    %v268 = vmax.f32 %v239, 0.0
    %v269 = vmax.f32 %v242, 0.0
    %v270 = vmax.f32 %v247, 0.0
    %v271 = vmax.f32 %v250, 0.0
    %v272 = vmax.f32 %v255, 0.0
    %v273 = vmax.f32 %v258, 0.0
    %v274 = vmax.f32 %v263, 0.0
    %v275 = vld [vmem:[%s2] sm:$0xf]
    %v276 = vld [vmem:[%s2 + $0x4] sm:$0xf]
    %v277 = vld [vmem:[%s2 + $0x8] sm:$0xf]
    %v278 = vld [vmem:[%s2 + $0xc] sm:$0xf]
    %v279 = vld [vmem:[%s2 + $0x10] sm:$0xf]
    %v280 = vld [vmem:[%s2 + $0x14] sm:$0xf]
    %v281 = vld [vmem:[%s2 + $0x18] sm:$0xf]
    %v282 = vpack.c.bf16 %v269, %v268
    %v283 = vpack.c.bf16 %v271, %v270
    %v284 = vpack.c.bf16 %v273, %v272
    %v285 = vpack.c.bf16 %v274, %v274
    %v286 = vld [vmem:[%s4] sm:$0xff]
    %v287 = vld [vmem:[%s4 + $0x8] sm:$0xff]
    %v288 = vld [vmem:[%s4 + $0x10] sm:$0xff]
    %v289 = vld [vmem:[%s4 + $0x18] sm:$0xff]
    %v290 = vld [vmem:[%s4 + $0x20] sm:$0xff]
    %v291 = vld [vmem:[%s4 + $0x28] sm:$0xff]
    %v292 = vld [vmem:[%s4 + $0x30] sm:$0xff]
    %294 = vset.pattern.permute.xlu0 0
    %295 = vperm.xlu0 %294, %v286
    %v296 = vpop.permute.xlu0 %295
    %299 = vset.pattern.permute.xlu0 0
    %300 = vperm.xlu0 %299, %v287
    %v301 = vpop.permute.xlu0 %300
    %304 = vset.pattern.permute.xlu0 0
    %305 = vperm.xlu0 %304, %v288
    %v306 = vpop.permute.xlu0 %305
    %309 = vset.pattern.permute.xlu0 0
    %310 = vperm.xlu0 %309, %v289
    %v311 = vpop.permute.xlu0 %310
    %314 = vset.pattern.permute.xlu0 0
    %315 = vperm.xlu0 %314, %v290
    %v316 = vpop.permute.xlu0 %315
    %319 = vset.pattern.permute.xlu0 0
    %320 = vperm.xlu0 %319, %v291
    %v321 = vpop.permute.xlu0 %320
    %324 = vset.pattern.permute.xlu0 0
    %325 = vperm.xlu0 %324, %v292
    %v326 = vpop.permute.xlu0 %325
    %v335 = vunpack.c.l.b16 %v275
    %v336 = vunpack.c.l.b16 %v276
    %v337 = vunpack.c.l.b16 %v277
    %v338 = vunpack.c.l.b16 %v278
    %v339 = vunpack.c.l.b16 %v279
    %v340 = vunpack.c.l.b16 %v280
    %v341 = vunpack.c.l.b16 %v281
    %v342 = vpack.c.b16 %v336, %v335
    %v343 = vpack.c.b16 %v338, %v337
    %v344 = vpack.c.b16 %v340, %v339
    %v345 = vpack.c.b16 %v341, %v341
    %vm346 = vcmask 457728
    %v348 = vsel %vm346, %v342, 0
    %v351 = vsel %vm346, %v343, 0
    %v354 = vsel %vm346, %v344, 0
    %v357 = vsel %vm346, %v345, 0
    %vm359 = vcmask 1043456
    %v361 = vsel %vm359, %v285, 0
    %363 = vmatprep.subr.bf16.mxu0 0
    %364 = vmatpush1.bf16.msra.mxu0 %v282
    %365 = vmatprep.subr.bf16.mxu0 0
    %366 = vmatpush1.bf16.msra.mxu0 %v283
    %367 = vmatprep.subr.bf16.mxu0 0
    %368 = vmatpush1.bf16.msra.mxu0 %v284
    %369 = vmatprep.subr.bf16.mxu0 0
    %370 = vmatpush1.bf16.msra.mxu0 %v361
    %371 = vmatprep.subr.bf16.mxu0 0
    %372 = vmatpush1.bf16.msra.mxu0 0
    %373 = vmatprep.subr.bf16.mxu0 0
    %374 = vmatpush1.bf16.msra.mxu0 0
    %375 = vmatprep.subr.bf16.mxu0 0
    %376 = vmatpush1.bf16.msra.mxu0 0
    %377 = vmatprep.subr.bf16.mxu0 0
    %378 = vmatpush1.bf16.msra.mxu0 0
    %379 = vmatprep.subr.bf16.mxu0 0
    %380 = vmatpush1.bf16.msra.mxu0 0
    %381 = vmatprep.subr.bf16.mxu0 0
    %382 = vmatpush1.bf16.msra.mxu0 0
    %383 = vmatprep.subr.bf16.mxu0 0
    %384 = vmatpush1.bf16.msra.mxu0 0
    %385 = vmatprep.subr.bf16.mxu0 0
    %386 = vmatpush1.bf16.msra.mxu0 0
    %387 = vmatprep.subr.bf16.mxu0 0
    %388 = vmatpush1.bf16.msra.mxu0 0
    %389 = vmatprep.subr.bf16.mxu0 0
    %390 = vmatpush1.bf16.msra.mxu0 0
    %391 = vmatprep.subr.bf16.mxu0 0
    %392 = vmatpush1.bf16.msra.mxu0 0
    %393 = vmatprep.subr.bf16.mxu0 0
    %394 = vmatpush1.bf16.msra.mxu0 0
    %395 = vmatprep.mubr.bf16.mxu0 0
    %396 = vmatmul.mubr.bf16.gmra.mrb[0].mxu0 %v348
    %v397 = vpop.f32.mrb[0].mxu0
    %v398 = vadd.f32 %v296, %v397
    %v399 = vpop.f32.mrb[0].mxu0
    %v400 = vpop.f32.mrb[0].mxu0
    %v401 = vadd.f32 %v301, %v400
    %v402 = vpop.f32.mrb[0].mxu0
    %403 = vmatprep.mubr.bf16.mxu0 0
    %404 = vmatmul.mubr.bf16.gmra.mrb[0].mxu0 %v351
    %v405 = vpop.f32.mrb[0].mxu0
    %v406 = vadd.f32 %v306, %v405
    %v407 = vpop.f32.mrb[0].mxu0
    %v408 = vpop.f32.mrb[0].mxu0
    %v409 = vadd.f32 %v311, %v408
    %v410 = vpop.f32.mrb[0].mxu0
    %411 = vmatprep.mubr.bf16.mxu0 0
    %412 = vmatmul.mubr.bf16.gmra.mrb[0].mxu0 %v354
    %v413 = vpop.f32.mrb[0].mxu0
    %v414 = vadd.f32 %v316, %v413
    %v415 = vpop.f32.mrb[0].mxu0
    %v416 = vpop.f32.mrb[0].mxu0
    %v417 = vadd.f32 %v321, %v416
    %v418 = vpop.f32.mrb[0].mxu0
    %419 = vmatprep.mubr.bf16.mxu0 0
    %420 = vmatmul.mubr.bf16.gmra.mrb[0].mxu0 %v357
    %v421 = vpop.f32.mrb[0].mxu0
    %v422 = vadd.f32 %v326, %v421
    %v423 = vpop.f32.mrb[0].mxu0
    %v424 = vpop.f32.mrb[0].mxu0
    %v425 = vpop.f32.mrb[0].mxu0
    %426 = vdwg.mxu0
    %v427 = vmax.f32 %v398, 0.0
    %v428 = vmax.f32 %v401, 0.0
    %v429 = vmax.f32 %v406, 0.0
    %v430 = vmax.f32 %v409, 0.0
    %v431 = vmax.f32 %v414, 0.0
    %v432 = vmax.f32 %v417, 0.0
    %v433 = vmax.f32 %v422, 0.0
    %v434 = vpack.c.bf16 %v428, %v427
    %v435 = vpack.c.bf16 %v430, %v429
    %v436 = vpack.c.bf16 %v432, %v431
    %v437 = vpack.c.bf16 %v433, %v433
    %v438 = vld [vmem:[%s5] sm:$0xf]
    %v439 = vld [vmem:[%s5 + $0x4] sm:$0xf]
    %v440 = vld [vmem:[%s5 + $0x8] sm:$0xf]
    %v441 = vld [vmem:[%s6] sm:$0xff]
    %v442 = vld [vmem:[%s6 + $0x8] sm:$0xff]
    %v443 = vld [vmem:[%s6 + $0x10] sm:$0xff]
    %445 = vset.pattern.permute.xlu0 0
    %446 = vperm.xlu0 %445, %v441
    %v447 = vpop.permute.xlu0 %446
    %450 = vset.pattern.permute.xlu0 0
    %451 = vperm.xlu0 %450, %v442
    %v452 = vpop.permute.xlu0 %451
    %455 = vset.pattern.permute.xlu0 0
    %456 = vperm.xlu0 %455, %v443
    %v457 = vpop.permute.xlu0 %456
    %v462 = vunpack.c.l.b16 %v438
    %v463 = vunpack.c.l.b16 %v439
    %v464 = vunpack.c.l.b16 %v440
    %v465 = vpack.c.b16 %v463, %v462
    %v466 = vpack.c.b16 %v464, %v464
    %v468 = vsel %vm346, %v465, 0
    %v471 = vsel %vm346, %v466, 0
    %v474 = vsel %vm359, %v437, 0
    %476 = vmatprep.subr.bf16.mxu0 0
    %477 = vmatpush1.bf16.msra.mxu0 %v434
    %478 = vmatprep.subr.bf16.mxu0 0
    %479 = vmatpush1.bf16.msra.mxu0 %v435
    %480 = vmatprep.subr.bf16.mxu0 0
    %481 = vmatpush1.bf16.msra.mxu0 %v436
    %482 = vmatprep.subr.bf16.mxu0 0
    %483 = vmatpush1.bf16.msra.mxu0 %v474
    %484 = vmatprep.subr.bf16.mxu0 0
    %485 = vmatpush1.bf16.msra.mxu0 0
    %486 = vmatprep.subr.bf16.mxu0 0
    %487 = vmatpush1.bf16.msra.mxu0 0
    %488 = vmatprep.subr.bf16.mxu0 0
    %489 = vmatpush1.bf16.msra.mxu0 0
    %490 = vmatprep.subr.bf16.mxu0 0
    %491 = vmatpush1.bf16.msra.mxu0 0
    %492 = vmatprep.subr.bf16.mxu0 0
    %493 = vmatpush1.bf16.msra.mxu0 0
    %494 = vmatprep.subr.bf16.mxu0 0
    %495 = vmatpush1.bf16.msra.mxu0 0
    %496 = vmatprep.subr.bf16.mxu0 0
    %497 = vmatpush1.bf16.msra.mxu0 0
    %498 = vmatprep.subr.bf16.mxu0 0
    %499 = vmatpush1.bf16.msra.mxu0 0
    %500 = vmatprep.subr.bf16.mxu0 0
    %501 = vmatpush1.bf16.msra.mxu0 0
    %502 = vmatprep.subr.bf16.mxu0 0
    %503 = vmatpush1.bf16.msra.mxu0 0
    %504 = vmatprep.subr.bf16.mxu0 0
    %505 = vmatpush1.bf16.msra.mxu0 0
    %506 = vmatprep.subr.bf16.mxu0 0
    %507 = vmatpush1.bf16.msra.mxu0 0
    %508 = vmatprep.mubr.bf16.mxu0 0
    %509 = vmatmul.mubr.bf16.gmra.mrb[0].mxu0 %v468
    %v510 = vpop.f32.mrb[0].mxu0
    %v511 = vadd.f32 %v447, %v510
    %v512 = vpop.f32.mrb[0].mxu0
    %v513 = vpop.f32.mrb[0].mxu0
    %v514 = vadd.f32 %v452, %v513
    %v515 = vpop.f32.mrb[0].mxu0
    %516 = vmatprep.mubr.bf16.mxu0 0
    %517 = vmatmul.mubr.bf16.gmra.mrb[0].mxu0 %v471
    %v518 = vpop.f32.mrb[0].mxu0
    %v519 = vadd.f32 %v457, %v518
    %v520 = vpop.f32.mrb[0].mxu0
    %v521 = vpop.f32.mrb[0].mxu0
    %v522 = vpop.f32.mrb[0].mxu0
    %523 = vdwg.mxu0
    %v524 = vmax.f32 %v511, 0.0
    %v525 = vmax.f32 %v514, 0.0
    %v526 = vmax.f32 %v519, 0.0
    %v527 = vld [vmem:[%s7] sm:$0x1]
    %v528 = vpack.c.bf16 %v525, %v524
    %v529 = vpack.c.bf16 %v526, %v526
    %v530 = vld [vmem:[#allocation2] sm:$0x1]
    %532 = vset.pattern.permute.xlu0 0
    %533 = vperm.xlu0 %532, %v530
    %v534 = vpop.permute.xlu0 %533
    %v536 = vlaneseq
    %v537 = vshrl.u32 %v536, 7
    %v538 = vsub.s32 0, %v537
    %v539 = vrot.slane %v534, %v538
    %vm540 = vcmask 195584
    %v542 = vsel %vm540, %v527, 0
    %v545 = vsel %vm359, %v529, 0
    %547 = vmatprep.subr.bf16.mxu0 0
    %548 = vmatpush1.bf16.msra.mxu0 %v528
    %549 = vmatprep.subr.bf16.mxu0 0
    %550 = vmatpush1.bf16.msra.mxu0 %v545
    %551 = vmatprep.subr.bf16.mxu0 0
    %552 = vmatpush1.bf16.msra.mxu0 0
    %553 = vmatprep.subr.bf16.mxu0 0
    %554 = vmatpush1.bf16.msra.mxu0 0
    %555 = vmatprep.subr.bf16.mxu0 0
    %556 = vmatpush1.bf16.msra.mxu0 0
    %557 = vmatprep.subr.bf16.mxu0 0
    %558 = vmatpush1.bf16.msra.mxu0 0
    %559 = vmatprep.subr.bf16.mxu0 0
    %560 = vmatpush1.bf16.msra.mxu0 0
    %561 = vmatprep.subr.bf16.mxu0 0
    %562 = vmatpush1.bf16.msra.mxu0 0
    %563 = vmatprep.subr.bf16.mxu0 0
    %564 = vmatpush1.bf16.msra.mxu0 0
    %565 = vmatprep.subr.bf16.mxu0 0
    %566 = vmatpush1.bf16.msra.mxu0 0
    %567 = vmatprep.subr.bf16.mxu0 0
    %568 = vmatpush1.bf16.msra.mxu0 0
    %569 = vmatprep.subr.bf16.mxu0 0
    %570 = vmatpush1.bf16.msra.mxu0 0
    %571 = vmatprep.subr.bf16.mxu0 0
    %572 = vmatpush1.bf16.msra.mxu0 0
    %573 = vmatprep.subr.bf16.mxu0 0
    %574 = vmatpush1.bf16.msra.mxu0 0
    %575 = vmatprep.subr.bf16.mxu0 0
    %576 = vmatpush1.bf16.msra.mxu0 0
    %577 = vmatprep.subr.bf16.mxu0 0
    %578 = vmatpush1.bf16.msra.mxu0 0
    %579 = vmatprep.mubr.bf16.mxu0 0
    %580 = vmatmul.mubr.bf16.gmra.mrb[0].mxu0 %v542
    %v581 = vpop.f32.mrb[0].mxu0
    %v582 = vadd.f32 %v539, %v581
    %v583 = vpop.f32.mrb[0].mxu0
    %v584 = vpop.f32.mrb[0].mxu0
    %v585 = vpop.f32.mrb[0].mxu0
    %586 = vdwg.mxu0
    %v587 = vld [vmem:[%s9] sm:$0xf]
    %v588 = vld [vmem:[%s9 + $0x4] sm:$0xf]
    %v589 = vld [vmem:[%s9 + $0x8] sm:$0xf]
    %v590 = vld [vmem:[%s9 + $0xc] sm:$0xf]
    %v591 = vld [vmem:[%s9 + $0x10] sm:$0xf]
    %v592 = vld [vmem:[%s9 + $0x14] sm:$0xf]
    %v593 = vld [vmem:[%s9 + $0x18] sm:$0xf]
    %v594 = vld [vmem:[%s9 + $0x1c] sm:$0xf]
    %v595 = vld [vmem:[%s9 + $0x20] sm:$0xf]
    %v596 = vld [vmem:[%s9 + $0x24] sm:$0xf]
    %v597 = vld [vmem:[%s9 + $0x28] sm:$0xf]
    %v598 = vld [vmem:[%s9 + $0x2c] sm:$0xf]
    %v599 = vld [vmem:[%s9 + $0x30] sm:$0xf]
    %v600 = vld [vmem:[%s9 + $0x34] sm:$0xf]
    %v601 = vld [vmem:[%s9 + $0x38] sm:$0xf]
    %v602 = vld [vmem:[%s9 + $0x3c] sm:$0xf]
    %v603 = vld [vmem:[%s10] sm:$0xff]
    %v604 = vld [vmem:[%s10 + $0x8] sm:$0xff]
    %v605 = vld [vmem:[%s10 + $0x10] sm:$0xff]
    %v606 = vld [vmem:[%s10 + $0x18] sm:$0xff]
    %v607 = vld [vmem:[%s10 + $0x20] sm:$0xff]
    %v608 = vld [vmem:[%s10 + $0x28] sm:$0xff]
    %v609 = vld [vmem:[%s10 + $0x30] sm:$0xff]
    %v610 = vld [vmem:[%s10 + $0x38] sm:$0xff]
    %v611 = vld [vmem:[%s10 + $0x40] sm:$0xff]
    %v612 = vld [vmem:[%s10 + $0x48] sm:$0xff]
    %v613 = vld [vmem:[%s10 + $0x50] sm:$0xff]
    %v614 = vld [vmem:[%s10 + $0x58] sm:$0xff]
    %v615 = vld [vmem:[%s10 + $0x60] sm:$0xff]
    %v616 = vld [vmem:[%s10 + $0x68] sm:$0xff]
    %v617 = vld [vmem:[%s10 + $0x70] sm:$0xff]
    %v618 = vld [vmem:[%s10 + $0x78] sm:$0xff]
    %620 = vset.pattern.permute.xlu0 0
    %621 = vperm.xlu0 %620, %v603
    %v622 = vpop.permute.xlu0 %621
    %625 = vset.pattern.permute.xlu0 0
    %626 = vperm.xlu0 %625, %v604
    %v627 = vpop.permute.xlu0 %626
    %630 = vset.pattern.permute.xlu0 0
    %631 = vperm.xlu0 %630, %v605
    %v632 = vpop.permute.xlu0 %631
    %635 = vset.pattern.permute.xlu0 0
    %636 = vperm.xlu0 %635, %v606
    %v637 = vpop.permute.xlu0 %636
    %640 = vset.pattern.permute.xlu0 0
    %641 = vperm.xlu0 %640, %v607
    %v642 = vpop.permute.xlu0 %641
    %645 = vset.pattern.permute.xlu0 0
    %646 = vperm.xlu0 %645, %v608
    %v647 = vpop.permute.xlu0 %646
    %650 = vset.pattern.permute.xlu0 0
    %651 = vperm.xlu0 %650, %v609
    %v652 = vpop.permute.xlu0 %651
    %655 = vset.pattern.permute.xlu0 0
    %656 = vperm.xlu0 %655, %v610
    %v657 = vpop.permute.xlu0 %656
    %660 = vset.pattern.permute.xlu0 0
    %661 = vperm.xlu0 %660, %v611
    %v662 = vpop.permute.xlu0 %661
    %665 = vset.pattern.permute.xlu0 0
    %666 = vperm.xlu0 %665, %v612
    %v667 = vpop.permute.xlu0 %666
    %670 = vset.pattern.permute.xlu0 0
    %671 = vperm.xlu0 %670, %v613
    %v672 = vpop.permute.xlu0 %671
    %675 = vset.pattern.permute.xlu0 0
    %676 = vperm.xlu0 %675, %v614
    %v677 = vpop.permute.xlu0 %676
    %680 = vset.pattern.permute.xlu0 0
    %681 = vperm.xlu0 %680, %v615
    %v682 = vpop.permute.xlu0 %681
    %685 = vset.pattern.permute.xlu0 0
    %686 = vperm.xlu0 %685, %v616
    %v687 = vpop.permute.xlu0 %686
    %690 = vset.pattern.permute.xlu0 0
    %691 = vperm.xlu0 %690, %v617
    %v692 = vpop.permute.xlu0 %691
    %695 = vset.pattern.permute.xlu0 0
    %696 = vperm.xlu0 %695, %v618
    %v697 = vpop.permute.xlu0 %696
    %v715 = vunpack.c.l.b16 %v587
    %v716 = vunpack.c.l.b16 %v588
    %v717 = vunpack.c.l.b16 %v589
    %v718 = vunpack.c.l.b16 %v590
    %v719 = vunpack.c.l.b16 %v591
    %v720 = vunpack.c.l.b16 %v592
    %v721 = vunpack.c.l.b16 %v593
    %v722 = vunpack.c.l.b16 %v594
    %v723 = vunpack.c.l.b16 %v595
    %v724 = vunpack.c.l.b16 %v596
    %v725 = vunpack.c.l.b16 %v597
    %v726 = vunpack.c.l.b16 %v598
    %v727 = vunpack.c.l.b16 %v599
    %v728 = vunpack.c.l.b16 %v600
    %v729 = vunpack.c.l.b16 %v601
    %v730 = vunpack.c.l.b16 %v602
    %v731 = vpack.c.b16 %v716, %v715
    %v732 = vpack.c.b16 %v718, %v717
    %v733 = vpack.c.b16 %v720, %v719
    %v734 = vpack.c.b16 %v722, %v721
    %v735 = vpack.c.b16 %v724, %v723
    %v736 = vpack.c.b16 %v726, %v725
    %v737 = vpack.c.b16 %v728, %v727
    %v738 = vpack.c.b16 %v730, %v729
    %v740 = vsel %vm346, %v731, 0
    %v743 = vsel %vm346, %v732, 0
    %v746 = vsel %vm346, %v733, 0
    %v749 = vsel %vm346, %v734, 0
    %v752 = vsel %vm346, %v735, 0
    %v755 = vsel %vm346, %v736, 0
    %v758 = vsel %vm346, %v737, 0
    %v761 = vsel %vm346, %v738, 0
    %763 = vmatprep.subr.bf16.mxu0 0
    %764 = vmatpush1.bf16.msra.mxu0 %v434
    %765 = vmatprep.subr.bf16.mxu0 0
    %766 = vmatpush1.bf16.msra.mxu0 %v435
    %767 = vmatprep.subr.bf16.mxu0 0
    %768 = vmatpush1.bf16.msra.mxu0 %v436
    %769 = vmatprep.subr.bf16.mxu0 0
    %770 = vmatpush1.bf16.msra.mxu0 %v474
    %771 = vmatprep.subr.bf16.mxu0 0
    %772 = vmatpush1.bf16.msra.mxu0 0
    %773 = vmatprep.subr.bf16.mxu0 0
    %774 = vmatpush1.bf16.msra.mxu0 0
    %775 = vmatprep.subr.bf16.mxu0 0
    %776 = vmatpush1.bf16.msra.mxu0 0
    %777 = vmatprep.subr.bf16.mxu0 0
    %778 = vmatpush1.bf16.msra.mxu0 0
    %779 = vmatprep.subr.bf16.mxu0 0
    %780 = vmatpush1.bf16.msra.mxu0 0
    %781 = vmatprep.subr.bf16.mxu0 0
    %782 = vmatpush1.bf16.msra.mxu0 0
    %783 = vmatprep.subr.bf16.mxu0 0
    %784 = vmatpush1.bf16.msra.mxu0 0
    %785 = vmatprep.subr.bf16.mxu0 0
    %786 = vmatpush1.bf16.msra.mxu0 0
    %787 = vmatprep.subr.bf16.mxu0 0
    %788 = vmatpush1.bf16.msra.mxu0 0
    %789 = vmatprep.subr.bf16.mxu0 0
    %790 = vmatpush1.bf16.msra.mxu0 0
    %791 = vmatprep.subr.bf16.mxu0 0
    %792 = vmatpush1.bf16.msra.mxu0 0
    %793 = vmatprep.subr.bf16.mxu0 0
    %794 = vmatpush1.bf16.msra.mxu0 0
    %795 = vmatprep.mubr.bf16.mxu0 0
    %796 = vmatmul.mubr.bf16.gmra.mrb[0].mxu0 %v740
    %v797 = vpop.f32.mrb[0].mxu0
    %v798 = vadd.f32 %v622, %v797
    %v799 = vpop.f32.mrb[0].mxu0
    %v800 = vpop.f32.mrb[0].mxu0
    %v801 = vadd.f32 %v627, %v800
    %v802 = vpop.f32.mrb[0].mxu0
    %803 = vmatprep.mubr.bf16.mxu0 0
    %804 = vmatmul.mubr.bf16.gmra.mrb[0].mxu0 %v743
    %v805 = vpop.f32.mrb[0].mxu0
    %v806 = vadd.f32 %v632, %v805
    %v807 = vpop.f32.mrb[0].mxu0
    %v808 = vpop.f32.mrb[0].mxu0
    %v809 = vadd.f32 %v637, %v808
    %v810 = vpop.f32.mrb[0].mxu0
    %811 = vmatprep.mubr.bf16.mxu0 0
    %812 = vmatmul.mubr.bf16.gmra.mrb[0].mxu0 %v746
    %v813 = vpop.f32.mrb[0].mxu0
    %v814 = vadd.f32 %v642, %v813
    %v815 = vpop.f32.mrb[0].mxu0
    %v816 = vpop.f32.mrb[0].mxu0
    %v817 = vadd.f32 %v647, %v816
    %v818 = vpop.f32.mrb[0].mxu0
    %819 = vmatprep.mubr.bf16.mxu0 0
    %820 = vmatmul.mubr.bf16.gmra.mrb[0].mxu0 %v749
    %v821 = vpop.f32.mrb[0].mxu0
    %v822 = vadd.f32 %v652, %v821
    %v823 = vpop.f32.mrb[0].mxu0
    %v824 = vpop.f32.mrb[0].mxu0
    %v825 = vadd.f32 %v657, %v824
    %v826 = vpop.f32.mrb[0].mxu0
    %827 = vmatprep.mubr.bf16.mxu0 0
    %828 = vmatmul.mubr.bf16.gmra.mrb[0].mxu0 %v752
    %v829 = vpop.f32.mrb[0].mxu0
    %v830 = vadd.f32 %v662, %v829
    %v831 = vpop.f32.mrb[0].mxu0
    %v832 = vpop.f32.mrb[0].mxu0
    %v833 = vadd.f32 %v667, %v832
    %v834 = vpop.f32.mrb[0].mxu0
    %835 = vmatprep.mubr.bf16.mxu0 0
    %836 = vmatmul.mubr.bf16.gmra.mrb[0].mxu0 %v755
    %v837 = vpop.f32.mrb[0].mxu0
    %v838 = vadd.f32 %v672, %v837
    %v839 = vpop.f32.mrb[0].mxu0
    %v840 = vpop.f32.mrb[0].mxu0
    %v841 = vadd.f32 %v677, %v840
    %v842 = vpop.f32.mrb[0].mxu0
    %843 = vmatprep.mubr.bf16.mxu0 0
    %844 = vmatmul.mubr.bf16.gmra.mrb[0].mxu0 %v758
    %v845 = vpop.f32.mrb[0].mxu0
    %v846 = vadd.f32 %v682, %v845
    %v847 = vpop.f32.mrb[0].mxu0
    %v848 = vpop.f32.mrb[0].mxu0
    %v849 = vadd.f32 %v687, %v848
    %v850 = vpop.f32.mrb[0].mxu0
    %851 = vmatprep.mubr.bf16.mxu0 0
    %852 = vmatmul.mubr.bf16.gmra.mrb[0].mxu0 %v761
    %v853 = vpop.f32.mrb[0].mxu0
    %v854 = vadd.f32 %v692, %v853
    %v855 = vpop.f32.mrb[0].mxu0
    %v856 = vpop.f32.mrb[0].mxu0
    %v857 = vadd.f32 %v697, %v856
    %v858 = vpop.f32.mrb[0].mxu0
    %859 = vdwg.mxu0
    %v860 = vmax.f32 %v798, 0.0
    %v861 = vmax.f32 %v801, 0.0
    %v862 = vmax.f32 %v806, 0.0
    %v863 = vmax.f32 %v809, 0.0
    %v864 = vmax.f32 %v814, 0.0
    %v865 = vmax.f32 %v817, 0.0
    %v866 = vmax.f32 %v822, 0.0
    %v867 = vmax.f32 %v825, 0.0
    %v868 = vmax.f32 %v830, 0.0
    %v869 = vmax.f32 %v833, 0.0
    %v870 = vmax.f32 %v838, 0.0
    %v871 = vmax.f32 %v841, 0.0
    %v872 = vmax.f32 %v846, 0.0
    %v873 = vmax.f32 %v849, 0.0
    %v874 = vmax.f32 %v854, 0.0
    %v875 = vmax.f32 %v857, 0.0
    %v876 = vld [vmem:[%s11] sm:$0xf]
    %v877 = vld [vmem:[%s11 + $0x4] sm:$0xf]
    %v878 = vld [vmem:[%s11 + $0x8] sm:$0xf]
    %v879 = vld [vmem:[%s11 + $0xc] sm:$0xf]
    %v880 = vld [vmem:[%s11 + $0x10] sm:$0xf]
    %v881 = vld [vmem:[%s11 + $0x14] sm:$0xf]
    %v882 = vld [vmem:[%s11 + $0x18] sm:$0xf]
    %v883 = vld [vmem:[%s11 + $0x1c] sm:$0xf]
    %v884 = vld [vmem:[%s11 + $0x20] sm:$0xf]
    %v885 = vld [vmem:[%s11 + $0x24] sm:$0xf]
    %v886 = vld [vmem:[%s11 + $0x28] sm:$0xf]
    %v887 = vld [vmem:[%s11 + $0x2c] sm:$0xf]
    %v888 = vld [vmem:[%s11 + $0x30] sm:$0xf]
    %v889 = vld [vmem:[%s11 + $0x34] sm:$0xf]
    %v890 = vld [vmem:[%s11 + $0x38] sm:$0xf]
    %v891 = vld [vmem:[%s11 + $0x3c] sm:$0xf]
    %v892 = vpack.c.bf16 %v861, %v860
    %v893 = vpack.c.bf16 %v863, %v862
    %v894 = vpack.c.bf16 %v865, %v864
    %v895 = vpack.c.bf16 %v867, %v866
    %v896 = vpack.c.bf16 %v869, %v868
    %v897 = vpack.c.bf16 %v871, %v870
    %v898 = vpack.c.bf16 %v873, %v872
    %v899 = vpack.c.bf16 %v875, %v874
    %v900 = vld [vmem:[%s12] sm:$0xff]
    %v901 = vld [vmem:[%s12 + $0x8] sm:$0xff]
    %v902 = vld [vmem:[%s12 + $0x10] sm:$0xff]
    %v903 = vld [vmem:[%s12 + $0x18] sm:$0xff]
    %v904 = vld [vmem:[%s12 + $0x20] sm:$0xff]
    %v905 = vld [vmem:[%s12 + $0x28] sm:$0xff]
    %v906 = vld [vmem:[%s12 + $0x30] sm:$0xff]
    %v907 = vld [vmem:[%s12 + $0x38] sm:$0xff]
    %v908 = vld [vmem:[%s12 + $0x40] sm:$0xff]
    %v909 = vld [vmem:[%s12 + $0x48] sm:$0xff]
    %v910 = vld [vmem:[%s12 + $0x50] sm:$0xff]
    %v911 = vld [vmem:[%s12 + $0x58] sm:$0xff]
    %v912 = vld [vmem:[%s12 + $0x60] sm:$0xff]
    %v913 = vld [vmem:[%s12 + $0x68] sm:$0xff]
    %v914 = vld [vmem:[%s12 + $0x70] sm:$0xff]
    %v915 = vld [vmem:[%s12 + $0x78] sm:$0xff]
    %917 = vset.pattern.permute.xlu0 0
    %918 = vperm.xlu0 %917, %v900
    %v919 = vpop.permute.xlu0 %918
    %922 = vset.pattern.permute.xlu0 0
    %923 = vperm.xlu0 %922, %v901
    %v924 = vpop.permute.xlu0 %923
    %927 = vset.pattern.permute.xlu0 0
    %928 = vperm.xlu0 %927, %v902
    %v929 = vpop.permute.xlu0 %928
    %932 = vset.pattern.permute.xlu0 0
    %933 = vperm.xlu0 %932, %v903
    %v934 = vpop.permute.xlu0 %933
    %937 = vset.pattern.permute.xlu0 0
    %938 = vperm.xlu0 %937, %v904
    %v939 = vpop.permute.xlu0 %938
    %942 = vset.pattern.permute.xlu0 0
    %943 = vperm.xlu0 %942, %v905
    %v944 = vpop.permute.xlu0 %943
    %947 = vset.pattern.permute.xlu0 0
    %948 = vperm.xlu0 %947, %v906
    %v949 = vpop.permute.xlu0 %948
    %952 = vset.pattern.permute.xlu0 0
    %953 = vperm.xlu0 %952, %v907
    %v954 = vpop.permute.xlu0 %953
    %957 = vset.pattern.permute.xlu0 0
    %958 = vperm.xlu0 %957, %v908
    %v959 = vpop.permute.xlu0 %958
    %962 = vset.pattern.permute.xlu0 0
    %963 = vperm.xlu0 %962, %v909
    %v964 = vpop.permute.xlu0 %963
    %967 = vset.pattern.permute.xlu0 0
    %968 = vperm.xlu0 %967, %v910
    %v969 = vpop.permute.xlu0 %968
    %972 = vset.pattern.permute.xlu0 0
    %973 = vperm.xlu0 %972, %v911
    %v974 = vpop.permute.xlu0 %973
    %977 = vset.pattern.permute.xlu0 0
    %978 = vperm.xlu0 %977, %v912
    %v979 = vpop.permute.xlu0 %978
    %982 = vset.pattern.permute.xlu0 0
    %983 = vperm.xlu0 %982, %v913
    %v984 = vpop.permute.xlu0 %983
    %987 = vset.pattern.permute.xlu0 0
    %988 = vperm.xlu0 %987, %v914
    %v989 = vpop.permute.xlu0 %988
    %992 = vset.pattern.permute.xlu0 0
    %993 = vperm.xlu0 %992, %v915
    %v994 = vpop.permute.xlu0 %993
    %v1012 = vunpack.c.l.b16 %v876
    %v1013 = vunpack.c.l.b16 %v877
    %v1014 = vunpack.c.l.b16 %v878
    %v1015 = vunpack.c.l.b16 %v879
    %v1016 = vunpack.c.l.b16 %v880
    %v1017 = vunpack.c.l.b16 %v881
    %v1018 = vunpack.c.l.b16 %v882
    %v1019 = vunpack.c.l.b16 %v883
    %v1020 = vunpack.c.l.b16 %v884
    %v1021 = vunpack.c.l.b16 %v885
    %v1022 = vunpack.c.l.b16 %v886
    %v1023 = vunpack.c.l.b16 %v887
    %v1024 = vunpack.c.l.b16 %v888
    %v1025 = vunpack.c.l.b16 %v889
    %v1026 = vunpack.c.l.b16 %v890
    %v1027 = vunpack.c.l.b16 %v891
    %v1028 = vpack.c.b16 %v1013, %v1012
    %v1029 = vpack.c.b16 %v1015, %v1014
    %v1030 = vpack.c.b16 %v1017, %v1016
    %v1031 = vpack.c.b16 %v1019, %v1018
    %v1032 = vpack.c.b16 %v1021, %v1020
    %v1033 = vpack.c.b16 %v1023, %v1022
    %v1034 = vpack.c.b16 %v1025, %v1024
    %v1035 = vpack.c.b16 %v1027, %v1026
    %1044 = vmatprep.subr.bf16.mxu0 0
    %1045 = vmatpush1.bf16.msra.mxu0 %v892
    %1046 = vmatprep.subr.bf16.mxu0 0
    %1047 = vmatpush1.bf16.msra.mxu0 %v893
    %1048 = vmatprep.subr.bf16.mxu0 0
    %1049 = vmatpush1.bf16.msra.mxu0 %v894
    %1050 = vmatprep.subr.bf16.mxu0 0
    %1051 = vmatpush1.bf16.msra.mxu0 %v895
    %1052 = vmatprep.subr.bf16.mxu0 0
    %1053 = vmatpush1.bf16.msra.mxu0 %v896
    %1054 = vmatprep.subr.bf16.mxu0 0
    %1055 = vmatpush1.bf16.msra.mxu0 %v897
    %1056 = vmatprep.subr.bf16.mxu0 0
    %1057 = vmatpush1.bf16.msra.mxu0 %v898
    %1058 = vmatprep.subr.bf16.mxu0 0
    %1059 = vmatpush1.bf16.msra.mxu0 %v899
    %1060 = vmatprep.subr.bf16.mxu0 0
    %1061 = vmatpush1.bf16.msra.mxu0 0
    %1062 = vmatprep.subr.bf16.mxu0 0
    %1063 = vmatpush1.bf16.msra.mxu0 0
    %1064 = vmatprep.subr.bf16.mxu0 0
    %1065 = vmatpush1.bf16.msra.mxu0 0
    %1066 = vmatprep.subr.bf16.mxu0 0
    %1067 = vmatpush1.bf16.msra.mxu0 0
    %1068 = vmatprep.subr.bf16.mxu0 0
    %1069 = vmatpush1.bf16.msra.mxu0 0
    %1070 = vmatprep.subr.bf16.mxu0 0
    %1071 = vmatpush1.bf16.msra.mxu0 0
    %1072 = vmatprep.subr.bf16.mxu0 0
    %1073 = vmatpush1.bf16.msra.mxu0 0
    %1074 = vmatprep.subr.bf16.mxu0 0
    %1075 = vmatpush1.bf16.msra.mxu0 0
    %1076 = vmatprep.mubr.bf16.mxu0 0
    %1077 = vmatmul.mubr.bf16.gmra.mrb[0].mxu0 %v1028
    %v1078 = vpop.f32.mrb[0].mxu0
    %v1079 = vadd.f32 %v919, %v1078
    %v1080 = vpop.f32.mrb[0].mxu0
    %v1081 = vpop.f32.mrb[0].mxu0
    %v1082 = vadd.f32 %v924, %v1081
    %v1083 = vpop.f32.mrb[0].mxu0
    %1084 = vmatprep.mubr.bf16.mxu0 0
    %1085 = vmatmul.mubr.bf16.gmra.mrb[0].mxu0 %v1029
    %v1086 = vpop.f32.mrb[0].mxu0
    %v1087 = vadd.f32 %v929, %v1086
    %v1088 = vpop.f32.mrb[0].mxu0
    %v1089 = vpop.f32.mrb[0].mxu0
    %v1090 = vadd.f32 %v934, %v1089
    %v1091 = vpop.f32.mrb[0].mxu0
    %1092 = vmatprep.mubr.bf16.mxu0 0
    %1093 = vmatmul.mubr.bf16.gmra.mrb[0].mxu0 %v1030
    %v1094 = vpop.f32.mrb[0].mxu0
    %v1095 = vadd.f32 %v939, %v1094
    %v1096 = vpop.f32.mrb[0].mxu0
    %v1097 = vpop.f32.mrb[0].mxu0
    %v1098 = vadd.f32 %v944, %v1097
    %v1099 = vpop.f32.mrb[0].mxu0
    %1100 = vmatprep.mubr.bf16.mxu0 0
    %1101 = vmatmul.mubr.bf16.gmra.mrb[0].mxu0 %v1031
    %v1102 = vpop.f32.mrb[0].mxu0
    %v1103 = vadd.f32 %v949, %v1102
    %v1104 = vpop.f32.mrb[0].mxu0
    %v1105 = vpop.f32.mrb[0].mxu0
    %v1106 = vadd.f32 %v954, %v1105
    %v1107 = vpop.f32.mrb[0].mxu0
    %1108 = vmatprep.mubr.bf16.mxu0 0
    %1109 = vmatmul.mubr.bf16.gmra.mrb[0].mxu0 %v1032
    %v1110 = vpop.f32.mrb[0].mxu0
    %v1111 = vadd.f32 %v959, %v1110
    %v1112 = vpop.f32.mrb[0].mxu0
    %v1113 = vpop.f32.mrb[0].mxu0
    %v1114 = vadd.f32 %v964, %v1113
    %v1115 = vpop.f32.mrb[0].mxu0
    %1116 = vmatprep.mubr.bf16.mxu0 0
    %1117 = vmatmul.mubr.bf16.gmra.mrb[0].mxu0 %v1033
    %v1118 = vpop.f32.mrb[0].mxu0
    %v1119 = vadd.f32 %v969, %v1118
    %v1120 = vpop.f32.mrb[0].mxu0
    %v1121 = vpop.f32.mrb[0].mxu0
    %v1122 = vadd.f32 %v974, %v1121
    %v1123 = vpop.f32.mrb[0].mxu0
    %1124 = vmatprep.mubr.bf16.mxu0 0
    %1125 = vmatmul.mubr.bf16.gmra.mrb[0].mxu0 %v1034
    %v1126 = vpop.f32.mrb[0].mxu0
    %v1127 = vadd.f32 %v979, %v1126
    %v1128 = vpop.f32.mrb[0].mxu0
    %v1129 = vpop.f32.mrb[0].mxu0
    %v1130 = vadd.f32 %v984, %v1129
    %v1131 = vpop.f32.mrb[0].mxu0
    %1132 = vmatprep.mubr.bf16.mxu0 0
    %1133 = vmatmul.mubr.bf16.gmra.mrb[0].mxu0 %v1035
    %v1134 = vpop.f32.mrb[0].mxu0
    %v1135 = vadd.f32 %v989, %v1134
    %v1136 = vpop.f32.mrb[0].mxu0
    %v1137 = vpop.f32.mrb[0].mxu0
    %v1138 = vadd.f32 %v994, %v1137
    %v1139 = vpop.f32.mrb[0].mxu0
    %1140 = vdwg.mxu0
    %v1141 = vmax.f32 %v1079, 0.0
    %v1142 = vmax.f32 %v1082, 0.0
    %v1143 = vmax.f32 %v1087, 0.0
    %v1144 = vmax.f32 %v1090, 0.0
    %v1145 = vmax.f32 %v1095, 0.0
    %v1146 = vmax.f32 %v1098, 0.0
    %v1147 = vmax.f32 %v1103, 0.0
    %v1148 = vmax.f32 %v1106, 0.0
    %v1149 = vmax.f32 %v1111, 0.0
    %v1150 = vmax.f32 %v1114, 0.0
    %v1151 = vmax.f32 %v1119, 0.0
    %v1152 = vmax.f32 %v1122, 0.0
    %v1153 = vmax.f32 %v1127, 0.0
    %v1154 = vmax.f32 %v1130, 0.0
    %v1155 = vmax.f32 %v1135, 0.0
    %v1156 = vmax.f32 %v1138, 0.0
    %v1157 = vld [vmem:[%s13] sm:$0xf]
    %v1158 = vld [vmem:[%s13 + $0x38] sm:$0xf]
    %v1159 = vld [vmem:[%s13 + $0x70] sm:$0xf]
    %v1160 = vld [vmem:[%s13 + $0xa8] sm:$0xf]
    %v1161 = vpack.c.bf16 %v1142, %v1141
    %v1162 = vpack.c.bf16 %v1144, %v1143
    %v1163 = vpack.c.bf16 %v1146, %v1145
    %v1164 = vpack.c.bf16 %v1148, %v1147
    %v1165 = vpack.c.bf16 %v1150, %v1149
    %v1166 = vpack.c.bf16 %v1152, %v1151
    %v1167 = vpack.c.bf16 %v1154, %v1153
    %v1168 = vpack.c.bf16 %v1156, %v1155
    %v1169 = vld [vmem:[%s9 + $0x40] sm:$0xf]
    %v1170 = vld [vmem:[%s9 + $0x44] sm:$0xf]
    %v1171 = vld [vmem:[%s9 + $0x48] sm:$0xf]
    %v1172 = vld [vmem:[%s9 + $0x4c] sm:$0xf]
    %v1173 = vld [vmem:[%s9 + $0x50] sm:$0xf]
    %v1174 = vld [vmem:[%s9 + $0x54] sm:$0xf]
    %v1175 = vld [vmem:[%s9 + $0x58] sm:$0xf]
    %v1176 = vld [vmem:[%s9 + $0x5c] sm:$0xf]
    %v1177 = vld [vmem:[%s9 + $0x60] sm:$0xf]
    %v1178 = vld [vmem:[%s9 + $0x64] sm:$0xf]
    %v1179 = vld [vmem:[%s9 + $0x68] sm:$0xf]
    %v1180 = vld [vmem:[%s9 + $0x6c] sm:$0xf]
    %v1181 = vld [vmem:[%s9 + $0x70] sm:$0xf]
    %v1182 = vld [vmem:[%s9 + $0x74] sm:$0xf]
    %v1183 = vld [vmem:[%s9 + $0x78] sm:$0xf]
    %v1184 = vld [vmem:[%s9 + $0x7c] sm:$0xf]
    %v1185 = vld [vmem:[%s10 + $0x80] sm:$0xff]
    %v1186 = vld [vmem:[%s10 + $0x88] sm:$0xff]
    %v1187 = vld [vmem:[%s10 + $0x90] sm:$0xff]
    %v1188 = vld [vmem:[%s10 + $0x98] sm:$0xff]
    %v1189 = vld [vmem:[%s10 + $0xa0] sm:$0xff]
    %v1190 = vld [vmem:[%s10 + $0xa8] sm:$0xff]
    %v1191 = vld [vmem:[%s10 + $0xb0] sm:$0xff]
    %v1192 = vld [vmem:[%s10 + $0xb8] sm:$0xff]
    %v1193 = vld [vmem:[%s10 + $0xc0] sm:$0xff]
    %v1194 = vld [vmem:[%s10 + $0xc8] sm:$0xff]
    %v1195 = vld [vmem:[%s10 + $0xd0] sm:$0xff]
    %v1196 = vld [vmem:[%s10 + $0xd8] sm:$0xff]
    %v1197 = vld [vmem:[%s10 + $0xe0] sm:$0xff]
    %v1198 = vld [vmem:[%s10 + $0xe8] sm:$0xff]
    %v1199 = vld [vmem:[%s10 + $0xf0] sm:$0xff]
    %v1200 = vld [vmem:[%s10 + $0xf8] sm:$0xff]
    %1202 = vset.pattern.permute.xlu0 0
    %1203 = vperm.xlu0 %1202, %v1185
    %v1204 = vpop.permute.xlu0 %1203
    %1207 = vset.pattern.permute.xlu0 0
    %1208 = vperm.xlu0 %1207, %v1186
    %v1209 = vpop.permute.xlu0 %1208
    %1212 = vset.pattern.permute.xlu0 0
    %1213 = vperm.xlu0 %1212, %v1187
    %v1214 = vpop.permute.xlu0 %1213
    %1217 = vset.pattern.permute.xlu0 0
    %1218 = vperm.xlu0 %1217, %v1188
    %v1219 = vpop.permute.xlu0 %1218
    %1222 = vset.pattern.permute.xlu0 0
    %1223 = vperm.xlu0 %1222, %v1189
    %v1224 = vpop.permute.xlu0 %1223
    %1227 = vset.pattern.permute.xlu0 0
    %1228 = vperm.xlu0 %1227, %v1190
    %v1229 = vpop.permute.xlu0 %1228
    %1232 = vset.pattern.permute.xlu0 0
    %1233 = vperm.xlu0 %1232, %v1191
    %v1234 = vpop.permute.xlu0 %1233
    %1237 = vset.pattern.permute.xlu0 0
    %1238 = vperm.xlu0 %1237, %v1192
    %v1239 = vpop.permute.xlu0 %1238
    %1242 = vset.pattern.permute.xlu0 0
    %1243 = vperm.xlu0 %1242, %v1193
    %v1244 = vpop.permute.xlu0 %1243
    %1247 = vset.pattern.permute.xlu0 0
    %1248 = vperm.xlu0 %1247, %v1194
    %v1249 = vpop.permute.xlu0 %1248
    %1252 = vset.pattern.permute.xlu0 0
    %1253 = vperm.xlu0 %1252, %v1195
    %v1254 = vpop.permute.xlu0 %1253
    %1257 = vset.pattern.permute.xlu0 0
    %1258 = vperm.xlu0 %1257, %v1196
    %v1259 = vpop.permute.xlu0 %1258
    %1262 = vset.pattern.permute.xlu0 0
    %1263 = vperm.xlu0 %1262, %v1197
    %v1264 = vpop.permute.xlu0 %1263
    %1267 = vset.pattern.permute.xlu0 0
    %1268 = vperm.xlu0 %1267, %v1198
    %v1269 = vpop.permute.xlu0 %1268
    %1272 = vset.pattern.permute.xlu0 0
    %1273 = vperm.xlu0 %1272, %v1199
    %v1274 = vpop.permute.xlu0 %1273
    %1277 = vset.pattern.permute.xlu0 0
    %1278 = vperm.xlu0 %1277, %v1200
    %v1279 = vpop.permute.xlu0 %1278
    %v1297 = vunpack.c.l.b16 %v1169
    %v1298 = vunpack.c.l.b16 %v1170
    %v1299 = vunpack.c.l.b16 %v1171
    %v1300 = vunpack.c.l.b16 %v1172
    %v1301 = vunpack.c.l.b16 %v1173
    %v1302 = vunpack.c.l.b16 %v1174
    %v1303 = vunpack.c.l.b16 %v1175
    %v1304 = vunpack.c.l.b16 %v1176
    %v1305 = vunpack.c.l.b16 %v1177
    %v1306 = vunpack.c.l.b16 %v1178
    %v1307 = vunpack.c.l.b16 %v1179
    %v1308 = vunpack.c.l.b16 %v1180
    %v1309 = vunpack.c.l.b16 %v1181
    %v1310 = vunpack.c.l.b16 %v1182
    %v1311 = vunpack.c.l.b16 %v1183
    %v1312 = vunpack.c.l.b16 %v1184
    %v1313 = vpack.c.b16 %v1298, %v1297
    %v1314 = vpack.c.b16 %v1300, %v1299
    %v1315 = vpack.c.b16 %v1302, %v1301
    %v1316 = vpack.c.b16 %v1304, %v1303
    %v1317 = vpack.c.b16 %v1306, %v1305
    %v1318 = vpack.c.b16 %v1308, %v1307
    %v1319 = vpack.c.b16 %v1310, %v1309
    %v1320 = vpack.c.b16 %v1312, %v1311
    %v1322 = vsel %vm346, %v1313, 0
    %v1325 = vsel %vm346, %v1314, 0
    %v1328 = vsel %vm346, %v1315, 0
    %v1331 = vsel %vm346, %v1316, 0
    %v1334 = vsel %vm346, %v1317, 0
    %v1337 = vsel %vm346, %v1318, 0
    %v1340 = vsel %vm346, %v1319, 0
    %v1343 = vsel %vm346, %v1320, 0
    %1345 = vmatprep.subr.bf16.mxu0 0
    %1346 = vmatpush1.bf16.msra.mxu0 %v434
    %1347 = vmatprep.subr.bf16.mxu0 0
    %1348 = vmatpush1.bf16.msra.mxu0 %v435
    %1349 = vmatprep.subr.bf16.mxu0 0
    %1350 = vmatpush1.bf16.msra.mxu0 %v436
    %1351 = vmatprep.subr.bf16.mxu0 0
    %1352 = vmatpush1.bf16.msra.mxu0 %v474
    %1353 = vmatprep.subr.bf16.mxu0 0
    %1354 = vmatpush1.bf16.msra.mxu0 0
    %1355 = vmatprep.subr.bf16.mxu0 0
    %1356 = vmatpush1.bf16.msra.mxu0 0
    %1357 = vmatprep.subr.bf16.mxu0 0
    %1358 = vmatpush1.bf16.msra.mxu0 0
    %1359 = vmatprep.subr.bf16.mxu0 0
    %1360 = vmatpush1.bf16.msra.mxu0 0
    %1361 = vmatprep.subr.bf16.mxu0 0
    %1362 = vmatpush1.bf16.msra.mxu0 0
    %1363 = vmatprep.subr.bf16.mxu0 0
    %1364 = vmatpush1.bf16.msra.mxu0 0
    %1365 = vmatprep.subr.bf16.mxu0 0
    %1366 = vmatpush1.bf16.msra.mxu0 0
    %1367 = vmatprep.subr.bf16.mxu0 0
    %1368 = vmatpush1.bf16.msra.mxu0 0
    %1369 = vmatprep.subr.bf16.mxu0 0
    %1370 = vmatpush1.bf16.msra.mxu0 0
    %1371 = vmatprep.subr.bf16.mxu0 0
    %1372 = vmatpush1.bf16.msra.mxu0 0
    %1373 = vmatprep.subr.bf16.mxu0 0
    %1374 = vmatpush1.bf16.msra.mxu0 0
    %1375 = vmatprep.subr.bf16.mxu0 0
    %1376 = vmatpush1.bf16.msra.mxu0 0
    %1377 = vmatprep.mubr.bf16.mxu0 0
    %1378 = vmatmul.mubr.bf16.gmra.mrb[0].mxu0 %v1322
    %v1379 = vpop.f32.mrb[0].mxu0
    %v1380 = vadd.f32 %v1204, %v1379
    %v1381 = vpop.f32.mrb[0].mxu0
    %v1382 = vpop.f32.mrb[0].mxu0
    %v1383 = vadd.f32 %v1209, %v1382
    %v1384 = vpop.f32.mrb[0].mxu0
    %1385 = vmatprep.mubr.bf16.mxu0 0
    %1386 = vmatmul.mubr.bf16.gmra.mrb[0].mxu0 %v1325
    %v1387 = vpop.f32.mrb[0].mxu0
    %v1388 = vadd.f32 %v1214, %v1387
    %v1389 = vpop.f32.mrb[0].mxu0
    %v1390 = vpop.f32.mrb[0].mxu0
    %v1391 = vadd.f32 %v1219, %v1390
    %v1392 = vpop.f32.mrb[0].mxu0
    %1393 = vmatprep.mubr.bf16.mxu0 0
    %1394 = vmatmul.mubr.bf16.gmra.mrb[0].mxu0 %v1328
    %v1395 = vpop.f32.mrb[0].mxu0
    %v1396 = vadd.f32 %v1224, %v1395
    %v1397 = vpop.f32.mrb[0].mxu0
    %v1398 = vpop.f32.mrb[0].mxu0
    %v1399 = vadd.f32 %v1229, %v1398
    %v1400 = vpop.f32.mrb[0].mxu0
    %1401 = vmatprep.mubr.bf16.mxu0 0
    %1402 = vmatmul.mubr.bf16.gmra.mrb[0].mxu0 %v1331
    %v1403 = vpop.f32.mrb[0].mxu0
    %v1404 = vadd.f32 %v1234, %v1403
    %v1405 = vpop.f32.mrb[0].mxu0
    %v1406 = vpop.f32.mrb[0].mxu0
    %v1407 = vadd.f32 %v1239, %v1406
    %v1408 = vpop.f32.mrb[0].mxu0
    %1409 = vmatprep.mubr.bf16.mxu0 0
    %1410 = vmatmul.mubr.bf16.gmra.mrb[0].mxu0 %v1334
    %v1411 = vpop.f32.mrb[0].mxu0
    %v1412 = vadd.f32 %v1244, %v1411
    %v1413 = vpop.f32.mrb[0].mxu0
    %v1414 = vpop.f32.mrb[0].mxu0
    %v1415 = vadd.f32 %v1249, %v1414
    %v1416 = vpop.f32.mrb[0].mxu0
    %1417 = vmatprep.mubr.bf16.mxu0 0
    %1418 = vmatmul.mubr.bf16.gmra.mrb[0].mxu0 %v1337
    %v1419 = vpop.f32.mrb[0].mxu0
    %v1420 = vadd.f32 %v1254, %v1419
    %v1421 = vpop.f32.mrb[0].mxu0
    %v1422 = vpop.f32.mrb[0].mxu0
    %v1423 = vadd.f32 %v1259, %v1422
    %v1424 = vpop.f32.mrb[0].mxu0
    %1425 = vmatprep.mubr.bf16.mxu0 0
    %1426 = vmatmul.mubr.bf16.gmra.mrb[0].mxu0 %v1340
    %v1427 = vpop.f32.mrb[0].mxu0
    %v1428 = vadd.f32 %v1264, %v1427
    %v1429 = vpop.f32.mrb[0].mxu0
    %v1430 = vpop.f32.mrb[0].mxu0
    %v1431 = vadd.f32 %v1269, %v1430
    %v1432 = vpop.f32.mrb[0].mxu0
    %1433 = vmatprep.mubr.bf16.mxu0 0
    %1434 = vmatmul.mubr.bf16.gmra.mrb[0].mxu0 %v1343
    %v1435 = vpop.f32.mrb[0].mxu0
    %v1436 = vadd.f32 %v1274, %v1435
    %v1437 = vpop.f32.mrb[0].mxu0
    %v1438 = vpop.f32.mrb[0].mxu0
    %v1439 = vadd.f32 %v1279, %v1438
    %v1440 = vpop.f32.mrb[0].mxu0
    %1441 = vdwg.mxu0
    %v1442 = vmax.f32 %v1380, 0.0
    %v1443 = vmax.f32 %v1383, 0.0
    %v1444 = vmax.f32 %v1388, 0.0
    %v1445 = vmax.f32 %v1391, 0.0
    %v1446 = vmax.f32 %v1396, 0.0
    %v1447 = vmax.f32 %v1399, 0.0
    %v1448 = vmax.f32 %v1404, 0.0
    %v1449 = vmax.f32 %v1407, 0.0
    %v1450 = vmax.f32 %v1412, 0.0
    %v1451 = vmax.f32 %v1415, 0.0
    %v1452 = vmax.f32 %v1420, 0.0
    %v1453 = vmax.f32 %v1423, 0.0
    %v1454 = vmax.f32 %v1428, 0.0
    %v1455 = vmax.f32 %v1431, 0.0
    %v1456 = vmax.f32 %v1436, 0.0
    %v1457 = vmax.f32 %v1439, 0.0
    %s1458 = scalar_lea.vmem %s11, 64
    %v1459 = vld [vmem:[%s1458] sm:$0xf]
    %v1460 = vld [vmem:[%s1458 + $0x4] sm:$0xf]
    %v1461 = vld [vmem:[%s1458 + $0x8] sm:$0xf]
    %v1462 = vld [vmem:[%s1458 + $0xc] sm:$0xf]
    %v1463 = vld [vmem:[%s1458 + $0x10] sm:$0xf]
    %v1464 = vld [vmem:[%s1458 + $0x14] sm:$0xf]
    %v1465 = vld [vmem:[%s1458 + $0x18] sm:$0xf]
    %v1466 = vld [vmem:[%s1458 + $0x1c] sm:$0xf]
    %v1467 = vld [vmem:[%s1458 + $0x20] sm:$0xf]
    %v1468 = vld [vmem:[%s1458 + $0x24] sm:$0xf]
    %v1469 = vld [vmem:[%s1458 + $0x28] sm:$0xf]
    %v1470 = vld [vmem:[%s1458 + $0x2c] sm:$0xf]
    %v1471 = vld [vmem:[%s1458 + $0x30] sm:$0xf]
    %v1472 = vld [vmem:[%s1458 + $0x34] sm:$0xf]
    %v1473 = vld [vmem:[%s1458 + $0x38] sm:$0xf]
    %v1474 = vld [vmem:[%s1458 + $0x3c] sm:$0xf]
    %v1475 = vpack.c.bf16 %v1443, %v1442
    %v1476 = vpack.c.bf16 %v1445, %v1444
    %v1477 = vpack.c.bf16 %v1447, %v1446
    %v1478 = vpack.c.bf16 %v1449, %v1448
    %v1479 = vpack.c.bf16 %v1451, %v1450
    %v1480 = vpack.c.bf16 %v1453, %v1452
    %v1481 = vpack.c.bf16 %v1455, %v1454
    %v1482 = vpack.c.bf16 %v1457, %v1456
    %s1483 = scalar_lea.vmem %s12, 128
    %v1484 = vld [vmem:[%s1483] sm:$0xff]
    %v1485 = vld [vmem:[%s1483 + $0x8] sm:$0xff]
    %v1486 = vld [vmem:[%s1483 + $0x10] sm:$0xff]
    %v1487 = vld [vmem:[%s1483 + $0x18] sm:$0xff]
    %v1488 = vld [vmem:[%s1483 + $0x20] sm:$0xff]
    %v1489 = vld [vmem:[%s1483 + $0x28] sm:$0xff]
    %v1490 = vld [vmem:[%s1483 + $0x30] sm:$0xff]
    %v1491 = vld [vmem:[%s1483 + $0x38] sm:$0xff]
    %v1492 = vld [vmem:[%s1483 + $0x40] sm:$0xff]
    %v1493 = vld [vmem:[%s1483 + $0x48] sm:$0xff]
    %v1494 = vld [vmem:[%s1483 + $0x50] sm:$0xff]
    %v1495 = vld [vmem:[%s1483 + $0x58] sm:$0xff]
    %v1496 = vld [vmem:[%s1483 + $0x60] sm:$0xff]
    %v1497 = vld [vmem:[%s1483 + $0x68] sm:$0xff]
    %v1498 = vld [vmem:[%s1483 + $0x70] sm:$0xff]
    %v1499 = vld [vmem:[%s1483 + $0x78] sm:$0xff]
    %1501 = vset.pattern.permute.xlu0 0
    %1502 = vperm.xlu0 %1501, %v1484
    %v1503 = vpop.permute.xlu0 %1502
    %1506 = vset.pattern.permute.xlu0 0
    %1507 = vperm.xlu0 %1506, %v1485
    %v1508 = vpop.permute.xlu0 %1507
    %1511 = vset.pattern.permute.xlu0 0
    %1512 = vperm.xlu0 %1511, %v1486
    %v1513 = vpop.permute.xlu0 %1512
    %1516 = vset.pattern.permute.xlu0 0
    %1517 = vperm.xlu0 %1516, %v1487
    %v1518 = vpop.permute.xlu0 %1517
    %1521 = vset.pattern.permute.xlu0 0
    %1522 = vperm.xlu0 %1521, %v1488
    %v1523 = vpop.permute.xlu0 %1522
    %1526 = vset.pattern.permute.xlu0 0
    %1527 = vperm.xlu0 %1526, %v1489
    %v1528 = vpop.permute.xlu0 %1527
    %1531 = vset.pattern.permute.xlu0 0
    %1532 = vperm.xlu0 %1531, %v1490
    %v1533 = vpop.permute.xlu0 %1532
    %1536 = vset.pattern.permute.xlu0 0
    %1537 = vperm.xlu0 %1536, %v1491
    %v1538 = vpop.permute.xlu0 %1537
    %1541 = vset.pattern.permute.xlu0 0
    %1542 = vperm.xlu0 %1541, %v1492
    %v1543 = vpop.permute.xlu0 %1542
    %1546 = vset.pattern.permute.xlu0 0
    %1547 = vperm.xlu0 %1546, %v1493
    %v1548 = vpop.permute.xlu0 %1547
    %1551 = vset.pattern.permute.xlu0 0
    %1552 = vperm.xlu0 %1551, %v1494
    %v1553 = vpop.permute.xlu0 %1552
    %1556 = vset.pattern.permute.xlu0 0
    %1557 = vperm.xlu0 %1556, %v1495
    %v1558 = vpop.permute.xlu0 %1557
    %1561 = vset.pattern.permute.xlu0 0
    %1562 = vperm.xlu0 %1561, %v1496
    %v1563 = vpop.permute.xlu0 %1562
    %1566 = vset.pattern.permute.xlu0 0
    %1567 = vperm.xlu0 %1566, %v1497
    %v1568 = vpop.permute.xlu0 %1567
    %1571 = vset.pattern.permute.xlu0 0
    %1572 = vperm.xlu0 %1571, %v1498
    %v1573 = vpop.permute.xlu0 %1572
    %1576 = vset.pattern.permute.xlu0 0
    %1577 = vperm.xlu0 %1576, %v1499
    %v1578 = vpop.permute.xlu0 %1577
    %v1596 = vunpack.c.l.b16 %v1459
    %v1597 = vunpack.c.l.b16 %v1460
    %v1598 = vunpack.c.l.b16 %v1461
    %v1599 = vunpack.c.l.b16 %v1462
    %v1600 = vunpack.c.l.b16 %v1463
    %v1601 = vunpack.c.l.b16 %v1464
    %v1602 = vunpack.c.l.b16 %v1465
    %v1603 = vunpack.c.l.b16 %v1466
    %v1604 = vunpack.c.l.b16 %v1467
    %v1605 = vunpack.c.l.b16 %v1468
    %v1606 = vunpack.c.l.b16 %v1469
    %v1607 = vunpack.c.l.b16 %v1470
    %v1608 = vunpack.c.l.b16 %v1471
    %v1609 = vunpack.c.l.b16 %v1472
    %v1610 = vunpack.c.l.b16 %v1473
    %v1611 = vunpack.c.l.b16 %v1474
    %v1612 = vpack.c.b16 %v1597, %v1596
    %v1613 = vpack.c.b16 %v1599, %v1598
    %v1614 = vpack.c.b16 %v1601, %v1600
    %v1615 = vpack.c.b16 %v1603, %v1602
    %v1616 = vpack.c.b16 %v1605, %v1604
    %v1617 = vpack.c.b16 %v1607, %v1606
    %v1618 = vpack.c.b16 %v1609, %v1608
    %v1619 = vpack.c.b16 %v1611, %v1610
    %1628 = vmatprep.subr.bf16.mxu0 0
    %1629 = vmatpush1.bf16.msra.mxu0 %v1475
    %1630 = vmatprep.subr.bf16.mxu0 0
    %1631 = vmatpush1.bf16.msra.mxu0 %v1476
    %1632 = vmatprep.subr.bf16.mxu0 0
    %1633 = vmatpush1.bf16.msra.mxu0 %v1477
    %1634 = vmatprep.subr.bf16.mxu0 0
    %1635 = vmatpush1.bf16.msra.mxu0 %v1478
    %1636 = vmatprep.subr.bf16.mxu0 0
    %1637 = vmatpush1.bf16.msra.mxu0 %v1479
    %1638 = vmatprep.subr.bf16.mxu0 0
    %1639 = vmatpush1.bf16.msra.mxu0 %v1480
    %1640 = vmatprep.subr.bf16.mxu0 0
    %1641 = vmatpush1.bf16.msra.mxu0 %v1481
    %1642 = vmatprep.subr.bf16.mxu0 0
    %1643 = vmatpush1.bf16.msra.mxu0 %v1482
    %1644 = vmatprep.subr.bf16.mxu0 0
    %1645 = vmatpush1.bf16.msra.mxu0 0
    %1646 = vmatprep.subr.bf16.mxu0 0
    %1647 = vmatpush1.bf16.msra.mxu0 0
    %1648 = vmatprep.subr.bf16.mxu0 0
    %1649 = vmatpush1.bf16.msra.mxu0 0
    %1650 = vmatprep.subr.bf16.mxu0 0
    %1651 = vmatpush1.bf16.msra.mxu0 0
    %1652 = vmatprep.subr.bf16.mxu0 0
    %1653 = vmatpush1.bf16.msra.mxu0 0
    %1654 = vmatprep.subr.bf16.mxu0 0
    %1655 = vmatpush1.bf16.msra.mxu0 0
    %1656 = vmatprep.subr.bf16.mxu0 0
    %1657 = vmatpush1.bf16.msra.mxu0 0
    %1658 = vmatprep.subr.bf16.mxu0 0
    %1659 = vmatpush1.bf16.msra.mxu0 0
    %1660 = vmatprep.mubr.bf16.mxu0 0
    %1661 = vmatmul.mubr.bf16.gmra.mrb[0].mxu0 %v1612
    %v1662 = vpop.f32.mrb[0].mxu0
    %v1663 = vadd.f32 %v1503, %v1662
    %v1664 = vpop.f32.mrb[0].mxu0
    %v1665 = vpop.f32.mrb[0].mxu0
    %v1666 = vadd.f32 %v1508, %v1665
    %v1667 = vpop.f32.mrb[0].mxu0
    %1668 = vmatprep.mubr.bf16.mxu0 0
    %1669 = vmatmul.mubr.bf16.gmra.mrb[0].mxu0 %v1613
    %v1670 = vpop.f32.mrb[0].mxu0
    %v1671 = vadd.f32 %v1513, %v1670
    %v1672 = vpop.f32.mrb[0].mxu0
    %v1673 = vpop.f32.mrb[0].mxu0
    %v1674 = vadd.f32 %v1518, %v1673
    %v1675 = vpop.f32.mrb[0].mxu0
    %1676 = vmatprep.mubr.bf16.mxu0 0
    %1677 = vmatmul.mubr.bf16.gmra.mrb[0].mxu0 %v1614
    %v1678 = vpop.f32.mrb[0].mxu0
    %v1679 = vadd.f32 %v1523, %v1678
    %v1680 = vpop.f32.mrb[0].mxu0
    %v1681 = vpop.f32.mrb[0].mxu0
    %v1682 = vadd.f32 %v1528, %v1681
    %v1683 = vpop.f32.mrb[0].mxu0
    %1684 = vmatprep.mubr.bf16.mxu0 0
    %1685 = vmatmul.mubr.bf16.gmra.mrb[0].mxu0 %v1615
    %v1686 = vpop.f32.mrb[0].mxu0
    %v1687 = vadd.f32 %v1533, %v1686
    %v1688 = vpop.f32.mrb[0].mxu0
    %v1689 = vpop.f32.mrb[0].mxu0
    %v1690 = vadd.f32 %v1538, %v1689
    %v1691 = vpop.f32.mrb[0].mxu0
    %1692 = vmatprep.mubr.bf16.mxu0 0
    %1693 = vmatmul.mubr.bf16.gmra.mrb[0].mxu0 %v1616
    %v1694 = vpop.f32.mrb[0].mxu0
    %v1695 = vadd.f32 %v1543, %v1694
    %v1696 = vpop.f32.mrb[0].mxu0
    %v1697 = vpop.f32.mrb[0].mxu0
    %v1698 = vadd.f32 %v1548, %v1697
    %v1699 = vpop.f32.mrb[0].mxu0
    %1700 = vmatprep.mubr.bf16.mxu0 0
    %1701 = vmatmul.mubr.bf16.gmra.mrb[0].mxu0 %v1617
    %v1702 = vpop.f32.mrb[0].mxu0
    %v1703 = vadd.f32 %v1553, %v1702
    %v1704 = vpop.f32.mrb[0].mxu0
    %v1705 = vpop.f32.mrb[0].mxu0
    %v1706 = vadd.f32 %v1558, %v1705
    %v1707 = vpop.f32.mrb[0].mxu0
    %1708 = vmatprep.mubr.bf16.mxu0 0
    %1709 = vmatmul.mubr.bf16.gmra.mrb[0].mxu0 %v1618
    %v1710 = vpop.f32.mrb[0].mxu0
    %v1711 = vadd.f32 %v1563, %v1710
    %v1712 = vpop.f32.mrb[0].mxu0
    %v1713 = vpop.f32.mrb[0].mxu0
    %v1714 = vadd.f32 %v1568, %v1713
    %v1715 = vpop.f32.mrb[0].mxu0
    %1716 = vmatprep.mubr.bf16.mxu0 0
    %1717 = vmatmul.mubr.bf16.gmra.mrb[0].mxu0 %v1619
    %v1718 = vpop.f32.mrb[0].mxu0
    %v1719 = vadd.f32 %v1573, %v1718
    %v1720 = vpop.f32.mrb[0].mxu0
    %v1721 = vpop.f32.mrb[0].mxu0
    %v1722 = vadd.f32 %v1578, %v1721
    %v1723 = vpop.f32.mrb[0].mxu0
    %1724 = vdwg.mxu0
    %v1725 = vmax.f32 %v1663, 0.0
    %v1726 = vmax.f32 %v1666, 0.0
    %v1727 = vmax.f32 %v1671, 0.0
    %v1728 = vmax.f32 %v1674, 0.0
    %v1729 = vmax.f32 %v1679, 0.0
    %v1730 = vmax.f32 %v1682, 0.0
    %v1731 = vmax.f32 %v1687, 0.0
    %v1732 = vmax.f32 %v1690, 0.0
    %v1733 = vmax.f32 %v1695, 0.0
    %v1734 = vmax.f32 %v1698, 0.0
    %v1735 = vmax.f32 %v1703, 0.0
    %v1736 = vmax.f32 %v1706, 0.0
    %v1737 = vmax.f32 %v1711, 0.0
    %v1738 = vmax.f32 %v1714, 0.0
    %v1739 = vmax.f32 %v1719, 0.0
    %v1740 = vmax.f32 %v1722, 0.0
    %v1741 = vld [vmem:[%s13 + $0x4] sm:$0xf]
    %v1742 = vld [vmem:[%s13 + $0x3c] sm:$0xf]
    %v1743 = vld [vmem:[%s13 + $0x74] sm:$0xf]
    %v1744 = vld [vmem:[%s13 + $0xac] sm:$0xf]
    %v1745 = vpack.c.bf16 %v1726, %v1725
    %v1746 = vpack.c.bf16 %v1728, %v1727
    %v1747 = vpack.c.bf16 %v1730, %v1729
    %v1748 = vpack.c.bf16 %v1732, %v1731
    %v1749 = vpack.c.bf16 %v1734, %v1733
    %v1750 = vpack.c.bf16 %v1736, %v1735
    %v1751 = vpack.c.bf16 %v1738, %v1737
    %v1752 = vpack.c.bf16 %v1740, %v1739
    %v1757 = vunpack.c.l.b16 %v1741
    %v1758 = vunpack.c.l.b16 %v1742
    %v1759 = vunpack.c.l.b16 %v1743
    %v1760 = vunpack.c.l.b16 %v1744
    %v1761 = vpack.c.b16 %v1758, %v1757
    %v1762 = vpack.c.b16 %v1760, %v1759
    %1765 = vmatprep.subr.bf16.mxu0 0
    %1766 = vmatpush1.bf16.msra.mxu0 %v1745
    %1767 = vmatprep.subr.bf16.mxu0 0
    %1768 = vmatpush1.bf16.msra.mxu0 %v1746
    %1769 = vmatprep.subr.bf16.mxu0 0
    %1770 = vmatpush1.bf16.msra.mxu0 %v1747
    %1771 = vmatprep.subr.bf16.mxu0 0
    %1772 = vmatpush1.bf16.msra.mxu0 %v1748
    %1773 = vmatprep.subr.bf16.mxu0 0
    %1774 = vmatpush1.bf16.msra.mxu0 %v1749
    %1775 = vmatprep.subr.bf16.mxu0 0
    %1776 = vmatpush1.bf16.msra.mxu0 %v1750
    %1777 = vmatprep.subr.bf16.mxu0 0
    %1778 = vmatpush1.bf16.msra.mxu0 %v1751
    %1779 = vmatprep.subr.bf16.mxu0 0
    %1780 = vmatpush1.bf16.msra.mxu0 %v1752
    %1781 = vmatprep.subr.bf16.mxu0 0
    %1782 = vmatpush1.bf16.msra.mxu0 0
    %1783 = vmatprep.subr.bf16.mxu0 0
    %1784 = vmatpush1.bf16.msra.mxu0 0
    %1785 = vmatprep.subr.bf16.mxu0 0
    %1786 = vmatpush1.bf16.msra.mxu0 0
    %1787 = vmatprep.subr.bf16.mxu0 0
    %1788 = vmatpush1.bf16.msra.mxu0 0
    %1789 = vmatprep.subr.bf16.mxu0 0
    %1790 = vmatpush1.bf16.msra.mxu0 0
    %1791 = vmatprep.subr.bf16.mxu0 0
    %1792 = vmatpush1.bf16.msra.mxu0 0
    %1793 = vmatprep.subr.bf16.mxu0 0
    %1794 = vmatpush1.bf16.msra.mxu0 0
    %1795 = vmatprep.subr.bf16.mxu0 0
    %1796 = vmatpush1.bf16.msra.mxu0 0
    %1797 = vmatprep.mubr.bf16.mxu0 0
    %1798 = vmatmul.mubr.bf16.gmra.mrb[0].mxu0 %v1761
    %v1799 = vpop.f32.mrb[0].mxu0
    %v1800 = vadd.f32 0.0, %v1799
    %v1801 = vpop.f32.mrb[0].mxu0
    %v1802 = vpop.f32.mrb[0].mxu0
    %v1803 = vadd.f32 0.0, %v1802
    %v1804 = vpop.f32.mrb[0].mxu0
    %1805 = vmatprep.mubr.bf16.mxu0 0
    %1806 = vmatmul.mubr.bf16.gmra.mrb[0].mxu0 %v1762
    %v1807 = vpop.f32.mrb[0].mxu0
    %v1808 = vadd.f32 0.0, %v1807
    %v1809 = vpop.f32.mrb[0].mxu0
    %v1810 = vpop.f32.mrb[0].mxu0
    %v1811 = vadd.f32 0.0, %v1810
    %v1812 = vpop.f32.mrb[0].mxu0
    %1813 = vdwg.mxu0
    %v1818 = vunpack.c.l.b16 %v1157
    %v1819 = vunpack.c.l.b16 %v1158
    %v1820 = vunpack.c.l.b16 %v1159
    %v1821 = vunpack.c.l.b16 %v1160
    %v1822 = vpack.c.b16 %v1819, %v1818
    %v1823 = vpack.c.b16 %v1821, %v1820
    %1826 = vmatprep.subr.bf16.mxu0 0
    %1827 = vmatpush1.bf16.msra.mxu0 %v1161
    %1828 = vmatprep.subr.bf16.mxu0 0
    %1829 = vmatpush1.bf16.msra.mxu0 %v1162
    %1830 = vmatprep.subr.bf16.mxu0 0
    %1831 = vmatpush1.bf16.msra.mxu0 %v1163
    %1832 = vmatprep.subr.bf16.mxu0 0
    %1833 = vmatpush1.bf16.msra.mxu0 %v1164
    %1834 = vmatprep.subr.bf16.mxu0 0
    %1835 = vmatpush1.bf16.msra.mxu0 %v1165
    %1836 = vmatprep.subr.bf16.mxu0 0
    %1837 = vmatpush1.bf16.msra.mxu0 %v1166
    %1838 = vmatprep.subr.bf16.mxu0 0
    %1839 = vmatpush1.bf16.msra.mxu0 %v1167
    %1840 = vmatprep.subr.bf16.mxu0 0
    %1841 = vmatpush1.bf16.msra.mxu0 %v1168
    %1842 = vmatprep.subr.bf16.mxu0 0
    %1843 = vmatpush1.bf16.msra.mxu0 0
    %1844 = vmatprep.subr.bf16.mxu0 0
    %1845 = vmatpush1.bf16.msra.mxu0 0
    %1846 = vmatprep.subr.bf16.mxu0 0
    %1847 = vmatpush1.bf16.msra.mxu0 0
    %1848 = vmatprep.subr.bf16.mxu0 0
    %1849 = vmatpush1.bf16.msra.mxu0 0
    %1850 = vmatprep.subr.bf16.mxu0 0
    %1851 = vmatpush1.bf16.msra.mxu0 0
    %1852 = vmatprep.subr.bf16.mxu0 0
    %1853 = vmatpush1.bf16.msra.mxu0 0
    %1854 = vmatprep.subr.bf16.mxu0 0
    %1855 = vmatpush1.bf16.msra.mxu0 0
    %1856 = vmatprep.subr.bf16.mxu0 0
    %1857 = vmatpush1.bf16.msra.mxu0 0
    %1858 = vmatprep.mubr.bf16.mxu0 0
    %1859 = vmatmul.mubr.bf16.gmra.mrb[0].mxu0 %v1822
    %v1860 = vpop.f32.mrb[0].mxu0
    %v1861 = vadd.f32 %v1800, %v1860
    %v1862 = vpop.f32.mrb[0].mxu0
    %v1863 = vpop.f32.mrb[0].mxu0
    %v1864 = vadd.f32 %v1803, %v1863
    %v1865 = vpop.f32.mrb[0].mxu0
    %1866 = vmatprep.mubr.bf16.mxu0 0
    %1867 = vmatmul.mubr.bf16.gmra.mrb[0].mxu0 %v1823
    %v1868 = vpop.f32.mrb[0].mxu0
    %v1869 = vadd.f32 %v1808, %v1868
    %v1870 = vpop.f32.mrb[0].mxu0
    %v1871 = vpop.f32.mrb[0].mxu0
    %v1872 = vadd.f32 %v1811, %v1871
    %v1873 = vpop.f32.mrb[0].mxu0
    %1874 = vdwg.mxu0
    %v1875 = vld [vmem:[%s9 + $0x80] sm:$0xf]
    %v1876 = vld [vmem:[%s9 + $0x84] sm:$0xf]
    %v1877 = vld [vmem:[%s9 + $0x88] sm:$0xf]
    %v1878 = vld [vmem:[%s9 + $0x8c] sm:$0xf]
    %v1879 = vld [vmem:[%s9 + $0x90] sm:$0xf]
    %v1880 = vld [vmem:[%s9 + $0x94] sm:$0xf]
    %v1881 = vld [vmem:[%s9 + $0x98] sm:$0xf]
    %v1882 = vld [vmem:[%s9 + $0x9c] sm:$0xf]
    %v1883 = vld [vmem:[%s9 + $0xa0] sm:$0xf]
    %v1884 = vld [vmem:[%s9 + $0xa4] sm:$0xf]
    %v1885 = vld [vmem:[%s9 + $0xa8] sm:$0xf]
    %v1886 = vld [vmem:[%s9 + $0xac] sm:$0xf]
    %v1887 = vld [vmem:[%s9 + $0xb0] sm:$0xf]
    %v1888 = vld [vmem:[%s9 + $0xb4] sm:$0xf]
    %v1889 = vld [vmem:[%s9 + $0xb8] sm:$0xf]
    %v1890 = vld [vmem:[%s9 + $0xbc] sm:$0xf]
    %v1891 = vld [vmem:[%s10 + $0x100] sm:$0xff]
    %v1892 = vld [vmem:[%s10 + $0x108] sm:$0xff]
    %v1893 = vld [vmem:[%s10 + $0x110] sm:$0xff]
    %v1894 = vld [vmem:[%s10 + $0x118] sm:$0xff]
    %v1895 = vld [vmem:[%s10 + $0x120] sm:$0xff]
    %v1896 = vld [vmem:[%s10 + $0x128] sm:$0xff]
    %v1897 = vld [vmem:[%s10 + $0x130] sm:$0xff]
    %v1898 = vld [vmem:[%s10 + $0x138] sm:$0xff]
    %v1899 = vld [vmem:[%s10 + $0x140] sm:$0xff]
    %v1900 = vld [vmem:[%s10 + $0x148] sm:$0xff]
    %v1901 = vld [vmem:[%s10 + $0x150] sm:$0xff]
    %v1902 = vld [vmem:[%s10 + $0x158] sm:$0xff]
    %v1903 = vld [vmem:[%s10 + $0x160] sm:$0xff]
    %v1904 = vld [vmem:[%s10 + $0x168] sm:$0xff]
    %v1905 = vld [vmem:[%s10 + $0x170] sm:$0xff]
    %v1906 = vld [vmem:[%s10 + $0x178] sm:$0xff]
    %1908 = vset.pattern.permute.xlu0 0
    %1909 = vperm.xlu0 %1908, %v1891
    %v1910 = vpop.permute.xlu0 %1909
    %1913 = vset.pattern.permute.xlu0 0
    %1914 = vperm.xlu0 %1913, %v1892
    %v1915 = vpop.permute.xlu0 %1914
    %1918 = vset.pattern.permute.xlu0 0
    %1919 = vperm.xlu0 %1918, %v1893
    %v1920 = vpop.permute.xlu0 %1919
    %1923 = vset.pattern.permute.xlu0 0
    %1924 = vperm.xlu0 %1923, %v1894
    %v1925 = vpop.permute.xlu0 %1924
    %1928 = vset.pattern.permute.xlu0 0
    %1929 = vperm.xlu0 %1928, %v1895
    %v1930 = vpop.permute.xlu0 %1929
    %1933 = vset.pattern.permute.xlu0 0
    %1934 = vperm.xlu0 %1933, %v1896
    %v1935 = vpop.permute.xlu0 %1934
    %1938 = vset.pattern.permute.xlu0 0
    %1939 = vperm.xlu0 %1938, %v1897
    %v1940 = vpop.permute.xlu0 %1939
    %1943 = vset.pattern.permute.xlu0 0
    %1944 = vperm.xlu0 %1943, %v1898
    %v1945 = vpop.permute.xlu0 %1944
    %1948 = vset.pattern.permute.xlu0 0
    %1949 = vperm.xlu0 %1948, %v1899
    %v1950 = vpop.permute.xlu0 %1949
    %1953 = vset.pattern.permute.xlu0 0
    %1954 = vperm.xlu0 %1953, %v1900
    %v1955 = vpop.permute.xlu0 %1954
    %1958 = vset.pattern.permute.xlu0 0
    %1959 = vperm.xlu0 %1958, %v1901
    %v1960 = vpop.permute.xlu0 %1959
    %1963 = vset.pattern.permute.xlu0 0
    %1964 = vperm.xlu0 %1963, %v1902
    %v1965 = vpop.permute.xlu0 %1964
    %1968 = vset.pattern.permute.xlu0 0
    %1969 = vperm.xlu0 %1968, %v1903
    %v1970 = vpop.permute.xlu0 %1969
    %1973 = vset.pattern.permute.xlu0 0
    %1974 = vperm.xlu0 %1973, %v1904
    %v1975 = vpop.permute.xlu0 %1974
    %1978 = vset.pattern.permute.xlu0 0
    %1979 = vperm.xlu0 %1978, %v1905
    %v1980 = vpop.permute.xlu0 %1979
    %1983 = vset.pattern.permute.xlu0 0
    %1984 = vperm.xlu0 %1983, %v1906
    %v1985 = vpop.permute.xlu0 %1984
    %v2003 = vunpack.c.l.b16 %v1875
    %v2004 = vunpack.c.l.b16 %v1876
    %v2005 = vunpack.c.l.b16 %v1877
    %v2006 = vunpack.c.l.b16 %v1878
    %v2007 = vunpack.c.l.b16 %v1879
    %v2008 = vunpack.c.l.b16 %v1880
    %v2009 = vunpack.c.l.b16 %v1881
    %v2010 = vunpack.c.l.b16 %v1882
    %v2011 = vunpack.c.l.b16 %v1883
    %v2012 = vunpack.c.l.b16 %v1884
    %v2013 = vunpack.c.l.b16 %v1885
    %v2014 = vunpack.c.l.b16 %v1886
    %v2015 = vunpack.c.l.b16 %v1887
    %v2016 = vunpack.c.l.b16 %v1888
    %v2017 = vunpack.c.l.b16 %v1889
    %v2018 = vunpack.c.l.b16 %v1890
    %v2019 = vpack.c.b16 %v2004, %v2003
    %v2020 = vpack.c.b16 %v2006, %v2005
    %v2021 = vpack.c.b16 %v2008, %v2007
    %v2022 = vpack.c.b16 %v2010, %v2009
    %v2023 = vpack.c.b16 %v2012, %v2011
    %v2024 = vpack.c.b16 %v2014, %v2013
    %v2025 = vpack.c.b16 %v2016, %v2015
    %v2026 = vpack.c.b16 %v2018, %v2017
    %v2028 = vsel %vm346, %v2019, 0
    %v2031 = vsel %vm346, %v2020, 0
    %v2034 = vsel %vm346, %v2021, 0
    %v2037 = vsel %vm346, %v2022, 0
    %v2040 = vsel %vm346, %v2023, 0
    %v2043 = vsel %vm346, %v2024, 0
    %v2046 = vsel %vm346, %v2025, 0
    %v2049 = vsel %vm346, %v2026, 0
    %2051 = vmatprep.subr.bf16.mxu0 0
    %2052 = vmatpush1.bf16.msra.mxu0 %v434
    %2053 = vmatprep.subr.bf16.mxu0 0
    %2054 = vmatpush1.bf16.msra.mxu0 %v435
    %2055 = vmatprep.subr.bf16.mxu0 0
    %2056 = vmatpush1.bf16.msra.mxu0 %v436
    %2057 = vmatprep.subr.bf16.mxu0 0
    %2058 = vmatpush1.bf16.msra.mxu0 %v474
    %2059 = vmatprep.subr.bf16.mxu0 0
    %2060 = vmatpush1.bf16.msra.mxu0 0
    %2061 = vmatprep.subr.bf16.mxu0 0
    %2062 = vmatpush1.bf16.msra.mxu0 0
    %2063 = vmatprep.subr.bf16.mxu0 0
    %2064 = vmatpush1.bf16.msra.mxu0 0
    %2065 = vmatprep.subr.bf16.mxu0 0
    %2066 = vmatpush1.bf16.msra.mxu0 0
    %2067 = vmatprep.subr.bf16.mxu0 0
    %2068 = vmatpush1.bf16.msra.mxu0 0
    %2069 = vmatprep.subr.bf16.mxu0 0
    %2070 = vmatpush1.bf16.msra.mxu0 0
    %2071 = vmatprep.subr.bf16.mxu0 0
    %2072 = vmatpush1.bf16.msra.mxu0 0
    %2073 = vmatprep.subr.bf16.mxu0 0
    %2074 = vmatpush1.bf16.msra.mxu0 0
    %2075 = vmatprep.subr.bf16.mxu0 0
    %2076 = vmatpush1.bf16.msra.mxu0 0
    %2077 = vmatprep.subr.bf16.mxu0 0
    %2078 = vmatpush1.bf16.msra.mxu0 0
    %2079 = vmatprep.subr.bf16.mxu0 0
    %2080 = vmatpush1.bf16.msra.mxu0 0
    %2081 = vmatprep.subr.bf16.mxu0 0
    %2082 = vmatpush1.bf16.msra.mxu0 0
    %2083 = vmatprep.mubr.bf16.mxu0 0
    %2084 = vmatmul.mubr.bf16.gmra.mrb[0].mxu0 %v2028
    %v2085 = vpop.f32.mrb[0].mxu0
    %v2086 = vadd.f32 %v1910, %v2085
    %v2087 = vpop.f32.mrb[0].mxu0
    %v2088 = vpop.f32.mrb[0].mxu0
    %v2089 = vadd.f32 %v1915, %v2088
    %v2090 = vpop.f32.mrb[0].mxu0
    %2091 = vmatprep.mubr.bf16.mxu0 0
    %2092 = vmatmul.mubr.bf16.gmra.mrb[0].mxu0 %v2031
    %v2093 = vpop.f32.mrb[0].mxu0
    %v2094 = vadd.f32 %v1920, %v2093
    %v2095 = vpop.f32.mrb[0].mxu0
    %v2096 = vpop.f32.mrb[0].mxu0
    %v2097 = vadd.f32 %v1925, %v2096
    %v2098 = vpop.f32.mrb[0].mxu0
    %2099 = vmatprep.mubr.bf16.mxu0 0
    %2100 = vmatmul.mubr.bf16.gmra.mrb[0].mxu0 %v2034
    %v2101 = vpop.f32.mrb[0].mxu0
    %v2102 = vadd.f32 %v1930, %v2101
    %v2103 = vpop.f32.mrb[0].mxu0
    %v2104 = vpop.f32.mrb[0].mxu0
    %v2105 = vadd.f32 %v1935, %v2104
    %v2106 = vpop.f32.mrb[0].mxu0
    %2107 = vmatprep.mubr.bf16.mxu0 0
    %2108 = vmatmul.mubr.bf16.gmra.mrb[0].mxu0 %v2037
    %v2109 = vpop.f32.mrb[0].mxu0
    %v2110 = vadd.f32 %v1940, %v2109
    %v2111 = vpop.f32.mrb[0].mxu0
    %v2112 = vpop.f32.mrb[0].mxu0
    %v2113 = vadd.f32 %v1945, %v2112
    %v2114 = vpop.f32.mrb[0].mxu0
    %2115 = vmatprep.mubr.bf16.mxu0 0
    %2116 = vmatmul.mubr.bf16.gmra.mrb[0].mxu0 %v2040
    %v2117 = vpop.f32.mrb[0].mxu0
    %v2118 = vadd.f32 %v1950, %v2117
    %v2119 = vpop.f32.mrb[0].mxu0
    %v2120 = vpop.f32.mrb[0].mxu0
    %v2121 = vadd.f32 %v1955, %v2120
    %v2122 = vpop.f32.mrb[0].mxu0
    %2123 = vmatprep.mubr.bf16.mxu0 0
    %2124 = vmatmul.mubr.bf16.gmra.mrb[0].mxu0 %v2043
    %v2125 = vpop.f32.mrb[0].mxu0
    %v2126 = vadd.f32 %v1960, %v2125
    %v2127 = vpop.f32.mrb[0].mxu0
    %v2128 = vpop.f32.mrb[0].mxu0
    %v2129 = vadd.f32 %v1965, %v2128
    %v2130 = vpop.f32.mrb[0].mxu0
    %2131 = vmatprep.mubr.bf16.mxu0 0
    %2132 = vmatmul.mubr.bf16.gmra.mrb[0].mxu0 %v2046
    %v2133 = vpop.f32.mrb[0].mxu0
    %v2134 = vadd.f32 %v1970, %v2133
    %v2135 = vpop.f32.mrb[0].mxu0
    %v2136 = vpop.f32.mrb[0].mxu0
    %v2137 = vadd.f32 %v1975, %v2136
    %v2138 = vpop.f32.mrb[0].mxu0
    %2139 = vmatprep.mubr.bf16.mxu0 0
    %2140 = vmatmul.mubr.bf16.gmra.mrb[0].mxu0 %v2049
    %v2141 = vpop.f32.mrb[0].mxu0
    %v2142 = vadd.f32 %v1980, %v2141
    %v2143 = vpop.f32.mrb[0].mxu0
    %v2144 = vpop.f32.mrb[0].mxu0
    %v2145 = vadd.f32 %v1985, %v2144
    %v2146 = vpop.f32.mrb[0].mxu0
    %2147 = vdwg.mxu0
    %v2148 = vmax.f32 %v2086, 0.0
    %v2149 = vmax.f32 %v2089, 0.0
    %v2150 = vmax.f32 %v2094, 0.0
    %v2151 = vmax.f32 %v2097, 0.0
    %v2152 = vmax.f32 %v2102, 0.0
    %v2153 = vmax.f32 %v2105, 0.0
    %v2154 = vmax.f32 %v2110, 0.0
    %v2155 = vmax.f32 %v2113, 0.0
    %v2156 = vmax.f32 %v2118, 0.0
    %v2157 = vmax.f32 %v2121, 0.0
    %v2158 = vmax.f32 %v2126, 0.0
    %v2159 = vmax.f32 %v2129, 0.0
    %v2160 = vmax.f32 %v2134, 0.0
    %v2161 = vmax.f32 %v2137, 0.0
    %v2162 = vmax.f32 %v2142, 0.0
    %v2163 = vmax.f32 %v2145, 0.0
    %s2164 = scalar_lea.vmem %s11, 128
    %v2165 = vld [vmem:[%s2164] sm:$0xf]
    %v2166 = vld [vmem:[%s2164 + $0x4] sm:$0xf]
    %v2167 = vld [vmem:[%s2164 + $0x8] sm:$0xf]
    %v2168 = vld [vmem:[%s2164 + $0xc] sm:$0xf]
    %v2169 = vld [vmem:[%s2164 + $0x10] sm:$0xf]
    %v2170 = vld [vmem:[%s2164 + $0x14] sm:$0xf]
    %v2171 = vld [vmem:[%s2164 + $0x18] sm:$0xf]
    %v2172 = vld [vmem:[%s2164 + $0x1c] sm:$0xf]
    %v2173 = vld [vmem:[%s2164 + $0x20] sm:$0xf]
    %v2174 = vld [vmem:[%s2164 + $0x24] sm:$0xf]
    %v2175 = vld [vmem:[%s2164 + $0x28] sm:$0xf]
    %v2176 = vld [vmem:[%s2164 + $0x2c] sm:$0xf]
    %v2177 = vld [vmem:[%s2164 + $0x30] sm:$0xf]
    %v2178 = vld [vmem:[%s2164 + $0x34] sm:$0xf]
    %v2179 = vld [vmem:[%s2164 + $0x38] sm:$0xf]
    %v2180 = vld [vmem:[%s2164 + $0x3c] sm:$0xf]
    %v2181 = vpack.c.bf16 %v2149, %v2148
    %v2182 = vpack.c.bf16 %v2151, %v2150
    %v2183 = vpack.c.bf16 %v2153, %v2152
    %v2184 = vpack.c.bf16 %v2155, %v2154
    %v2185 = vpack.c.bf16 %v2157, %v2156
    %v2186 = vpack.c.bf16 %v2159, %v2158
    %v2187 = vpack.c.bf16 %v2161, %v2160
    %v2188 = vpack.c.bf16 %v2163, %v2162
    %s2189 = scalar_lea.vmem %s12, 256
    %v2190 = vld [vmem:[%s2189] sm:$0xff]
    %v2191 = vld [vmem:[%s2189 + $0x8] sm:$0xff]
    %v2192 = vld [vmem:[%s2189 + $0x10] sm:$0xff]
    %v2193 = vld [vmem:[%s2189 + $0x18] sm:$0xff]
    %v2194 = vld [vmem:[%s2189 + $0x20] sm:$0xff]
    %v2195 = vld [vmem:[%s2189 + $0x28] sm:$0xff]
    %v2196 = vld [vmem:[%s2189 + $0x30] sm:$0xff]
    %v2197 = vld [vmem:[%s2189 + $0x38] sm:$0xff]
    %v2198 = vld [vmem:[%s2189 + $0x40] sm:$0xff]
    %v2199 = vld [vmem:[%s2189 + $0x48] sm:$0xff]
    %v2200 = vld [vmem:[%s2189 + $0x50] sm:$0xff]
    %v2201 = vld [vmem:[%s2189 + $0x58] sm:$0xff]
    %v2202 = vld [vmem:[%s2189 + $0x60] sm:$0xff]
    %v2203 = vld [vmem:[%s2189 + $0x68] sm:$0xff]
    %v2204 = vld [vmem:[%s2189 + $0x70] sm:$0xff]
    %v2205 = vld [vmem:[%s2189 + $0x78] sm:$0xff]
    %2207 = vset.pattern.permute.xlu0 0
    %2208 = vperm.xlu0 %2207, %v2190
    %v2209 = vpop.permute.xlu0 %2208
    %2212 = vset.pattern.permute.xlu0 0
    %2213 = vperm.xlu0 %2212, %v2191
    %v2214 = vpop.permute.xlu0 %2213
    %2217 = vset.pattern.permute.xlu0 0
    %2218 = vperm.xlu0 %2217, %v2192
    %v2219 = vpop.permute.xlu0 %2218
    %2222 = vset.pattern.permute.xlu0 0
    %2223 = vperm.xlu0 %2222, %v2193
    %v2224 = vpop.permute.xlu0 %2223
    %2227 = vset.pattern.permute.xlu0 0
    %2228 = vperm.xlu0 %2227, %v2194
    %v2229 = vpop.permute.xlu0 %2228
    %2232 = vset.pattern.permute.xlu0 0
    %2233 = vperm.xlu0 %2232, %v2195
    %v2234 = vpop.permute.xlu0 %2233
    %2237 = vset.pattern.permute.xlu0 0
    %2238 = vperm.xlu0 %2237, %v2196
    %v2239 = vpop.permute.xlu0 %2238
    %2242 = vset.pattern.permute.xlu0 0
    %2243 = vperm.xlu0 %2242, %v2197
    %v2244 = vpop.permute.xlu0 %2243
    %2247 = vset.pattern.permute.xlu0 0
    %2248 = vperm.xlu0 %2247, %v2198
    %v2249 = vpop.permute.xlu0 %2248
    %2252 = vset.pattern.permute.xlu0 0
    %2253 = vperm.xlu0 %2252, %v2199
    %v2254 = vpop.permute.xlu0 %2253
    %2257 = vset.pattern.permute.xlu0 0
    %2258 = vperm.xlu0 %2257, %v2200
    %v2259 = vpop.permute.xlu0 %2258
    %2262 = vset.pattern.permute.xlu0 0
    %2263 = vperm.xlu0 %2262, %v2201
    %v2264 = vpop.permute.xlu0 %2263
    %2267 = vset.pattern.permute.xlu0 0
    %2268 = vperm.xlu0 %2267, %v2202
    %v2269 = vpop.permute.xlu0 %2268
    %2272 = vset.pattern.permute.xlu0 0
    %2273 = vperm.xlu0 %2272, %v2203
    %v2274 = vpop.permute.xlu0 %2273
    %2277 = vset.pattern.permute.xlu0 0
    %2278 = vperm.xlu0 %2277, %v2204
    %v2279 = vpop.permute.xlu0 %2278
    %2282 = vset.pattern.permute.xlu0 0
    %2283 = vperm.xlu0 %2282, %v2205
    %v2284 = vpop.permute.xlu0 %2283
    %v2302 = vunpack.c.l.b16 %v2165
    %v2303 = vunpack.c.l.b16 %v2166
    %v2304 = vunpack.c.l.b16 %v2167
    %v2305 = vunpack.c.l.b16 %v2168
    %v2306 = vunpack.c.l.b16 %v2169
    %v2307 = vunpack.c.l.b16 %v2170
    %v2308 = vunpack.c.l.b16 %v2171
    %v2309 = vunpack.c.l.b16 %v2172
    %v2310 = vunpack.c.l.b16 %v2173
    %v2311 = vunpack.c.l.b16 %v2174
    %v2312 = vunpack.c.l.b16 %v2175
    %v2313 = vunpack.c.l.b16 %v2176
    %v2314 = vunpack.c.l.b16 %v2177
    %v2315 = vunpack.c.l.b16 %v2178
    %v2316 = vunpack.c.l.b16 %v2179
    %v2317 = vunpack.c.l.b16 %v2180
    %v2318 = vpack.c.b16 %v2303, %v2302
    %v2319 = vpack.c.b16 %v2305, %v2304
    %v2320 = vpack.c.b16 %v2307, %v2306
    %v2321 = vpack.c.b16 %v2309, %v2308
    %v2322 = vpack.c.b16 %v2311, %v2310
    %v2323 = vpack.c.b16 %v2313, %v2312
    %v2324 = vpack.c.b16 %v2315, %v2314
    %v2325 = vpack.c.b16 %v2317, %v2316
    %2334 = vmatprep.subr.bf16.mxu0 0
    %2335 = vmatpush1.bf16.msra.mxu0 %v2181
    %2336 = vmatprep.subr.bf16.mxu0 0
    %2337 = vmatpush1.bf16.msra.mxu0 %v2182
    %2338 = vmatprep.subr.bf16.mxu0 0
    %2339 = vmatpush1.bf16.msra.mxu0 %v2183
    %2340 = vmatprep.subr.bf16.mxu0 0
    %2341 = vmatpush1.bf16.msra.mxu0 %v2184
    %2342 = vmatprep.subr.bf16.mxu0 0
    %2343 = vmatpush1.bf16.msra.mxu0 %v2185
    %2344 = vmatprep.subr.bf16.mxu0 0
    %2345 = vmatpush1.bf16.msra.mxu0 %v2186
    %2346 = vmatprep.subr.bf16.mxu0 0
    %2347 = vmatpush1.bf16.msra.mxu0 %v2187
    %2348 = vmatprep.subr.bf16.mxu0 0
    %2349 = vmatpush1.bf16.msra.mxu0 %v2188
    %2350 = vmatprep.subr.bf16.mxu0 0
    %2351 = vmatpush1.bf16.msra.mxu0 0
    %2352 = vmatprep.subr.bf16.mxu0 0
    %2353 = vmatpush1.bf16.msra.mxu0 0
    %2354 = vmatprep.subr.bf16.mxu0 0
    %2355 = vmatpush1.bf16.msra.mxu0 0
    %2356 = vmatprep.subr.bf16.mxu0 0
    %2357 = vmatpush1.bf16.msra.mxu0 0
    %2358 = vmatprep.subr.bf16.mxu0 0
    %2359 = vmatpush1.bf16.msra.mxu0 0
    %2360 = vmatprep.subr.bf16.mxu0 0
    %2361 = vmatpush1.bf16.msra.mxu0 0
    %2362 = vmatprep.subr.bf16.mxu0 0
    %2363 = vmatpush1.bf16.msra.mxu0 0
    %2364 = vmatprep.subr.bf16.mxu0 0
    %2365 = vmatpush1.bf16.msra.mxu0 0
    %2366 = vmatprep.mubr.bf16.mxu0 0
    %2367 = vmatmul.mubr.bf16.gmra.mrb[0].mxu0 %v2318
    %v2368 = vpop.f32.mrb[0].mxu0
    %v2369 = vadd.f32 %v2209, %v2368
    %v2370 = vpop.f32.mrb[0].mxu0
    %v2371 = vpop.f32.mrb[0].mxu0
    %v2372 = vadd.f32 %v2214, %v2371
    %v2373 = vpop.f32.mrb[0].mxu0
    %2374 = vmatprep.mubr.bf16.mxu0 0
    %2375 = vmatmul.mubr.bf16.gmra.mrb[0].mxu0 %v2319
    %v2376 = vpop.f32.mrb[0].mxu0
    %v2377 = vadd.f32 %v2219, %v2376
    %v2378 = vpop.f32.mrb[0].mxu0
    %v2379 = vpop.f32.mrb[0].mxu0
    %v2380 = vadd.f32 %v2224, %v2379
    %v2381 = vpop.f32.mrb[0].mxu0
    %2382 = vmatprep.mubr.bf16.mxu0 0
    %2383 = vmatmul.mubr.bf16.gmra.mrb[0].mxu0 %v2320
    %v2384 = vpop.f32.mrb[0].mxu0
    %v2385 = vadd.f32 %v2229, %v2384
    %v2386 = vpop.f32.mrb[0].mxu0
    %v2387 = vpop.f32.mrb[0].mxu0
    %v2388 = vadd.f32 %v2234, %v2387
    %v2389 = vpop.f32.mrb[0].mxu0
    %2390 = vmatprep.mubr.bf16.mxu0 0
    %2391 = vmatmul.mubr.bf16.gmra.mrb[0].mxu0 %v2321
    %v2392 = vpop.f32.mrb[0].mxu0
    %v2393 = vadd.f32 %v2239, %v2392
    %v2394 = vpop.f32.mrb[0].mxu0
    %v2395 = vpop.f32.mrb[0].mxu0
    %v2396 = vadd.f32 %v2244, %v2395
    %v2397 = vpop.f32.mrb[0].mxu0
    %2398 = vmatprep.mubr.bf16.mxu0 0
    %2399 = vmatmul.mubr.bf16.gmra.mrb[0].mxu0 %v2322
    %v2400 = vpop.f32.mrb[0].mxu0
    %v2401 = vadd.f32 %v2249, %v2400
    %v2402 = vpop.f32.mrb[0].mxu0
    %v2403 = vpop.f32.mrb[0].mxu0
    %v2404 = vadd.f32 %v2254, %v2403
    %v2405 = vpop.f32.mrb[0].mxu0
    %2406 = vmatprep.mubr.bf16.mxu0 0
    %2407 = vmatmul.mubr.bf16.gmra.mrb[0].mxu0 %v2323
    %v2408 = vpop.f32.mrb[0].mxu0
    %v2409 = vadd.f32 %v2259, %v2408
    %v2410 = vpop.f32.mrb[0].mxu0
    %v2411 = vpop.f32.mrb[0].mxu0
    %v2412 = vadd.f32 %v2264, %v2411
    %v2413 = vpop.f32.mrb[0].mxu0
    %2414 = vmatprep.mubr.bf16.mxu0 0
    %2415 = vmatmul.mubr.bf16.gmra.mrb[0].mxu0 %v2324
    %v2416 = vpop.f32.mrb[0].mxu0
    %v2417 = vadd.f32 %v2269, %v2416
    %v2418 = vpop.f32.mrb[0].mxu0
    %v2419 = vpop.f32.mrb[0].mxu0
    %v2420 = vadd.f32 %v2274, %v2419
    %v2421 = vpop.f32.mrb[0].mxu0
    %2422 = vmatprep.mubr.bf16.mxu0 0
    %2423 = vmatmul.mubr.bf16.gmra.mrb[0].mxu0 %v2325
    %v2424 = vpop.f32.mrb[0].mxu0
    %v2425 = vadd.f32 %v2279, %v2424
    %v2426 = vpop.f32.mrb[0].mxu0
    %v2427 = vpop.f32.mrb[0].mxu0
    %v2428 = vadd.f32 %v2284, %v2427
    %v2429 = vpop.f32.mrb[0].mxu0
    %2430 = vdwg.mxu0
    %v2431 = vmax.f32 %v2369, 0.0
    %v2432 = vmax.f32 %v2372, 0.0
    %v2433 = vmax.f32 %v2377, 0.0
    %v2434 = vmax.f32 %v2380, 0.0
    %v2435 = vmax.f32 %v2385, 0.0
    %v2436 = vmax.f32 %v2388, 0.0
    %v2437 = vmax.f32 %v2393, 0.0
    %v2438 = vmax.f32 %v2396, 0.0
    %v2439 = vmax.f32 %v2401, 0.0
    %v2440 = vmax.f32 %v2404, 0.0
    %v2441 = vmax.f32 %v2409, 0.0
    %v2442 = vmax.f32 %v2412, 0.0
    %v2443 = vmax.f32 %v2417, 0.0
    %v2444 = vmax.f32 %v2420, 0.0
    %v2445 = vmax.f32 %v2425, 0.0
    %v2446 = vmax.f32 %v2428, 0.0
    %v2447 = vld [vmem:[%s13 + $0x8] sm:$0xf]
    %v2448 = vld [vmem:[%s13 + $0x40] sm:$0xf]
    %v2449 = vld [vmem:[%s13 + $0x78] sm:$0xf]
    %v2450 = vld [vmem:[%s13 + $0xb0] sm:$0xf]
    %v2451 = vpack.c.bf16 %v2432, %v2431
    %v2452 = vpack.c.bf16 %v2434, %v2433
    %v2453 = vpack.c.bf16 %v2436, %v2435
    %v2454 = vpack.c.bf16 %v2438, %v2437
    %v2455 = vpack.c.bf16 %v2440, %v2439
    %v2456 = vpack.c.bf16 %v2442, %v2441
    %v2457 = vpack.c.bf16 %v2444, %v2443
    %v2458 = vpack.c.bf16 %v2446, %v2445
    %v2463 = vunpack.c.l.b16 %v2447
    %v2464 = vunpack.c.l.b16 %v2448
    %v2465 = vunpack.c.l.b16 %v2449
    %v2466 = vunpack.c.l.b16 %v2450
    %v2467 = vpack.c.b16 %v2464, %v2463
    %v2468 = vpack.c.b16 %v2466, %v2465
    %2471 = vmatprep.subr.bf16.mxu0 0
    %2472 = vmatpush1.bf16.msra.mxu0 %v2451
    %2473 = vmatprep.subr.bf16.mxu0 0
    %2474 = vmatpush1.bf16.msra.mxu0 %v2452
    %2475 = vmatprep.subr.bf16.mxu0 0
    %2476 = vmatpush1.bf16.msra.mxu0 %v2453
    %2477 = vmatprep.subr.bf16.mxu0 0
    %2478 = vmatpush1.bf16.msra.mxu0 %v2454
    %2479 = vmatprep.subr.bf16.mxu0 0
    %2480 = vmatpush1.bf16.msra.mxu0 %v2455
    %2481 = vmatprep.subr.bf16.mxu0 0
    %2482 = vmatpush1.bf16.msra.mxu0 %v2456
    %2483 = vmatprep.subr.bf16.mxu0 0
    %2484 = vmatpush1.bf16.msra.mxu0 %v2457
    %2485 = vmatprep.subr.bf16.mxu0 0
    %2486 = vmatpush1.bf16.msra.mxu0 %v2458
    %2487 = vmatprep.subr.bf16.mxu0 0
    %2488 = vmatpush1.bf16.msra.mxu0 0
    %2489 = vmatprep.subr.bf16.mxu0 0
    %2490 = vmatpush1.bf16.msra.mxu0 0
    %2491 = vmatprep.subr.bf16.mxu0 0
    %2492 = vmatpush1.bf16.msra.mxu0 0
    %2493 = vmatprep.subr.bf16.mxu0 0
    %2494 = vmatpush1.bf16.msra.mxu0 0
    %2495 = vmatprep.subr.bf16.mxu0 0
    %2496 = vmatpush1.bf16.msra.mxu0 0
    %2497 = vmatprep.subr.bf16.mxu0 0
    %2498 = vmatpush1.bf16.msra.mxu0 0
    %2499 = vmatprep.subr.bf16.mxu0 0
    %2500 = vmatpush1.bf16.msra.mxu0 0
    %2501 = vmatprep.subr.bf16.mxu0 0
    %2502 = vmatpush1.bf16.msra.mxu0 0
    %2503 = vmatprep.mubr.bf16.mxu0 0
    %2504 = vmatmul.mubr.bf16.gmra.mrb[0].mxu0 %v2467
    %v2505 = vpop.f32.mrb[0].mxu0
    %v2506 = vadd.f32 0.0, %v2505
    %v2507 = vpop.f32.mrb[0].mxu0
    %v2508 = vpop.f32.mrb[0].mxu0
    %v2509 = vadd.f32 0.0, %v2508
    %v2510 = vpop.f32.mrb[0].mxu0
    %2511 = vmatprep.mubr.bf16.mxu0 0
    %2512 = vmatmul.mubr.bf16.gmra.mrb[0].mxu0 %v2468
    %v2513 = vpop.f32.mrb[0].mxu0
    %v2514 = vadd.f32 0.0, %v2513
    %v2515 = vpop.f32.mrb[0].mxu0
    %v2516 = vpop.f32.mrb[0].mxu0
    %v2517 = vadd.f32 0.0, %v2516
    %v2518 = vpop.f32.mrb[0].mxu0
    %2519 = vdwg.mxu0
    %v2520 = vadd.f32 %v1861, %v2506
    %v2521 = vadd.f32 %v1864, %v2509
    %v2522 = vadd.f32 %v1869, %v2514
    %v2523 = vadd.f32 %v1872, %v2517
    %v2524 = vld [vmem:[%s9 + $0xc0] sm:$0xf]
    %v2525 = vld [vmem:[%s9 + $0xc4] sm:$0xf]
    %v2526 = vld [vmem:[%s9 + $0xc8] sm:$0xf]
    %v2527 = vld [vmem:[%s9 + $0xcc] sm:$0xf]
    %v2528 = vld [vmem:[%s9 + $0xd0] sm:$0xf]
    %v2529 = vld [vmem:[%s9 + $0xd4] sm:$0xf]
    %v2530 = vld [vmem:[%s9 + $0xd8] sm:$0xf]
    %v2531 = vld [vmem:[%s9 + $0xdc] sm:$0xf]
    %v2532 = vld [vmem:[%s9 + $0xe0] sm:$0xf]
    %v2533 = vld [vmem:[%s9 + $0xe4] sm:$0xf]
    %v2534 = vld [vmem:[%s9 + $0xe8] sm:$0xf]
    %v2535 = vld [vmem:[%s9 + $0xec] sm:$0xf]
    %v2536 = vld [vmem:[%s9 + $0xf0] sm:$0xf]
    %v2537 = vld [vmem:[%s9 + $0xf4] sm:$0xf]
    %v2538 = vld [vmem:[%s9 + $0xf8] sm:$0xf]
    %v2539 = vld [vmem:[%s9 + $0xfc] sm:$0xf]
    %v2540 = vld [vmem:[%s10 + $0x180] sm:$0xff]
    %v2541 = vld [vmem:[%s10 + $0x188] sm:$0xff]
    %v2542 = vld [vmem:[%s10 + $0x190] sm:$0xff]
    %v2543 = vld [vmem:[%s10 + $0x198] sm:$0xff]
    %v2544 = vld [vmem:[%s10 + $0x1a0] sm:$0xff]
    %v2545 = vld [vmem:[%s10 + $0x1a8] sm:$0xff]
    %v2546 = vld [vmem:[%s10 + $0x1b0] sm:$0xff]
    %v2547 = vld [vmem:[%s10 + $0x1b8] sm:$0xff]
    %v2548 = vld [vmem:[%s10 + $0x1c0] sm:$0xff]
    %v2549 = vld [vmem:[%s10 + $0x1c8] sm:$0xff]
    %v2550 = vld [vmem:[%s10 + $0x1d0] sm:$0xff]
    %v2551 = vld [vmem:[%s10 + $0x1d8] sm:$0xff]
    %v2552 = vld [vmem:[%s10 + $0x1e0] sm:$0xff]
    %v2553 = vld [vmem:[%s10 + $0x1e8] sm:$0xff]
    %v2554 = vld [vmem:[%s10 + $0x1f0] sm:$0xff]
    %v2555 = vld [vmem:[%s10 + $0x1f8] sm:$0xff]
    %2557 = vset.pattern.permute.xlu0 0
    %2558 = vperm.xlu0 %2557, %v2540
    %v2559 = vpop.permute.xlu0 %2558
    %2562 = vset.pattern.permute.xlu0 0
    %2563 = vperm.xlu0 %2562, %v2541
    %v2564 = vpop.permute.xlu0 %2563
    %2567 = vset.pattern.permute.xlu0 0
    %2568 = vperm.xlu0 %2567, %v2542
    %v2569 = vpop.permute.xlu0 %2568
    %2572 = vset.pattern.permute.xlu0 0
    %2573 = vperm.xlu0 %2572, %v2543
    %v2574 = vpop.permute.xlu0 %2573
    %2577 = vset.pattern.permute.xlu0 0
    %2578 = vperm.xlu0 %2577, %v2544
    %v2579 = vpop.permute.xlu0 %2578
    %2582 = vset.pattern.permute.xlu0 0
    %2583 = vperm.xlu0 %2582, %v2545
    %v2584 = vpop.permute.xlu0 %2583
    %2587 = vset.pattern.permute.xlu0 0
    %2588 = vperm.xlu0 %2587, %v2546
    %v2589 = vpop.permute.xlu0 %2588
    %2592 = vset.pattern.permute.xlu0 0
    %2593 = vperm.xlu0 %2592, %v2547
    %v2594 = vpop.permute.xlu0 %2593
    %2597 = vset.pattern.permute.xlu0 0
    %2598 = vperm.xlu0 %2597, %v2548
    %v2599 = vpop.permute.xlu0 %2598
    %2602 = vset.pattern.permute.xlu0 0
    %2603 = vperm.xlu0 %2602, %v2549
    %v2604 = vpop.permute.xlu0 %2603
    %2607 = vset.pattern.permute.xlu0 0
    %2608 = vperm.xlu0 %2607, %v2550
    %v2609 = vpop.permute.xlu0 %2608
    %2612 = vset.pattern.permute.xlu0 0
    %2613 = vperm.xlu0 %2612, %v2551
    %v2614 = vpop.permute.xlu0 %2613
    %2617 = vset.pattern.permute.xlu0 0
    %2618 = vperm.xlu0 %2617, %v2552
    %v2619 = vpop.permute.xlu0 %2618
    %2622 = vset.pattern.permute.xlu0 0
    %2623 = vperm.xlu0 %2622, %v2553
    %v2624 = vpop.permute.xlu0 %2623
    %2627 = vset.pattern.permute.xlu0 0
    %2628 = vperm.xlu0 %2627, %v2554
    %v2629 = vpop.permute.xlu0 %2628
    %2632 = vset.pattern.permute.xlu0 0
    %2633 = vperm.xlu0 %2632, %v2555
    %v2634 = vpop.permute.xlu0 %2633
    %v2652 = vunpack.c.l.b16 %v2524
    %v2653 = vunpack.c.l.b16 %v2525
    %v2654 = vunpack.c.l.b16 %v2526
    %v2655 = vunpack.c.l.b16 %v2527
    %v2656 = vunpack.c.l.b16 %v2528
    %v2657 = vunpack.c.l.b16 %v2529
    %v2658 = vunpack.c.l.b16 %v2530
    %v2659 = vunpack.c.l.b16 %v2531
    %v2660 = vunpack.c.l.b16 %v2532
    %v2661 = vunpack.c.l.b16 %v2533
    %v2662 = vunpack.c.l.b16 %v2534
    %v2663 = vunpack.c.l.b16 %v2535
    %v2664 = vunpack.c.l.b16 %v2536
    %v2665 = vunpack.c.l.b16 %v2537
    %v2666 = vunpack.c.l.b16 %v2538
    %v2667 = vunpack.c.l.b16 %v2539
    %v2668 = vpack.c.b16 %v2653, %v2652
    %v2669 = vpack.c.b16 %v2655, %v2654
    %v2670 = vpack.c.b16 %v2657, %v2656
    %v2671 = vpack.c.b16 %v2659, %v2658
    %v2672 = vpack.c.b16 %v2661, %v2660
    %v2673 = vpack.c.b16 %v2663, %v2662
    %v2674 = vpack.c.b16 %v2665, %v2664
    %v2675 = vpack.c.b16 %v2667, %v2666
    %v2677 = vsel %vm346, %v2668, 0
    %v2680 = vsel %vm346, %v2669, 0
    %v2683 = vsel %vm346, %v2670, 0
    %v2686 = vsel %vm346, %v2671, 0
    %v2689 = vsel %vm346, %v2672, 0
    %v2692 = vsel %vm346, %v2673, 0
    %v2695 = vsel %vm346, %v2674, 0
    %v2698 = vsel %vm346, %v2675, 0
    %2700 = vmatprep.subr.bf16.mxu0 0
    %2701 = vmatpush1.bf16.msra.mxu0 %v434
    %2702 = vmatprep.subr.bf16.mxu0 0
    %2703 = vmatpush1.bf16.msra.mxu0 %v435
    %2704 = vmatprep.subr.bf16.mxu0 0
    %2705 = vmatpush1.bf16.msra.mxu0 %v436
    %2706 = vmatprep.subr.bf16.mxu0 0
    %2707 = vmatpush1.bf16.msra.mxu0 %v474
    %2708 = vmatprep.subr.bf16.mxu0 0
    %2709 = vmatpush1.bf16.msra.mxu0 0
    %2710 = vmatprep.subr.bf16.mxu0 0
    %2711 = vmatpush1.bf16.msra.mxu0 0
    %2712 = vmatprep.subr.bf16.mxu0 0
    %2713 = vmatpush1.bf16.msra.mxu0 0
    %2714 = vmatprep.subr.bf16.mxu0 0
    %2715 = vmatpush1.bf16.msra.mxu0 0
    %2716 = vmatprep.subr.bf16.mxu0 0
    %2717 = vmatpush1.bf16.msra.mxu0 0
    %2718 = vmatprep.subr.bf16.mxu0 0
    %2719 = vmatpush1.bf16.msra.mxu0 0
    %2720 = vmatprep.subr.bf16.mxu0 0
    %2721 = vmatpush1.bf16.msra.mxu0 0
    %2722 = vmatprep.subr.bf16.mxu0 0
    %2723 = vmatpush1.bf16.msra.mxu0 0
    %2724 = vmatprep.subr.bf16.mxu0 0
    %2725 = vmatpush1.bf16.msra.mxu0 0
    %2726 = vmatprep.subr.bf16.mxu0 0
    %2727 = vmatpush1.bf16.msra.mxu0 0
    %2728 = vmatprep.subr.bf16.mxu0 0
    %2729 = vmatpush1.bf16.msra.mxu0 0
    %2730 = vmatprep.subr.bf16.mxu0 0
    %2731 = vmatpush1.bf16.msra.mxu0 0
    %2732 = vmatprep.mubr.bf16.mxu0 0
    %2733 = vmatmul.mubr.bf16.gmra.mrb[0].mxu0 %v2677
    %v2734 = vpop.f32.mrb[0].mxu0
    %v2735 = vadd.f32 %v2559, %v2734
    %v2736 = vpop.f32.mrb[0].mxu0
    %v2737 = vpop.f32.mrb[0].mxu0
    %v2738 = vadd.f32 %v2564, %v2737
    %v2739 = vpop.f32.mrb[0].mxu0
    %2740 = vmatprep.mubr.bf16.mxu0 0
    %2741 = vmatmul.mubr.bf16.gmra.mrb[0].mxu0 %v2680
    %v2742 = vpop.f32.mrb[0].mxu0
    %v2743 = vadd.f32 %v2569, %v2742
    %v2744 = vpop.f32.mrb[0].mxu0
    %v2745 = vpop.f32.mrb[0].mxu0
    %v2746 = vadd.f32 %v2574, %v2745
    %v2747 = vpop.f32.mrb[0].mxu0
    %2748 = vmatprep.mubr.bf16.mxu0 0
    %2749 = vmatmul.mubr.bf16.gmra.mrb[0].mxu0 %v2683
    %v2750 = vpop.f32.mrb[0].mxu0
    %v2751 = vadd.f32 %v2579, %v2750
    %v2752 = vpop.f32.mrb[0].mxu0
    %v2753 = vpop.f32.mrb[0].mxu0
    %v2754 = vadd.f32 %v2584, %v2753
    %v2755 = vpop.f32.mrb[0].mxu0
    %2756 = vmatprep.mubr.bf16.mxu0 0
    %2757 = vmatmul.mubr.bf16.gmra.mrb[0].mxu0 %v2686
    %v2758 = vpop.f32.mrb[0].mxu0
    %v2759 = vadd.f32 %v2589, %v2758
    %v2760 = vpop.f32.mrb[0].mxu0
    %v2761 = vpop.f32.mrb[0].mxu0
    %v2762 = vadd.f32 %v2594, %v2761
    %v2763 = vpop.f32.mrb[0].mxu0
    %2764 = vmatprep.mubr.bf16.mxu0 0
    %2765 = vmatmul.mubr.bf16.gmra.mrb[0].mxu0 %v2689
    %v2766 = vpop.f32.mrb[0].mxu0
    %v2767 = vadd.f32 %v2599, %v2766
    %v2768 = vpop.f32.mrb[0].mxu0
    %v2769 = vpop.f32.mrb[0].mxu0
    %v2770 = vadd.f32 %v2604, %v2769
    %v2771 = vpop.f32.mrb[0].mxu0
    %2772 = vmatprep.mubr.bf16.mxu0 0
    %2773 = vmatmul.mubr.bf16.gmra.mrb[0].mxu0 %v2692
    %v2774 = vpop.f32.mrb[0].mxu0
    %v2775 = vadd.f32 %v2609, %v2774
    %v2776 = vpop.f32.mrb[0].mxu0
    %v2777 = vpop.f32.mrb[0].mxu0
    %v2778 = vadd.f32 %v2614, %v2777
    %v2779 = vpop.f32.mrb[0].mxu0
    %2780 = vmatprep.mubr.bf16.mxu0 0
    %2781 = vmatmul.mubr.bf16.gmra.mrb[0].mxu0 %v2695
    %v2782 = vpop.f32.mrb[0].mxu0
    %v2783 = vadd.f32 %v2619, %v2782
    %v2784 = vpop.f32.mrb[0].mxu0
    %v2785 = vpop.f32.mrb[0].mxu0
    %v2786 = vadd.f32 %v2624, %v2785
    %v2787 = vpop.f32.mrb[0].mxu0
    %2788 = vmatprep.mubr.bf16.mxu0 0
    %2789 = vmatmul.mubr.bf16.gmra.mrb[0].mxu0 %v2698
    %v2790 = vpop.f32.mrb[0].mxu0
    %v2791 = vadd.f32 %v2629, %v2790
    %v2792 = vpop.f32.mrb[0].mxu0
    %v2793 = vpop.f32.mrb[0].mxu0
    %v2794 = vadd.f32 %v2634, %v2793
    %v2795 = vpop.f32.mrb[0].mxu0
    %2796 = vdwg.mxu0
    %v2797 = vmax.f32 %v2735, 0.0
    %v2798 = vmax.f32 %v2738, 0.0
    %v2799 = vmax.f32 %v2743, 0.0
    %v2800 = vmax.f32 %v2746, 0.0
    %v2801 = vmax.f32 %v2751, 0.0
    %v2802 = vmax.f32 %v2754, 0.0
    %v2803 = vmax.f32 %v2759, 0.0
    %v2804 = vmax.f32 %v2762, 0.0
    %v2805 = vmax.f32 %v2767, 0.0
    %v2806 = vmax.f32 %v2770, 0.0
    %v2807 = vmax.f32 %v2775, 0.0
    %v2808 = vmax.f32 %v2778, 0.0
    %v2809 = vmax.f32 %v2783, 0.0
    %v2810 = vmax.f32 %v2786, 0.0
    %v2811 = vmax.f32 %v2791, 0.0
    %v2812 = vmax.f32 %v2794, 0.0
    %s2813 = scalar_lea.vmem %s11, 192
    %v2814 = vld [vmem:[%s2813] sm:$0xf]
    %v2815 = vld [vmem:[%s2813 + $0x4] sm:$0xf]
    %v2816 = vld [vmem:[%s2813 + $0x8] sm:$0xf]
    %v2817 = vld [vmem:[%s2813 + $0xc] sm:$0xf]
    %v2818 = vld [vmem:[%s2813 + $0x10] sm:$0xf]
    %v2819 = vld [vmem:[%s2813 + $0x14] sm:$0xf]
    %v2820 = vld [vmem:[%s2813 + $0x18] sm:$0xf]
    %v2821 = vld [vmem:[%s2813 + $0x1c] sm:$0xf]
    %v2822 = vld [vmem:[%s2813 + $0x20] sm:$0xf]
    %v2823 = vld [vmem:[%s2813 + $0x24] sm:$0xf]
    %v2824 = vld [vmem:[%s2813 + $0x28] sm:$0xf]
    %v2825 = vld [vmem:[%s2813 + $0x2c] sm:$0xf]
    %v2826 = vld [vmem:[%s2813 + $0x30] sm:$0xf]
    %v2827 = vld [vmem:[%s2813 + $0x34] sm:$0xf]
    %v2828 = vld [vmem:[%s2813 + $0x38] sm:$0xf]
    %v2829 = vld [vmem:[%s2813 + $0x3c] sm:$0xf]
    %v2830 = vpack.c.bf16 %v2798, %v2797
    %v2831 = vpack.c.bf16 %v2800, %v2799
    %v2832 = vpack.c.bf16 %v2802, %v2801
    %v2833 = vpack.c.bf16 %v2804, %v2803
    %v2834 = vpack.c.bf16 %v2806, %v2805
    %v2835 = vpack.c.bf16 %v2808, %v2807
    %v2836 = vpack.c.bf16 %v2810, %v2809
    %v2837 = vpack.c.bf16 %v2812, %v2811
    %s2838 = scalar_lea.vmem %s12, 384
    %v2839 = vld [vmem:[%s2838] sm:$0xff]
    %v2840 = vld [vmem:[%s2838 + $0x8] sm:$0xff]
    %v2841 = vld [vmem:[%s2838 + $0x10] sm:$0xff]
    %v2842 = vld [vmem:[%s2838 + $0x18] sm:$0xff]
    %v2843 = vld [vmem:[%s2838 + $0x20] sm:$0xff]
    %v2844 = vld [vmem:[%s2838 + $0x28] sm:$0xff]
    %v2845 = vld [vmem:[%s2838 + $0x30] sm:$0xff]
    %v2846 = vld [vmem:[%s2838 + $0x38] sm:$0xff]
    %v2847 = vld [vmem:[%s2838 + $0x40] sm:$0xff]
    %v2848 = vld [vmem:[%s2838 + $0x48] sm:$0xff]
    %v2849 = vld [vmem:[%s2838 + $0x50] sm:$0xff]
    %v2850 = vld [vmem:[%s2838 + $0x58] sm:$0xff]
    %v2851 = vld [vmem:[%s2838 + $0x60] sm:$0xff]
    %v2852 = vld [vmem:[%s2838 + $0x68] sm:$0xff]
    %v2853 = vld [vmem:[%s2838 + $0x70] sm:$0xff]
    %v2854 = vld [vmem:[%s2838 + $0x78] sm:$0xff]
    %2856 = vset.pattern.permute.xlu0 0
    %2857 = vperm.xlu0 %2856, %v2839
    %v2858 = vpop.permute.xlu0 %2857
    %2861 = vset.pattern.permute.xlu0 0
    %2862 = vperm.xlu0 %2861, %v2840
    %v2863 = vpop.permute.xlu0 %2862
    %2866 = vset.pattern.permute.xlu0 0
    %2867 = vperm.xlu0 %2866, %v2841
    %v2868 = vpop.permute.xlu0 %2867
    %2871 = vset.pattern.permute.xlu0 0
    %2872 = vperm.xlu0 %2871, %v2842
    %v2873 = vpop.permute.xlu0 %2872
    %2876 = vset.pattern.permute.xlu0 0
    %2877 = vperm.xlu0 %2876, %v2843
    %v2878 = vpop.permute.xlu0 %2877
    %2881 = vset.pattern.permute.xlu0 0
    %2882 = vperm.xlu0 %2881, %v2844
    %v2883 = vpop.permute.xlu0 %2882
    %2886 = vset.pattern.permute.xlu0 0
    %2887 = vperm.xlu0 %2886, %v2845
    %v2888 = vpop.permute.xlu0 %2887
    %2891 = vset.pattern.permute.xlu0 0
    %2892 = vperm.xlu0 %2891, %v2846
    %v2893 = vpop.permute.xlu0 %2892
    %2896 = vset.pattern.permute.xlu0 0
    %2897 = vperm.xlu0 %2896, %v2847
    %v2898 = vpop.permute.xlu0 %2897
    %2901 = vset.pattern.permute.xlu0 0
    %2902 = vperm.xlu0 %2901, %v2848
    %v2903 = vpop.permute.xlu0 %2902
    %2906 = vset.pattern.permute.xlu0 0
    %2907 = vperm.xlu0 %2906, %v2849
    %v2908 = vpop.permute.xlu0 %2907
    %2911 = vset.pattern.permute.xlu0 0
    %2912 = vperm.xlu0 %2911, %v2850
    %v2913 = vpop.permute.xlu0 %2912
    %2916 = vset.pattern.permute.xlu0 0
    %2917 = vperm.xlu0 %2916, %v2851
    %v2918 = vpop.permute.xlu0 %2917
    %2921 = vset.pattern.permute.xlu0 0
    %2922 = vperm.xlu0 %2921, %v2852
    %v2923 = vpop.permute.xlu0 %2922
    %2926 = vset.pattern.permute.xlu0 0
    %2927 = vperm.xlu0 %2926, %v2853
    %v2928 = vpop.permute.xlu0 %2927
    %2931 = vset.pattern.permute.xlu0 0
    %2932 = vperm.xlu0 %2931, %v2854
    %v2933 = vpop.permute.xlu0 %2932
    %v2951 = vunpack.c.l.b16 %v2814
    %v2952 = vunpack.c.l.b16 %v2815
    %v2953 = vunpack.c.l.b16 %v2816
    %v2954 = vunpack.c.l.b16 %v2817
    %v2955 = vunpack.c.l.b16 %v2818
    %v2956 = vunpack.c.l.b16 %v2819
    %v2957 = vunpack.c.l.b16 %v2820
    %v2958 = vunpack.c.l.b16 %v2821
    %v2959 = vunpack.c.l.b16 %v2822
    %v2960 = vunpack.c.l.b16 %v2823
    %v2961 = vunpack.c.l.b16 %v2824
    %v2962 = vunpack.c.l.b16 %v2825
    %v2963 = vunpack.c.l.b16 %v2826
    %v2964 = vunpack.c.l.b16 %v2827
    %v2965 = vunpack.c.l.b16 %v2828
    %v2966 = vunpack.c.l.b16 %v2829
    %v2967 = vpack.c.b16 %v2952, %v2951
    %v2968 = vpack.c.b16 %v2954, %v2953
    %v2969 = vpack.c.b16 %v2956, %v2955
    %v2970 = vpack.c.b16 %v2958, %v2957
    %v2971 = vpack.c.b16 %v2960, %v2959
    %v2972 = vpack.c.b16 %v2962, %v2961
    %v2973 = vpack.c.b16 %v2964, %v2963
    %v2974 = vpack.c.b16 %v2966, %v2965
    %2983 = vmatprep.subr.bf16.mxu0 0
    %2984 = vmatpush1.bf16.msra.mxu0 %v2830
    %2985 = vmatprep.subr.bf16.mxu0 0
    %2986 = vmatpush1.bf16.msra.mxu0 %v2831
    %2987 = vmatprep.subr.bf16.mxu0 0
    %2988 = vmatpush1.bf16.msra.mxu0 %v2832
    %2989 = vmatprep.subr.bf16.mxu0 0
    %2990 = vmatpush1.bf16.msra.mxu0 %v2833
    %2991 = vmatprep.subr.bf16.mxu0 0
    %2992 = vmatpush1.bf16.msra.mxu0 %v2834
    %2993 = vmatprep.subr.bf16.mxu0 0
    %2994 = vmatpush1.bf16.msra.mxu0 %v2835
    %2995 = vmatprep.subr.bf16.mxu0 0
    %2996 = vmatpush1.bf16.msra.mxu0 %v2836
    %2997 = vmatprep.subr.bf16.mxu0 0
    %2998 = vmatpush1.bf16.msra.mxu0 %v2837
    %2999 = vmatprep.subr.bf16.mxu0 0
    %3000 = vmatpush1.bf16.msra.mxu0 0
    %3001 = vmatprep.subr.bf16.mxu0 0
    %3002 = vmatpush1.bf16.msra.mxu0 0
    %3003 = vmatprep.subr.bf16.mxu0 0
    %3004 = vmatpush1.bf16.msra.mxu0 0
    %3005 = vmatprep.subr.bf16.mxu0 0
    %3006 = vmatpush1.bf16.msra.mxu0 0
    %3007 = vmatprep.subr.bf16.mxu0 0
    %3008 = vmatpush1.bf16.msra.mxu0 0
    %3009 = vmatprep.subr.bf16.mxu0 0
    %3010 = vmatpush1.bf16.msra.mxu0 0
    %3011 = vmatprep.subr.bf16.mxu0 0
    %3012 = vmatpush1.bf16.msra.mxu0 0
    %3013 = vmatprep.subr.bf16.mxu0 0
    %3014 = vmatpush1.bf16.msra.mxu0 0
    %3015 = vmatprep.mubr.bf16.mxu0 0
    %3016 = vmatmul.mubr.bf16.gmra.mrb[0].mxu0 %v2967
    %v3017 = vpop.f32.mrb[0].mxu0
    %v3018 = vadd.f32 %v2858, %v3017
    %v3019 = vpop.f32.mrb[0].mxu0
    %v3020 = vpop.f32.mrb[0].mxu0
    %v3021 = vadd.f32 %v2863, %v3020
    %v3022 = vpop.f32.mrb[0].mxu0
    %3023 = vmatprep.mubr.bf16.mxu0 0
    %3024 = vmatmul.mubr.bf16.gmra.mrb[0].mxu0 %v2968
    %v3025 = vpop.f32.mrb[0].mxu0
    %v3026 = vadd.f32 %v2868, %v3025
    %v3027 = vpop.f32.mrb[0].mxu0
    %v3028 = vpop.f32.mrb[0].mxu0
    %v3029 = vadd.f32 %v2873, %v3028
    %v3030 = vpop.f32.mrb[0].mxu0
    %3031 = vmatprep.mubr.bf16.mxu0 0
    %3032 = vmatmul.mubr.bf16.gmra.mrb[0].mxu0 %v2969
    %v3033 = vpop.f32.mrb[0].mxu0
    %v3034 = vadd.f32 %v2878, %v3033
    %v3035 = vpop.f32.mrb[0].mxu0
    %v3036 = vpop.f32.mrb[0].mxu0
    %v3037 = vadd.f32 %v2883, %v3036
    %v3038 = vpop.f32.mrb[0].mxu0
    %3039 = vmatprep.mubr.bf16.mxu0 0
    %3040 = vmatmul.mubr.bf16.gmra.mrb[0].mxu0 %v2970
    %v3041 = vpop.f32.mrb[0].mxu0
    %v3042 = vadd.f32 %v2888, %v3041
    %v3043 = vpop.f32.mrb[0].mxu0
    %v3044 = vpop.f32.mrb[0].mxu0
    %v3045 = vadd.f32 %v2893, %v3044
    %v3046 = vpop.f32.mrb[0].mxu0
    %3047 = vmatprep.mubr.bf16.mxu0 0
    %3048 = vmatmul.mubr.bf16.gmra.mrb[0].mxu0 %v2971
    %v3049 = vpop.f32.mrb[0].mxu0
    %v3050 = vadd.f32 %v2898, %v3049
    %v3051 = vpop.f32.mrb[0].mxu0
    %v3052 = vpop.f32.mrb[0].mxu0
    %v3053 = vadd.f32 %v2903, %v3052
    %v3054 = vpop.f32.mrb[0].mxu0
    %3055 = vmatprep.mubr.bf16.mxu0 0
    %3056 = vmatmul.mubr.bf16.gmra.mrb[0].mxu0 %v2972
    %v3057 = vpop.f32.mrb[0].mxu0
    %v3058 = vadd.f32 %v2908, %v3057
    %v3059 = vpop.f32.mrb[0].mxu0
    %v3060 = vpop.f32.mrb[0].mxu0
    %v3061 = vadd.f32 %v2913, %v3060
    %v3062 = vpop.f32.mrb[0].mxu0
    %3063 = vmatprep.mubr.bf16.mxu0 0
    %3064 = vmatmul.mubr.bf16.gmra.mrb[0].mxu0 %v2973
    %v3065 = vpop.f32.mrb[0].mxu0
    %v3066 = vadd.f32 %v2918, %v3065
    %v3067 = vpop.f32.mrb[0].mxu0
    %v3068 = vpop.f32.mrb[0].mxu0
    %v3069 = vadd.f32 %v2923, %v3068
    %v3070 = vpop.f32.mrb[0].mxu0
    %3071 = vmatprep.mubr.bf16.mxu0 0
    %3072 = vmatmul.mubr.bf16.gmra.mrb[0].mxu0 %v2974
    %v3073 = vpop.f32.mrb[0].mxu0
    %v3074 = vadd.f32 %v2928, %v3073
    %v3075 = vpop.f32.mrb[0].mxu0
    %v3076 = vpop.f32.mrb[0].mxu0
    %v3077 = vadd.f32 %v2933, %v3076
    %v3078 = vpop.f32.mrb[0].mxu0
    %3079 = vdwg.mxu0
    %v3080 = vmax.f32 %v3018, 0.0
    %v3081 = vmax.f32 %v3021, 0.0
    %v3082 = vmax.f32 %v3026, 0.0
    %v3083 = vmax.f32 %v3029, 0.0
    %v3084 = vmax.f32 %v3034, 0.0
    %v3085 = vmax.f32 %v3037, 0.0
    %v3086 = vmax.f32 %v3042, 0.0
    %v3087 = vmax.f32 %v3045, 0.0
    %v3088 = vmax.f32 %v3050, 0.0
    %v3089 = vmax.f32 %v3053, 0.0
    %v3090 = vmax.f32 %v3058, 0.0
    %v3091 = vmax.f32 %v3061, 0.0
    %v3092 = vmax.f32 %v3066, 0.0
    %v3093 = vmax.f32 %v3069, 0.0
    %v3094 = vmax.f32 %v3074, 0.0
    %v3095 = vmax.f32 %v3077, 0.0
    %v3096 = vld [vmem:[%s13 + $0xc] sm:$0xf]
    %v3097 = vld [vmem:[%s13 + $0x44] sm:$0xf]
    %v3098 = vld [vmem:[%s13 + $0x7c] sm:$0xf]
    %v3099 = vld [vmem:[%s13 + $0xb4] sm:$0xf]
    %v3100 = vpack.c.bf16 %v3081, %v3080
    %v3101 = vpack.c.bf16 %v3083, %v3082
    %v3102 = vpack.c.bf16 %v3085, %v3084
    %v3103 = vpack.c.bf16 %v3087, %v3086
    %v3104 = vpack.c.bf16 %v3089, %v3088
    %v3105 = vpack.c.bf16 %v3091, %v3090
    %v3106 = vpack.c.bf16 %v3093, %v3092
    %v3107 = vpack.c.bf16 %v3095, %v3094
    %v3112 = vunpack.c.l.b16 %v3096
    %v3113 = vunpack.c.l.b16 %v3097
    %v3114 = vunpack.c.l.b16 %v3098
    %v3115 = vunpack.c.l.b16 %v3099
    %v3116 = vpack.c.b16 %v3113, %v3112
    %v3117 = vpack.c.b16 %v3115, %v3114
    %3120 = vmatprep.subr.bf16.mxu0 0
    %3121 = vmatpush1.bf16.msra.mxu0 %v3100
    %3122 = vmatprep.subr.bf16.mxu0 0
    %3123 = vmatpush1.bf16.msra.mxu0 %v3101
    %3124 = vmatprep.subr.bf16.mxu0 0
    %3125 = vmatpush1.bf16.msra.mxu0 %v3102
    %3126 = vmatprep.subr.bf16.mxu0 0
    %3127 = vmatpush1.bf16.msra.mxu0 %v3103
    %3128 = vmatprep.subr.bf16.mxu0 0
    %3129 = vmatpush1.bf16.msra.mxu0 %v3104
    %3130 = vmatprep.subr.bf16.mxu0 0
    %3131 = vmatpush1.bf16.msra.mxu0 %v3105
    %3132 = vmatprep.subr.bf16.mxu0 0
    %3133 = vmatpush1.bf16.msra.mxu0 %v3106
    %3134 = vmatprep.subr.bf16.mxu0 0
    %3135 = vmatpush1.bf16.msra.mxu0 %v3107
    %3136 = vmatprep.subr.bf16.mxu0 0
    %3137 = vmatpush1.bf16.msra.mxu0 0
    %3138 = vmatprep.subr.bf16.mxu0 0
    %3139 = vmatpush1.bf16.msra.mxu0 0
    %3140 = vmatprep.subr.bf16.mxu0 0
    %3141 = vmatpush1.bf16.msra.mxu0 0
    %3142 = vmatprep.subr.bf16.mxu0 0
    %3143 = vmatpush1.bf16.msra.mxu0 0
    %3144 = vmatprep.subr.bf16.mxu0 0
    %3145 = vmatpush1.bf16.msra.mxu0 0
    %3146 = vmatprep.subr.bf16.mxu0 0
    %3147 = vmatpush1.bf16.msra.mxu0 0
    %3148 = vmatprep.subr.bf16.mxu0 0
    %3149 = vmatpush1.bf16.msra.mxu0 0
    %3150 = vmatprep.subr.bf16.mxu0 0
    %3151 = vmatpush1.bf16.msra.mxu0 0
    %3152 = vmatprep.mubr.bf16.mxu0 0
    %3153 = vmatmul.mubr.bf16.gmra.mrb[0].mxu0 %v3116
    %v3154 = vpop.f32.mrb[0].mxu0
    %v3155 = vadd.f32 0.0, %v3154
    %v3156 = vpop.f32.mrb[0].mxu0
    %v3157 = vpop.f32.mrb[0].mxu0
    %v3158 = vadd.f32 0.0, %v3157
    %v3159 = vpop.f32.mrb[0].mxu0
    %3160 = vmatprep.mubr.bf16.mxu0 0
    %3161 = vmatmul.mubr.bf16.gmra.mrb[0].mxu0 %v3117
    %v3162 = vpop.f32.mrb[0].mxu0
    %v3163 = vadd.f32 0.0, %v3162
    %v3164 = vpop.f32.mrb[0].mxu0
    %v3165 = vpop.f32.mrb[0].mxu0
    %v3166 = vadd.f32 0.0, %v3165
    %v3167 = vpop.f32.mrb[0].mxu0
    %3168 = vdwg.mxu0
    %v3169 = vadd.f32 %v2520, %v3155
    %v3170 = vadd.f32 %v2521, %v3158
    %v3171 = vadd.f32 %v2522, %v3163
    %v3172 = vadd.f32 %v2523, %v3166
    %v3173 = vld [vmem:[%s9 + $0x100] sm:$0xf]
    %v3174 = vld [vmem:[%s9 + $0x104] sm:$0xf]
    %v3175 = vld [vmem:[%s9 + $0x108] sm:$0xf]
    %v3176 = vld [vmem:[%s9 + $0x10c] sm:$0xf]
    %v3177 = vld [vmem:[%s9 + $0x110] sm:$0xf]
    %v3178 = vld [vmem:[%s9 + $0x114] sm:$0xf]
    %v3179 = vld [vmem:[%s9 + $0x118] sm:$0xf]
    %v3180 = vld [vmem:[%s9 + $0x11c] sm:$0xf]
    %v3181 = vld [vmem:[%s9 + $0x120] sm:$0xf]
    %v3182 = vld [vmem:[%s9 + $0x124] sm:$0xf]
    %v3183 = vld [vmem:[%s9 + $0x128] sm:$0xf]
    %v3184 = vld [vmem:[%s9 + $0x12c] sm:$0xf]
    %v3185 = vld [vmem:[%s9 + $0x130] sm:$0xf]
    %v3186 = vld [vmem:[%s9 + $0x134] sm:$0xf]
    %v3187 = vld [vmem:[%s9 + $0x138] sm:$0xf]
    %v3188 = vld [vmem:[%s9 + $0x13c] sm:$0xf]
    %v3189 = vld [vmem:[%s10 + $0x200] sm:$0xff]
    %v3190 = vld [vmem:[%s10 + $0x208] sm:$0xff]
    %v3191 = vld [vmem:[%s10 + $0x210] sm:$0xff]
    %v3192 = vld [vmem:[%s10 + $0x218] sm:$0xff]
    %v3193 = vld [vmem:[%s10 + $0x220] sm:$0xff]
    %v3194 = vld [vmem:[%s10 + $0x228] sm:$0xff]
    %v3195 = vld [vmem:[%s10 + $0x230] sm:$0xff]
    %v3196 = vld [vmem:[%s10 + $0x238] sm:$0xff]
    %v3197 = vld [vmem:[%s10 + $0x240] sm:$0xff]
    %v3198 = vld [vmem:[%s10 + $0x248] sm:$0xff]
    %v3199 = vld [vmem:[%s10 + $0x250] sm:$0xff]
    %v3200 = vld [vmem:[%s10 + $0x258] sm:$0xff]
    %v3201 = vld [vmem:[%s10 + $0x260] sm:$0xff]
    %v3202 = vld [vmem:[%s10 + $0x268] sm:$0xff]
    %v3203 = vld [vmem:[%s10 + $0x270] sm:$0xff]
    %v3204 = vld [vmem:[%s10 + $0x278] sm:$0xff]
    %3206 = vset.pattern.permute.xlu0 0
    %3207 = vperm.xlu0 %3206, %v3189
    %v3208 = vpop.permute.xlu0 %3207
    %3211 = vset.pattern.permute.xlu0 0
    %3212 = vperm.xlu0 %3211, %v3190
    %v3213 = vpop.permute.xlu0 %3212
    %3216 = vset.pattern.permute.xlu0 0
    %3217 = vperm.xlu0 %3216, %v3191
    %v3218 = vpop.permute.xlu0 %3217
    %3221 = vset.pattern.permute.xlu0 0
    %3222 = vperm.xlu0 %3221, %v3192
    %v3223 = vpop.permute.xlu0 %3222
    %3226 = vset.pattern.permute.xlu0 0
    %3227 = vperm.xlu0 %3226, %v3193
    %v3228 = vpop.permute.xlu0 %3227
    %3231 = vset.pattern.permute.xlu0 0
    %3232 = vperm.xlu0 %3231, %v3194
    %v3233 = vpop.permute.xlu0 %3232
    %3236 = vset.pattern.permute.xlu0 0
    %3237 = vperm.xlu0 %3236, %v3195
    %v3238 = vpop.permute.xlu0 %3237
    %3241 = vset.pattern.permute.xlu0 0
    %3242 = vperm.xlu0 %3241, %v3196
    %v3243 = vpop.permute.xlu0 %3242
    %3246 = vset.pattern.permute.xlu0 0
    %3247 = vperm.xlu0 %3246, %v3197
    %v3248 = vpop.permute.xlu0 %3247
    %3251 = vset.pattern.permute.xlu0 0
    %3252 = vperm.xlu0 %3251, %v3198
    %v3253 = vpop.permute.xlu0 %3252
    %3256 = vset.pattern.permute.xlu0 0
    %3257 = vperm.xlu0 %3256, %v3199
    %v3258 = vpop.permute.xlu0 %3257
    %3261 = vset.pattern.permute.xlu0 0
    %3262 = vperm.xlu0 %3261, %v3200
    %v3263 = vpop.permute.xlu0 %3262
    %3266 = vset.pattern.permute.xlu0 0
    %3267 = vperm.xlu0 %3266, %v3201
    %v3268 = vpop.permute.xlu0 %3267
    %3271 = vset.pattern.permute.xlu0 0
    %3272 = vperm.xlu0 %3271, %v3202
    %v3273 = vpop.permute.xlu0 %3272
    %3276 = vset.pattern.permute.xlu0 0
    %3277 = vperm.xlu0 %3276, %v3203
    %v3278 = vpop.permute.xlu0 %3277
    %3281 = vset.pattern.permute.xlu0 0
    %3282 = vperm.xlu0 %3281, %v3204
    %v3283 = vpop.permute.xlu0 %3282
    %v3301 = vunpack.c.l.b16 %v3173
    %v3302 = vunpack.c.l.b16 %v3174
    %v3303 = vunpack.c.l.b16 %v3175
    %v3304 = vunpack.c.l.b16 %v3176
    %v3305 = vunpack.c.l.b16 %v3177
    %v3306 = vunpack.c.l.b16 %v3178
    %v3307 = vunpack.c.l.b16 %v3179
    %v3308 = vunpack.c.l.b16 %v3180
    %v3309 = vunpack.c.l.b16 %v3181
    %v3310 = vunpack.c.l.b16 %v3182
    %v3311 = vunpack.c.l.b16 %v3183
    %v3312 = vunpack.c.l.b16 %v3184
    %v3313 = vunpack.c.l.b16 %v3185
    %v3314 = vunpack.c.l.b16 %v3186
    %v3315 = vunpack.c.l.b16 %v3187
    %v3316 = vunpack.c.l.b16 %v3188
    %v3317 = vpack.c.b16 %v3302, %v3301
    %v3318 = vpack.c.b16 %v3304, %v3303
    %v3319 = vpack.c.b16 %v3306, %v3305
    %v3320 = vpack.c.b16 %v3308, %v3307
    %v3321 = vpack.c.b16 %v3310, %v3309
    %v3322 = vpack.c.b16 %v3312, %v3311
    %v3323 = vpack.c.b16 %v3314, %v3313
    %v3324 = vpack.c.b16 %v3316, %v3315
    %v3326 = vsel %vm346, %v3317, 0
    %v3329 = vsel %vm346, %v3318, 0
    %v3332 = vsel %vm346, %v3319, 0
    %v3335 = vsel %vm346, %v3320, 0
    %v3338 = vsel %vm346, %v3321, 0
    %v3341 = vsel %vm346, %v3322, 0
    %v3344 = vsel %vm346, %v3323, 0
    %v3347 = vsel %vm346, %v3324, 0
    %3349 = vmatprep.subr.bf16.mxu0 0
    %3350 = vmatpush1.bf16.msra.mxu0 %v434
    %3351 = vmatprep.subr.bf16.mxu0 0
    %3352 = vmatpush1.bf16.msra.mxu0 %v435
    %3353 = vmatprep.subr.bf16.mxu0 0
    %3354 = vmatpush1.bf16.msra.mxu0 %v436
    %3355 = vmatprep.subr.bf16.mxu0 0
    %3356 = vmatpush1.bf16.msra.mxu0 %v474
    %3357 = vmatprep.subr.bf16.mxu0 0
    %3358 = vmatpush1.bf16.msra.mxu0 0
    %3359 = vmatprep.subr.bf16.mxu0 0
    %3360 = vmatpush1.bf16.msra.mxu0 0
    %3361 = vmatprep.subr.bf16.mxu0 0
    %3362 = vmatpush1.bf16.msra.mxu0 0
    %3363 = vmatprep.subr.bf16.mxu0 0
    %3364 = vmatpush1.bf16.msra.mxu0 0
    %3365 = vmatprep.subr.bf16.mxu0 0
    %3366 = vmatpush1.bf16.msra.mxu0 0
    %3367 = vmatprep.subr.bf16.mxu0 0
    %3368 = vmatpush1.bf16.msra.mxu0 0
    %3369 = vmatprep.subr.bf16.mxu0 0
    %3370 = vmatpush1.bf16.msra.mxu0 0
    %3371 = vmatprep.subr.bf16.mxu0 0
    %3372 = vmatpush1.bf16.msra.mxu0 0
    %3373 = vmatprep.subr.bf16.mxu0 0
    %3374 = vmatpush1.bf16.msra.mxu0 0
    %3375 = vmatprep.subr.bf16.mxu0 0
    %3376 = vmatpush1.bf16.msra.mxu0 0
    %3377 = vmatprep.subr.bf16.mxu0 0
    %3378 = vmatpush1.bf16.msra.mxu0 0
    %3379 = vmatprep.subr.bf16.mxu0 0
    %3380 = vmatpush1.bf16.msra.mxu0 0
    %3381 = vmatprep.mubr.bf16.mxu0 0
    %3382 = vmatmul.mubr.bf16.gmra.mrb[0].mxu0 %v3326
    %v3383 = vpop.f32.mrb[0].mxu0
    %v3384 = vadd.f32 %v3208, %v3383
    %v3385 = vpop.f32.mrb[0].mxu0
    %v3386 = vpop.f32.mrb[0].mxu0
    %v3387 = vadd.f32 %v3213, %v3386
    %v3388 = vpop.f32.mrb[0].mxu0
    %3389 = vmatprep.mubr.bf16.mxu0 0
    %3390 = vmatmul.mubr.bf16.gmra.mrb[0].mxu0 %v3329
    %v3391 = vpop.f32.mrb[0].mxu0
    %v3392 = vadd.f32 %v3218, %v3391
    %v3393 = vpop.f32.mrb[0].mxu0
    %v3394 = vpop.f32.mrb[0].mxu0
    %v3395 = vadd.f32 %v3223, %v3394
    %v3396 = vpop.f32.mrb[0].mxu0
    %3397 = vmatprep.mubr.bf16.mxu0 0
    %3398 = vmatmul.mubr.bf16.gmra.mrb[0].mxu0 %v3332
    %v3399 = vpop.f32.mrb[0].mxu0
    %v3400 = vadd.f32 %v3228, %v3399
    %v3401 = vpop.f32.mrb[0].mxu0
    %v3402 = vpop.f32.mrb[0].mxu0
    %v3403 = vadd.f32 %v3233, %v3402
    %v3404 = vpop.f32.mrb[0].mxu0
    %3405 = vmatprep.mubr.bf16.mxu0 0
    %3406 = vmatmul.mubr.bf16.gmra.mrb[0].mxu0 %v3335
    %v3407 = vpop.f32.mrb[0].mxu0
    %v3408 = vadd.f32 %v3238, %v3407
    %v3409 = vpop.f32.mrb[0].mxu0
    %v3410 = vpop.f32.mrb[0].mxu0
    %v3411 = vadd.f32 %v3243, %v3410
    %v3412 = vpop.f32.mrb[0].mxu0
    %3413 = vmatprep.mubr.bf16.mxu0 0
    %3414 = vmatmul.mubr.bf16.gmra.mrb[0].mxu0 %v3338
    %v3415 = vpop.f32.mrb[0].mxu0
    %v3416 = vadd.f32 %v3248, %v3415
    %v3417 = vpop.f32.mrb[0].mxu0
    %v3418 = vpop.f32.mrb[0].mxu0
    %v3419 = vadd.f32 %v3253, %v3418
    %v3420 = vpop.f32.mrb[0].mxu0
    %3421 = vmatprep.mubr.bf16.mxu0 0
    %3422 = vmatmul.mubr.bf16.gmra.mrb[0].mxu0 %v3341
    %v3423 = vpop.f32.mrb[0].mxu0
    %v3424 = vadd.f32 %v3258, %v3423
    %v3425 = vpop.f32.mrb[0].mxu0
    %v3426 = vpop.f32.mrb[0].mxu0
    %v3427 = vadd.f32 %v3263, %v3426
    %v3428 = vpop.f32.mrb[0].mxu0
    %3429 = vmatprep.mubr.bf16.mxu0 0
    %3430 = vmatmul.mubr.bf16.gmra.mrb[0].mxu0 %v3344
    %v3431 = vpop.f32.mrb[0].mxu0
    %v3432 = vadd.f32 %v3268, %v3431
    %v3433 = vpop.f32.mrb[0].mxu0
    %v3434 = vpop.f32.mrb[0].mxu0
    %v3435 = vadd.f32 %v3273, %v3434
    %v3436 = vpop.f32.mrb[0].mxu0
    %3437 = vmatprep.mubr.bf16.mxu0 0
    %3438 = vmatmul.mubr.bf16.gmra.mrb[0].mxu0 %v3347
    %v3439 = vpop.f32.mrb[0].mxu0
    %v3440 = vadd.f32 %v3278, %v3439
    %v3441 = vpop.f32.mrb[0].mxu0
    %v3442 = vpop.f32.mrb[0].mxu0
    %v3443 = vadd.f32 %v3283, %v3442
    %v3444 = vpop.f32.mrb[0].mxu0
    %3445 = vdwg.mxu0
    %v3446 = vmax.f32 %v3384, 0.0
    %v3447 = vmax.f32 %v3387, 0.0
    %v3448 = vmax.f32 %v3392, 0.0
    %v3449 = vmax.f32 %v3395, 0.0
    %v3450 = vmax.f32 %v3400, 0.0
    %v3451 = vmax.f32 %v3403, 0.0
    %v3452 = vmax.f32 %v3408, 0.0
    %v3453 = vmax.f32 %v3411, 0.0
    %v3454 = vmax.f32 %v3416, 0.0
    %v3455 = vmax.f32 %v3419, 0.0
    %v3456 = vmax.f32 %v3424, 0.0
    %v3457 = vmax.f32 %v3427, 0.0
    %v3458 = vmax.f32 %v3432, 0.0
    %v3459 = vmax.f32 %v3435, 0.0
    %v3460 = vmax.f32 %v3440, 0.0
    %v3461 = vmax.f32 %v3443, 0.0
    %s3462 = scalar_lea.vmem %s11, 256
    %v3463 = vld [vmem:[%s3462] sm:$0xf]
    %v3464 = vld [vmem:[%s3462 + $0x4] sm:$0xf]
    %v3465 = vld [vmem:[%s3462 + $0x8] sm:$0xf]
    %v3466 = vld [vmem:[%s3462 + $0xc] sm:$0xf]
    %v3467 = vld [vmem:[%s3462 + $0x10] sm:$0xf]
    %v3468 = vld [vmem:[%s3462 + $0x14] sm:$0xf]
    %v3469 = vld [vmem:[%s3462 + $0x18] sm:$0xf]
    %v3470 = vld [vmem:[%s3462 + $0x1c] sm:$0xf]
    %v3471 = vld [vmem:[%s3462 + $0x20] sm:$0xf]
    %v3472 = vld [vmem:[%s3462 + $0x24] sm:$0xf]
    %v3473 = vld [vmem:[%s3462 + $0x28] sm:$0xf]
    %v3474 = vld [vmem:[%s3462 + $0x2c] sm:$0xf]
    %v3475 = vld [vmem:[%s3462 + $0x30] sm:$0xf]
    %v3476 = vld [vmem:[%s3462 + $0x34] sm:$0xf]
    %v3477 = vld [vmem:[%s3462 + $0x38] sm:$0xf]
    %v3478 = vld [vmem:[%s3462 + $0x3c] sm:$0xf]
    %v3479 = vpack.c.bf16 %v3447, %v3446
    %v3480 = vpack.c.bf16 %v3449, %v3448
    %v3481 = vpack.c.bf16 %v3451, %v3450
    %v3482 = vpack.c.bf16 %v3453, %v3452
    %v3483 = vpack.c.bf16 %v3455, %v3454
    %v3484 = vpack.c.bf16 %v3457, %v3456
    %v3485 = vpack.c.bf16 %v3459, %v3458
    %v3486 = vpack.c.bf16 %v3461, %v3460
    %s3487 = scalar_lea.vmem %s12, 512
    %v3488 = vld [vmem:[%s3487] sm:$0xff]
    %v3489 = vld [vmem:[%s3487 + $0x8] sm:$0xff]
    %v3490 = vld [vmem:[%s3487 + $0x10] sm:$0xff]
    %v3491 = vld [vmem:[%s3487 + $0x18] sm:$0xff]
    %v3492 = vld [vmem:[%s3487 + $0x20] sm:$0xff]
    %v3493 = vld [vmem:[%s3487 + $0x28] sm:$0xff]
    %v3494 = vld [vmem:[%s3487 + $0x30] sm:$0xff]
    %v3495 = vld [vmem:[%s3487 + $0x38] sm:$0xff]
    %v3496 = vld [vmem:[%s3487 + $0x40] sm:$0xff]
    %v3497 = vld [vmem:[%s3487 + $0x48] sm:$0xff]
    %v3498 = vld [vmem:[%s3487 + $0x50] sm:$0xff]
    %v3499 = vld [vmem:[%s3487 + $0x58] sm:$0xff]
    %v3500 = vld [vmem:[%s3487 + $0x60] sm:$0xff]
    %v3501 = vld [vmem:[%s3487 + $0x68] sm:$0xff]
    %v3502 = vld [vmem:[%s3487 + $0x70] sm:$0xff]
    %v3503 = vld [vmem:[%s3487 + $0x78] sm:$0xff]
    %3505 = vset.pattern.permute.xlu0 0
    %3506 = vperm.xlu0 %3505, %v3488
    %v3507 = vpop.permute.xlu0 %3506
    %3510 = vset.pattern.permute.xlu0 0
    %3511 = vperm.xlu0 %3510, %v3489
    %v3512 = vpop.permute.xlu0 %3511
    %3515 = vset.pattern.permute.xlu0 0
    %3516 = vperm.xlu0 %3515, %v3490
    %v3517 = vpop.permute.xlu0 %3516
    %3520 = vset.pattern.permute.xlu0 0
    %3521 = vperm.xlu0 %3520, %v3491
    %v3522 = vpop.permute.xlu0 %3521
    %3525 = vset.pattern.permute.xlu0 0
    %3526 = vperm.xlu0 %3525, %v3492
    %v3527 = vpop.permute.xlu0 %3526
    %3530 = vset.pattern.permute.xlu0 0
    %3531 = vperm.xlu0 %3530, %v3493
    %v3532 = vpop.permute.xlu0 %3531
    %3535 = vset.pattern.permute.xlu0 0
    %3536 = vperm.xlu0 %3535, %v3494
    %v3537 = vpop.permute.xlu0 %3536
    %3540 = vset.pattern.permute.xlu0 0
    %3541 = vperm.xlu0 %3540, %v3495
    %v3542 = vpop.permute.xlu0 %3541
    %3545 = vset.pattern.permute.xlu0 0
    %3546 = vperm.xlu0 %3545, %v3496
    %v3547 = vpop.permute.xlu0 %3546
    %3550 = vset.pattern.permute.xlu0 0
    %3551 = vperm.xlu0 %3550, %v3497
    %v3552 = vpop.permute.xlu0 %3551
    %3555 = vset.pattern.permute.xlu0 0
    %3556 = vperm.xlu0 %3555, %v3498
    %v3557 = vpop.permute.xlu0 %3556
    %3560 = vset.pattern.permute.xlu0 0
    %3561 = vperm.xlu0 %3560, %v3499
    %v3562 = vpop.permute.xlu0 %3561
    %3565 = vset.pattern.permute.xlu0 0
    %3566 = vperm.xlu0 %3565, %v3500
    %v3567 = vpop.permute.xlu0 %3566
    %3570 = vset.pattern.permute.xlu0 0
    %3571 = vperm.xlu0 %3570, %v3501
    %v3572 = vpop.permute.xlu0 %3571
    %3575 = vset.pattern.permute.xlu0 0
    %3576 = vperm.xlu0 %3575, %v3502
    %v3577 = vpop.permute.xlu0 %3576
    %3580 = vset.pattern.permute.xlu0 0
    %3581 = vperm.xlu0 %3580, %v3503
    %v3582 = vpop.permute.xlu0 %3581
    %v3600 = vunpack.c.l.b16 %v3463
    %v3601 = vunpack.c.l.b16 %v3464
    %v3602 = vunpack.c.l.b16 %v3465
    %v3603 = vunpack.c.l.b16 %v3466
    %v3604 = vunpack.c.l.b16 %v3467
    %v3605 = vunpack.c.l.b16 %v3468
    %v3606 = vunpack.c.l.b16 %v3469
    %v3607 = vunpack.c.l.b16 %v3470
    %v3608 = vunpack.c.l.b16 %v3471
    %v3609 = vunpack.c.l.b16 %v3472
    %v3610 = vunpack.c.l.b16 %v3473
    %v3611 = vunpack.c.l.b16 %v3474
    %v3612 = vunpack.c.l.b16 %v3475
    %v3613 = vunpack.c.l.b16 %v3476
    %v3614 = vunpack.c.l.b16 %v3477
    %v3615 = vunpack.c.l.b16 %v3478
    %v3616 = vpack.c.b16 %v3601, %v3600
    %v3617 = vpack.c.b16 %v3603, %v3602
    %v3618 = vpack.c.b16 %v3605, %v3604
    %v3619 = vpack.c.b16 %v3607, %v3606
    %v3620 = vpack.c.b16 %v3609, %v3608
    %v3621 = vpack.c.b16 %v3611, %v3610
    %v3622 = vpack.c.b16 %v3613, %v3612
    %v3623 = vpack.c.b16 %v3615, %v3614
    %3632 = vmatprep.subr.bf16.mxu0 0
    %3633 = vmatpush1.bf16.msra.mxu0 %v3479
    %3634 = vmatprep.subr.bf16.mxu0 0
    %3635 = vmatpush1.bf16.msra.mxu0 %v3480
    %3636 = vmatprep.subr.bf16.mxu0 0
    %3637 = vmatpush1.bf16.msra.mxu0 %v3481
    %3638 = vmatprep.subr.bf16.mxu0 0
    %3639 = vmatpush1.bf16.msra.mxu0 %v3482
    %3640 = vmatprep.subr.bf16.mxu0 0
    %3641 = vmatpush1.bf16.msra.mxu0 %v3483
    %3642 = vmatprep.subr.bf16.mxu0 0
    %3643 = vmatpush1.bf16.msra.mxu0 %v3484
    %3644 = vmatprep.subr.bf16.mxu0 0
    %3645 = vmatpush1.bf16.msra.mxu0 %v3485
    %3646 = vmatprep.subr.bf16.mxu0 0
    %3647 = vmatpush1.bf16.msra.mxu0 %v3486
    %3648 = vmatprep.subr.bf16.mxu0 0
    %3649 = vmatpush1.bf16.msra.mxu0 0
    %3650 = vmatprep.subr.bf16.mxu0 0
    %3651 = vmatpush1.bf16.msra.mxu0 0
    %3652 = vmatprep.subr.bf16.mxu0 0
    %3653 = vmatpush1.bf16.msra.mxu0 0
    %3654 = vmatprep.subr.bf16.mxu0 0
    %3655 = vmatpush1.bf16.msra.mxu0 0
    %3656 = vmatprep.subr.bf16.mxu0 0
    %3657 = vmatpush1.bf16.msra.mxu0 0
    %3658 = vmatprep.subr.bf16.mxu0 0
    %3659 = vmatpush1.bf16.msra.mxu0 0
    %3660 = vmatprep.subr.bf16.mxu0 0
    %3661 = vmatpush1.bf16.msra.mxu0 0
    %3662 = vmatprep.subr.bf16.mxu0 0
    %3663 = vmatpush1.bf16.msra.mxu0 0
    %3664 = vmatprep.mubr.bf16.mxu0 0
    %3665 = vmatmul.mubr.bf16.gmra.mrb[0].mxu0 %v3616
    %v3666 = vpop.f32.mrb[0].mxu0
    %v3667 = vadd.f32 %v3507, %v3666
    %v3668 = vpop.f32.mrb[0].mxu0
    %v3669 = vpop.f32.mrb[0].mxu0
    %v3670 = vadd.f32 %v3512, %v3669
    %v3671 = vpop.f32.mrb[0].mxu0
    %3672 = vmatprep.mubr.bf16.mxu0 0
    %3673 = vmatmul.mubr.bf16.gmra.mrb[0].mxu0 %v3617
    %v3674 = vpop.f32.mrb[0].mxu0
    %v3675 = vadd.f32 %v3517, %v3674
    %v3676 = vpop.f32.mrb[0].mxu0
    %v3677 = vpop.f32.mrb[0].mxu0
    %v3678 = vadd.f32 %v3522, %v3677
    %v3679 = vpop.f32.mrb[0].mxu0
    %3680 = vmatprep.mubr.bf16.mxu0 0
    %3681 = vmatmul.mubr.bf16.gmra.mrb[0].mxu0 %v3618
    %v3682 = vpop.f32.mrb[0].mxu0
    %v3683 = vadd.f32 %v3527, %v3682
    %v3684 = vpop.f32.mrb[0].mxu0
    %v3685 = vpop.f32.mrb[0].mxu0
    %v3686 = vadd.f32 %v3532, %v3685
    %v3687 = vpop.f32.mrb[0].mxu0
    %3688 = vmatprep.mubr.bf16.mxu0 0
    %3689 = vmatmul.mubr.bf16.gmra.mrb[0].mxu0 %v3619
    %v3690 = vpop.f32.mrb[0].mxu0
    %v3691 = vadd.f32 %v3537, %v3690
    %v3692 = vpop.f32.mrb[0].mxu0
    %v3693 = vpop.f32.mrb[0].mxu0
    %v3694 = vadd.f32 %v3542, %v3693
    %v3695 = vpop.f32.mrb[0].mxu0
    %3696 = vmatprep.mubr.bf16.mxu0 0
    %3697 = vmatmul.mubr.bf16.gmra.mrb[0].mxu0 %v3620
    %v3698 = vpop.f32.mrb[0].mxu0
    %v3699 = vadd.f32 %v3547, %v3698
    %v3700 = vpop.f32.mrb[0].mxu0
    %v3701 = vpop.f32.mrb[0].mxu0
    %v3702 = vadd.f32 %v3552, %v3701
    %v3703 = vpop.f32.mrb[0].mxu0
    %3704 = vmatprep.mubr.bf16.mxu0 0
    %3705 = vmatmul.mubr.bf16.gmra.mrb[0].mxu0 %v3621
    %v3706 = vpop.f32.mrb[0].mxu0
    %v3707 = vadd.f32 %v3557, %v3706
    %v3708 = vpop.f32.mrb[0].mxu0
    %v3709 = vpop.f32.mrb[0].mxu0
    %v3710 = vadd.f32 %v3562, %v3709
    %v3711 = vpop.f32.mrb[0].mxu0
    %3712 = vmatprep.mubr.bf16.mxu0 0
    %3713 = vmatmul.mubr.bf16.gmra.mrb[0].mxu0 %v3622
    %v3714 = vpop.f32.mrb[0].mxu0
    %v3715 = vadd.f32 %v3567, %v3714
    %v3716 = vpop.f32.mrb[0].mxu0
    %v3717 = vpop.f32.mrb[0].mxu0
    %v3718 = vadd.f32 %v3572, %v3717
    %v3719 = vpop.f32.mrb[0].mxu0
    %3720 = vmatprep.mubr.bf16.mxu0 0
    %3721 = vmatmul.mubr.bf16.gmra.mrb[0].mxu0 %v3623
    %v3722 = vpop.f32.mrb[0].mxu0
    %v3723 = vadd.f32 %v3577, %v3722
    %v3724 = vpop.f32.mrb[0].mxu0
    %v3725 = vpop.f32.mrb[0].mxu0
    %v3726 = vadd.f32 %v3582, %v3725
    %v3727 = vpop.f32.mrb[0].mxu0
    %3728 = vdwg.mxu0
    %v3729 = vmax.f32 %v3667, 0.0
    %v3730 = vmax.f32 %v3670, 0.0
    %v3731 = vmax.f32 %v3675, 0.0
    %v3732 = vmax.f32 %v3678, 0.0
    %v3733 = vmax.f32 %v3683, 0.0
    %v3734 = vmax.f32 %v3686, 0.0
    %v3735 = vmax.f32 %v3691, 0.0
    %v3736 = vmax.f32 %v3694, 0.0
    %v3737 = vmax.f32 %v3699, 0.0
    %v3738 = vmax.f32 %v3702, 0.0
    %v3739 = vmax.f32 %v3707, 0.0
    %v3740 = vmax.f32 %v3710, 0.0
    %v3741 = vmax.f32 %v3715, 0.0
    %v3742 = vmax.f32 %v3718, 0.0
    %v3743 = vmax.f32 %v3723, 0.0
    %v3744 = vmax.f32 %v3726, 0.0
    %v3745 = vld [vmem:[%s13 + $0x10] sm:$0xf]
    %v3746 = vld [vmem:[%s13 + $0x48] sm:$0xf]
    %v3747 = vld [vmem:[%s13 + $0x80] sm:$0xf]
    %v3748 = vld [vmem:[%s13 + $0xb8] sm:$0xf]
    %v3749 = vpack.c.bf16 %v3730, %v3729
    %v3750 = vpack.c.bf16 %v3732, %v3731
    %v3751 = vpack.c.bf16 %v3734, %v3733
    %v3752 = vpack.c.bf16 %v3736, %v3735
    %v3753 = vpack.c.bf16 %v3738, %v3737
    %v3754 = vpack.c.bf16 %v3740, %v3739
    %v3755 = vpack.c.bf16 %v3742, %v3741
    %v3756 = vpack.c.bf16 %v3744, %v3743
    %v3761 = vunpack.c.l.b16 %v3745
    %v3762 = vunpack.c.l.b16 %v3746
    %v3763 = vunpack.c.l.b16 %v3747
    %v3764 = vunpack.c.l.b16 %v3748
    %v3765 = vpack.c.b16 %v3762, %v3761
    %v3766 = vpack.c.b16 %v3764, %v3763
    %3769 = vmatprep.subr.bf16.mxu0 0
    %3770 = vmatpush1.bf16.msra.mxu0 %v3749
    %3771 = vmatprep.subr.bf16.mxu0 0
    %3772 = vmatpush1.bf16.msra.mxu0 %v3750
    %3773 = vmatprep.subr.bf16.mxu0 0
    %3774 = vmatpush1.bf16.msra.mxu0 %v3751
    %3775 = vmatprep.subr.bf16.mxu0 0
    %3776 = vmatpush1.bf16.msra.mxu0 %v3752
    %3777 = vmatprep.subr.bf16.mxu0 0
    %3778 = vmatpush1.bf16.msra.mxu0 %v3753
    %3779 = vmatprep.subr.bf16.mxu0 0
    %3780 = vmatpush1.bf16.msra.mxu0 %v3754
    %3781 = vmatprep.subr.bf16.mxu0 0
    %3782 = vmatpush1.bf16.msra.mxu0 %v3755
    %3783 = vmatprep.subr.bf16.mxu0 0
    %3784 = vmatpush1.bf16.msra.mxu0 %v3756
    %3785 = vmatprep.subr.bf16.mxu0 0
    %3786 = vmatpush1.bf16.msra.mxu0 0
    %3787 = vmatprep.subr.bf16.mxu0 0
    %3788 = vmatpush1.bf16.msra.mxu0 0
    %3789 = vmatprep.subr.bf16.mxu0 0
    %3790 = vmatpush1.bf16.msra.mxu0 0
    %3791 = vmatprep.subr.bf16.mxu0 0
    %3792 = vmatpush1.bf16.msra.mxu0 0
    %3793 = vmatprep.subr.bf16.mxu0 0
    %3794 = vmatpush1.bf16.msra.mxu0 0
    %3795 = vmatprep.subr.bf16.mxu0 0
    %3796 = vmatpush1.bf16.msra.mxu0 0
    %3797 = vmatprep.subr.bf16.mxu0 0
    %3798 = vmatpush1.bf16.msra.mxu0 0
    %3799 = vmatprep.subr.bf16.mxu0 0
    %3800 = vmatpush1.bf16.msra.mxu0 0
    %3801 = vmatprep.mubr.bf16.mxu0 0
    %3802 = vmatmul.mubr.bf16.gmra.mrb[0].mxu0 %v3765
    %v3803 = vpop.f32.mrb[0].mxu0
    %v3804 = vadd.f32 0.0, %v3803
    %v3805 = vpop.f32.mrb[0].mxu0
    %v3806 = vpop.f32.mrb[0].mxu0
    %v3807 = vadd.f32 0.0, %v3806
    %v3808 = vpop.f32.mrb[0].mxu0
    %3809 = vmatprep.mubr.bf16.mxu0 0
    %3810 = vmatmul.mubr.bf16.gmra.mrb[0].mxu0 %v3766
    %v3811 = vpop.f32.mrb[0].mxu0
    %v3812 = vadd.f32 0.0, %v3811
    %v3813 = vpop.f32.mrb[0].mxu0
    %v3814 = vpop.f32.mrb[0].mxu0
    %v3815 = vadd.f32 0.0, %v3814
    %v3816 = vpop.f32.mrb[0].mxu0
    %3817 = vdwg.mxu0
    %v3818 = vadd.f32 %v3169, %v3804
    %v3819 = vadd.f32 %v3170, %v3807
    %v3820 = vadd.f32 %v3171, %v3812
    %v3821 = vadd.f32 %v3172, %v3815
    %v3822 = vld [vmem:[%s9 + $0x140] sm:$0xf]
    %v3823 = vld [vmem:[%s9 + $0x144] sm:$0xf]
    %v3824 = vld [vmem:[%s9 + $0x148] sm:$0xf]
    %v3825 = vld [vmem:[%s9 + $0x14c] sm:$0xf]
    %v3826 = vld [vmem:[%s9 + $0x150] sm:$0xf]
    %v3827 = vld [vmem:[%s9 + $0x154] sm:$0xf]
    %v3828 = vld [vmem:[%s9 + $0x158] sm:$0xf]
    %v3829 = vld [vmem:[%s9 + $0x15c] sm:$0xf]
    %v3830 = vld [vmem:[%s9 + $0x160] sm:$0xf]
    %v3831 = vld [vmem:[%s9 + $0x164] sm:$0xf]
    %v3832 = vld [vmem:[%s9 + $0x168] sm:$0xf]
    %v3833 = vld [vmem:[%s9 + $0x16c] sm:$0xf]
    %v3834 = vld [vmem:[%s9 + $0x170] sm:$0xf]
    %v3835 = vld [vmem:[%s9 + $0x174] sm:$0xf]
    %v3836 = vld [vmem:[%s9 + $0x178] sm:$0xf]
    %v3837 = vld [vmem:[%s9 + $0x17c] sm:$0xf]
    %v3838 = vld [vmem:[%s10 + $0x280] sm:$0xff]
    %v3839 = vld [vmem:[%s10 + $0x288] sm:$0xff]
    %v3840 = vld [vmem:[%s10 + $0x290] sm:$0xff]
    %v3841 = vld [vmem:[%s10 + $0x298] sm:$0xff]
    %v3842 = vld [vmem:[%s10 + $0x2a0] sm:$0xff]
    %v3843 = vld [vmem:[%s10 + $0x2a8] sm:$0xff]
    %v3844 = vld [vmem:[%s10 + $0x2b0] sm:$0xff]
    %v3845 = vld [vmem:[%s10 + $0x2b8] sm:$0xff]
    %v3846 = vld [vmem:[%s10 + $0x2c0] sm:$0xff]
    %v3847 = vld [vmem:[%s10 + $0x2c8] sm:$0xff]
    %v3848 = vld [vmem:[%s10 + $0x2d0] sm:$0xff]
    %v3849 = vld [vmem:[%s10 + $0x2d8] sm:$0xff]
    %v3850 = vld [vmem:[%s10 + $0x2e0] sm:$0xff]
    %v3851 = vld [vmem:[%s10 + $0x2e8] sm:$0xff]
    %v3852 = vld [vmem:[%s10 + $0x2f0] sm:$0xff]
    %v3853 = vld [vmem:[%s10 + $0x2f8] sm:$0xff]
    %3855 = vset.pattern.permute.xlu0 0
    %3856 = vperm.xlu0 %3855, %v3838
    %v3857 = vpop.permute.xlu0 %3856
    %3860 = vset.pattern.permute.xlu0 0
    %3861 = vperm.xlu0 %3860, %v3839
    %v3862 = vpop.permute.xlu0 %3861
    %3865 = vset.pattern.permute.xlu0 0
    %3866 = vperm.xlu0 %3865, %v3840
    %v3867 = vpop.permute.xlu0 %3866
    %3870 = vset.pattern.permute.xlu0 0
    %3871 = vperm.xlu0 %3870, %v3841
    %v3872 = vpop.permute.xlu0 %3871
    %3875 = vset.pattern.permute.xlu0 0
    %3876 = vperm.xlu0 %3875, %v3842
    %v3877 = vpop.permute.xlu0 %3876
    %3880 = vset.pattern.permute.xlu0 0
    %3881 = vperm.xlu0 %3880, %v3843
    %v3882 = vpop.permute.xlu0 %3881
    %3885 = vset.pattern.permute.xlu0 0
    %3886 = vperm.xlu0 %3885, %v3844
    %v3887 = vpop.permute.xlu0 %3886
    %3890 = vset.pattern.permute.xlu0 0
    %3891 = vperm.xlu0 %3890, %v3845
    %v3892 = vpop.permute.xlu0 %3891
    %3895 = vset.pattern.permute.xlu0 0
    %3896 = vperm.xlu0 %3895, %v3846
    %v3897 = vpop.permute.xlu0 %3896
    %3900 = vset.pattern.permute.xlu0 0
    %3901 = vperm.xlu0 %3900, %v3847
    %v3902 = vpop.permute.xlu0 %3901
    %3905 = vset.pattern.permute.xlu0 0
    %3906 = vperm.xlu0 %3905, %v3848
    %v3907 = vpop.permute.xlu0 %3906
    %3910 = vset.pattern.permute.xlu0 0
    %3911 = vperm.xlu0 %3910, %v3849
    %v3912 = vpop.permute.xlu0 %3911
    %3915 = vset.pattern.permute.xlu0 0
    %3916 = vperm.xlu0 %3915, %v3850
    %v3917 = vpop.permute.xlu0 %3916
    %3920 = vset.pattern.permute.xlu0 0
    %3921 = vperm.xlu0 %3920, %v3851
    %v3922 = vpop.permute.xlu0 %3921
    %3925 = vset.pattern.permute.xlu0 0
    %3926 = vperm.xlu0 %3925, %v3852
    %v3927 = vpop.permute.xlu0 %3926
    %3930 = vset.pattern.permute.xlu0 0
    %3931 = vperm.xlu0 %3930, %v3853
    %v3932 = vpop.permute.xlu0 %3931
    %v3950 = vunpack.c.l.b16 %v3822
    %v3951 = vunpack.c.l.b16 %v3823
    %v3952 = vunpack.c.l.b16 %v3824
    %v3953 = vunpack.c.l.b16 %v3825
    %v3954 = vunpack.c.l.b16 %v3826
    %v3955 = vunpack.c.l.b16 %v3827
    %v3956 = vunpack.c.l.b16 %v3828
    %v3957 = vunpack.c.l.b16 %v3829
    %v3958 = vunpack.c.l.b16 %v3830
    %v3959 = vunpack.c.l.b16 %v3831
    %v3960 = vunpack.c.l.b16 %v3832
    %v3961 = vunpack.c.l.b16 %v3833
    %v3962 = vunpack.c.l.b16 %v3834
    %v3963 = vunpack.c.l.b16 %v3835
    %v3964 = vunpack.c.l.b16 %v3836
    %v3965 = vunpack.c.l.b16 %v3837
    %v3966 = vpack.c.b16 %v3951, %v3950
    %v3967 = vpack.c.b16 %v3953, %v3952
    %v3968 = vpack.c.b16 %v3955, %v3954
    %v3969 = vpack.c.b16 %v3957, %v3956
    %v3970 = vpack.c.b16 %v3959, %v3958
    %v3971 = vpack.c.b16 %v3961, %v3960
    %v3972 = vpack.c.b16 %v3963, %v3962
    %v3973 = vpack.c.b16 %v3965, %v3964
    %v3975 = vsel %vm346, %v3966, 0
    %v3978 = vsel %vm346, %v3967, 0
    %v3981 = vsel %vm346, %v3968, 0
    %v3984 = vsel %vm346, %v3969, 0
    %v3987 = vsel %vm346, %v3970, 0
    %v3990 = vsel %vm346, %v3971, 0
    %v3993 = vsel %vm346, %v3972, 0
    %v3996 = vsel %vm346, %v3973, 0
    %3998 = vmatprep.subr.bf16.mxu0 0
    %3999 = vmatpush1.bf16.msra.mxu0 %v434
    %4000 = vmatprep.subr.bf16.mxu0 0
    %4001 = vmatpush1.bf16.msra.mxu0 %v435
    %4002 = vmatprep.subr.bf16.mxu0 0
    %4003 = vmatpush1.bf16.msra.mxu0 %v436
    %4004 = vmatprep.subr.bf16.mxu0 0
    %4005 = vmatpush1.bf16.msra.mxu0 %v474
    %4006 = vmatprep.subr.bf16.mxu0 0
    %4007 = vmatpush1.bf16.msra.mxu0 0
    %4008 = vmatprep.subr.bf16.mxu0 0
    %4009 = vmatpush1.bf16.msra.mxu0 0
    %4010 = vmatprep.subr.bf16.mxu0 0
    %4011 = vmatpush1.bf16.msra.mxu0 0
    %4012 = vmatprep.subr.bf16.mxu0 0
    %4013 = vmatpush1.bf16.msra.mxu0 0
    %4014 = vmatprep.subr.bf16.mxu0 0
    %4015 = vmatpush1.bf16.msra.mxu0 0
    %4016 = vmatprep.subr.bf16.mxu0 0
    %4017 = vmatpush1.bf16.msra.mxu0 0
    %4018 = vmatprep.subr.bf16.mxu0 0
    %4019 = vmatpush1.bf16.msra.mxu0 0
    %4020 = vmatprep.subr.bf16.mxu0 0
    %4021 = vmatpush1.bf16.msra.mxu0 0
    %4022 = vmatprep.subr.bf16.mxu0 0
    %4023 = vmatpush1.bf16.msra.mxu0 0
    %4024 = vmatprep.subr.bf16.mxu0 0
    %4025 = vmatpush1.bf16.msra.mxu0 0
    %4026 = vmatprep.subr.bf16.mxu0 0
    %4027 = vmatpush1.bf16.msra.mxu0 0
    %4028 = vmatprep.subr.bf16.mxu0 0
    %4029 = vmatpush1.bf16.msra.mxu0 0
    %4030 = vmatprep.mubr.bf16.mxu0 0
    %4031 = vmatmul.mubr.bf16.gmra.mrb[0].mxu0 %v3975
    %v4032 = vpop.f32.mrb[0].mxu0
    %v4033 = vadd.f32 %v3857, %v4032
    %v4034 = vpop.f32.mrb[0].mxu0
    %v4035 = vpop.f32.mrb[0].mxu0
    %v4036 = vadd.f32 %v3862, %v4035
    %v4037 = vpop.f32.mrb[0].mxu0
    %4038 = vmatprep.mubr.bf16.mxu0 0
    %4039 = vmatmul.mubr.bf16.gmra.mrb[0].mxu0 %v3978
    %v4040 = vpop.f32.mrb[0].mxu0
    %v4041 = vadd.f32 %v3867, %v4040
    %v4042 = vpop.f32.mrb[0].mxu0
    %v4043 = vpop.f32.mrb[0].mxu0
    %v4044 = vadd.f32 %v3872, %v4043
    %v4045 = vpop.f32.mrb[0].mxu0
    %4046 = vmatprep.mubr.bf16.mxu0 0
    %4047 = vmatmul.mubr.bf16.gmra.mrb[0].mxu0 %v3981
    %v4048 = vpop.f32.mrb[0].mxu0
    %v4049 = vadd.f32 %v3877, %v4048
    %v4050 = vpop.f32.mrb[0].mxu0
    %v4051 = vpop.f32.mrb[0].mxu0
    %v4052 = vadd.f32 %v3882, %v4051
    %v4053 = vpop.f32.mrb[0].mxu0
    %4054 = vmatprep.mubr.bf16.mxu0 0
    %4055 = vmatmul.mubr.bf16.gmra.mrb[0].mxu0 %v3984
    %v4056 = vpop.f32.mrb[0].mxu0
    %v4057 = vadd.f32 %v3887, %v4056
    %v4058 = vpop.f32.mrb[0].mxu0
    %v4059 = vpop.f32.mrb[0].mxu0
    %v4060 = vadd.f32 %v3892, %v4059
    %v4061 = vpop.f32.mrb[0].mxu0
    %4062 = vmatprep.mubr.bf16.mxu0 0
    %4063 = vmatmul.mubr.bf16.gmra.mrb[0].mxu0 %v3987
    %v4064 = vpop.f32.mrb[0].mxu0
    %v4065 = vadd.f32 %v3897, %v4064
    %v4066 = vpop.f32.mrb[0].mxu0
    %v4067 = vpop.f32.mrb[0].mxu0
    %v4068 = vadd.f32 %v3902, %v4067
    %v4069 = vpop.f32.mrb[0].mxu0
    %4070 = vmatprep.mubr.bf16.mxu0 0
    %4071 = vmatmul.mubr.bf16.gmra.mrb[0].mxu0 %v3990
    %v4072 = vpop.f32.mrb[0].mxu0
    %v4073 = vadd.f32 %v3907, %v4072
    %v4074 = vpop.f32.mrb[0].mxu0
    %v4075 = vpop.f32.mrb[0].mxu0
    %v4076 = vadd.f32 %v3912, %v4075
    %v4077 = vpop.f32.mrb[0].mxu0
    %4078 = vmatprep.mubr.bf16.mxu0 0
    %4079 = vmatmul.mubr.bf16.gmra.mrb[0].mxu0 %v3993
    %v4080 = vpop.f32.mrb[0].mxu0
    %v4081 = vadd.f32 %v3917, %v4080
    %v4082 = vpop.f32.mrb[0].mxu0
    %v4083 = vpop.f32.mrb[0].mxu0
    %v4084 = vadd.f32 %v3922, %v4083
    %v4085 = vpop.f32.mrb[0].mxu0
    %4086 = vmatprep.mubr.bf16.mxu0 0
    %4087 = vmatmul.mubr.bf16.gmra.mrb[0].mxu0 %v3996
    %v4088 = vpop.f32.mrb[0].mxu0
    %v4089 = vadd.f32 %v3927, %v4088
    %v4090 = vpop.f32.mrb[0].mxu0
    %v4091 = vpop.f32.mrb[0].mxu0
    %v4092 = vadd.f32 %v3932, %v4091
    %v4093 = vpop.f32.mrb[0].mxu0
    %4094 = vdwg.mxu0
    %v4095 = vmax.f32 %v4033, 0.0
    %v4096 = vmax.f32 %v4036, 0.0
    %v4097 = vmax.f32 %v4041, 0.0
    %v4098 = vmax.f32 %v4044, 0.0
    %v4099 = vmax.f32 %v4049, 0.0
    %v4100 = vmax.f32 %v4052, 0.0
    %v4101 = vmax.f32 %v4057, 0.0
    %v4102 = vmax.f32 %v4060, 0.0
    %v4103 = vmax.f32 %v4065, 0.0
    %v4104 = vmax.f32 %v4068, 0.0
    %v4105 = vmax.f32 %v4073, 0.0
    %v4106 = vmax.f32 %v4076, 0.0
    %v4107 = vmax.f32 %v4081, 0.0
    %v4108 = vmax.f32 %v4084, 0.0
    %v4109 = vmax.f32 %v4089, 0.0
    %v4110 = vmax.f32 %v4092, 0.0
    %s4111 = scalar_lea.vmem %s11, 320
    %v4112 = vld [vmem:[%s4111] sm:$0xf]
    %v4113 = vld [vmem:[%s4111 + $0x4] sm:$0xf]
    %v4114 = vld [vmem:[%s4111 + $0x8] sm:$0xf]
    %v4115 = vld [vmem:[%s4111 + $0xc] sm:$0xf]
    %v4116 = vld [vmem:[%s4111 + $0x10] sm:$0xf]
    %v4117 = vld [vmem:[%s4111 + $0x14] sm:$0xf]
    %v4118 = vld [vmem:[%s4111 + $0x18] sm:$0xf]
    %v4119 = vld [vmem:[%s4111 + $0x1c] sm:$0xf]
    %v4120 = vld [vmem:[%s4111 + $0x20] sm:$0xf]
    %v4121 = vld [vmem:[%s4111 + $0x24] sm:$0xf]
    %v4122 = vld [vmem:[%s4111 + $0x28] sm:$0xf]
    %v4123 = vld [vmem:[%s4111 + $0x2c] sm:$0xf]
    %v4124 = vld [vmem:[%s4111 + $0x30] sm:$0xf]
    %v4125 = vld [vmem:[%s4111 + $0x34] sm:$0xf]
    %v4126 = vld [vmem:[%s4111 + $0x38] sm:$0xf]
    %v4127 = vld [vmem:[%s4111 + $0x3c] sm:$0xf]
    %v4128 = vpack.c.bf16 %v4096, %v4095
    %v4129 = vpack.c.bf16 %v4098, %v4097
    %v4130 = vpack.c.bf16 %v4100, %v4099
    %v4131 = vpack.c.bf16 %v4102, %v4101
    %v4132 = vpack.c.bf16 %v4104, %v4103
    %v4133 = vpack.c.bf16 %v4106, %v4105
    %v4134 = vpack.c.bf16 %v4108, %v4107
    %v4135 = vpack.c.bf16 %v4110, %v4109
    %s4136 = scalar_lea.vmem %s12, 640
    %v4137 = vld [vmem:[%s4136] sm:$0xff]
    %v4138 = vld [vmem:[%s4136 + $0x8] sm:$0xff]
    %v4139 = vld [vmem:[%s4136 + $0x10] sm:$0xff]
    %v4140 = vld [vmem:[%s4136 + $0x18] sm:$0xff]
    %v4141 = vld [vmem:[%s4136 + $0x20] sm:$0xff]
    %v4142 = vld [vmem:[%s4136 + $0x28] sm:$0xff]
    %v4143 = vld [vmem:[%s4136 + $0x30] sm:$0xff]
    %v4144 = vld [vmem:[%s4136 + $0x38] sm:$0xff]
    %v4145 = vld [vmem:[%s4136 + $0x40] sm:$0xff]
    %v4146 = vld [vmem:[%s4136 + $0x48] sm:$0xff]
    %v4147 = vld [vmem:[%s4136 + $0x50] sm:$0xff]
    %v4148 = vld [vmem:[%s4136 + $0x58] sm:$0xff]
    %v4149 = vld [vmem:[%s4136 + $0x60] sm:$0xff]
    %v4150 = vld [vmem:[%s4136 + $0x68] sm:$0xff]
    %v4151 = vld [vmem:[%s4136 + $0x70] sm:$0xff]
    %v4152 = vld [vmem:[%s4136 + $0x78] sm:$0xff]
    %4154 = vset.pattern.permute.xlu0 0
    %4155 = vperm.xlu0 %4154, %v4137
    %v4156 = vpop.permute.xlu0 %4155
    %4159 = vset.pattern.permute.xlu0 0
    %4160 = vperm.xlu0 %4159, %v4138
    %v4161 = vpop.permute.xlu0 %4160
    %4164 = vset.pattern.permute.xlu0 0
    %4165 = vperm.xlu0 %4164, %v4139
    %v4166 = vpop.permute.xlu0 %4165
    %4169 = vset.pattern.permute.xlu0 0
    %4170 = vperm.xlu0 %4169, %v4140
    %v4171 = vpop.permute.xlu0 %4170
    %4174 = vset.pattern.permute.xlu0 0
    %4175 = vperm.xlu0 %4174, %v4141
    %v4176 = vpop.permute.xlu0 %4175
    %4179 = vset.pattern.permute.xlu0 0
    %4180 = vperm.xlu0 %4179, %v4142
    %v4181 = vpop.permute.xlu0 %4180
    %4184 = vset.pattern.permute.xlu0 0
    %4185 = vperm.xlu0 %4184, %v4143
    %v4186 = vpop.permute.xlu0 %4185
    %4189 = vset.pattern.permute.xlu0 0
    %4190 = vperm.xlu0 %4189, %v4144
    %v4191 = vpop.permute.xlu0 %4190
    %4194 = vset.pattern.permute.xlu0 0
    %4195 = vperm.xlu0 %4194, %v4145
    %v4196 = vpop.permute.xlu0 %4195
    %4199 = vset.pattern.permute.xlu0 0
    %4200 = vperm.xlu0 %4199, %v4146
    %v4201 = vpop.permute.xlu0 %4200
    %4204 = vset.pattern.permute.xlu0 0
    %4205 = vperm.xlu0 %4204, %v4147
    %v4206 = vpop.permute.xlu0 %4205
    %4209 = vset.pattern.permute.xlu0 0
    %4210 = vperm.xlu0 %4209, %v4148
    %v4211 = vpop.permute.xlu0 %4210
    %4214 = vset.pattern.permute.xlu0 0
    %4215 = vperm.xlu0 %4214, %v4149
    %v4216 = vpop.permute.xlu0 %4215
    %4219 = vset.pattern.permute.xlu0 0
    %4220 = vperm.xlu0 %4219, %v4150
    %v4221 = vpop.permute.xlu0 %4220
    %4224 = vset.pattern.permute.xlu0 0
    %4225 = vperm.xlu0 %4224, %v4151
    %v4226 = vpop.permute.xlu0 %4225
    %4229 = vset.pattern.permute.xlu0 0
    %4230 = vperm.xlu0 %4229, %v4152
    %v4231 = vpop.permute.xlu0 %4230
    %v4249 = vunpack.c.l.b16 %v4112
    %v4250 = vunpack.c.l.b16 %v4113
    %v4251 = vunpack.c.l.b16 %v4114
    %v4252 = vunpack.c.l.b16 %v4115
    %v4253 = vunpack.c.l.b16 %v4116
    %v4254 = vunpack.c.l.b16 %v4117
    %v4255 = vunpack.c.l.b16 %v4118
    %v4256 = vunpack.c.l.b16 %v4119
    %v4257 = vunpack.c.l.b16 %v4120
    %v4258 = vunpack.c.l.b16 %v4121
    %v4259 = vunpack.c.l.b16 %v4122
    %v4260 = vunpack.c.l.b16 %v4123
    %v4261 = vunpack.c.l.b16 %v4124
    %v4262 = vunpack.c.l.b16 %v4125
    %v4263 = vunpack.c.l.b16 %v4126
    %v4264 = vunpack.c.l.b16 %v4127
    %v4265 = vpack.c.b16 %v4250, %v4249
    %v4266 = vpack.c.b16 %v4252, %v4251
    %v4267 = vpack.c.b16 %v4254, %v4253
    %v4268 = vpack.c.b16 %v4256, %v4255
    %v4269 = vpack.c.b16 %v4258, %v4257
    %v4270 = vpack.c.b16 %v4260, %v4259
    %v4271 = vpack.c.b16 %v4262, %v4261
    %v4272 = vpack.c.b16 %v4264, %v4263
    %4281 = vmatprep.subr.bf16.mxu0 0
    %4282 = vmatpush1.bf16.msra.mxu0 %v4128
    %4283 = vmatprep.subr.bf16.mxu0 0
    %4284 = vmatpush1.bf16.msra.mxu0 %v4129
    %4285 = vmatprep.subr.bf16.mxu0 0
    %4286 = vmatpush1.bf16.msra.mxu0 %v4130
    %4287 = vmatprep.subr.bf16.mxu0 0
    %4288 = vmatpush1.bf16.msra.mxu0 %v4131
    %4289 = vmatprep.subr.bf16.mxu0 0
    %4290 = vmatpush1.bf16.msra.mxu0 %v4132
    %4291 = vmatprep.subr.bf16.mxu0 0
    %4292 = vmatpush1.bf16.msra.mxu0 %v4133
    %4293 = vmatprep.subr.bf16.mxu0 0
    %4294 = vmatpush1.bf16.msra.mxu0 %v4134
    %4295 = vmatprep.subr.bf16.mxu0 0
    %4296 = vmatpush1.bf16.msra.mxu0 %v4135
    %4297 = vmatprep.subr.bf16.mxu0 0
    %4298 = vmatpush1.bf16.msra.mxu0 0
    %4299 = vmatprep.subr.bf16.mxu0 0
    %4300 = vmatpush1.bf16.msra.mxu0 0
    %4301 = vmatprep.subr.bf16.mxu0 0
    %4302 = vmatpush1.bf16.msra.mxu0 0
    %4303 = vmatprep.subr.bf16.mxu0 0
    %4304 = vmatpush1.bf16.msra.mxu0 0
    %4305 = vmatprep.subr.bf16.mxu0 0
    %4306 = vmatpush1.bf16.msra.mxu0 0
    %4307 = vmatprep.subr.bf16.mxu0 0
    %4308 = vmatpush1.bf16.msra.mxu0 0
    %4309 = vmatprep.subr.bf16.mxu0 0
    %4310 = vmatpush1.bf16.msra.mxu0 0
    %4311 = vmatprep.subr.bf16.mxu0 0
    %4312 = vmatpush1.bf16.msra.mxu0 0
    %4313 = vmatprep.mubr.bf16.mxu0 0
    %4314 = vmatmul.mubr.bf16.gmra.mrb[0].mxu0 %v4265
    %v4315 = vpop.f32.mrb[0].mxu0
    %v4316 = vadd.f32 %v4156, %v4315
    %v4317 = vpop.f32.mrb[0].mxu0
    %v4318 = vpop.f32.mrb[0].mxu0
    %v4319 = vadd.f32 %v4161, %v4318
    %v4320 = vpop.f32.mrb[0].mxu0
    %4321 = vmatprep.mubr.bf16.mxu0 0
    %4322 = vmatmul.mubr.bf16.gmra.mrb[0].mxu0 %v4266
    %v4323 = vpop.f32.mrb[0].mxu0
    %v4324 = vadd.f32 %v4166, %v4323
    %v4325 = vpop.f32.mrb[0].mxu0
    %v4326 = vpop.f32.mrb[0].mxu0
    %v4327 = vadd.f32 %v4171, %v4326
    %v4328 = vpop.f32.mrb[0].mxu0
    %4329 = vmatprep.mubr.bf16.mxu0 0
    %4330 = vmatmul.mubr.bf16.gmra.mrb[0].mxu0 %v4267
    %v4331 = vpop.f32.mrb[0].mxu0
    %v4332 = vadd.f32 %v4176, %v4331
    %v4333 = vpop.f32.mrb[0].mxu0
    %v4334 = vpop.f32.mrb[0].mxu0
    %v4335 = vadd.f32 %v4181, %v4334
    %v4336 = vpop.f32.mrb[0].mxu0
    %4337 = vmatprep.mubr.bf16.mxu0 0
    %4338 = vmatmul.mubr.bf16.gmra.mrb[0].mxu0 %v4268
    %v4339 = vpop.f32.mrb[0].mxu0
    %v4340 = vadd.f32 %v4186, %v4339
    %v4341 = vpop.f32.mrb[0].mxu0
    %v4342 = vpop.f32.mrb[0].mxu0
    %v4343 = vadd.f32 %v4191, %v4342
    %v4344 = vpop.f32.mrb[0].mxu0
    %4345 = vmatprep.mubr.bf16.mxu0 0
    %4346 = vmatmul.mubr.bf16.gmra.mrb[0].mxu0 %v4269
    %v4347 = vpop.f32.mrb[0].mxu0
    %v4348 = vadd.f32 %v4196, %v4347
    %v4349 = vpop.f32.mrb[0].mxu0
    %v4350 = vpop.f32.mrb[0].mxu0
    %v4351 = vadd.f32 %v4201, %v4350
    %v4352 = vpop.f32.mrb[0].mxu0
    %4353 = vmatprep.mubr.bf16.mxu0 0
    %4354 = vmatmul.mubr.bf16.gmra.mrb[0].mxu0 %v4270
    %v4355 = vpop.f32.mrb[0].mxu0
    %v4356 = vadd.f32 %v4206, %v4355
    %v4357 = vpop.f32.mrb[0].mxu0
    %v4358 = vpop.f32.mrb[0].mxu0
    %v4359 = vadd.f32 %v4211, %v4358
    %v4360 = vpop.f32.mrb[0].mxu0
    %4361 = vmatprep.mubr.bf16.mxu0 0
    %4362 = vmatmul.mubr.bf16.gmra.mrb[0].mxu0 %v4271
    %v4363 = vpop.f32.mrb[0].mxu0
    %v4364 = vadd.f32 %v4216, %v4363
    %v4365 = vpop.f32.mrb[0].mxu0
    %v4366 = vpop.f32.mrb[0].mxu0
    %v4367 = vadd.f32 %v4221, %v4366
    %v4368 = vpop.f32.mrb[0].mxu0
    %4369 = vmatprep.mubr.bf16.mxu0 0
    %4370 = vmatmul.mubr.bf16.gmra.mrb[0].mxu0 %v4272
    %v4371 = vpop.f32.mrb[0].mxu0
    %v4372 = vadd.f32 %v4226, %v4371
    %v4373 = vpop.f32.mrb[0].mxu0
    %v4374 = vpop.f32.mrb[0].mxu0
    %v4375 = vadd.f32 %v4231, %v4374
    %v4376 = vpop.f32.mrb[0].mxu0
    %4377 = vdwg.mxu0
    %v4378 = vmax.f32 %v4316, 0.0
    %v4379 = vmax.f32 %v4319, 0.0
    %v4380 = vmax.f32 %v4324, 0.0
    %v4381 = vmax.f32 %v4327, 0.0
    %v4382 = vmax.f32 %v4332, 0.0
    %v4383 = vmax.f32 %v4335, 0.0
    %v4384 = vmax.f32 %v4340, 0.0
    %v4385 = vmax.f32 %v4343, 0.0
    %v4386 = vmax.f32 %v4348, 0.0
    %v4387 = vmax.f32 %v4351, 0.0
    %v4388 = vmax.f32 %v4356, 0.0
    %v4389 = vmax.f32 %v4359, 0.0
    %v4390 = vmax.f32 %v4364, 0.0
    %v4391 = vmax.f32 %v4367, 0.0
    %v4392 = vmax.f32 %v4372, 0.0
    %v4393 = vmax.f32 %v4375, 0.0
    %v4394 = vld [vmem:[%s13 + $0x14] sm:$0xf]
    %v4395 = vld [vmem:[%s13 + $0x4c] sm:$0xf]
    %v4396 = vld [vmem:[%s13 + $0x84] sm:$0xf]
    %v4397 = vld [vmem:[%s13 + $0xbc] sm:$0xf]
    %v4398 = vpack.c.bf16 %v4379, %v4378
    %v4399 = vpack.c.bf16 %v4381, %v4380
    %v4400 = vpack.c.bf16 %v4383, %v4382
    %v4401 = vpack.c.bf16 %v4385, %v4384
    %v4402 = vpack.c.bf16 %v4387, %v4386
    %v4403 = vpack.c.bf16 %v4389, %v4388
    %v4404 = vpack.c.bf16 %v4391, %v4390
    %v4405 = vpack.c.bf16 %v4393, %v4392
    %v4410 = vunpack.c.l.b16 %v4394
    %v4411 = vunpack.c.l.b16 %v4395
    %v4412 = vunpack.c.l.b16 %v4396
    %v4413 = vunpack.c.l.b16 %v4397
    %v4414 = vpack.c.b16 %v4411, %v4410
    %v4415 = vpack.c.b16 %v4413, %v4412
    %4418 = vmatprep.subr.bf16.mxu0 0
    %4419 = vmatpush1.bf16.msra.mxu0 %v4398
    %4420 = vmatprep.subr.bf16.mxu0 0
    %4421 = vmatpush1.bf16.msra.mxu0 %v4399
    %4422 = vmatprep.subr.bf16.mxu0 0
    %4423 = vmatpush1.bf16.msra.mxu0 %v4400
    %4424 = vmatprep.subr.bf16.mxu0 0
    %4425 = vmatpush1.bf16.msra.mxu0 %v4401
    %4426 = vmatprep.subr.bf16.mxu0 0
    %4427 = vmatpush1.bf16.msra.mxu0 %v4402
    %4428 = vmatprep.subr.bf16.mxu0 0
    %4429 = vmatpush1.bf16.msra.mxu0 %v4403
    %4430 = vmatprep.subr.bf16.mxu0 0
    %4431 = vmatpush1.bf16.msra.mxu0 %v4404
    %4432 = vmatprep.subr.bf16.mxu0 0
    %4433 = vmatpush1.bf16.msra.mxu0 %v4405
    %4434 = vmatprep.subr.bf16.mxu0 0
    %4435 = vmatpush1.bf16.msra.mxu0 0
    %4436 = vmatprep.subr.bf16.mxu0 0
    %4437 = vmatpush1.bf16.msra.mxu0 0
    %4438 = vmatprep.subr.bf16.mxu0 0
    %4439 = vmatpush1.bf16.msra.mxu0 0
    %4440 = vmatprep.subr.bf16.mxu0 0
    %4441 = vmatpush1.bf16.msra.mxu0 0
    %4442 = vmatprep.subr.bf16.mxu0 0
    %4443 = vmatpush1.bf16.msra.mxu0 0
    %4444 = vmatprep.subr.bf16.mxu0 0
    %4445 = vmatpush1.bf16.msra.mxu0 0
    %4446 = vmatprep.subr.bf16.mxu0 0
    %4447 = vmatpush1.bf16.msra.mxu0 0
    %4448 = vmatprep.subr.bf16.mxu0 0
    %4449 = vmatpush1.bf16.msra.mxu0 0
    %4450 = vmatprep.mubr.bf16.mxu0 0
    %4451 = vmatmul.mubr.bf16.gmra.mrb[0].mxu0 %v4414
    %v4452 = vpop.f32.mrb[0].mxu0
    %v4453 = vadd.f32 0.0, %v4452
    %v4454 = vpop.f32.mrb[0].mxu0
    %v4455 = vpop.f32.mrb[0].mxu0
    %v4456 = vadd.f32 0.0, %v4455
    %v4457 = vpop.f32.mrb[0].mxu0
    %4458 = vmatprep.mubr.bf16.mxu0 0
    %4459 = vmatmul.mubr.bf16.gmra.mrb[0].mxu0 %v4415
    %v4460 = vpop.f32.mrb[0].mxu0
    %v4461 = vadd.f32 0.0, %v4460
    %v4462 = vpop.f32.mrb[0].mxu0
    %v4463 = vpop.f32.mrb[0].mxu0
    %v4464 = vadd.f32 0.0, %v4463
    %v4465 = vpop.f32.mrb[0].mxu0
    %4466 = vdwg.mxu0
    %v4467 = vadd.f32 %v3818, %v4453
    %v4468 = vadd.f32 %v3819, %v4456
    %v4469 = vadd.f32 %v3820, %v4461
    %v4470 = vadd.f32 %v3821, %v4464
    %v4471 = vld [vmem:[%s9 + $0x180] sm:$0xf]
    %v4472 = vld [vmem:[%s9 + $0x184] sm:$0xf]
    %v4473 = vld [vmem:[%s9 + $0x188] sm:$0xf]
    %v4474 = vld [vmem:[%s9 + $0x18c] sm:$0xf]
    %v4475 = vld [vmem:[%s9 + $0x190] sm:$0xf]
    %v4476 = vld [vmem:[%s9 + $0x194] sm:$0xf]
    %v4477 = vld [vmem:[%s9 + $0x198] sm:$0xf]
    %v4478 = vld [vmem:[%s9 + $0x19c] sm:$0xf]
    %v4479 = vld [vmem:[%s9 + $0x1a0] sm:$0xf]
    %v4480 = vld [vmem:[%s9 + $0x1a4] sm:$0xf]
    %v4481 = vld [vmem:[%s9 + $0x1a8] sm:$0xf]
    %v4482 = vld [vmem:[%s9 + $0x1ac] sm:$0xf]
    %v4483 = vld [vmem:[%s9 + $0x1b0] sm:$0xf]
    %v4484 = vld [vmem:[%s9 + $0x1b4] sm:$0xf]
    %v4485 = vld [vmem:[%s9 + $0x1b8] sm:$0xf]
    %v4486 = vld [vmem:[%s9 + $0x1bc] sm:$0xf]
    %v4487 = vld [vmem:[%s10 + $0x300] sm:$0xff]
    %v4488 = vld [vmem:[%s10 + $0x308] sm:$0xff]
    %v4489 = vld [vmem:[%s10 + $0x310] sm:$0xff]
    %v4490 = vld [vmem:[%s10 + $0x318] sm:$0xff]
    %v4491 = vld [vmem:[%s10 + $0x320] sm:$0xff]
    %v4492 = vld [vmem:[%s10 + $0x328] sm:$0xff]
    %v4493 = vld [vmem:[%s10 + $0x330] sm:$0xff]
    %v4494 = vld [vmem:[%s10 + $0x338] sm:$0xff]
    %v4495 = vld [vmem:[%s10 + $0x340] sm:$0xff]
    %v4496 = vld [vmem:[%s10 + $0x348] sm:$0xff]
    %v4497 = vld [vmem:[%s10 + $0x350] sm:$0xff]
    %v4498 = vld [vmem:[%s10 + $0x358] sm:$0xff]
    %v4499 = vld [vmem:[%s10 + $0x360] sm:$0xff]
    %v4500 = vld [vmem:[%s10 + $0x368] sm:$0xff]
    %v4501 = vld [vmem:[%s10 + $0x370] sm:$0xff]
    %v4502 = vld [vmem:[%s10 + $0x378] sm:$0xff]
    %4504 = vset.pattern.permute.xlu0 0
    %4505 = vperm.xlu0 %4504, %v4487
    %v4506 = vpop.permute.xlu0 %4505
    %4509 = vset.pattern.permute.xlu0 0
    %4510 = vperm.xlu0 %4509, %v4488
    %v4511 = vpop.permute.xlu0 %4510
    %4514 = vset.pattern.permute.xlu0 0
    %4515 = vperm.xlu0 %4514, %v4489
    %v4516 = vpop.permute.xlu0 %4515
    %4519 = vset.pattern.permute.xlu0 0
    %4520 = vperm.xlu0 %4519, %v4490
    %v4521 = vpop.permute.xlu0 %4520
    %4524 = vset.pattern.permute.xlu0 0
    %4525 = vperm.xlu0 %4524, %v4491
    %v4526 = vpop.permute.xlu0 %4525
    %4529 = vset.pattern.permute.xlu0 0
    %4530 = vperm.xlu0 %4529, %v4492
    %v4531 = vpop.permute.xlu0 %4530
    %4534 = vset.pattern.permute.xlu0 0
    %4535 = vperm.xlu0 %4534, %v4493
    %v4536 = vpop.permute.xlu0 %4535
    %4539 = vset.pattern.permute.xlu0 0
    %4540 = vperm.xlu0 %4539, %v4494
    %v4541 = vpop.permute.xlu0 %4540
    %4544 = vset.pattern.permute.xlu0 0
    %4545 = vperm.xlu0 %4544, %v4495
    %v4546 = vpop.permute.xlu0 %4545
    %4549 = vset.pattern.permute.xlu0 0
    %4550 = vperm.xlu0 %4549, %v4496
    %v4551 = vpop.permute.xlu0 %4550
    %4554 = vset.pattern.permute.xlu0 0
    %4555 = vperm.xlu0 %4554, %v4497
    %v4556 = vpop.permute.xlu0 %4555
    %4559 = vset.pattern.permute.xlu0 0
    %4560 = vperm.xlu0 %4559, %v4498
    %v4561 = vpop.permute.xlu0 %4560
    %4564 = vset.pattern.permute.xlu0 0
    %4565 = vperm.xlu0 %4564, %v4499
    %v4566 = vpop.permute.xlu0 %4565
    %4569 = vset.pattern.permute.xlu0 0
    %4570 = vperm.xlu0 %4569, %v4500
    %v4571 = vpop.permute.xlu0 %4570
    %4574 = vset.pattern.permute.xlu0 0
    %4575 = vperm.xlu0 %4574, %v4501
    %v4576 = vpop.permute.xlu0 %4575
    %4579 = vset.pattern.permute.xlu0 0
    %4580 = vperm.xlu0 %4579, %v4502
    %v4581 = vpop.permute.xlu0 %4580
    %v4599 = vunpack.c.l.b16 %v4471
    %v4600 = vunpack.c.l.b16 %v4472
    %v4601 = vunpack.c.l.b16 %v4473
    %v4602 = vunpack.c.l.b16 %v4474
    %v4603 = vunpack.c.l.b16 %v4475
    %v4604 = vunpack.c.l.b16 %v4476
    %v4605 = vunpack.c.l.b16 %v4477
    %v4606 = vunpack.c.l.b16 %v4478
    %v4607 = vunpack.c.l.b16 %v4479
    %v4608 = vunpack.c.l.b16 %v4480
    %v4609 = vunpack.c.l.b16 %v4481
    %v4610 = vunpack.c.l.b16 %v4482
    %v4611 = vunpack.c.l.b16 %v4483
    %v4612 = vunpack.c.l.b16 %v4484
    %v4613 = vunpack.c.l.b16 %v4485
    %v4614 = vunpack.c.l.b16 %v4486
    %v4615 = vpack.c.b16 %v4600, %v4599
    %v4616 = vpack.c.b16 %v4602, %v4601
    %v4617 = vpack.c.b16 %v4604, %v4603
    %v4618 = vpack.c.b16 %v4606, %v4605
    %v4619 = vpack.c.b16 %v4608, %v4607
    %v4620 = vpack.c.b16 %v4610, %v4609
    %v4621 = vpack.c.b16 %v4612, %v4611
    %v4622 = vpack.c.b16 %v4614, %v4613
    %v4624 = vsel %vm346, %v4615, 0
    %v4627 = vsel %vm346, %v4616, 0
    %v4630 = vsel %vm346, %v4617, 0
    %v4633 = vsel %vm346, %v4618, 0
    %v4636 = vsel %vm346, %v4619, 0
    %v4639 = vsel %vm346, %v4620, 0
    %v4642 = vsel %vm346, %v4621, 0
    %v4645 = vsel %vm346, %v4622, 0
    %4647 = vmatprep.subr.bf16.mxu0 0
    %4648 = vmatpush1.bf16.msra.mxu0 %v434
    %4649 = vmatprep.subr.bf16.mxu0 0
    %4650 = vmatpush1.bf16.msra.mxu0 %v435
    %4651 = vmatprep.subr.bf16.mxu0 0
    %4652 = vmatpush1.bf16.msra.mxu0 %v436
    %4653 = vmatprep.subr.bf16.mxu0 0
    %4654 = vmatpush1.bf16.msra.mxu0 %v474
    %4655 = vmatprep.subr.bf16.mxu0 0
    %4656 = vmatpush1.bf16.msra.mxu0 0
    %4657 = vmatprep.subr.bf16.mxu0 0
    %4658 = vmatpush1.bf16.msra.mxu0 0
    %4659 = vmatprep.subr.bf16.mxu0 0
    %4660 = vmatpush1.bf16.msra.mxu0 0
    %4661 = vmatprep.subr.bf16.mxu0 0
    %4662 = vmatpush1.bf16.msra.mxu0 0
    %4663 = vmatprep.subr.bf16.mxu0 0
    %4664 = vmatpush1.bf16.msra.mxu0 0
    %4665 = vmatprep.subr.bf16.mxu0 0
    %4666 = vmatpush1.bf16.msra.mxu0 0
    %4667 = vmatprep.subr.bf16.mxu0 0
    %4668 = vmatpush1.bf16.msra.mxu0 0
    %4669 = vmatprep.subr.bf16.mxu0 0
    %4670 = vmatpush1.bf16.msra.mxu0 0
    %4671 = vmatprep.subr.bf16.mxu0 0
    %4672 = vmatpush1.bf16.msra.mxu0 0
    %4673 = vmatprep.subr.bf16.mxu0 0
    %4674 = vmatpush1.bf16.msra.mxu0 0
    %4675 = vmatprep.subr.bf16.mxu0 0
    %4676 = vmatpush1.bf16.msra.mxu0 0
    %4677 = vmatprep.subr.bf16.mxu0 0
    %4678 = vmatpush1.bf16.msra.mxu0 0
    %4679 = vmatprep.mubr.bf16.mxu0 0
    %4680 = vmatmul.mubr.bf16.gmra.mrb[0].mxu0 %v4624
    %v4681 = vpop.f32.mrb[0].mxu0
    %v4682 = vadd.f32 %v4506, %v4681
    %v4683 = vpop.f32.mrb[0].mxu0
    %v4684 = vpop.f32.mrb[0].mxu0
    %v4685 = vadd.f32 %v4511, %v4684
    %v4686 = vpop.f32.mrb[0].mxu0
    %4687 = vmatprep.mubr.bf16.mxu0 0
    %4688 = vmatmul.mubr.bf16.gmra.mrb[0].mxu0 %v4627
    %v4689 = vpop.f32.mrb[0].mxu0
    %v4690 = vadd.f32 %v4516, %v4689
    %v4691 = vpop.f32.mrb[0].mxu0
    %v4692 = vpop.f32.mrb[0].mxu0
    %v4693 = vadd.f32 %v4521, %v4692
    %v4694 = vpop.f32.mrb[0].mxu0
    %4695 = vmatprep.mubr.bf16.mxu0 0
    %4696 = vmatmul.mubr.bf16.gmra.mrb[0].mxu0 %v4630
    %v4697 = vpop.f32.mrb[0].mxu0
    %v4698 = vadd.f32 %v4526, %v4697
    %v4699 = vpop.f32.mrb[0].mxu0
    %v4700 = vpop.f32.mrb[0].mxu0
    %v4701 = vadd.f32 %v4531, %v4700
    %v4702 = vpop.f32.mrb[0].mxu0
    %4703 = vmatprep.mubr.bf16.mxu0 0
    %4704 = vmatmul.mubr.bf16.gmra.mrb[0].mxu0 %v4633
    %v4705 = vpop.f32.mrb[0].mxu0
    %v4706 = vadd.f32 %v4536, %v4705
    %v4707 = vpop.f32.mrb[0].mxu0
    %v4708 = vpop.f32.mrb[0].mxu0
    %v4709 = vadd.f32 %v4541, %v4708
    %v4710 = vpop.f32.mrb[0].mxu0
    %4711 = vmatprep.mubr.bf16.mxu0 0
    %4712 = vmatmul.mubr.bf16.gmra.mrb[0].mxu0 %v4636
    %v4713 = vpop.f32.mrb[0].mxu0
    %v4714 = vadd.f32 %v4546, %v4713
    %v4715 = vpop.f32.mrb[0].mxu0
    %v4716 = vpop.f32.mrb[0].mxu0
    %v4717 = vadd.f32 %v4551, %v4716
    %v4718 = vpop.f32.mrb[0].mxu0
    %4719 = vmatprep.mubr.bf16.mxu0 0
    %4720 = vmatmul.mubr.bf16.gmra.mrb[0].mxu0 %v4639
    %v4721 = vpop.f32.mrb[0].mxu0
    %v4722 = vadd.f32 %v4556, %v4721
    %v4723 = vpop.f32.mrb[0].mxu0
    %v4724 = vpop.f32.mrb[0].mxu0
    %v4725 = vadd.f32 %v4561, %v4724
    %v4726 = vpop.f32.mrb[0].mxu0
    %4727 = vmatprep.mubr.bf16.mxu0 0
    %4728 = vmatmul.mubr.bf16.gmra.mrb[0].mxu0 %v4642
    %v4729 = vpop.f32.mrb[0].mxu0
    %v4730 = vadd.f32 %v4566, %v4729
    %v4731 = vpop.f32.mrb[0].mxu0
    %v4732 = vpop.f32.mrb[0].mxu0
    %v4733 = vadd.f32 %v4571, %v4732
    %v4734 = vpop.f32.mrb[0].mxu0
    %4735 = vmatprep.mubr.bf16.mxu0 0
    %4736 = vmatmul.mubr.bf16.gmra.mrb[0].mxu0 %v4645
    %v4737 = vpop.f32.mrb[0].mxu0
    %v4738 = vadd.f32 %v4576, %v4737
    %v4739 = vpop.f32.mrb[0].mxu0
    %v4740 = vpop.f32.mrb[0].mxu0
    %v4741 = vadd.f32 %v4581, %v4740
    %v4742 = vpop.f32.mrb[0].mxu0
    %4743 = vdwg.mxu0
    %v4744 = vmax.f32 %v4682, 0.0
    %v4745 = vmax.f32 %v4685, 0.0
    %v4746 = vmax.f32 %v4690, 0.0
    %v4747 = vmax.f32 %v4693, 0.0
    %v4748 = vmax.f32 %v4698, 0.0
    %v4749 = vmax.f32 %v4701, 0.0
    %v4750 = vmax.f32 %v4706, 0.0
    %v4751 = vmax.f32 %v4709, 0.0
    %v4752 = vmax.f32 %v4714, 0.0
    %v4753 = vmax.f32 %v4717, 0.0
    %v4754 = vmax.f32 %v4722, 0.0
    %v4755 = vmax.f32 %v4725, 0.0
    %v4756 = vmax.f32 %v4730, 0.0
    %v4757 = vmax.f32 %v4733, 0.0
    %v4758 = vmax.f32 %v4738, 0.0
    %v4759 = vmax.f32 %v4741, 0.0
    %s4760 = scalar_lea.vmem %s11, 384
    %v4761 = vld [vmem:[%s4760] sm:$0xf]
    %v4762 = vld [vmem:[%s4760 + $0x4] sm:$0xf]
    %v4763 = vld [vmem:[%s4760 + $0x8] sm:$0xf]
    %v4764 = vld [vmem:[%s4760 + $0xc] sm:$0xf]
    %v4765 = vld [vmem:[%s4760 + $0x10] sm:$0xf]
    %v4766 = vld [vmem:[%s4760 + $0x14] sm:$0xf]
    %v4767 = vld [vmem:[%s4760 + $0x18] sm:$0xf]
    %v4768 = vld [vmem:[%s4760 + $0x1c] sm:$0xf]
    %v4769 = vld [vmem:[%s4760 + $0x20] sm:$0xf]
    %v4770 = vld [vmem:[%s4760 + $0x24] sm:$0xf]
    %v4771 = vld [vmem:[%s4760 + $0x28] sm:$0xf]
    %v4772 = vld [vmem:[%s4760 + $0x2c] sm:$0xf]
    %v4773 = vld [vmem:[%s4760 + $0x30] sm:$0xf]
    %v4774 = vld [vmem:[%s4760 + $0x34] sm:$0xf]
    %v4775 = vld [vmem:[%s4760 + $0x38] sm:$0xf]
    %v4776 = vld [vmem:[%s4760 + $0x3c] sm:$0xf]
    %v4777 = vpack.c.bf16 %v4745, %v4744
    %v4778 = vpack.c.bf16 %v4747, %v4746
    %v4779 = vpack.c.bf16 %v4749, %v4748
    %v4780 = vpack.c.bf16 %v4751, %v4750
    %v4781 = vpack.c.bf16 %v4753, %v4752
    %v4782 = vpack.c.bf16 %v4755, %v4754
    %v4783 = vpack.c.bf16 %v4757, %v4756
    %v4784 = vpack.c.bf16 %v4759, %v4758
    %s4785 = scalar_lea.vmem %s12, 768
    %v4786 = vld [vmem:[%s4785] sm:$0xff]
    %v4787 = vld [vmem:[%s4785 + $0x8] sm:$0xff]
    %v4788 = vld [vmem:[%s4785 + $0x10] sm:$0xff]
    %v4789 = vld [vmem:[%s4785 + $0x18] sm:$0xff]
    %v4790 = vld [vmem:[%s4785 + $0x20] sm:$0xff]
    %v4791 = vld [vmem:[%s4785 + $0x28] sm:$0xff]
    %v4792 = vld [vmem:[%s4785 + $0x30] sm:$0xff]
    %v4793 = vld [vmem:[%s4785 + $0x38] sm:$0xff]
    %v4794 = vld [vmem:[%s4785 + $0x40] sm:$0xff]
    %v4795 = vld [vmem:[%s4785 + $0x48] sm:$0xff]
    %v4796 = vld [vmem:[%s4785 + $0x50] sm:$0xff]
    %v4797 = vld [vmem:[%s4785 + $0x58] sm:$0xff]
    %v4798 = vld [vmem:[%s4785 + $0x60] sm:$0xff]
    %v4799 = vld [vmem:[%s4785 + $0x68] sm:$0xff]
    %v4800 = vld [vmem:[%s4785 + $0x70] sm:$0xff]
    %v4801 = vld [vmem:[%s4785 + $0x78] sm:$0xff]
    %4803 = vset.pattern.permute.xlu0 0
    %4804 = vperm.xlu0 %4803, %v4786
    %v4805 = vpop.permute.xlu0 %4804
    %4808 = vset.pattern.permute.xlu0 0
    %4809 = vperm.xlu0 %4808, %v4787
    %v4810 = vpop.permute.xlu0 %4809
    %4813 = vset.pattern.permute.xlu0 0
    %4814 = vperm.xlu0 %4813, %v4788
    %v4815 = vpop.permute.xlu0 %4814
    %4818 = vset.pattern.permute.xlu0 0
    %4819 = vperm.xlu0 %4818, %v4789
    %v4820 = vpop.permute.xlu0 %4819
    %4823 = vset.pattern.permute.xlu0 0
    %4824 = vperm.xlu0 %4823, %v4790
    %v4825 = vpop.permute.xlu0 %4824
    %4828 = vset.pattern.permute.xlu0 0
    %4829 = vperm.xlu0 %4828, %v4791
    %v4830 = vpop.permute.xlu0 %4829
    %4833 = vset.pattern.permute.xlu0 0
    %4834 = vperm.xlu0 %4833, %v4792
    %v4835 = vpop.permute.xlu0 %4834
    %4838 = vset.pattern.permute.xlu0 0
    %4839 = vperm.xlu0 %4838, %v4793
    %v4840 = vpop.permute.xlu0 %4839
    %4843 = vset.pattern.permute.xlu0 0
    %4844 = vperm.xlu0 %4843, %v4794
    %v4845 = vpop.permute.xlu0 %4844
    %4848 = vset.pattern.permute.xlu0 0
    %4849 = vperm.xlu0 %4848, %v4795
    %v4850 = vpop.permute.xlu0 %4849
    %4853 = vset.pattern.permute.xlu0 0
    %4854 = vperm.xlu0 %4853, %v4796
    %v4855 = vpop.permute.xlu0 %4854
    %4858 = vset.pattern.permute.xlu0 0
    %4859 = vperm.xlu0 %4858, %v4797
    %v4860 = vpop.permute.xlu0 %4859
    %4863 = vset.pattern.permute.xlu0 0
    %4864 = vperm.xlu0 %4863, %v4798
    %v4865 = vpop.permute.xlu0 %4864
    %4868 = vset.pattern.permute.xlu0 0
    %4869 = vperm.xlu0 %4868, %v4799
    %v4870 = vpop.permute.xlu0 %4869
    %4873 = vset.pattern.permute.xlu0 0
    %4874 = vperm.xlu0 %4873, %v4800
    %v4875 = vpop.permute.xlu0 %4874
    %4878 = vset.pattern.permute.xlu0 0
    %4879 = vperm.xlu0 %4878, %v4801
    %v4880 = vpop.permute.xlu0 %4879
    %v4898 = vunpack.c.l.b16 %v4761
    %v4899 = vunpack.c.l.b16 %v4762
    %v4900 = vunpack.c.l.b16 %v4763
    %v4901 = vunpack.c.l.b16 %v4764
    %v4902 = vunpack.c.l.b16 %v4765
    %v4903 = vunpack.c.l.b16 %v4766
    %v4904 = vunpack.c.l.b16 %v4767
    %v4905 = vunpack.c.l.b16 %v4768
    %v4906 = vunpack.c.l.b16 %v4769
    %v4907 = vunpack.c.l.b16 %v4770
    %v4908 = vunpack.c.l.b16 %v4771
    %v4909 = vunpack.c.l.b16 %v4772
    %v4910 = vunpack.c.l.b16 %v4773
    %v4911 = vunpack.c.l.b16 %v4774
    %v4912 = vunpack.c.l.b16 %v4775
    %v4913 = vunpack.c.l.b16 %v4776
    %v4914 = vpack.c.b16 %v4899, %v4898
    %v4915 = vpack.c.b16 %v4901, %v4900
    %v4916 = vpack.c.b16 %v4903, %v4902
    %v4917 = vpack.c.b16 %v4905, %v4904
    %v4918 = vpack.c.b16 %v4907, %v4906
    %v4919 = vpack.c.b16 %v4909, %v4908
    %v4920 = vpack.c.b16 %v4911, %v4910
    %v4921 = vpack.c.b16 %v4913, %v4912
    %4930 = vmatprep.subr.bf16.mxu0 0
    %4931 = vmatpush1.bf16.msra.mxu0 %v4777
    %4932 = vmatprep.subr.bf16.mxu0 0
    %4933 = vmatpush1.bf16.msra.mxu0 %v4778
    %4934 = vmatprep.subr.bf16.mxu0 0
    %4935 = vmatpush1.bf16.msra.mxu0 %v4779
    %4936 = vmatprep.subr.bf16.mxu0 0
    %4937 = vmatpush1.bf16.msra.mxu0 %v4780
    %4938 = vmatprep.subr.bf16.mxu0 0
    %4939 = vmatpush1.bf16.msra.mxu0 %v4781
    %4940 = vmatprep.subr.bf16.mxu0 0
    %4941 = vmatpush1.bf16.msra.mxu0 %v4782
    %4942 = vmatprep.subr.bf16.mxu0 0
    %4943 = vmatpush1.bf16.msra.mxu0 %v4783
    %4944 = vmatprep.subr.bf16.mxu0 0
    %4945 = vmatpush1.bf16.msra.mxu0 %v4784
    %4946 = vmatprep.subr.bf16.mxu0 0
    %4947 = vmatpush1.bf16.msra.mxu0 0
    %4948 = vmatprep.subr.bf16.mxu0 0
    %4949 = vmatpush1.bf16.msra.mxu0 0
    %4950 = vmatprep.subr.bf16.mxu0 0
    %4951 = vmatpush1.bf16.msra.mxu0 0
    %4952 = vmatprep.subr.bf16.mxu0 0
    %4953 = vmatpush1.bf16.msra.mxu0 0
    %4954 = vmatprep.subr.bf16.mxu0 0
    %4955 = vmatpush1.bf16.msra.mxu0 0
    %4956 = vmatprep.subr.bf16.mxu0 0
    %4957 = vmatpush1.bf16.msra.mxu0 0
    %4958 = vmatprep.subr.bf16.mxu0 0
    %4959 = vmatpush1.bf16.msra.mxu0 0
    %4960 = vmatprep.subr.bf16.mxu0 0
    %4961 = vmatpush1.bf16.msra.mxu0 0
    %4962 = vmatprep.mubr.bf16.mxu0 0
    %4963 = vmatmul.mubr.bf16.gmra.mrb[0].mxu0 %v4914
    %v4964 = vpop.f32.mrb[0].mxu0
    %v4965 = vadd.f32 %v4805, %v4964
    %v4966 = vpop.f32.mrb[0].mxu0
    %v4967 = vpop.f32.mrb[0].mxu0
    %v4968 = vadd.f32 %v4810, %v4967
    %v4969 = vpop.f32.mrb[0].mxu0
    %4970 = vmatprep.mubr.bf16.mxu0 0
    %4971 = vmatmul.mubr.bf16.gmra.mrb[0].mxu0 %v4915
    %v4972 = vpop.f32.mrb[0].mxu0
    %v4973 = vadd.f32 %v4815, %v4972
    %v4974 = vpop.f32.mrb[0].mxu0
    %v4975 = vpop.f32.mrb[0].mxu0
    %v4976 = vadd.f32 %v4820, %v4975
    %v4977 = vpop.f32.mrb[0].mxu0
    %4978 = vmatprep.mubr.bf16.mxu0 0
    %4979 = vmatmul.mubr.bf16.gmra.mrb[0].mxu0 %v4916
    %v4980 = vpop.f32.mrb[0].mxu0
    %v4981 = vadd.f32 %v4825, %v4980
    %v4982 = vpop.f32.mrb[0].mxu0
    %v4983 = vpop.f32.mrb[0].mxu0
    %v4984 = vadd.f32 %v4830, %v4983
    %v4985 = vpop.f32.mrb[0].mxu0
    %4986 = vmatprep.mubr.bf16.mxu0 0
    %4987 = vmatmul.mubr.bf16.gmra.mrb[0].mxu0 %v4917
    %v4988 = vpop.f32.mrb[0].mxu0
    %v4989 = vadd.f32 %v4835, %v4988
    %v4990 = vpop.f32.mrb[0].mxu0
    %v4991 = vpop.f32.mrb[0].mxu0
    %v4992 = vadd.f32 %v4840, %v4991
    %v4993 = vpop.f32.mrb[0].mxu0
    %4994 = vmatprep.mubr.bf16.mxu0 0
    %4995 = vmatmul.mubr.bf16.gmra.mrb[0].mxu0 %v4918
    %v4996 = vpop.f32.mrb[0].mxu0
    %v4997 = vadd.f32 %v4845, %v4996
    %v4998 = vpop.f32.mrb[0].mxu0
    %v4999 = vpop.f32.mrb[0].mxu0
    %v5000 = vadd.f32 %v4850, %v4999
    %v5001 = vpop.f32.mrb[0].mxu0
    %5002 = vmatprep.mubr.bf16.mxu0 0
    %5003 = vmatmul.mubr.bf16.gmra.mrb[0].mxu0 %v4919
    %v5004 = vpop.f32.mrb[0].mxu0
    %v5005 = vadd.f32 %v4855, %v5004
    %v5006 = vpop.f32.mrb[0].mxu0
    %v5007 = vpop.f32.mrb[0].mxu0
    %v5008 = vadd.f32 %v4860, %v5007
    %v5009 = vpop.f32.mrb[0].mxu0
    %5010 = vmatprep.mubr.bf16.mxu0 0
    %5011 = vmatmul.mubr.bf16.gmra.mrb[0].mxu0 %v4920
    %v5012 = vpop.f32.mrb[0].mxu0
    %v5013 = vadd.f32 %v4865, %v5012
    %v5014 = vpop.f32.mrb[0].mxu0
    %v5015 = vpop.f32.mrb[0].mxu0
    %v5016 = vadd.f32 %v4870, %v5015
    %v5017 = vpop.f32.mrb[0].mxu0
    %5018 = vmatprep.mubr.bf16.mxu0 0
    %5019 = vmatmul.mubr.bf16.gmra.mrb[0].mxu0 %v4921
    %v5020 = vpop.f32.mrb[0].mxu0
    %v5021 = vadd.f32 %v4875, %v5020
    %v5022 = vpop.f32.mrb[0].mxu0
    %v5023 = vpop.f32.mrb[0].mxu0
    %v5024 = vadd.f32 %v4880, %v5023
    %v5025 = vpop.f32.mrb[0].mxu0
    %5026 = vdwg.mxu0
    %v5027 = vmax.f32 %v4965, 0.0
    %v5028 = vmax.f32 %v4968, 0.0
    %v5029 = vmax.f32 %v4973, 0.0
    %v5030 = vmax.f32 %v4976, 0.0
    %v5031 = vmax.f32 %v4981, 0.0
    %v5032 = vmax.f32 %v4984, 0.0
    %v5033 = vmax.f32 %v4989, 0.0
    %v5034 = vmax.f32 %v4992, 0.0
    %v5035 = vmax.f32 %v4997, 0.0
    %v5036 = vmax.f32 %v5000, 0.0
    %v5037 = vmax.f32 %v5005, 0.0
    %v5038 = vmax.f32 %v5008, 0.0
    %v5039 = vmax.f32 %v5013, 0.0
    %v5040 = vmax.f32 %v5016, 0.0
    %v5041 = vmax.f32 %v5021, 0.0
    %v5042 = vmax.f32 %v5024, 0.0
    %v5043 = vld [vmem:[%s13 + $0x18] sm:$0xf]
    %v5044 = vld [vmem:[%s13 + $0x50] sm:$0xf]
    %v5045 = vld [vmem:[%s13 + $0x88] sm:$0xf]
    %v5046 = vld [vmem:[%s13 + $0xc0] sm:$0xf]
    %v5047 = vpack.c.bf16 %v5028, %v5027
    %v5048 = vpack.c.bf16 %v5030, %v5029
    %v5049 = vpack.c.bf16 %v5032, %v5031
    %v5050 = vpack.c.bf16 %v5034, %v5033
    %v5051 = vpack.c.bf16 %v5036, %v5035
    %v5052 = vpack.c.bf16 %v5038, %v5037
    %v5053 = vpack.c.bf16 %v5040, %v5039
    %v5054 = vpack.c.bf16 %v5042, %v5041
    %v5059 = vunpack.c.l.b16 %v5043
    %v5060 = vunpack.c.l.b16 %v5044
    %v5061 = vunpack.c.l.b16 %v5045
    %v5062 = vunpack.c.l.b16 %v5046
    %v5063 = vpack.c.b16 %v5060, %v5059
    %v5064 = vpack.c.b16 %v5062, %v5061
    %5067 = vmatprep.subr.bf16.mxu0 0
    %5068 = vmatpush1.bf16.msra.mxu0 %v5047
    %5069 = vmatprep.subr.bf16.mxu0 0
    %5070 = vmatpush1.bf16.msra.mxu0 %v5048
    %5071 = vmatprep.subr.bf16.mxu0 0
    %5072 = vmatpush1.bf16.msra.mxu0 %v5049
    %5073 = vmatprep.subr.bf16.mxu0 0
    %5074 = vmatpush1.bf16.msra.mxu0 %v5050
    %5075 = vmatprep.subr.bf16.mxu0 0
    %5076 = vmatpush1.bf16.msra.mxu0 %v5051
    %5077 = vmatprep.subr.bf16.mxu0 0
    %5078 = vmatpush1.bf16.msra.mxu0 %v5052
    %5079 = vmatprep.subr.bf16.mxu0 0
    %5080 = vmatpush1.bf16.msra.mxu0 %v5053
    %5081 = vmatprep.subr.bf16.mxu0 0
    %5082 = vmatpush1.bf16.msra.mxu0 %v5054
    %5083 = vmatprep.subr.bf16.mxu0 0
    %5084 = vmatpush1.bf16.msra.mxu0 0
    %5085 = vmatprep.subr.bf16.mxu0 0
    %5086 = vmatpush1.bf16.msra.mxu0 0
    %5087 = vmatprep.subr.bf16.mxu0 0
    %5088 = vmatpush1.bf16.msra.mxu0 0
    %5089 = vmatprep.subr.bf16.mxu0 0
    %5090 = vmatpush1.bf16.msra.mxu0 0
    %5091 = vmatprep.subr.bf16.mxu0 0
    %5092 = vmatpush1.bf16.msra.mxu0 0
    %5093 = vmatprep.subr.bf16.mxu0 0
    %5094 = vmatpush1.bf16.msra.mxu0 0
    %5095 = vmatprep.subr.bf16.mxu0 0
    %5096 = vmatpush1.bf16.msra.mxu0 0
    %5097 = vmatprep.subr.bf16.mxu0 0
    %5098 = vmatpush1.bf16.msra.mxu0 0
    %5099 = vmatprep.mubr.bf16.mxu0 0
    %5100 = vmatmul.mubr.bf16.gmra.mrb[0].mxu0 %v5063
    %v5101 = vpop.f32.mrb[0].mxu0
    %v5102 = vadd.f32 0.0, %v5101
    %v5103 = vpop.f32.mrb[0].mxu0
    %v5104 = vpop.f32.mrb[0].mxu0
    %v5105 = vadd.f32 0.0, %v5104
    %v5106 = vpop.f32.mrb[0].mxu0
    %5107 = vmatprep.mubr.bf16.mxu0 0
    %5108 = vmatmul.mubr.bf16.gmra.mrb[0].mxu0 %v5064
    %v5109 = vpop.f32.mrb[0].mxu0
    %v5110 = vadd.f32 0.0, %v5109
    %v5111 = vpop.f32.mrb[0].mxu0
    %v5112 = vpop.f32.mrb[0].mxu0
    %v5113 = vadd.f32 0.0, %v5112
    %v5114 = vpop.f32.mrb[0].mxu0
    %5115 = vdwg.mxu0
    %v5116 = vadd.f32 %v4467, %v5102
    %v5117 = vadd.f32 %v4468, %v5105
    %v5118 = vadd.f32 %v4469, %v5110
    %v5119 = vadd.f32 %v4470, %v5113
    %v5120 = vld [vmem:[%s9 + $0x1c0] sm:$0xf]
    %v5121 = vld [vmem:[%s9 + $0x1c4] sm:$0xf]
    %v5122 = vld [vmem:[%s9 + $0x1c8] sm:$0xf]
    %v5123 = vld [vmem:[%s9 + $0x1cc] sm:$0xf]
    %v5124 = vld [vmem:[%s9 + $0x1d0] sm:$0xf]
    %v5125 = vld [vmem:[%s9 + $0x1d4] sm:$0xf]
    %v5126 = vld [vmem:[%s9 + $0x1d8] sm:$0xf]
    %v5127 = vld [vmem:[%s9 + $0x1dc] sm:$0xf]
    %v5128 = vld [vmem:[%s9 + $0x1e0] sm:$0xf]
    %v5129 = vld [vmem:[%s9 + $0x1e4] sm:$0xf]
    %v5130 = vld [vmem:[%s9 + $0x1e8] sm:$0xf]
    %v5131 = vld [vmem:[%s9 + $0x1ec] sm:$0xf]
    %v5132 = vld [vmem:[%s9 + $0x1f0] sm:$0xf]
    %v5133 = vld [vmem:[%s9 + $0x1f4] sm:$0xf]
    %v5134 = vld [vmem:[%s9 + $0x1f8] sm:$0xf]
    %v5135 = vld [vmem:[%s9 + $0x1fc] sm:$0xf]
    %v5136 = vld [vmem:[%s10 + $0x380] sm:$0xff]
    %v5137 = vld [vmem:[%s10 + $0x388] sm:$0xff]
    %v5138 = vld [vmem:[%s10 + $0x390] sm:$0xff]
    %v5139 = vld [vmem:[%s10 + $0x398] sm:$0xff]
    %v5140 = vld [vmem:[%s10 + $0x3a0] sm:$0xff]
    %v5141 = vld [vmem:[%s10 + $0x3a8] sm:$0xff]
    %v5142 = vld [vmem:[%s10 + $0x3b0] sm:$0xff]
    %v5143 = vld [vmem:[%s10 + $0x3b8] sm:$0xff]
    %v5144 = vld [vmem:[%s10 + $0x3c0] sm:$0xff]
    %v5145 = vld [vmem:[%s10 + $0x3c8] sm:$0xff]
    %v5146 = vld [vmem:[%s10 + $0x3d0] sm:$0xff]
    %v5147 = vld [vmem:[%s10 + $0x3d8] sm:$0xff]
    %v5148 = vld [vmem:[%s10 + $0x3e0] sm:$0xff]
    %v5149 = vld [vmem:[%s10 + $0x3e8] sm:$0xff]
    %v5150 = vld [vmem:[%s10 + $0x3f0] sm:$0xff]
    %v5151 = vld [vmem:[%s10 + $0x3f8] sm:$0xff]
    %5153 = vset.pattern.permute.xlu0 0
    %5154 = vperm.xlu0 %5153, %v5136
    %v5155 = vpop.permute.xlu0 %5154
    %5158 = vset.pattern.permute.xlu0 0
    %5159 = vperm.xlu0 %5158, %v5137
    %v5160 = vpop.permute.xlu0 %5159
    %5163 = vset.pattern.permute.xlu0 0
    %5164 = vperm.xlu0 %5163, %v5138
    %v5165 = vpop.permute.xlu0 %5164
    %5168 = vset.pattern.permute.xlu0 0
    %5169 = vperm.xlu0 %5168, %v5139
    %v5170 = vpop.permute.xlu0 %5169
    %5173 = vset.pattern.permute.xlu0 0
    %5174 = vperm.xlu0 %5173, %v5140
    %v5175 = vpop.permute.xlu0 %5174
    %5178 = vset.pattern.permute.xlu0 0
    %5179 = vperm.xlu0 %5178, %v5141
    %v5180 = vpop.permute.xlu0 %5179
    %5183 = vset.pattern.permute.xlu0 0
    %5184 = vperm.xlu0 %5183, %v5142
    %v5185 = vpop.permute.xlu0 %5184
    %5188 = vset.pattern.permute.xlu0 0
    %5189 = vperm.xlu0 %5188, %v5143
    %v5190 = vpop.permute.xlu0 %5189
    %5193 = vset.pattern.permute.xlu0 0
    %5194 = vperm.xlu0 %5193, %v5144
    %v5195 = vpop.permute.xlu0 %5194
    %5198 = vset.pattern.permute.xlu0 0
    %5199 = vperm.xlu0 %5198, %v5145
    %v5200 = vpop.permute.xlu0 %5199
    %5203 = vset.pattern.permute.xlu0 0
    %5204 = vperm.xlu0 %5203, %v5146
    %v5205 = vpop.permute.xlu0 %5204
    %5208 = vset.pattern.permute.xlu0 0
    %5209 = vperm.xlu0 %5208, %v5147
    %v5210 = vpop.permute.xlu0 %5209
    %5213 = vset.pattern.permute.xlu0 0
    %5214 = vperm.xlu0 %5213, %v5148
    %v5215 = vpop.permute.xlu0 %5214
    %5218 = vset.pattern.permute.xlu0 0
    %5219 = vperm.xlu0 %5218, %v5149
    %v5220 = vpop.permute.xlu0 %5219
    %5223 = vset.pattern.permute.xlu0 0
    %5224 = vperm.xlu0 %5223, %v5150
    %v5225 = vpop.permute.xlu0 %5224
    %5228 = vset.pattern.permute.xlu0 0
    %5229 = vperm.xlu0 %5228, %v5151
    %v5230 = vpop.permute.xlu0 %5229
    %v5248 = vunpack.c.l.b16 %v5120
    %v5249 = vunpack.c.l.b16 %v5121
    %v5250 = vunpack.c.l.b16 %v5122
    %v5251 = vunpack.c.l.b16 %v5123
    %v5252 = vunpack.c.l.b16 %v5124
    %v5253 = vunpack.c.l.b16 %v5125
    %v5254 = vunpack.c.l.b16 %v5126
    %v5255 = vunpack.c.l.b16 %v5127
    %v5256 = vunpack.c.l.b16 %v5128
    %v5257 = vunpack.c.l.b16 %v5129
    %v5258 = vunpack.c.l.b16 %v5130
    %v5259 = vunpack.c.l.b16 %v5131
    %v5260 = vunpack.c.l.b16 %v5132
    %v5261 = vunpack.c.l.b16 %v5133
    %v5262 = vunpack.c.l.b16 %v5134
    %v5263 = vunpack.c.l.b16 %v5135
    %v5264 = vpack.c.b16 %v5249, %v5248
    %v5265 = vpack.c.b16 %v5251, %v5250
    %v5266 = vpack.c.b16 %v5253, %v5252
    %v5267 = vpack.c.b16 %v5255, %v5254
    %v5268 = vpack.c.b16 %v5257, %v5256
    %v5269 = vpack.c.b16 %v5259, %v5258
    %v5270 = vpack.c.b16 %v5261, %v5260
    %v5271 = vpack.c.b16 %v5263, %v5262
    %v5273 = vsel %vm346, %v5264, 0
    %v5276 = vsel %vm346, %v5265, 0
    %v5279 = vsel %vm346, %v5266, 0
    %v5282 = vsel %vm346, %v5267, 0
    %v5285 = vsel %vm346, %v5268, 0
    %v5288 = vsel %vm346, %v5269, 0
    %v5291 = vsel %vm346, %v5270, 0
    %v5294 = vsel %vm346, %v5271, 0
    %5296 = vmatprep.subr.bf16.mxu0 0
    %5297 = vmatpush1.bf16.msra.mxu0 %v434
    %5298 = vmatprep.subr.bf16.mxu0 0
    %5299 = vmatpush1.bf16.msra.mxu0 %v435
    %5300 = vmatprep.subr.bf16.mxu0 0
    %5301 = vmatpush1.bf16.msra.mxu0 %v436
    %5302 = vmatprep.subr.bf16.mxu0 0
    %5303 = vmatpush1.bf16.msra.mxu0 %v474
    %5304 = vmatprep.subr.bf16.mxu0 0
    %5305 = vmatpush1.bf16.msra.mxu0 0
    %5306 = vmatprep.subr.bf16.mxu0 0
    %5307 = vmatpush1.bf16.msra.mxu0 0
    %5308 = vmatprep.subr.bf16.mxu0 0
    %5309 = vmatpush1.bf16.msra.mxu0 0
    %5310 = vmatprep.subr.bf16.mxu0 0
    %5311 = vmatpush1.bf16.msra.mxu0 0
    %5312 = vmatprep.subr.bf16.mxu0 0
    %5313 = vmatpush1.bf16.msra.mxu0 0
    %5314 = vmatprep.subr.bf16.mxu0 0
    %5315 = vmatpush1.bf16.msra.mxu0 0
    %5316 = vmatprep.subr.bf16.mxu0 0
    %5317 = vmatpush1.bf16.msra.mxu0 0
    %5318 = vmatprep.subr.bf16.mxu0 0
    %5319 = vmatpush1.bf16.msra.mxu0 0
    %5320 = vmatprep.subr.bf16.mxu0 0
    %5321 = vmatpush1.bf16.msra.mxu0 0
    %5322 = vmatprep.subr.bf16.mxu0 0
    %5323 = vmatpush1.bf16.msra.mxu0 0
    %5324 = vmatprep.subr.bf16.mxu0 0
    %5325 = vmatpush1.bf16.msra.mxu0 0
    %5326 = vmatprep.subr.bf16.mxu0 0
    %5327 = vmatpush1.bf16.msra.mxu0 0
    %5328 = vmatprep.mubr.bf16.mxu0 0
    %5329 = vmatmul.mubr.bf16.gmra.mrb[0].mxu0 %v5273
    %v5330 = vpop.f32.mrb[0].mxu0
    %v5331 = vadd.f32 %v5155, %v5330
    %v5332 = vpop.f32.mrb[0].mxu0
    %v5333 = vpop.f32.mrb[0].mxu0
    %v5334 = vadd.f32 %v5160, %v5333
    %v5335 = vpop.f32.mrb[0].mxu0
    %5336 = vmatprep.mubr.bf16.mxu0 0
    %5337 = vmatmul.mubr.bf16.gmra.mrb[0].mxu0 %v5276
    %v5338 = vpop.f32.mrb[0].mxu0
    %v5339 = vadd.f32 %v5165, %v5338
    %v5340 = vpop.f32.mrb[0].mxu0
    %v5341 = vpop.f32.mrb[0].mxu0
    %v5342 = vadd.f32 %v5170, %v5341
    %v5343 = vpop.f32.mrb[0].mxu0
    %5344 = vmatprep.mubr.bf16.mxu0 0
    %5345 = vmatmul.mubr.bf16.gmra.mrb[0].mxu0 %v5279
    %v5346 = vpop.f32.mrb[0].mxu0
    %v5347 = vadd.f32 %v5175, %v5346
    %v5348 = vpop.f32.mrb[0].mxu0
    %v5349 = vpop.f32.mrb[0].mxu0
    %v5350 = vadd.f32 %v5180, %v5349
    %v5351 = vpop.f32.mrb[0].mxu0
    %5352 = vmatprep.mubr.bf16.mxu0 0
    %5353 = vmatmul.mubr.bf16.gmra.mrb[0].mxu0 %v5282
    %v5354 = vpop.f32.mrb[0].mxu0
    %v5355 = vadd.f32 %v5185, %v5354
    %v5356 = vpop.f32.mrb[0].mxu0
    %v5357 = vpop.f32.mrb[0].mxu0
    %v5358 = vadd.f32 %v5190, %v5357
    %v5359 = vpop.f32.mrb[0].mxu0
    %5360 = vmatprep.mubr.bf16.mxu0 0
    %5361 = vmatmul.mubr.bf16.gmra.mrb[0].mxu0 %v5285
    %v5362 = vpop.f32.mrb[0].mxu0
    %v5363 = vadd.f32 %v5195, %v5362
    %v5364 = vpop.f32.mrb[0].mxu0
    %v5365 = vpop.f32.mrb[0].mxu0
    %v5366 = vadd.f32 %v5200, %v5365
    %v5367 = vpop.f32.mrb[0].mxu0
    %5368 = vmatprep.mubr.bf16.mxu0 0
    %5369 = vmatmul.mubr.bf16.gmra.mrb[0].mxu0 %v5288
    %v5370 = vpop.f32.mrb[0].mxu0
    %v5371 = vadd.f32 %v5205, %v5370
    %v5372 = vpop.f32.mrb[0].mxu0
    %v5373 = vpop.f32.mrb[0].mxu0
    %v5374 = vadd.f32 %v5210, %v5373
    %v5375 = vpop.f32.mrb[0].mxu0
    %5376 = vmatprep.mubr.bf16.mxu0 0
    %5377 = vmatmul.mubr.bf16.gmra.mrb[0].mxu0 %v5291
    %v5378 = vpop.f32.mrb[0].mxu0
    %v5379 = vadd.f32 %v5215, %v5378
    %v5380 = vpop.f32.mrb[0].mxu0
    %v5381 = vpop.f32.mrb[0].mxu0
    %v5382 = vadd.f32 %v5220, %v5381
    %v5383 = vpop.f32.mrb[0].mxu0
    %5384 = vmatprep.mubr.bf16.mxu0 0
    %5385 = vmatmul.mubr.bf16.gmra.mrb[0].mxu0 %v5294
    %v5386 = vpop.f32.mrb[0].mxu0
    %v5387 = vadd.f32 %v5225, %v5386
    %v5388 = vpop.f32.mrb[0].mxu0
    %v5389 = vpop.f32.mrb[0].mxu0
    %v5390 = vadd.f32 %v5230, %v5389
    %v5391 = vpop.f32.mrb[0].mxu0
    %5392 = vdwg.mxu0
    %v5393 = vmax.f32 %v5331, 0.0
    %v5394 = vmax.f32 %v5334, 0.0
    %v5395 = vmax.f32 %v5339, 0.0
    %v5396 = vmax.f32 %v5342, 0.0
    %v5397 = vmax.f32 %v5347, 0.0
    %v5398 = vmax.f32 %v5350, 0.0
    %v5399 = vmax.f32 %v5355, 0.0
    %v5400 = vmax.f32 %v5358, 0.0
    %v5401 = vmax.f32 %v5363, 0.0
    %v5402 = vmax.f32 %v5366, 0.0
    %v5403 = vmax.f32 %v5371, 0.0
    %v5404 = vmax.f32 %v5374, 0.0
    %v5405 = vmax.f32 %v5379, 0.0
    %v5406 = vmax.f32 %v5382, 0.0
    %v5407 = vmax.f32 %v5387, 0.0
    %v5408 = vmax.f32 %v5390, 0.0
    %s5409 = scalar_lea.vmem %s11, 448
    %v5410 = vld [vmem:[%s5409] sm:$0xf]
    %v5411 = vld [vmem:[%s5409 + $0x4] sm:$0xf]
    %v5412 = vld [vmem:[%s5409 + $0x8] sm:$0xf]
    %v5413 = vld [vmem:[%s5409 + $0xc] sm:$0xf]
    %v5414 = vld [vmem:[%s5409 + $0x10] sm:$0xf]
    %v5415 = vld [vmem:[%s5409 + $0x14] sm:$0xf]
    %v5416 = vld [vmem:[%s5409 + $0x18] sm:$0xf]
    %v5417 = vld [vmem:[%s5409 + $0x1c] sm:$0xf]
    %v5418 = vld [vmem:[%s5409 + $0x20] sm:$0xf]
    %v5419 = vld [vmem:[%s5409 + $0x24] sm:$0xf]
    %v5420 = vld [vmem:[%s5409 + $0x28] sm:$0xf]
    %v5421 = vld [vmem:[%s5409 + $0x2c] sm:$0xf]
    %v5422 = vld [vmem:[%s5409 + $0x30] sm:$0xf]
    %v5423 = vld [vmem:[%s5409 + $0x34] sm:$0xf]
    %v5424 = vld [vmem:[%s5409 + $0x38] sm:$0xf]
    %v5425 = vld [vmem:[%s5409 + $0x3c] sm:$0xf]
    %v5426 = vpack.c.bf16 %v5394, %v5393
    %v5427 = vpack.c.bf16 %v5396, %v5395
    %v5428 = vpack.c.bf16 %v5398, %v5397
    %v5429 = vpack.c.bf16 %v5400, %v5399
    %v5430 = vpack.c.bf16 %v5402, %v5401
    %v5431 = vpack.c.bf16 %v5404, %v5403
    %v5432 = vpack.c.bf16 %v5406, %v5405
    %v5433 = vpack.c.bf16 %v5408, %v5407
    %s5434 = scalar_lea.vmem %s12, 896
    %v5435 = vld [vmem:[%s5434] sm:$0xff]
    %v5436 = vld [vmem:[%s5434 + $0x8] sm:$0xff]
    %v5437 = vld [vmem:[%s5434 + $0x10] sm:$0xff]
    %v5438 = vld [vmem:[%s5434 + $0x18] sm:$0xff]
    %v5439 = vld [vmem:[%s5434 + $0x20] sm:$0xff]
    %v5440 = vld [vmem:[%s5434 + $0x28] sm:$0xff]
    %v5441 = vld [vmem:[%s5434 + $0x30] sm:$0xff]
    %v5442 = vld [vmem:[%s5434 + $0x38] sm:$0xff]
    %v5443 = vld [vmem:[%s5434 + $0x40] sm:$0xff]
    %v5444 = vld [vmem:[%s5434 + $0x48] sm:$0xff]
    %v5445 = vld [vmem:[%s5434 + $0x50] sm:$0xff]
    %v5446 = vld [vmem:[%s5434 + $0x58] sm:$0xff]
    %v5447 = vld [vmem:[%s5434 + $0x60] sm:$0xff]
    %v5448 = vld [vmem:[%s5434 + $0x68] sm:$0xff]
    %v5449 = vld [vmem:[%s5434 + $0x70] sm:$0xff]
    %v5450 = vld [vmem:[%s5434 + $0x78] sm:$0xff]
    %5452 = vset.pattern.permute.xlu0 0
    %5453 = vperm.xlu0 %5452, %v5435
    %v5454 = vpop.permute.xlu0 %5453
    %5457 = vset.pattern.permute.xlu0 0
    %5458 = vperm.xlu0 %5457, %v5436
    %v5459 = vpop.permute.xlu0 %5458
    %5462 = vset.pattern.permute.xlu0 0
    %5463 = vperm.xlu0 %5462, %v5437
    %v5464 = vpop.permute.xlu0 %5463
    %5467 = vset.pattern.permute.xlu0 0
    %5468 = vperm.xlu0 %5467, %v5438
    %v5469 = vpop.permute.xlu0 %5468
    %5472 = vset.pattern.permute.xlu0 0
    %5473 = vperm.xlu0 %5472, %v5439
    %v5474 = vpop.permute.xlu0 %5473
    %5477 = vset.pattern.permute.xlu0 0
    %5478 = vperm.xlu0 %5477, %v5440
    %v5479 = vpop.permute.xlu0 %5478
    %5482 = vset.pattern.permute.xlu0 0
    %5483 = vperm.xlu0 %5482, %v5441
    %v5484 = vpop.permute.xlu0 %5483
    %5487 = vset.pattern.permute.xlu0 0
    %5488 = vperm.xlu0 %5487, %v5442
    %v5489 = vpop.permute.xlu0 %5488
    %5492 = vset.pattern.permute.xlu0 0
    %5493 = vperm.xlu0 %5492, %v5443
    %v5494 = vpop.permute.xlu0 %5493
    %5497 = vset.pattern.permute.xlu0 0
    %5498 = vperm.xlu0 %5497, %v5444
    %v5499 = vpop.permute.xlu0 %5498
    %5502 = vset.pattern.permute.xlu0 0
    %5503 = vperm.xlu0 %5502, %v5445
    %v5504 = vpop.permute.xlu0 %5503
    %5507 = vset.pattern.permute.xlu0 0
    %5508 = vperm.xlu0 %5507, %v5446
    %v5509 = vpop.permute.xlu0 %5508
    %5512 = vset.pattern.permute.xlu0 0
    %5513 = vperm.xlu0 %5512, %v5447
    %v5514 = vpop.permute.xlu0 %5513
    %5517 = vset.pattern.permute.xlu0 0
    %5518 = vperm.xlu0 %5517, %v5448
    %v5519 = vpop.permute.xlu0 %5518
    %5522 = vset.pattern.permute.xlu0 0
    %5523 = vperm.xlu0 %5522, %v5449
    %v5524 = vpop.permute.xlu0 %5523
    %5527 = vset.pattern.permute.xlu0 0
    %5528 = vperm.xlu0 %5527, %v5450
    %v5529 = vpop.permute.xlu0 %5528
    %v5547 = vunpack.c.l.b16 %v5410
    %v5548 = vunpack.c.l.b16 %v5411
    %v5549 = vunpack.c.l.b16 %v5412
    %v5550 = vunpack.c.l.b16 %v5413
    %v5551 = vunpack.c.l.b16 %v5414
    %v5552 = vunpack.c.l.b16 %v5415
    %v5553 = vunpack.c.l.b16 %v5416
    %v5554 = vunpack.c.l.b16 %v5417
    %v5555 = vunpack.c.l.b16 %v5418
    %v5556 = vunpack.c.l.b16 %v5419
    %v5557 = vunpack.c.l.b16 %v5420
    %v5558 = vunpack.c.l.b16 %v5421
    %v5559 = vunpack.c.l.b16 %v5422
    %v5560 = vunpack.c.l.b16 %v5423
    %v5561 = vunpack.c.l.b16 %v5424
    %v5562 = vunpack.c.l.b16 %v5425
    %v5563 = vpack.c.b16 %v5548, %v5547
    %v5564 = vpack.c.b16 %v5550, %v5549
    %v5565 = vpack.c.b16 %v5552, %v5551
    %v5566 = vpack.c.b16 %v5554, %v5553
    %v5567 = vpack.c.b16 %v5556, %v5555
    %v5568 = vpack.c.b16 %v5558, %v5557
    %v5569 = vpack.c.b16 %v5560, %v5559
    %v5570 = vpack.c.b16 %v5562, %v5561
    %5579 = vmatprep.subr.bf16.mxu0 0
    %5580 = vmatpush1.bf16.msra.mxu0 %v5426
    %5581 = vmatprep.subr.bf16.mxu0 0
    %5582 = vmatpush1.bf16.msra.mxu0 %v5427
    %5583 = vmatprep.subr.bf16.mxu0 0
    %5584 = vmatpush1.bf16.msra.mxu0 %v5428
    %5585 = vmatprep.subr.bf16.mxu0 0
    %5586 = vmatpush1.bf16.msra.mxu0 %v5429
    %5587 = vmatprep.subr.bf16.mxu0 0
    %5588 = vmatpush1.bf16.msra.mxu0 %v5430
    %5589 = vmatprep.subr.bf16.mxu0 0
    %5590 = vmatpush1.bf16.msra.mxu0 %v5431
    %5591 = vmatprep.subr.bf16.mxu0 0
    %5592 = vmatpush1.bf16.msra.mxu0 %v5432
    %5593 = vmatprep.subr.bf16.mxu0 0
    %5594 = vmatpush1.bf16.msra.mxu0 %v5433
    %5595 = vmatprep.subr.bf16.mxu0 0
    %5596 = vmatpush1.bf16.msra.mxu0 0
    %5597 = vmatprep.subr.bf16.mxu0 0
    %5598 = vmatpush1.bf16.msra.mxu0 0
    %5599 = vmatprep.subr.bf16.mxu0 0
    %5600 = vmatpush1.bf16.msra.mxu0 0
    %5601 = vmatprep.subr.bf16.mxu0 0
    %5602 = vmatpush1.bf16.msra.mxu0 0
    %5603 = vmatprep.subr.bf16.mxu0 0
    %5604 = vmatpush1.bf16.msra.mxu0 0
    %5605 = vmatprep.subr.bf16.mxu0 0
    %5606 = vmatpush1.bf16.msra.mxu0 0
    %5607 = vmatprep.subr.bf16.mxu0 0
    %5608 = vmatpush1.bf16.msra.mxu0 0
    %5609 = vmatprep.subr.bf16.mxu0 0
    %5610 = vmatpush1.bf16.msra.mxu0 0
    %5611 = vmatprep.mubr.bf16.mxu0 0
    %5612 = vmatmul.mubr.bf16.gmra.mrb[0].mxu0 %v5563
    %v5613 = vpop.f32.mrb[0].mxu0
    %v5614 = vadd.f32 %v5454, %v5613
    %v5615 = vpop.f32.mrb[0].mxu0
    %v5616 = vpop.f32.mrb[0].mxu0
    %v5617 = vadd.f32 %v5459, %v5616
    %v5618 = vpop.f32.mrb[0].mxu0
    %5619 = vmatprep.mubr.bf16.mxu0 0
    %5620 = vmatmul.mubr.bf16.gmra.mrb[0].mxu0 %v5564
    %v5621 = vpop.f32.mrb[0].mxu0
    %v5622 = vadd.f32 %v5464, %v5621
    %v5623 = vpop.f32.mrb[0].mxu0
    %v5624 = vpop.f32.mrb[0].mxu0
    %v5625 = vadd.f32 %v5469, %v5624
    %v5626 = vpop.f32.mrb[0].mxu0
    %5627 = vmatprep.mubr.bf16.mxu0 0
    %5628 = vmatmul.mubr.bf16.gmra.mrb[0].mxu0 %v5565
    %v5629 = vpop.f32.mrb[0].mxu0
    %v5630 = vadd.f32 %v5474, %v5629
    %v5631 = vpop.f32.mrb[0].mxu0
    %v5632 = vpop.f32.mrb[0].mxu0
    %v5633 = vadd.f32 %v5479, %v5632
    %v5634 = vpop.f32.mrb[0].mxu0
    %5635 = vmatprep.mubr.bf16.mxu0 0
    %5636 = vmatmul.mubr.bf16.gmra.mrb[0].mxu0 %v5566
    %v5637 = vpop.f32.mrb[0].mxu0
    %v5638 = vadd.f32 %v5484, %v5637
    %v5639 = vpop.f32.mrb[0].mxu0
    %v5640 = vpop.f32.mrb[0].mxu0
    %v5641 = vadd.f32 %v5489, %v5640
    %v5642 = vpop.f32.mrb[0].mxu0
    %5643 = vmatprep.mubr.bf16.mxu0 0
    %5644 = vmatmul.mubr.bf16.gmra.mrb[0].mxu0 %v5567
    %v5645 = vpop.f32.mrb[0].mxu0
    %v5646 = vadd.f32 %v5494, %v5645
    %v5647 = vpop.f32.mrb[0].mxu0
    %v5648 = vpop.f32.mrb[0].mxu0
    %v5649 = vadd.f32 %v5499, %v5648
    %v5650 = vpop.f32.mrb[0].mxu0
    %5651 = vmatprep.mubr.bf16.mxu0 0
    %5652 = vmatmul.mubr.bf16.gmra.mrb[0].mxu0 %v5568
    %v5653 = vpop.f32.mrb[0].mxu0
    %v5654 = vadd.f32 %v5504, %v5653
    %v5655 = vpop.f32.mrb[0].mxu0
    %v5656 = vpop.f32.mrb[0].mxu0
    %v5657 = vadd.f32 %v5509, %v5656
    %v5658 = vpop.f32.mrb[0].mxu0
    %5659 = vmatprep.mubr.bf16.mxu0 0
    %5660 = vmatmul.mubr.bf16.gmra.mrb[0].mxu0 %v5569
    %v5661 = vpop.f32.mrb[0].mxu0
    %v5662 = vadd.f32 %v5514, %v5661
    %v5663 = vpop.f32.mrb[0].mxu0
    %v5664 = vpop.f32.mrb[0].mxu0
    %v5665 = vadd.f32 %v5519, %v5664
    %v5666 = vpop.f32.mrb[0].mxu0
    %5667 = vmatprep.mubr.bf16.mxu0 0
    %5668 = vmatmul.mubr.bf16.gmra.mrb[0].mxu0 %v5570
    %v5669 = vpop.f32.mrb[0].mxu0
    %v5670 = vadd.f32 %v5524, %v5669
    %v5671 = vpop.f32.mrb[0].mxu0
    %v5672 = vpop.f32.mrb[0].mxu0
    %v5673 = vadd.f32 %v5529, %v5672
    %v5674 = vpop.f32.mrb[0].mxu0
    %5675 = vdwg.mxu0
    %v5676 = vmax.f32 %v5614, 0.0
    %v5677 = vmax.f32 %v5617, 0.0
    %v5678 = vmax.f32 %v5622, 0.0
    %v5679 = vmax.f32 %v5625, 0.0
    %v5680 = vmax.f32 %v5630, 0.0
    %v5681 = vmax.f32 %v5633, 0.0
    %v5682 = vmax.f32 %v5638, 0.0
    %v5683 = vmax.f32 %v5641, 0.0
    %v5684 = vmax.f32 %v5646, 0.0
    %v5685 = vmax.f32 %v5649, 0.0
    %v5686 = vmax.f32 %v5654, 0.0
    %v5687 = vmax.f32 %v5657, 0.0
    %v5688 = vmax.f32 %v5662, 0.0
    %v5689 = vmax.f32 %v5665, 0.0
    %v5690 = vmax.f32 %v5670, 0.0
    %v5691 = vmax.f32 %v5673, 0.0
    %v5692 = vld [vmem:[%s13 + $0x1c] sm:$0xf]
    %v5693 = vld [vmem:[%s13 + $0x54] sm:$0xf]
    %v5694 = vld [vmem:[%s13 + $0x8c] sm:$0xf]
    %v5695 = vld [vmem:[%s13 + $0xc4] sm:$0xf]
    %v5696 = vpack.c.bf16 %v5677, %v5676
    %v5697 = vpack.c.bf16 %v5679, %v5678
    %v5698 = vpack.c.bf16 %v5681, %v5680
    %v5699 = vpack.c.bf16 %v5683, %v5682
    %v5700 = vpack.c.bf16 %v5685, %v5684
    %v5701 = vpack.c.bf16 %v5687, %v5686
    %v5702 = vpack.c.bf16 %v5689, %v5688
    %v5703 = vpack.c.bf16 %v5691, %v5690
    %v5708 = vunpack.c.l.b16 %v5692
    %v5709 = vunpack.c.l.b16 %v5693
    %v5710 = vunpack.c.l.b16 %v5694
    %v5711 = vunpack.c.l.b16 %v5695
    %v5712 = vpack.c.b16 %v5709, %v5708
    %v5713 = vpack.c.b16 %v5711, %v5710
    %5716 = vmatprep.subr.bf16.mxu0 0
    %5717 = vmatpush1.bf16.msra.mxu0 %v5696
    %5718 = vmatprep.subr.bf16.mxu0 0
    %5719 = vmatpush1.bf16.msra.mxu0 %v5697
    %5720 = vmatprep.subr.bf16.mxu0 0
    %5721 = vmatpush1.bf16.msra.mxu0 %v5698
    %5722 = vmatprep.subr.bf16.mxu0 0
    %5723 = vmatpush1.bf16.msra.mxu0 %v5699
    %5724 = vmatprep.subr.bf16.mxu0 0
    %5725 = vmatpush1.bf16.msra.mxu0 %v5700
    %5726 = vmatprep.subr.bf16.mxu0 0
    %5727 = vmatpush1.bf16.msra.mxu0 %v5701
    %5728 = vmatprep.subr.bf16.mxu0 0
    %5729 = vmatpush1.bf16.msra.mxu0 %v5702
    %5730 = vmatprep.subr.bf16.mxu0 0
    %5731 = vmatpush1.bf16.msra.mxu0 %v5703
    %5732 = vmatprep.subr.bf16.mxu0 0
    %5733 = vmatpush1.bf16.msra.mxu0 0
    %5734 = vmatprep.subr.bf16.mxu0 0
    %5735 = vmatpush1.bf16.msra.mxu0 0
    %5736 = vmatprep.subr.bf16.mxu0 0
    %5737 = vmatpush1.bf16.msra.mxu0 0
    %5738 = vmatprep.subr.bf16.mxu0 0
    %5739 = vmatpush1.bf16.msra.mxu0 0
    %5740 = vmatprep.subr.bf16.mxu0 0
    %5741 = vmatpush1.bf16.msra.mxu0 0
    %5742 = vmatprep.subr.bf16.mxu0 0
    %5743 = vmatpush1.bf16.msra.mxu0 0
    %5744 = vmatprep.subr.bf16.mxu0 0
    %5745 = vmatpush1.bf16.msra.mxu0 0
    %5746 = vmatprep.subr.bf16.mxu0 0
    %5747 = vmatpush1.bf16.msra.mxu0 0
    %5748 = vmatprep.mubr.bf16.mxu0 0
    %5749 = vmatmul.mubr.bf16.gmra.mrb[0].mxu0 %v5712
    %v5750 = vpop.f32.mrb[0].mxu0
    %v5751 = vadd.f32 0.0, %v5750
    %v5752 = vpop.f32.mrb[0].mxu0
    %v5753 = vpop.f32.mrb[0].mxu0
    %v5754 = vadd.f32 0.0, %v5753
    %v5755 = vpop.f32.mrb[0].mxu0
    %5756 = vmatprep.mubr.bf16.mxu0 0
    %5757 = vmatmul.mubr.bf16.gmra.mrb[0].mxu0 %v5713
    %v5758 = vpop.f32.mrb[0].mxu0
    %v5759 = vadd.f32 0.0, %v5758
    %v5760 = vpop.f32.mrb[0].mxu0
    %v5761 = vpop.f32.mrb[0].mxu0
    %v5762 = vadd.f32 0.0, %v5761
    %v5763 = vpop.f32.mrb[0].mxu0
    %5764 = vdwg.mxu0
    %v5765 = vadd.f32 %v5116, %v5751
    %v5766 = vadd.f32 %v5117, %v5754
    %v5767 = vadd.f32 %v5118, %v5759
    %v5768 = vadd.f32 %v5119, %v5762
    %v5769 = vld [vmem:[%s9 + $0x200] sm:$0xf]
    %v5770 = vld [vmem:[%s9 + $0x204] sm:$0xf]
    %v5771 = vld [vmem:[%s9 + $0x208] sm:$0xf]
    %v5772 = vld [vmem:[%s9 + $0x20c] sm:$0xf]
    %v5773 = vld [vmem:[%s9 + $0x210] sm:$0xf]
    %v5774 = vld [vmem:[%s9 + $0x214] sm:$0xf]
    %v5775 = vld [vmem:[%s9 + $0x218] sm:$0xf]
    %v5776 = vld [vmem:[%s9 + $0x21c] sm:$0xf]
    %v5777 = vld [vmem:[%s9 + $0x220] sm:$0xf]
    %v5778 = vld [vmem:[%s9 + $0x224] sm:$0xf]
    %v5779 = vld [vmem:[%s9 + $0x228] sm:$0xf]
    %v5780 = vld [vmem:[%s9 + $0x22c] sm:$0xf]
    %v5781 = vld [vmem:[%s9 + $0x230] sm:$0xf]
    %v5782 = vld [vmem:[%s9 + $0x234] sm:$0xf]
    %v5783 = vld [vmem:[%s9 + $0x238] sm:$0xf]
    %v5784 = vld [vmem:[%s9 + $0x23c] sm:$0xf]
    %v5785 = vld [vmem:[%s10 + $0x400] sm:$0xff]
    %v5786 = vld [vmem:[%s10 + $0x408] sm:$0xff]
    %v5787 = vld [vmem:[%s10 + $0x410] sm:$0xff]
    %v5788 = vld [vmem:[%s10 + $0x418] sm:$0xff]
    %v5789 = vld [vmem:[%s10 + $0x420] sm:$0xff]
    %v5790 = vld [vmem:[%s10 + $0x428] sm:$0xff]
    %v5791 = vld [vmem:[%s10 + $0x430] sm:$0xff]
    %v5792 = vld [vmem:[%s10 + $0x438] sm:$0xff]
    %v5793 = vld [vmem:[%s10 + $0x440] sm:$0xff]
    %v5794 = vld [vmem:[%s10 + $0x448] sm:$0xff]
    %v5795 = vld [vmem:[%s10 + $0x450] sm:$0xff]
    %v5796 = vld [vmem:[%s10 + $0x458] sm:$0xff]
    %v5797 = vld [vmem:[%s10 + $0x460] sm:$0xff]
    %v5798 = vld [vmem:[%s10 + $0x468] sm:$0xff]
    %v5799 = vld [vmem:[%s10 + $0x470] sm:$0xff]
    %v5800 = vld [vmem:[%s10 + $0x478] sm:$0xff]
    %5802 = vset.pattern.permute.xlu0 0
    %5803 = vperm.xlu0 %5802, %v5785
    %v5804 = vpop.permute.xlu0 %5803
    %5807 = vset.pattern.permute.xlu0 0
    %5808 = vperm.xlu0 %5807, %v5786
    %v5809 = vpop.permute.xlu0 %5808
    %5812 = vset.pattern.permute.xlu0 0
    %5813 = vperm.xlu0 %5812, %v5787
    %v5814 = vpop.permute.xlu0 %5813
    %5817 = vset.pattern.permute.xlu0 0
    %5818 = vperm.xlu0 %5817, %v5788
    %v5819 = vpop.permute.xlu0 %5818
    %5822 = vset.pattern.permute.xlu0 0
    %5823 = vperm.xlu0 %5822, %v5789
    %v5824 = vpop.permute.xlu0 %5823
    %5827 = vset.pattern.permute.xlu0 0
    %5828 = vperm.xlu0 %5827, %v5790
    %v5829 = vpop.permute.xlu0 %5828
    %5832 = vset.pattern.permute.xlu0 0
    %5833 = vperm.xlu0 %5832, %v5791
    %v5834 = vpop.permute.xlu0 %5833
    %5837 = vset.pattern.permute.xlu0 0
    %5838 = vperm.xlu0 %5837, %v5792
    %v5839 = vpop.permute.xlu0 %5838
    %5842 = vset.pattern.permute.xlu0 0
    %5843 = vperm.xlu0 %5842, %v5793
    %v5844 = vpop.permute.xlu0 %5843
    %5847 = vset.pattern.permute.xlu0 0
    %5848 = vperm.xlu0 %5847, %v5794
    %v5849 = vpop.permute.xlu0 %5848
    %5852 = vset.pattern.permute.xlu0 0
    %5853 = vperm.xlu0 %5852, %v5795
    %v5854 = vpop.permute.xlu0 %5853
    %5857 = vset.pattern.permute.xlu0 0
    %5858 = vperm.xlu0 %5857, %v5796
    %v5859 = vpop.permute.xlu0 %5858
    %5862 = vset.pattern.permute.xlu0 0
    %5863 = vperm.xlu0 %5862, %v5797
    %v5864 = vpop.permute.xlu0 %5863
    %5867 = vset.pattern.permute.xlu0 0
    %5868 = vperm.xlu0 %5867, %v5798
    %v5869 = vpop.permute.xlu0 %5868
    %5872 = vset.pattern.permute.xlu0 0
    %5873 = vperm.xlu0 %5872, %v5799
    %v5874 = vpop.permute.xlu0 %5873
    %5877 = vset.pattern.permute.xlu0 0
    %5878 = vperm.xlu0 %5877, %v5800
    %v5879 = vpop.permute.xlu0 %5878
    %v5897 = vunpack.c.l.b16 %v5769
    %v5898 = vunpack.c.l.b16 %v5770
    %v5899 = vunpack.c.l.b16 %v5771
    %v5900 = vunpack.c.l.b16 %v5772
    %v5901 = vunpack.c.l.b16 %v5773
    %v5902 = vunpack.c.l.b16 %v5774
    %v5903 = vunpack.c.l.b16 %v5775
    %v5904 = vunpack.c.l.b16 %v5776
    %v5905 = vunpack.c.l.b16 %v5777
    %v5906 = vunpack.c.l.b16 %v5778
    %v5907 = vunpack.c.l.b16 %v5779
    %v5908 = vunpack.c.l.b16 %v5780
    %v5909 = vunpack.c.l.b16 %v5781
    %v5910 = vunpack.c.l.b16 %v5782
    %v5911 = vunpack.c.l.b16 %v5783
    %v5912 = vunpack.c.l.b16 %v5784
    %v5913 = vpack.c.b16 %v5898, %v5897
    %v5914 = vpack.c.b16 %v5900, %v5899
    %v5915 = vpack.c.b16 %v5902, %v5901
    %v5916 = vpack.c.b16 %v5904, %v5903
    %v5917 = vpack.c.b16 %v5906, %v5905
    %v5918 = vpack.c.b16 %v5908, %v5907
    %v5919 = vpack.c.b16 %v5910, %v5909
    %v5920 = vpack.c.b16 %v5912, %v5911
    %v5922 = vsel %vm346, %v5913, 0
    %v5925 = vsel %vm346, %v5914, 0
    %v5928 = vsel %vm346, %v5915, 0
    %v5931 = vsel %vm346, %v5916, 0
    %v5934 = vsel %vm346, %v5917, 0
    %v5937 = vsel %vm346, %v5918, 0
    %v5940 = vsel %vm346, %v5919, 0
    %v5943 = vsel %vm346, %v5920, 0
    %5945 = vmatprep.subr.bf16.mxu0 0
    %5946 = vmatpush1.bf16.msra.mxu0 %v434
    %5947 = vmatprep.subr.bf16.mxu0 0
    %5948 = vmatpush1.bf16.msra.mxu0 %v435
    %5949 = vmatprep.subr.bf16.mxu0 0
    %5950 = vmatpush1.bf16.msra.mxu0 %v436
    %5951 = vmatprep.subr.bf16.mxu0 0
    %5952 = vmatpush1.bf16.msra.mxu0 %v474
    %5953 = vmatprep.subr.bf16.mxu0 0
    %5954 = vmatpush1.bf16.msra.mxu0 0
    %5955 = vmatprep.subr.bf16.mxu0 0
    %5956 = vmatpush1.bf16.msra.mxu0 0
    %5957 = vmatprep.subr.bf16.mxu0 0
    %5958 = vmatpush1.bf16.msra.mxu0 0
    %5959 = vmatprep.subr.bf16.mxu0 0
    %5960 = vmatpush1.bf16.msra.mxu0 0
    %5961 = vmatprep.subr.bf16.mxu0 0
    %5962 = vmatpush1.bf16.msra.mxu0 0
    %5963 = vmatprep.subr.bf16.mxu0 0
    %5964 = vmatpush1.bf16.msra.mxu0 0
    %5965 = vmatprep.subr.bf16.mxu0 0
    %5966 = vmatpush1.bf16.msra.mxu0 0
    %5967 = vmatprep.subr.bf16.mxu0 0
    %5968 = vmatpush1.bf16.msra.mxu0 0
    %5969 = vmatprep.subr.bf16.mxu0 0
    %5970 = vmatpush1.bf16.msra.mxu0 0
    %5971 = vmatprep.subr.bf16.mxu0 0
    %5972 = vmatpush1.bf16.msra.mxu0 0
    %5973 = vmatprep.subr.bf16.mxu0 0
    %5974 = vmatpush1.bf16.msra.mxu0 0
    %5975 = vmatprep.subr.bf16.mxu0 0
    %5976 = vmatpush1.bf16.msra.mxu0 0
    %5977 = vmatprep.mubr.bf16.mxu0 0
    %5978 = vmatmul.mubr.bf16.gmra.mrb[0].mxu0 %v5922
    %v5979 = vpop.f32.mrb[0].mxu0
    %v5980 = vadd.f32 %v5804, %v5979
    %v5981 = vpop.f32.mrb[0].mxu0
    %v5982 = vpop.f32.mrb[0].mxu0
    %v5983 = vadd.f32 %v5809, %v5982
    %v5984 = vpop.f32.mrb[0].mxu0
    %5985 = vmatprep.mubr.bf16.mxu0 0
    %5986 = vmatmul.mubr.bf16.gmra.mrb[0].mxu0 %v5925
    %v5987 = vpop.f32.mrb[0].mxu0
    %v5988 = vadd.f32 %v5814, %v5987
    %v5989 = vpop.f32.mrb[0].mxu0
    %v5990 = vpop.f32.mrb[0].mxu0
    %v5991 = vadd.f32 %v5819, %v5990
    %v5992 = vpop.f32.mrb[0].mxu0
    %5993 = vmatprep.mubr.bf16.mxu0 0
    %5994 = vmatmul.mubr.bf16.gmra.mrb[0].mxu0 %v5928
    %v5995 = vpop.f32.mrb[0].mxu0
    %v5996 = vadd.f32 %v5824, %v5995
    %v5997 = vpop.f32.mrb[0].mxu0
    %v5998 = vpop.f32.mrb[0].mxu0
    %v5999 = vadd.f32 %v5829, %v5998
    %v6000 = vpop.f32.mrb[0].mxu0
    %6001 = vmatprep.mubr.bf16.mxu0 0
    %6002 = vmatmul.mubr.bf16.gmra.mrb[0].mxu0 %v5931
    %v6003 = vpop.f32.mrb[0].mxu0
    %v6004 = vadd.f32 %v5834, %v6003
    %v6005 = vpop.f32.mrb[0].mxu0
    %v6006 = vpop.f32.mrb[0].mxu0
    %v6007 = vadd.f32 %v5839, %v6006
    %v6008 = vpop.f32.mrb[0].mxu0
    %6009 = vmatprep.mubr.bf16.mxu0 0
    %6010 = vmatmul.mubr.bf16.gmra.mrb[0].mxu0 %v5934
    %v6011 = vpop.f32.mrb[0].mxu0
    %v6012 = vadd.f32 %v5844, %v6011
    %v6013 = vpop.f32.mrb[0].mxu0
    %v6014 = vpop.f32.mrb[0].mxu0
    %v6015 = vadd.f32 %v5849, %v6014
    %v6016 = vpop.f32.mrb[0].mxu0
    %6017 = vmatprep.mubr.bf16.mxu0 0
    %6018 = vmatmul.mubr.bf16.gmra.mrb[0].mxu0 %v5937
    %v6019 = vpop.f32.mrb[0].mxu0
    %v6020 = vadd.f32 %v5854, %v6019
    %v6021 = vpop.f32.mrb[0].mxu0
    %v6022 = vpop.f32.mrb[0].mxu0
    %v6023 = vadd.f32 %v5859, %v6022
    %v6024 = vpop.f32.mrb[0].mxu0
    %6025 = vmatprep.mubr.bf16.mxu0 0
    %6026 = vmatmul.mubr.bf16.gmra.mrb[0].mxu0 %v5940
    %v6027 = vpop.f32.mrb[0].mxu0
    %v6028 = vadd.f32 %v5864, %v6027
    %v6029 = vpop.f32.mrb[0].mxu0
    %v6030 = vpop.f32.mrb[0].mxu0
    %v6031 = vadd.f32 %v5869, %v6030
    %v6032 = vpop.f32.mrb[0].mxu0
    %6033 = vmatprep.mubr.bf16.mxu0 0
    %6034 = vmatmul.mubr.bf16.gmra.mrb[0].mxu0 %v5943
    %v6035 = vpop.f32.mrb[0].mxu0
    %v6036 = vadd.f32 %v5874, %v6035
    %v6037 = vpop.f32.mrb[0].mxu0
    %v6038 = vpop.f32.mrb[0].mxu0
    %v6039 = vadd.f32 %v5879, %v6038
    %v6040 = vpop.f32.mrb[0].mxu0
    %6041 = vdwg.mxu0
    %v6042 = vmax.f32 %v5980, 0.0
    %v6043 = vmax.f32 %v5983, 0.0
    %v6044 = vmax.f32 %v5988, 0.0
    %v6045 = vmax.f32 %v5991, 0.0
    %v6046 = vmax.f32 %v5996, 0.0
    %v6047 = vmax.f32 %v5999, 0.0
    %v6048 = vmax.f32 %v6004, 0.0
    %v6049 = vmax.f32 %v6007, 0.0
    %v6050 = vmax.f32 %v6012, 0.0
    %v6051 = vmax.f32 %v6015, 0.0
    %v6052 = vmax.f32 %v6020, 0.0
    %v6053 = vmax.f32 %v6023, 0.0
    %v6054 = vmax.f32 %v6028, 0.0
    %v6055 = vmax.f32 %v6031, 0.0
    %v6056 = vmax.f32 %v6036, 0.0
    %v6057 = vmax.f32 %v6039, 0.0
    %s6058 = scalar_lea.vmem %s11, 512
    %v6059 = vld [vmem:[%s6058] sm:$0xf]
    %v6060 = vld [vmem:[%s6058 + $0x4] sm:$0xf]
    %v6061 = vld [vmem:[%s6058 + $0x8] sm:$0xf]
    %v6062 = vld [vmem:[%s6058 + $0xc] sm:$0xf]
    %v6063 = vld [vmem:[%s6058 + $0x10] sm:$0xf]
    %v6064 = vld [vmem:[%s6058 + $0x14] sm:$0xf]
    %v6065 = vld [vmem:[%s6058 + $0x18] sm:$0xf]
    %v6066 = vld [vmem:[%s6058 + $0x1c] sm:$0xf]
    %v6067 = vld [vmem:[%s6058 + $0x20] sm:$0xf]
    %v6068 = vld [vmem:[%s6058 + $0x24] sm:$0xf]
    %v6069 = vld [vmem:[%s6058 + $0x28] sm:$0xf]
    %v6070 = vld [vmem:[%s6058 + $0x2c] sm:$0xf]
    %v6071 = vld [vmem:[%s6058 + $0x30] sm:$0xf]
    %v6072 = vld [vmem:[%s6058 + $0x34] sm:$0xf]
    %v6073 = vld [vmem:[%s6058 + $0x38] sm:$0xf]
    %v6074 = vld [vmem:[%s6058 + $0x3c] sm:$0xf]
    %v6075 = vpack.c.bf16 %v6043, %v6042
    %v6076 = vpack.c.bf16 %v6045, %v6044
    %v6077 = vpack.c.bf16 %v6047, %v6046
    %v6078 = vpack.c.bf16 %v6049, %v6048
    %v6079 = vpack.c.bf16 %v6051, %v6050
    %v6080 = vpack.c.bf16 %v6053, %v6052
    %v6081 = vpack.c.bf16 %v6055, %v6054
    %v6082 = vpack.c.bf16 %v6057, %v6056
    %s6083 = scalar_lea.vmem %s12, 1024
    %v6084 = vld [vmem:[%s6083] sm:$0xff]
    %v6085 = vld [vmem:[%s6083 + $0x8] sm:$0xff]
    %v6086 = vld [vmem:[%s6083 + $0x10] sm:$0xff]
    %v6087 = vld [vmem:[%s6083 + $0x18] sm:$0xff]
    %v6088 = vld [vmem:[%s6083 + $0x20] sm:$0xff]
    %v6089 = vld [vmem:[%s6083 + $0x28] sm:$0xff]
    %v6090 = vld [vmem:[%s6083 + $0x30] sm:$0xff]
    %v6091 = vld [vmem:[%s6083 + $0x38] sm:$0xff]
    %v6092 = vld [vmem:[%s6083 + $0x40] sm:$0xff]
    %v6093 = vld [vmem:[%s6083 + $0x48] sm:$0xff]
    %v6094 = vld [vmem:[%s6083 + $0x50] sm:$0xff]
    %v6095 = vld [vmem:[%s6083 + $0x58] sm:$0xff]
    %v6096 = vld [vmem:[%s6083 + $0x60] sm:$0xff]
    %v6097 = vld [vmem:[%s6083 + $0x68] sm:$0xff]
    %v6098 = vld [vmem:[%s6083 + $0x70] sm:$0xff]
    %v6099 = vld [vmem:[%s6083 + $0x78] sm:$0xff]
    %6101 = vset.pattern.permute.xlu0 0
    %6102 = vperm.xlu0 %6101, %v6084
    %v6103 = vpop.permute.xlu0 %6102
    %6106 = vset.pattern.permute.xlu0 0
    %6107 = vperm.xlu0 %6106, %v6085
    %v6108 = vpop.permute.xlu0 %6107
    %6111 = vset.pattern.permute.xlu0 0
    %6112 = vperm.xlu0 %6111, %v6086
    %v6113 = vpop.permute.xlu0 %6112
    %6116 = vset.pattern.permute.xlu0 0
    %6117 = vperm.xlu0 %6116, %v6087
    %v6118 = vpop.permute.xlu0 %6117
    %6121 = vset.pattern.permute.xlu0 0
    %6122 = vperm.xlu0 %6121, %v6088
    %v6123 = vpop.permute.xlu0 %6122
    %6126 = vset.pattern.permute.xlu0 0
    %6127 = vperm.xlu0 %6126, %v6089
    %v6128 = vpop.permute.xlu0 %6127
    %6131 = vset.pattern.permute.xlu0 0
    %6132 = vperm.xlu0 %6131, %v6090
    %v6133 = vpop.permute.xlu0 %6132
    %6136 = vset.pattern.permute.xlu0 0
    %6137 = vperm.xlu0 %6136, %v6091
    %v6138 = vpop.permute.xlu0 %6137
    %6141 = vset.pattern.permute.xlu0 0
    %6142 = vperm.xlu0 %6141, %v6092
    %v6143 = vpop.permute.xlu0 %6142
    %6146 = vset.pattern.permute.xlu0 0
    %6147 = vperm.xlu0 %6146, %v6093
    %v6148 = vpop.permute.xlu0 %6147
    %6151 = vset.pattern.permute.xlu0 0
    %6152 = vperm.xlu0 %6151, %v6094
    %v6153 = vpop.permute.xlu0 %6152
    %6156 = vset.pattern.permute.xlu0 0
    %6157 = vperm.xlu0 %6156, %v6095
    %v6158 = vpop.permute.xlu0 %6157
    %6161 = vset.pattern.permute.xlu0 0
    %6162 = vperm.xlu0 %6161, %v6096
    %v6163 = vpop.permute.xlu0 %6162
    %6166 = vset.pattern.permute.xlu0 0
    %6167 = vperm.xlu0 %6166, %v6097
    %v6168 = vpop.permute.xlu0 %6167
    %6171 = vset.pattern.permute.xlu0 0
    %6172 = vperm.xlu0 %6171, %v6098
    %v6173 = vpop.permute.xlu0 %6172
    %6176 = vset.pattern.permute.xlu0 0
    %6177 = vperm.xlu0 %6176, %v6099
    %v6178 = vpop.permute.xlu0 %6177
    %v6196 = vunpack.c.l.b16 %v6059
    %v6197 = vunpack.c.l.b16 %v6060
    %v6198 = vunpack.c.l.b16 %v6061
    %v6199 = vunpack.c.l.b16 %v6062
    %v6200 = vunpack.c.l.b16 %v6063
    %v6201 = vunpack.c.l.b16 %v6064
    %v6202 = vunpack.c.l.b16 %v6065
    %v6203 = vunpack.c.l.b16 %v6066
    %v6204 = vunpack.c.l.b16 %v6067
    %v6205 = vunpack.c.l.b16 %v6068
    %v6206 = vunpack.c.l.b16 %v6069
    %v6207 = vunpack.c.l.b16 %v6070
    %v6208 = vunpack.c.l.b16 %v6071
    %v6209 = vunpack.c.l.b16 %v6072
    %v6210 = vunpack.c.l.b16 %v6073
    %v6211 = vunpack.c.l.b16 %v6074
    %v6212 = vpack.c.b16 %v6197, %v6196
    %v6213 = vpack.c.b16 %v6199, %v6198
    %v6214 = vpack.c.b16 %v6201, %v6200
    %v6215 = vpack.c.b16 %v6203, %v6202
    %v6216 = vpack.c.b16 %v6205, %v6204
    %v6217 = vpack.c.b16 %v6207, %v6206
    %v6218 = vpack.c.b16 %v6209, %v6208
    %v6219 = vpack.c.b16 %v6211, %v6210
    %6228 = vmatprep.subr.bf16.mxu0 0
    %6229 = vmatpush1.bf16.msra.mxu0 %v6075
    %6230 = vmatprep.subr.bf16.mxu0 0
    %6231 = vmatpush1.bf16.msra.mxu0 %v6076
    %6232 = vmatprep.subr.bf16.mxu0 0
    %6233 = vmatpush1.bf16.msra.mxu0 %v6077
    %6234 = vmatprep.subr.bf16.mxu0 0
    %6235 = vmatpush1.bf16.msra.mxu0 %v6078
    %6236 = vmatprep.subr.bf16.mxu0 0
    %6237 = vmatpush1.bf16.msra.mxu0 %v6079
    %6238 = vmatprep.subr.bf16.mxu0 0
    %6239 = vmatpush1.bf16.msra.mxu0 %v6080
    %6240 = vmatprep.subr.bf16.mxu0 0
    %6241 = vmatpush1.bf16.msra.mxu0 %v6081
    %6242 = vmatprep.subr.bf16.mxu0 0
    %6243 = vmatpush1.bf16.msra.mxu0 %v6082
    %6244 = vmatprep.subr.bf16.mxu0 0
    %6245 = vmatpush1.bf16.msra.mxu0 0
    %6246 = vmatprep.subr.bf16.mxu0 0
    %6247 = vmatpush1.bf16.msra.mxu0 0
    %6248 = vmatprep.subr.bf16.mxu0 0
    %6249 = vmatpush1.bf16.msra.mxu0 0
    %6250 = vmatprep.subr.bf16.mxu0 0
    %6251 = vmatpush1.bf16.msra.mxu0 0
    %6252 = vmatprep.subr.bf16.mxu0 0
    %6253 = vmatpush1.bf16.msra.mxu0 0
    %6254 = vmatprep.subr.bf16.mxu0 0
    %6255 = vmatpush1.bf16.msra.mxu0 0
    %6256 = vmatprep.subr.bf16.mxu0 0
    %6257 = vmatpush1.bf16.msra.mxu0 0
    %6258 = vmatprep.subr.bf16.mxu0 0
    %6259 = vmatpush1.bf16.msra.mxu0 0
    %6260 = vmatprep.mubr.bf16.mxu0 0
    %6261 = vmatmul.mubr.bf16.gmra.mrb[0].mxu0 %v6212
    %v6262 = vpop.f32.mrb[0].mxu0
    %v6263 = vadd.f32 %v6103, %v6262
    %v6264 = vpop.f32.mrb[0].mxu0
    %v6265 = vpop.f32.mrb[0].mxu0
    %v6266 = vadd.f32 %v6108, %v6265
    %v6267 = vpop.f32.mrb[0].mxu0
    %6268 = vmatprep.mubr.bf16.mxu0 0
    %6269 = vmatmul.mubr.bf16.gmra.mrb[0].mxu0 %v6213
    %v6270 = vpop.f32.mrb[0].mxu0
    %v6271 = vadd.f32 %v6113, %v6270
    %v6272 = vpop.f32.mrb[0].mxu0
    %v6273 = vpop.f32.mrb[0].mxu0
    %v6274 = vadd.f32 %v6118, %v6273
    %v6275 = vpop.f32.mrb[0].mxu0
    %6276 = vmatprep.mubr.bf16.mxu0 0
    %6277 = vmatmul.mubr.bf16.gmra.mrb[0].mxu0 %v6214
    %v6278 = vpop.f32.mrb[0].mxu0
    %v6279 = vadd.f32 %v6123, %v6278
    %v6280 = vpop.f32.mrb[0].mxu0
    %v6281 = vpop.f32.mrb[0].mxu0
    %v6282 = vadd.f32 %v6128, %v6281
    %v6283 = vpop.f32.mrb[0].mxu0
    %6284 = vmatprep.mubr.bf16.mxu0 0
    %6285 = vmatmul.mubr.bf16.gmra.mrb[0].mxu0 %v6215
    %v6286 = vpop.f32.mrb[0].mxu0
    %v6287 = vadd.f32 %v6133, %v6286
    %v6288 = vpop.f32.mrb[0].mxu0
    %v6289 = vpop.f32.mrb[0].mxu0
    %v6290 = vadd.f32 %v6138, %v6289
    %v6291 = vpop.f32.mrb[0].mxu0
    %6292 = vmatprep.mubr.bf16.mxu0 0
    %6293 = vmatmul.mubr.bf16.gmra.mrb[0].mxu0 %v6216
    %v6294 = vpop.f32.mrb[0].mxu0
    %v6295 = vadd.f32 %v6143, %v6294
    %v6296 = vpop.f32.mrb[0].mxu0
    %v6297 = vpop.f32.mrb[0].mxu0
    %v6298 = vadd.f32 %v6148, %v6297
    %v6299 = vpop.f32.mrb[0].mxu0
    %6300 = vmatprep.mubr.bf16.mxu0 0
    %6301 = vmatmul.mubr.bf16.gmra.mrb[0].mxu0 %v6217
    %v6302 = vpop.f32.mrb[0].mxu0
    %v6303 = vadd.f32 %v6153, %v6302
    %v6304 = vpop.f32.mrb[0].mxu0
    %v6305 = vpop.f32.mrb[0].mxu0
    %v6306 = vadd.f32 %v6158, %v6305
    %v6307 = vpop.f32.mrb[0].mxu0
    %6308 = vmatprep.mubr.bf16.mxu0 0
    %6309 = vmatmul.mubr.bf16.gmra.mrb[0].mxu0 %v6218
    %v6310 = vpop.f32.mrb[0].mxu0
    %v6311 = vadd.f32 %v6163, %v6310
    %v6312 = vpop.f32.mrb[0].mxu0
    %v6313 = vpop.f32.mrb[0].mxu0
    %v6314 = vadd.f32 %v6168, %v6313
    %v6315 = vpop.f32.mrb[0].mxu0
    %6316 = vmatprep.mubr.bf16.mxu0 0
    %6317 = vmatmul.mubr.bf16.gmra.mrb[0].mxu0 %v6219
    %v6318 = vpop.f32.mrb[0].mxu0
    %v6319 = vadd.f32 %v6173, %v6318
    %v6320 = vpop.f32.mrb[0].mxu0
    %v6321 = vpop.f32.mrb[0].mxu0
    %v6322 = vadd.f32 %v6178, %v6321
    %v6323 = vpop.f32.mrb[0].mxu0
    %6324 = vdwg.mxu0
    %v6325 = vmax.f32 %v6263, 0.0
    %v6326 = vmax.f32 %v6266, 0.0
    %v6327 = vmax.f32 %v6271, 0.0
    %v6328 = vmax.f32 %v6274, 0.0
    %v6329 = vmax.f32 %v6279, 0.0
    %v6330 = vmax.f32 %v6282, 0.0
    %v6331 = vmax.f32 %v6287, 0.0
    %v6332 = vmax.f32 %v6290, 0.0
    %v6333 = vmax.f32 %v6295, 0.0
    %v6334 = vmax.f32 %v6298, 0.0
    %v6335 = vmax.f32 %v6303, 0.0
    %v6336 = vmax.f32 %v6306, 0.0
    %v6337 = vmax.f32 %v6311, 0.0
    %v6338 = vmax.f32 %v6314, 0.0
    %v6339 = vmax.f32 %v6319, 0.0
    %v6340 = vmax.f32 %v6322, 0.0
    %v6341 = vld [vmem:[%s13 + $0x20] sm:$0xf]
    %v6342 = vld [vmem:[%s13 + $0x58] sm:$0xf]
    %v6343 = vld [vmem:[%s13 + $0x90] sm:$0xf]
    %v6344 = vld [vmem:[%s13 + $0xc8] sm:$0xf]
    %v6345 = vpack.c.bf16 %v6326, %v6325
    %v6346 = vpack.c.bf16 %v6328, %v6327
    %v6347 = vpack.c.bf16 %v6330, %v6329
    %v6348 = vpack.c.bf16 %v6332, %v6331
    %v6349 = vpack.c.bf16 %v6334, %v6333
    %v6350 = vpack.c.bf16 %v6336, %v6335
    %v6351 = vpack.c.bf16 %v6338, %v6337
    %v6352 = vpack.c.bf16 %v6340, %v6339
    %v6357 = vunpack.c.l.b16 %v6341
    %v6358 = vunpack.c.l.b16 %v6342
    %v6359 = vunpack.c.l.b16 %v6343
    %v6360 = vunpack.c.l.b16 %v6344
    %v6361 = vpack.c.b16 %v6358, %v6357
    %v6362 = vpack.c.b16 %v6360, %v6359
    %6365 = vmatprep.subr.bf16.mxu0 0
    %6366 = vmatpush1.bf16.msra.mxu0 %v6345
    %6367 = vmatprep.subr.bf16.mxu0 0
    %6368 = vmatpush1.bf16.msra.mxu0 %v6346
    %6369 = vmatprep.subr.bf16.mxu0 0
    %6370 = vmatpush1.bf16.msra.mxu0 %v6347
    %6371 = vmatprep.subr.bf16.mxu0 0
    %6372 = vmatpush1.bf16.msra.mxu0 %v6348
    %6373 = vmatprep.subr.bf16.mxu0 0
    %6374 = vmatpush1.bf16.msra.mxu0 %v6349
    %6375 = vmatprep.subr.bf16.mxu0 0
    %6376 = vmatpush1.bf16.msra.mxu0 %v6350
    %6377 = vmatprep.subr.bf16.mxu0 0
    %6378 = vmatpush1.bf16.msra.mxu0 %v6351
    %6379 = vmatprep.subr.bf16.mxu0 0
    %6380 = vmatpush1.bf16.msra.mxu0 %v6352
    %6381 = vmatprep.subr.bf16.mxu0 0
    %6382 = vmatpush1.bf16.msra.mxu0 0
    %6383 = vmatprep.subr.bf16.mxu0 0
    %6384 = vmatpush1.bf16.msra.mxu0 0
    %6385 = vmatprep.subr.bf16.mxu0 0
    %6386 = vmatpush1.bf16.msra.mxu0 0
    %6387 = vmatprep.subr.bf16.mxu0 0
    %6388 = vmatpush1.bf16.msra.mxu0 0
    %6389 = vmatprep.subr.bf16.mxu0 0
    %6390 = vmatpush1.bf16.msra.mxu0 0
    %6391 = vmatprep.subr.bf16.mxu0 0
    %6392 = vmatpush1.bf16.msra.mxu0 0
    %6393 = vmatprep.subr.bf16.mxu0 0
    %6394 = vmatpush1.bf16.msra.mxu0 0
    %6395 = vmatprep.subr.bf16.mxu0 0
    %6396 = vmatpush1.bf16.msra.mxu0 0
    %6397 = vmatprep.mubr.bf16.mxu0 0
    %6398 = vmatmul.mubr.bf16.gmra.mrb[0].mxu0 %v6361
    %v6399 = vpop.f32.mrb[0].mxu0
    %v6400 = vadd.f32 0.0, %v6399
    %v6401 = vpop.f32.mrb[0].mxu0
    %v6402 = vpop.f32.mrb[0].mxu0
    %v6403 = vadd.f32 0.0, %v6402
    %v6404 = vpop.f32.mrb[0].mxu0
    %6405 = vmatprep.mubr.bf16.mxu0 0
    %6406 = vmatmul.mubr.bf16.gmra.mrb[0].mxu0 %v6362
    %v6407 = vpop.f32.mrb[0].mxu0
    %v6408 = vadd.f32 0.0, %v6407
    %v6409 = vpop.f32.mrb[0].mxu0
    %v6410 = vpop.f32.mrb[0].mxu0
    %v6411 = vadd.f32 0.0, %v6410
    %v6412 = vpop.f32.mrb[0].mxu0
    %6413 = vdwg.mxu0
    %v6414 = vadd.f32 %v5765, %v6400
    %v6415 = vadd.f32 %v5766, %v6403
    %v6416 = vadd.f32 %v5767, %v6408
    %v6417 = vadd.f32 %v5768, %v6411
    %v6418 = vld [vmem:[%s9 + $0x240] sm:$0xf]
    %v6419 = vld [vmem:[%s9 + $0x244] sm:$0xf]
    %v6420 = vld [vmem:[%s9 + $0x248] sm:$0xf]
    %v6421 = vld [vmem:[%s9 + $0x24c] sm:$0xf]
    %v6422 = vld [vmem:[%s9 + $0x250] sm:$0xf]
    %v6423 = vld [vmem:[%s9 + $0x254] sm:$0xf]
    %v6424 = vld [vmem:[%s9 + $0x258] sm:$0xf]
    %v6425 = vld [vmem:[%s9 + $0x25c] sm:$0xf]
    %v6426 = vld [vmem:[%s9 + $0x260] sm:$0xf]
    %v6427 = vld [vmem:[%s9 + $0x264] sm:$0xf]
    %v6428 = vld [vmem:[%s9 + $0x268] sm:$0xf]
    %v6429 = vld [vmem:[%s9 + $0x26c] sm:$0xf]
    %v6430 = vld [vmem:[%s9 + $0x270] sm:$0xf]
    %v6431 = vld [vmem:[%s9 + $0x274] sm:$0xf]
    %v6432 = vld [vmem:[%s9 + $0x278] sm:$0xf]
    %v6433 = vld [vmem:[%s9 + $0x27c] sm:$0xf]
    %v6434 = vld [vmem:[%s10 + $0x480] sm:$0xff]
    %v6435 = vld [vmem:[%s10 + $0x488] sm:$0xff]
    %v6436 = vld [vmem:[%s10 + $0x490] sm:$0xff]
    %v6437 = vld [vmem:[%s10 + $0x498] sm:$0xff]
    %v6438 = vld [vmem:[%s10 + $0x4a0] sm:$0xff]
    %v6439 = vld [vmem:[%s10 + $0x4a8] sm:$0xff]
    %v6440 = vld [vmem:[%s10 + $0x4b0] sm:$0xff]
    %v6441 = vld [vmem:[%s10 + $0x4b8] sm:$0xff]
    %v6442 = vld [vmem:[%s10 + $0x4c0] sm:$0xff]
    %v6443 = vld [vmem:[%s10 + $0x4c8] sm:$0xff]
    %v6444 = vld [vmem:[%s10 + $0x4d0] sm:$0xff]
    %v6445 = vld [vmem:[%s10 + $0x4d8] sm:$0xff]
    %v6446 = vld [vmem:[%s10 + $0x4e0] sm:$0xff]
    %v6447 = vld [vmem:[%s10 + $0x4e8] sm:$0xff]
    %v6448 = vld [vmem:[%s10 + $0x4f0] sm:$0xff]
    %v6449 = vld [vmem:[%s10 + $0x4f8] sm:$0xff]
    %6451 = vset.pattern.permute.xlu0 0
    %6452 = vperm.xlu0 %6451, %v6434
    %v6453 = vpop.permute.xlu0 %6452
    %6456 = vset.pattern.permute.xlu0 0
    %6457 = vperm.xlu0 %6456, %v6435
    %v6458 = vpop.permute.xlu0 %6457
    %6461 = vset.pattern.permute.xlu0 0
    %6462 = vperm.xlu0 %6461, %v6436
    %v6463 = vpop.permute.xlu0 %6462
    %6466 = vset.pattern.permute.xlu0 0
    %6467 = vperm.xlu0 %6466, %v6437
    %v6468 = vpop.permute.xlu0 %6467
    %6471 = vset.pattern.permute.xlu0 0
    %6472 = vperm.xlu0 %6471, %v6438
    %v6473 = vpop.permute.xlu0 %6472
    %6476 = vset.pattern.permute.xlu0 0
    %6477 = vperm.xlu0 %6476, %v6439
    %v6478 = vpop.permute.xlu0 %6477
    %6481 = vset.pattern.permute.xlu0 0
    %6482 = vperm.xlu0 %6481, %v6440
    %v6483 = vpop.permute.xlu0 %6482
    %6486 = vset.pattern.permute.xlu0 0
    %6487 = vperm.xlu0 %6486, %v6441
    %v6488 = vpop.permute.xlu0 %6487
    %6491 = vset.pattern.permute.xlu0 0
    %6492 = vperm.xlu0 %6491, %v6442
    %v6493 = vpop.permute.xlu0 %6492
    %6496 = vset.pattern.permute.xlu0 0
    %6497 = vperm.xlu0 %6496, %v6443
    %v6498 = vpop.permute.xlu0 %6497
    %6501 = vset.pattern.permute.xlu0 0
    %6502 = vperm.xlu0 %6501, %v6444
    %v6503 = vpop.permute.xlu0 %6502
    %6506 = vset.pattern.permute.xlu0 0
    %6507 = vperm.xlu0 %6506, %v6445
    %v6508 = vpop.permute.xlu0 %6507
    %6511 = vset.pattern.permute.xlu0 0
    %6512 = vperm.xlu0 %6511, %v6446
    %v6513 = vpop.permute.xlu0 %6512
    %6516 = vset.pattern.permute.xlu0 0
    %6517 = vperm.xlu0 %6516, %v6447
    %v6518 = vpop.permute.xlu0 %6517
    %6521 = vset.pattern.permute.xlu0 0
    %6522 = vperm.xlu0 %6521, %v6448
    %v6523 = vpop.permute.xlu0 %6522
    %6526 = vset.pattern.permute.xlu0 0
    %6527 = vperm.xlu0 %6526, %v6449
    %v6528 = vpop.permute.xlu0 %6527
    %v6546 = vunpack.c.l.b16 %v6418
    %v6547 = vunpack.c.l.b16 %v6419
    %v6548 = vunpack.c.l.b16 %v6420
    %v6549 = vunpack.c.l.b16 %v6421
    %v6550 = vunpack.c.l.b16 %v6422
    %v6551 = vunpack.c.l.b16 %v6423
    %v6552 = vunpack.c.l.b16 %v6424
    %v6553 = vunpack.c.l.b16 %v6425
    %v6554 = vunpack.c.l.b16 %v6426
    %v6555 = vunpack.c.l.b16 %v6427
    %v6556 = vunpack.c.l.b16 %v6428
    %v6557 = vunpack.c.l.b16 %v6429
    %v6558 = vunpack.c.l.b16 %v6430
    %v6559 = vunpack.c.l.b16 %v6431
    %v6560 = vunpack.c.l.b16 %v6432
    %v6561 = vunpack.c.l.b16 %v6433
    %v6562 = vpack.c.b16 %v6547, %v6546
    %v6563 = vpack.c.b16 %v6549, %v6548
    %v6564 = vpack.c.b16 %v6551, %v6550
    %v6565 = vpack.c.b16 %v6553, %v6552
    %v6566 = vpack.c.b16 %v6555, %v6554
    %v6567 = vpack.c.b16 %v6557, %v6556
    %v6568 = vpack.c.b16 %v6559, %v6558
    %v6569 = vpack.c.b16 %v6561, %v6560
    %v6571 = vsel %vm346, %v6562, 0
    %v6574 = vsel %vm346, %v6563, 0
    %v6577 = vsel %vm346, %v6564, 0
    %v6580 = vsel %vm346, %v6565, 0
    %v6583 = vsel %vm346, %v6566, 0
    %v6586 = vsel %vm346, %v6567, 0
    %v6589 = vsel %vm346, %v6568, 0
    %v6592 = vsel %vm346, %v6569, 0
    %6594 = vmatprep.subr.bf16.mxu0 0
    %6595 = vmatpush1.bf16.msra.mxu0 %v434
    %6596 = vmatprep.subr.bf16.mxu0 0
    %6597 = vmatpush1.bf16.msra.mxu0 %v435
    %6598 = vmatprep.subr.bf16.mxu0 0
    %6599 = vmatpush1.bf16.msra.mxu0 %v436
    %6600 = vmatprep.subr.bf16.mxu0 0
    %6601 = vmatpush1.bf16.msra.mxu0 %v474
    %6602 = vmatprep.subr.bf16.mxu0 0
    %6603 = vmatpush1.bf16.msra.mxu0 0
    %6604 = vmatprep.subr.bf16.mxu0 0
    %6605 = vmatpush1.bf16.msra.mxu0 0
    %6606 = vmatprep.subr.bf16.mxu0 0
    %6607 = vmatpush1.bf16.msra.mxu0 0
    %6608 = vmatprep.subr.bf16.mxu0 0
    %6609 = vmatpush1.bf16.msra.mxu0 0
    %6610 = vmatprep.subr.bf16.mxu0 0
    %6611 = vmatpush1.bf16.msra.mxu0 0
    %6612 = vmatprep.subr.bf16.mxu0 0
    %6613 = vmatpush1.bf16.msra.mxu0 0
    %6614 = vmatprep.subr.bf16.mxu0 0
    %6615 = vmatpush1.bf16.msra.mxu0 0
    %6616 = vmatprep.subr.bf16.mxu0 0
    %6617 = vmatpush1.bf16.msra.mxu0 0
    %6618 = vmatprep.subr.bf16.mxu0 0
    %6619 = vmatpush1.bf16.msra.mxu0 0
    %6620 = vmatprep.subr.bf16.mxu0 0
    %6621 = vmatpush1.bf16.msra.mxu0 0
    %6622 = vmatprep.subr.bf16.mxu0 0
    %6623 = vmatpush1.bf16.msra.mxu0 0
    %6624 = vmatprep.subr.bf16.mxu0 0
    %6625 = vmatpush1.bf16.msra.mxu0 0
    %6626 = vmatprep.mubr.bf16.mxu0 0
    %6627 = vmatmul.mubr.bf16.gmra.mrb[0].mxu0 %v6571
    %v6628 = vpop.f32.mrb[0].mxu0
    %v6629 = vadd.f32 %v6453, %v6628
    %v6630 = vpop.f32.mrb[0].mxu0
    %v6631 = vpop.f32.mrb[0].mxu0
    %v6632 = vadd.f32 %v6458, %v6631
    %v6633 = vpop.f32.mrb[0].mxu0
    %6634 = vmatprep.mubr.bf16.mxu0 0
    %6635 = vmatmul.mubr.bf16.gmra.mrb[0].mxu0 %v6574
    %v6636 = vpop.f32.mrb[0].mxu0
    %v6637 = vadd.f32 %v6463, %v6636
    %v6638 = vpop.f32.mrb[0].mxu0
    %v6639 = vpop.f32.mrb[0].mxu0
    %v6640 = vadd.f32 %v6468, %v6639
    %v6641 = vpop.f32.mrb[0].mxu0
    %6642 = vmatprep.mubr.bf16.mxu0 0
    %6643 = vmatmul.mubr.bf16.gmra.mrb[0].mxu0 %v6577
    %v6644 = vpop.f32.mrb[0].mxu0
    %v6645 = vadd.f32 %v6473, %v6644
    %v6646 = vpop.f32.mrb[0].mxu0
    %v6647 = vpop.f32.mrb[0].mxu0
    %v6648 = vadd.f32 %v6478, %v6647
    %v6649 = vpop.f32.mrb[0].mxu0
    %6650 = vmatprep.mubr.bf16.mxu0 0
    %6651 = vmatmul.mubr.bf16.gmra.mrb[0].mxu0 %v6580
    %v6652 = vpop.f32.mrb[0].mxu0
    %v6653 = vadd.f32 %v6483, %v6652
    %v6654 = vpop.f32.mrb[0].mxu0
    %v6655 = vpop.f32.mrb[0].mxu0
    %v6656 = vadd.f32 %v6488, %v6655
    %v6657 = vpop.f32.mrb[0].mxu0
    %6658 = vmatprep.mubr.bf16.mxu0 0
    %6659 = vmatmul.mubr.bf16.gmra.mrb[0].mxu0 %v6583
    %v6660 = vpop.f32.mrb[0].mxu0
    %v6661 = vadd.f32 %v6493, %v6660
    %v6662 = vpop.f32.mrb[0].mxu0
    %v6663 = vpop.f32.mrb[0].mxu0
    %v6664 = vadd.f32 %v6498, %v6663
    %v6665 = vpop.f32.mrb[0].mxu0
    %6666 = vmatprep.mubr.bf16.mxu0 0
    %6667 = vmatmul.mubr.bf16.gmra.mrb[0].mxu0 %v6586
    %v6668 = vpop.f32.mrb[0].mxu0
    %v6669 = vadd.f32 %v6503, %v6668
    %v6670 = vpop.f32.mrb[0].mxu0
    %v6671 = vpop.f32.mrb[0].mxu0
    %v6672 = vadd.f32 %v6508, %v6671
    %v6673 = vpop.f32.mrb[0].mxu0
    %6674 = vmatprep.mubr.bf16.mxu0 0
    %6675 = vmatmul.mubr.bf16.gmra.mrb[0].mxu0 %v6589
    %v6676 = vpop.f32.mrb[0].mxu0
    %v6677 = vadd.f32 %v6513, %v6676
    %v6678 = vpop.f32.mrb[0].mxu0
    %v6679 = vpop.f32.mrb[0].mxu0
    %v6680 = vadd.f32 %v6518, %v6679
    %v6681 = vpop.f32.mrb[0].mxu0
    %6682 = vmatprep.mubr.bf16.mxu0 0
    %6683 = vmatmul.mubr.bf16.gmra.mrb[0].mxu0 %v6592
    %v6684 = vpop.f32.mrb[0].mxu0
    %v6685 = vadd.f32 %v6523, %v6684
    %v6686 = vpop.f32.mrb[0].mxu0
    %v6687 = vpop.f32.mrb[0].mxu0
    %v6688 = vadd.f32 %v6528, %v6687
    %v6689 = vpop.f32.mrb[0].mxu0
    %6690 = vdwg.mxu0
    %v6691 = vmax.f32 %v6629, 0.0
    %v6692 = vmax.f32 %v6632, 0.0
    %v6693 = vmax.f32 %v6637, 0.0
    %v6694 = vmax.f32 %v6640, 0.0
    %v6695 = vmax.f32 %v6645, 0.0
    %v6696 = vmax.f32 %v6648, 0.0
    %v6697 = vmax.f32 %v6653, 0.0
    %v6698 = vmax.f32 %v6656, 0.0
    %v6699 = vmax.f32 %v6661, 0.0
    %v6700 = vmax.f32 %v6664, 0.0
    %v6701 = vmax.f32 %v6669, 0.0
    %v6702 = vmax.f32 %v6672, 0.0
    %v6703 = vmax.f32 %v6677, 0.0
    %v6704 = vmax.f32 %v6680, 0.0
    %v6705 = vmax.f32 %v6685, 0.0
    %v6706 = vmax.f32 %v6688, 0.0
    %s6707 = scalar_lea.vmem %s11, 576
    %v6708 = vld [vmem:[%s6707] sm:$0xf]
    %v6709 = vld [vmem:[%s6707 + $0x4] sm:$0xf]
    %v6710 = vld [vmem:[%s6707 + $0x8] sm:$0xf]
    %v6711 = vld [vmem:[%s6707 + $0xc] sm:$0xf]
    %v6712 = vld [vmem:[%s6707 + $0x10] sm:$0xf]
    %v6713 = vld [vmem:[%s6707 + $0x14] sm:$0xf]
    %v6714 = vld [vmem:[%s6707 + $0x18] sm:$0xf]
    %v6715 = vld [vmem:[%s6707 + $0x1c] sm:$0xf]
    %v6716 = vld [vmem:[%s6707 + $0x20] sm:$0xf]
    %v6717 = vld [vmem:[%s6707 + $0x24] sm:$0xf]
    %v6718 = vld [vmem:[%s6707 + $0x28] sm:$0xf]
    %v6719 = vld [vmem:[%s6707 + $0x2c] sm:$0xf]
    %v6720 = vld [vmem:[%s6707 + $0x30] sm:$0xf]
    %v6721 = vld [vmem:[%s6707 + $0x34] sm:$0xf]
    %v6722 = vld [vmem:[%s6707 + $0x38] sm:$0xf]
    %v6723 = vld [vmem:[%s6707 + $0x3c] sm:$0xf]
    %v6724 = vpack.c.bf16 %v6692, %v6691
    %v6725 = vpack.c.bf16 %v6694, %v6693
    %v6726 = vpack.c.bf16 %v6696, %v6695
    %v6727 = vpack.c.bf16 %v6698, %v6697
    %v6728 = vpack.c.bf16 %v6700, %v6699
    %v6729 = vpack.c.bf16 %v6702, %v6701
    %v6730 = vpack.c.bf16 %v6704, %v6703
    %v6731 = vpack.c.bf16 %v6706, %v6705
    %s6732 = scalar_lea.vmem %s12, 1152
    %v6733 = vld [vmem:[%s6732] sm:$0xff]
    %v6734 = vld [vmem:[%s6732 + $0x8] sm:$0xff]
    %v6735 = vld [vmem:[%s6732 + $0x10] sm:$0xff]
    %v6736 = vld [vmem:[%s6732 + $0x18] sm:$0xff]
    %v6737 = vld [vmem:[%s6732 + $0x20] sm:$0xff]
    %v6738 = vld [vmem:[%s6732 + $0x28] sm:$0xff]
    %v6739 = vld [vmem:[%s6732 + $0x30] sm:$0xff]
    %v6740 = vld [vmem:[%s6732 + $0x38] sm:$0xff]
    %v6741 = vld [vmem:[%s6732 + $0x40] sm:$0xff]
    %v6742 = vld [vmem:[%s6732 + $0x48] sm:$0xff]
    %v6743 = vld [vmem:[%s6732 + $0x50] sm:$0xff]
    %v6744 = vld [vmem:[%s6732 + $0x58] sm:$0xff]
    %v6745 = vld [vmem:[%s6732 + $0x60] sm:$0xff]
    %v6746 = vld [vmem:[%s6732 + $0x68] sm:$0xff]
    %v6747 = vld [vmem:[%s6732 + $0x70] sm:$0xff]
    %v6748 = vld [vmem:[%s6732 + $0x78] sm:$0xff]
    %6750 = vset.pattern.permute.xlu0 0
    %6751 = vperm.xlu0 %6750, %v6733
    %v6752 = vpop.permute.xlu0 %6751
    %6755 = vset.pattern.permute.xlu0 0
    %6756 = vperm.xlu0 %6755, %v6734
    %v6757 = vpop.permute.xlu0 %6756
    %6760 = vset.pattern.permute.xlu0 0
    %6761 = vperm.xlu0 %6760, %v6735
    %v6762 = vpop.permute.xlu0 %6761
    %6765 = vset.pattern.permute.xlu0 0
    %6766 = vperm.xlu0 %6765, %v6736
    %v6767 = vpop.permute.xlu0 %6766
    %6770 = vset.pattern.permute.xlu0 0
    %6771 = vperm.xlu0 %6770, %v6737
    %v6772 = vpop.permute.xlu0 %6771
    %6775 = vset.pattern.permute.xlu0 0
    %6776 = vperm.xlu0 %6775, %v6738
    %v6777 = vpop.permute.xlu0 %6776
    %6780 = vset.pattern.permute.xlu0 0
    %6781 = vperm.xlu0 %6780, %v6739
    %v6782 = vpop.permute.xlu0 %6781
    %6785 = vset.pattern.permute.xlu0 0
    %6786 = vperm.xlu0 %6785, %v6740
    %v6787 = vpop.permute.xlu0 %6786
    %6790 = vset.pattern.permute.xlu0 0
    %6791 = vperm.xlu0 %6790, %v6741
    %v6792 = vpop.permute.xlu0 %6791
    %6795 = vset.pattern.permute.xlu0 0
    %6796 = vperm.xlu0 %6795, %v6742
    %v6797 = vpop.permute.xlu0 %6796
    %6800 = vset.pattern.permute.xlu0 0
    %6801 = vperm.xlu0 %6800, %v6743
    %v6802 = vpop.permute.xlu0 %6801
    %6805 = vset.pattern.permute.xlu0 0
    %6806 = vperm.xlu0 %6805, %v6744
    %v6807 = vpop.permute.xlu0 %6806
    %6810 = vset.pattern.permute.xlu0 0
    %6811 = vperm.xlu0 %6810, %v6745
    %v6812 = vpop.permute.xlu0 %6811
    %6815 = vset.pattern.permute.xlu0 0
    %6816 = vperm.xlu0 %6815, %v6746
    %v6817 = vpop.permute.xlu0 %6816
    %6820 = vset.pattern.permute.xlu0 0
    %6821 = vperm.xlu0 %6820, %v6747
    %v6822 = vpop.permute.xlu0 %6821
    %6825 = vset.pattern.permute.xlu0 0
    %6826 = vperm.xlu0 %6825, %v6748
    %v6827 = vpop.permute.xlu0 %6826
    %v6845 = vunpack.c.l.b16 %v6708
    %v6846 = vunpack.c.l.b16 %v6709
    %v6847 = vunpack.c.l.b16 %v6710
    %v6848 = vunpack.c.l.b16 %v6711
    %v6849 = vunpack.c.l.b16 %v6712
    %v6850 = vunpack.c.l.b16 %v6713
    %v6851 = vunpack.c.l.b16 %v6714
    %v6852 = vunpack.c.l.b16 %v6715
    %v6853 = vunpack.c.l.b16 %v6716
    %v6854 = vunpack.c.l.b16 %v6717
    %v6855 = vunpack.c.l.b16 %v6718
    %v6856 = vunpack.c.l.b16 %v6719
    %v6857 = vunpack.c.l.b16 %v6720
    %v6858 = vunpack.c.l.b16 %v6721
    %v6859 = vunpack.c.l.b16 %v6722
    %v6860 = vunpack.c.l.b16 %v6723
    %v6861 = vpack.c.b16 %v6846, %v6845
    %v6862 = vpack.c.b16 %v6848, %v6847
    %v6863 = vpack.c.b16 %v6850, %v6849
    %v6864 = vpack.c.b16 %v6852, %v6851
    %v6865 = vpack.c.b16 %v6854, %v6853
    %v6866 = vpack.c.b16 %v6856, %v6855
    %v6867 = vpack.c.b16 %v6858, %v6857
    %v6868 = vpack.c.b16 %v6860, %v6859
    %6877 = vmatprep.subr.bf16.mxu0 0
    %6878 = vmatpush1.bf16.msra.mxu0 %v6724
    %6879 = vmatprep.subr.bf16.mxu0 0
    %6880 = vmatpush1.bf16.msra.mxu0 %v6725
    %6881 = vmatprep.subr.bf16.mxu0 0
    %6882 = vmatpush1.bf16.msra.mxu0 %v6726
    %6883 = vmatprep.subr.bf16.mxu0 0
    %6884 = vmatpush1.bf16.msra.mxu0 %v6727
    %6885 = vmatprep.subr.bf16.mxu0 0
    %6886 = vmatpush1.bf16.msra.mxu0 %v6728
    %6887 = vmatprep.subr.bf16.mxu0 0
    %6888 = vmatpush1.bf16.msra.mxu0 %v6729
    %6889 = vmatprep.subr.bf16.mxu0 0
    %6890 = vmatpush1.bf16.msra.mxu0 %v6730
    %6891 = vmatprep.subr.bf16.mxu0 0
    %6892 = vmatpush1.bf16.msra.mxu0 %v6731
    %6893 = vmatprep.subr.bf16.mxu0 0
    %6894 = vmatpush1.bf16.msra.mxu0 0
    %6895 = vmatprep.subr.bf16.mxu0 0
    %6896 = vmatpush1.bf16.msra.mxu0 0
    %6897 = vmatprep.subr.bf16.mxu0 0
    %6898 = vmatpush1.bf16.msra.mxu0 0
    %6899 = vmatprep.subr.bf16.mxu0 0
    %6900 = vmatpush1.bf16.msra.mxu0 0
    %6901 = vmatprep.subr.bf16.mxu0 0
    %6902 = vmatpush1.bf16.msra.mxu0 0
    %6903 = vmatprep.subr.bf16.mxu0 0
    %6904 = vmatpush1.bf16.msra.mxu0 0
    %6905 = vmatprep.subr.bf16.mxu0 0
    %6906 = vmatpush1.bf16.msra.mxu0 0
    %6907 = vmatprep.subr.bf16.mxu0 0
    %6908 = vmatpush1.bf16.msra.mxu0 0
    %6909 = vmatprep.mubr.bf16.mxu0 0
    %6910 = vmatmul.mubr.bf16.gmra.mrb[0].mxu0 %v6861
    %v6911 = vpop.f32.mrb[0].mxu0
    %v6912 = vadd.f32 %v6752, %v6911
    %v6913 = vpop.f32.mrb[0].mxu0
    %v6914 = vpop.f32.mrb[0].mxu0
    %v6915 = vadd.f32 %v6757, %v6914
    %v6916 = vpop.f32.mrb[0].mxu0
    %6917 = vmatprep.mubr.bf16.mxu0 0
    %6918 = vmatmul.mubr.bf16.gmra.mrb[0].mxu0 %v6862
    %v6919 = vpop.f32.mrb[0].mxu0
    %v6920 = vadd.f32 %v6762, %v6919
    %v6921 = vpop.f32.mrb[0].mxu0
    %v6922 = vpop.f32.mrb[0].mxu0
    %v6923 = vadd.f32 %v6767, %v6922
    %v6924 = vpop.f32.mrb[0].mxu0
    %6925 = vmatprep.mubr.bf16.mxu0 0
    %6926 = vmatmul.mubr.bf16.gmra.mrb[0].mxu0 %v6863
    %v6927 = vpop.f32.mrb[0].mxu0
    %v6928 = vadd.f32 %v6772, %v6927
    %v6929 = vpop.f32.mrb[0].mxu0
    %v6930 = vpop.f32.mrb[0].mxu0
    %v6931 = vadd.f32 %v6777, %v6930
    %v6932 = vpop.f32.mrb[0].mxu0
    %6933 = vmatprep.mubr.bf16.mxu0 0
    %6934 = vmatmul.mubr.bf16.gmra.mrb[0].mxu0 %v6864
    %v6935 = vpop.f32.mrb[0].mxu0
    %v6936 = vadd.f32 %v6782, %v6935
    %v6937 = vpop.f32.mrb[0].mxu0
    %v6938 = vpop.f32.mrb[0].mxu0
    %v6939 = vadd.f32 %v6787, %v6938
    %v6940 = vpop.f32.mrb[0].mxu0
    %6941 = vmatprep.mubr.bf16.mxu0 0
    %6942 = vmatmul.mubr.bf16.gmra.mrb[0].mxu0 %v6865
    %v6943 = vpop.f32.mrb[0].mxu0
    %v6944 = vadd.f32 %v6792, %v6943
    %v6945 = vpop.f32.mrb[0].mxu0
    %v6946 = vpop.f32.mrb[0].mxu0
    %v6947 = vadd.f32 %v6797, %v6946
    %v6948 = vpop.f32.mrb[0].mxu0
    %6949 = vmatprep.mubr.bf16.mxu0 0
    %6950 = vmatmul.mubr.bf16.gmra.mrb[0].mxu0 %v6866
    %v6951 = vpop.f32.mrb[0].mxu0
    %v6952 = vadd.f32 %v6802, %v6951
    %v6953 = vpop.f32.mrb[0].mxu0
    %v6954 = vpop.f32.mrb[0].mxu0
    %v6955 = vadd.f32 %v6807, %v6954
    %v6956 = vpop.f32.mrb[0].mxu0
    %6957 = vmatprep.mubr.bf16.mxu0 0
    %6958 = vmatmul.mubr.bf16.gmra.mrb[0].mxu0 %v6867
    %v6959 = vpop.f32.mrb[0].mxu0
    %v6960 = vadd.f32 %v6812, %v6959
    %v6961 = vpop.f32.mrb[0].mxu0
    %v6962 = vpop.f32.mrb[0].mxu0
    %v6963 = vadd.f32 %v6817, %v6962
    %v6964 = vpop.f32.mrb[0].mxu0
    %6965 = vmatprep.mubr.bf16.mxu0 0
    %6966 = vmatmul.mubr.bf16.gmra.mrb[0].mxu0 %v6868
    %v6967 = vpop.f32.mrb[0].mxu0
    %v6968 = vadd.f32 %v6822, %v6967
    %v6969 = vpop.f32.mrb[0].mxu0
    %v6970 = vpop.f32.mrb[0].mxu0
    %v6971 = vadd.f32 %v6827, %v6970
    %v6972 = vpop.f32.mrb[0].mxu0
    %6973 = vdwg.mxu0
    %v6974 = vmax.f32 %v6912, 0.0
    %v6975 = vmax.f32 %v6915, 0.0
    %v6976 = vmax.f32 %v6920, 0.0
    %v6977 = vmax.f32 %v6923, 0.0
    %v6978 = vmax.f32 %v6928, 0.0
    %v6979 = vmax.f32 %v6931, 0.0
    %v6980 = vmax.f32 %v6936, 0.0
    %v6981 = vmax.f32 %v6939, 0.0
    %v6982 = vmax.f32 %v6944, 0.0
    %v6983 = vmax.f32 %v6947, 0.0
    %v6984 = vmax.f32 %v6952, 0.0
    %v6985 = vmax.f32 %v6955, 0.0
    %v6986 = vmax.f32 %v6960, 0.0
    %v6987 = vmax.f32 %v6963, 0.0
    %v6988 = vmax.f32 %v6968, 0.0
    %v6989 = vmax.f32 %v6971, 0.0
    %v6990 = vld [vmem:[%s13 + $0x24] sm:$0xf]
    %v6991 = vld [vmem:[%s13 + $0x5c] sm:$0xf]
    %v6992 = vld [vmem:[%s13 + $0x94] sm:$0xf]
    %v6993 = vld [vmem:[%s13 + $0xcc] sm:$0xf]
    %v6994 = vpack.c.bf16 %v6975, %v6974
    %v6995 = vpack.c.bf16 %v6977, %v6976
    %v6996 = vpack.c.bf16 %v6979, %v6978
    %v6997 = vpack.c.bf16 %v6981, %v6980
    %v6998 = vpack.c.bf16 %v6983, %v6982
    %v6999 = vpack.c.bf16 %v6985, %v6984
    %v7000 = vpack.c.bf16 %v6987, %v6986
    %v7001 = vpack.c.bf16 %v6989, %v6988
    %v7006 = vunpack.c.l.b16 %v6990
    %v7007 = vunpack.c.l.b16 %v6991
    %v7008 = vunpack.c.l.b16 %v6992
    %v7009 = vunpack.c.l.b16 %v6993
    %v7010 = vpack.c.b16 %v7007, %v7006
    %v7011 = vpack.c.b16 %v7009, %v7008
    %7014 = vmatprep.subr.bf16.mxu0 0
    %7015 = vmatpush1.bf16.msra.mxu0 %v6994
    %7016 = vmatprep.subr.bf16.mxu0 0
    %7017 = vmatpush1.bf16.msra.mxu0 %v6995
    %7018 = vmatprep.subr.bf16.mxu0 0
    %7019 = vmatpush1.bf16.msra.mxu0 %v6996
    %7020 = vmatprep.subr.bf16.mxu0 0
    %7021 = vmatpush1.bf16.msra.mxu0 %v6997
    %7022 = vmatprep.subr.bf16.mxu0 0
    %7023 = vmatpush1.bf16.msra.mxu0 %v6998
    %7024 = vmatprep.subr.bf16.mxu0 0
    %7025 = vmatpush1.bf16.msra.mxu0 %v6999
    %7026 = vmatprep.subr.bf16.mxu0 0
    %7027 = vmatpush1.bf16.msra.mxu0 %v7000
    %7028 = vmatprep.subr.bf16.mxu0 0
    %7029 = vmatpush1.bf16.msra.mxu0 %v7001
    %7030 = vmatprep.subr.bf16.mxu0 0
    %7031 = vmatpush1.bf16.msra.mxu0 0
    %7032 = vmatprep.subr.bf16.mxu0 0
    %7033 = vmatpush1.bf16.msra.mxu0 0
    %7034 = vmatprep.subr.bf16.mxu0 0
    %7035 = vmatpush1.bf16.msra.mxu0 0
    %7036 = vmatprep.subr.bf16.mxu0 0
    %7037 = vmatpush1.bf16.msra.mxu0 0
    %7038 = vmatprep.subr.bf16.mxu0 0
    %7039 = vmatpush1.bf16.msra.mxu0 0
    %7040 = vmatprep.subr.bf16.mxu0 0
    %7041 = vmatpush1.bf16.msra.mxu0 0
    %7042 = vmatprep.subr.bf16.mxu0 0
    %7043 = vmatpush1.bf16.msra.mxu0 0
    %7044 = vmatprep.subr.bf16.mxu0 0
    %7045 = vmatpush1.bf16.msra.mxu0 0
    %7046 = vmatprep.mubr.bf16.mxu0 0
    %7047 = vmatmul.mubr.bf16.gmra.mrb[0].mxu0 %v7010
    %v7048 = vpop.f32.mrb[0].mxu0
    %v7049 = vadd.f32 0.0, %v7048
    %v7050 = vpop.f32.mrb[0].mxu0
    %v7051 = vpop.f32.mrb[0].mxu0
    %v7052 = vadd.f32 0.0, %v7051
    %v7053 = vpop.f32.mrb[0].mxu0
    %7054 = vmatprep.mubr.bf16.mxu0 0
    %7055 = vmatmul.mubr.bf16.gmra.mrb[0].mxu0 %v7011
    %v7056 = vpop.f32.mrb[0].mxu0
    %v7057 = vadd.f32 0.0, %v7056
    %v7058 = vpop.f32.mrb[0].mxu0
    %v7059 = vpop.f32.mrb[0].mxu0
    %v7060 = vadd.f32 0.0, %v7059
    %v7061 = vpop.f32.mrb[0].mxu0
    %7062 = vdwg.mxu0
    %v7063 = vadd.f32 %v6414, %v7049
    %v7064 = vadd.f32 %v6415, %v7052
    %v7065 = vadd.f32 %v6416, %v7057
    %v7066 = vadd.f32 %v6417, %v7060
    %v7067 = vld [vmem:[%s9 + $0x280] sm:$0xf]
    %v7068 = vld [vmem:[%s9 + $0x284] sm:$0xf]
    %v7069 = vld [vmem:[%s9 + $0x288] sm:$0xf]
    %v7070 = vld [vmem:[%s9 + $0x28c] sm:$0xf]
    %v7071 = vld [vmem:[%s9 + $0x290] sm:$0xf]
    %v7072 = vld [vmem:[%s9 + $0x294] sm:$0xf]
    %v7073 = vld [vmem:[%s9 + $0x298] sm:$0xf]
    %v7074 = vld [vmem:[%s9 + $0x29c] sm:$0xf]
    %v7075 = vld [vmem:[%s9 + $0x2a0] sm:$0xf]
    %v7076 = vld [vmem:[%s9 + $0x2a4] sm:$0xf]
    %v7077 = vld [vmem:[%s9 + $0x2a8] sm:$0xf]
    %v7078 = vld [vmem:[%s9 + $0x2ac] sm:$0xf]
    %v7079 = vld [vmem:[%s9 + $0x2b0] sm:$0xf]
    %v7080 = vld [vmem:[%s9 + $0x2b4] sm:$0xf]
    %v7081 = vld [vmem:[%s9 + $0x2b8] sm:$0xf]
    %v7082 = vld [vmem:[%s9 + $0x2bc] sm:$0xf]
    %v7083 = vld [vmem:[%s10 + $0x500] sm:$0xff]
    %v7084 = vld [vmem:[%s10 + $0x508] sm:$0xff]
    %v7085 = vld [vmem:[%s10 + $0x510] sm:$0xff]
    %v7086 = vld [vmem:[%s10 + $0x518] sm:$0xff]
    %v7087 = vld [vmem:[%s10 + $0x520] sm:$0xff]
    %v7088 = vld [vmem:[%s10 + $0x528] sm:$0xff]
    %v7089 = vld [vmem:[%s10 + $0x530] sm:$0xff]
    %v7090 = vld [vmem:[%s10 + $0x538] sm:$0xff]
    %v7091 = vld [vmem:[%s10 + $0x540] sm:$0xff]
    %v7092 = vld [vmem:[%s10 + $0x548] sm:$0xff]
    %v7093 = vld [vmem:[%s10 + $0x550] sm:$0xff]
    %v7094 = vld [vmem:[%s10 + $0x558] sm:$0xff]
    %v7095 = vld [vmem:[%s10 + $0x560] sm:$0xff]
    %v7096 = vld [vmem:[%s10 + $0x568] sm:$0xff]
    %v7097 = vld [vmem:[%s10 + $0x570] sm:$0xff]
    %v7098 = vld [vmem:[%s10 + $0x578] sm:$0xff]
    %7100 = vset.pattern.permute.xlu0 0
    %7101 = vperm.xlu0 %7100, %v7083
    %v7102 = vpop.permute.xlu0 %7101
    %7105 = vset.pattern.permute.xlu0 0
    %7106 = vperm.xlu0 %7105, %v7084
    %v7107 = vpop.permute.xlu0 %7106
    %7110 = vset.pattern.permute.xlu0 0
    %7111 = vperm.xlu0 %7110, %v7085
    %v7112 = vpop.permute.xlu0 %7111
    %7115 = vset.pattern.permute.xlu0 0
    %7116 = vperm.xlu0 %7115, %v7086
    %v7117 = vpop.permute.xlu0 %7116
    %7120 = vset.pattern.permute.xlu0 0
    %7121 = vperm.xlu0 %7120, %v7087
    %v7122 = vpop.permute.xlu0 %7121
    %7125 = vset.pattern.permute.xlu0 0
    %7126 = vperm.xlu0 %7125, %v7088
    %v7127 = vpop.permute.xlu0 %7126
    %7130 = vset.pattern.permute.xlu0 0
    %7131 = vperm.xlu0 %7130, %v7089
    %v7132 = vpop.permute.xlu0 %7131
    %7135 = vset.pattern.permute.xlu0 0
    %7136 = vperm.xlu0 %7135, %v7090
    %v7137 = vpop.permute.xlu0 %7136
    %7140 = vset.pattern.permute.xlu0 0
    %7141 = vperm.xlu0 %7140, %v7091
    %v7142 = vpop.permute.xlu0 %7141
    %7145 = vset.pattern.permute.xlu0 0
    %7146 = vperm.xlu0 %7145, %v7092
    %v7147 = vpop.permute.xlu0 %7146
    %7150 = vset.pattern.permute.xlu0 0
    %7151 = vperm.xlu0 %7150, %v7093
    %v7152 = vpop.permute.xlu0 %7151
    %7155 = vset.pattern.permute.xlu0 0
    %7156 = vperm.xlu0 %7155, %v7094
    %v7157 = vpop.permute.xlu0 %7156
    %7160 = vset.pattern.permute.xlu0 0
    %7161 = vperm.xlu0 %7160, %v7095
    %v7162 = vpop.permute.xlu0 %7161
    %7165 = vset.pattern.permute.xlu0 0
    %7166 = vperm.xlu0 %7165, %v7096
    %v7167 = vpop.permute.xlu0 %7166
    %7170 = vset.pattern.permute.xlu0 0
    %7171 = vperm.xlu0 %7170, %v7097
    %v7172 = vpop.permute.xlu0 %7171
    %7175 = vset.pattern.permute.xlu0 0
    %7176 = vperm.xlu0 %7175, %v7098
    %v7177 = vpop.permute.xlu0 %7176
    %v7195 = vunpack.c.l.b16 %v7067
    %v7196 = vunpack.c.l.b16 %v7068
    %v7197 = vunpack.c.l.b16 %v7069
    %v7198 = vunpack.c.l.b16 %v7070
    %v7199 = vunpack.c.l.b16 %v7071
    %v7200 = vunpack.c.l.b16 %v7072
    %v7201 = vunpack.c.l.b16 %v7073
    %v7202 = vunpack.c.l.b16 %v7074
    %v7203 = vunpack.c.l.b16 %v7075
    %v7204 = vunpack.c.l.b16 %v7076
    %v7205 = vunpack.c.l.b16 %v7077
    %v7206 = vunpack.c.l.b16 %v7078
    %v7207 = vunpack.c.l.b16 %v7079
    %v7208 = vunpack.c.l.b16 %v7080
    %v7209 = vunpack.c.l.b16 %v7081
    %v7210 = vunpack.c.l.b16 %v7082
    %v7211 = vpack.c.b16 %v7196, %v7195
    %v7212 = vpack.c.b16 %v7198, %v7197
    %v7213 = vpack.c.b16 %v7200, %v7199
    %v7214 = vpack.c.b16 %v7202, %v7201
    %v7215 = vpack.c.b16 %v7204, %v7203
    %v7216 = vpack.c.b16 %v7206, %v7205
    %v7217 = vpack.c.b16 %v7208, %v7207
    %v7218 = vpack.c.b16 %v7210, %v7209
    %v7220 = vsel %vm346, %v7211, 0
    %v7223 = vsel %vm346, %v7212, 0
    %v7226 = vsel %vm346, %v7213, 0
    %v7229 = vsel %vm346, %v7214, 0
    %v7232 = vsel %vm346, %v7215, 0
    %v7235 = vsel %vm346, %v7216, 0
    %v7238 = vsel %vm346, %v7217, 0
    %v7241 = vsel %vm346, %v7218, 0
    %7243 = vmatprep.subr.bf16.mxu0 0
    %7244 = vmatpush1.bf16.msra.mxu0 %v434
    %7245 = vmatprep.subr.bf16.mxu0 0
    %7246 = vmatpush1.bf16.msra.mxu0 %v435
    %7247 = vmatprep.subr.bf16.mxu0 0
    %7248 = vmatpush1.bf16.msra.mxu0 %v436
    %7249 = vmatprep.subr.bf16.mxu0 0
    %7250 = vmatpush1.bf16.msra.mxu0 %v474
    %7251 = vmatprep.subr.bf16.mxu0 0
    %7252 = vmatpush1.bf16.msra.mxu0 0
    %7253 = vmatprep.subr.bf16.mxu0 0
    %7254 = vmatpush1.bf16.msra.mxu0 0
    %7255 = vmatprep.subr.bf16.mxu0 0
    %7256 = vmatpush1.bf16.msra.mxu0 0
    %7257 = vmatprep.subr.bf16.mxu0 0
    %7258 = vmatpush1.bf16.msra.mxu0 0
    %7259 = vmatprep.subr.bf16.mxu0 0
    %7260 = vmatpush1.bf16.msra.mxu0 0
    %7261 = vmatprep.subr.bf16.mxu0 0
    %7262 = vmatpush1.bf16.msra.mxu0 0
    %7263 = vmatprep.subr.bf16.mxu0 0
    %7264 = vmatpush1.bf16.msra.mxu0 0
    %7265 = vmatprep.subr.bf16.mxu0 0
    %7266 = vmatpush1.bf16.msra.mxu0 0
    %7267 = vmatprep.subr.bf16.mxu0 0
    %7268 = vmatpush1.bf16.msra.mxu0 0
    %7269 = vmatprep.subr.bf16.mxu0 0
    %7270 = vmatpush1.bf16.msra.mxu0 0
    %7271 = vmatprep.subr.bf16.mxu0 0
    %7272 = vmatpush1.bf16.msra.mxu0 0
    %7273 = vmatprep.subr.bf16.mxu0 0
    %7274 = vmatpush1.bf16.msra.mxu0 0
    %7275 = vmatprep.mubr.bf16.mxu0 0
    %7276 = vmatmul.mubr.bf16.gmra.mrb[0].mxu0 %v7220
    %v7277 = vpop.f32.mrb[0].mxu0
    %v7278 = vadd.f32 %v7102, %v7277
    %v7279 = vpop.f32.mrb[0].mxu0
    %v7280 = vpop.f32.mrb[0].mxu0
    %v7281 = vadd.f32 %v7107, %v7280
    %v7282 = vpop.f32.mrb[0].mxu0
    %7283 = vmatprep.mubr.bf16.mxu0 0
    %7284 = vmatmul.mubr.bf16.gmra.mrb[0].mxu0 %v7223
    %v7285 = vpop.f32.mrb[0].mxu0
    %v7286 = vadd.f32 %v7112, %v7285
    %v7287 = vpop.f32.mrb[0].mxu0
    %v7288 = vpop.f32.mrb[0].mxu0
    %v7289 = vadd.f32 %v7117, %v7288
    %v7290 = vpop.f32.mrb[0].mxu0
    %7291 = vmatprep.mubr.bf16.mxu0 0
    %7292 = vmatmul.mubr.bf16.gmra.mrb[0].mxu0 %v7226
    %v7293 = vpop.f32.mrb[0].mxu0
    %v7294 = vadd.f32 %v7122, %v7293
    %v7295 = vpop.f32.mrb[0].mxu0
    %v7296 = vpop.f32.mrb[0].mxu0
    %v7297 = vadd.f32 %v7127, %v7296
    %v7298 = vpop.f32.mrb[0].mxu0
    %7299 = vmatprep.mubr.bf16.mxu0 0
    %7300 = vmatmul.mubr.bf16.gmra.mrb[0].mxu0 %v7229
    %v7301 = vpop.f32.mrb[0].mxu0
    %v7302 = vadd.f32 %v7132, %v7301
    %v7303 = vpop.f32.mrb[0].mxu0
    %v7304 = vpop.f32.mrb[0].mxu0
    %v7305 = vadd.f32 %v7137, %v7304
    %v7306 = vpop.f32.mrb[0].mxu0
    %7307 = vmatprep.mubr.bf16.mxu0 0
    %7308 = vmatmul.mubr.bf16.gmra.mrb[0].mxu0 %v7232
    %v7309 = vpop.f32.mrb[0].mxu0
    %v7310 = vadd.f32 %v7142, %v7309
    %v7311 = vpop.f32.mrb[0].mxu0
    %v7312 = vpop.f32.mrb[0].mxu0
    %v7313 = vadd.f32 %v7147, %v7312
    %v7314 = vpop.f32.mrb[0].mxu0
    %7315 = vmatprep.mubr.bf16.mxu0 0
    %7316 = vmatmul.mubr.bf16.gmra.mrb[0].mxu0 %v7235
    %v7317 = vpop.f32.mrb[0].mxu0
    %v7318 = vadd.f32 %v7152, %v7317
    %v7319 = vpop.f32.mrb[0].mxu0
    %v7320 = vpop.f32.mrb[0].mxu0
    %v7321 = vadd.f32 %v7157, %v7320
    %v7322 = vpop.f32.mrb[0].mxu0
    %7323 = vmatprep.mubr.bf16.mxu0 0
    %7324 = vmatmul.mubr.bf16.gmra.mrb[0].mxu0 %v7238
    %v7325 = vpop.f32.mrb[0].mxu0
    %v7326 = vadd.f32 %v7162, %v7325
    %v7327 = vpop.f32.mrb[0].mxu0
    %v7328 = vpop.f32.mrb[0].mxu0
    %v7329 = vadd.f32 %v7167, %v7328
    %v7330 = vpop.f32.mrb[0].mxu0
    %7331 = vmatprep.mubr.bf16.mxu0 0
    %7332 = vmatmul.mubr.bf16.gmra.mrb[0].mxu0 %v7241
    %v7333 = vpop.f32.mrb[0].mxu0
    %v7334 = vadd.f32 %v7172, %v7333
    %v7335 = vpop.f32.mrb[0].mxu0
    %v7336 = vpop.f32.mrb[0].mxu0
    %v7337 = vadd.f32 %v7177, %v7336
    %v7338 = vpop.f32.mrb[0].mxu0
    %7339 = vdwg.mxu0
    %v7340 = vmax.f32 %v7278, 0.0
    %v7341 = vmax.f32 %v7281, 0.0
    %v7342 = vmax.f32 %v7286, 0.0
    %v7343 = vmax.f32 %v7289, 0.0
    %v7344 = vmax.f32 %v7294, 0.0
    %v7345 = vmax.f32 %v7297, 0.0
    %v7346 = vmax.f32 %v7302, 0.0
    %v7347 = vmax.f32 %v7305, 0.0
    %v7348 = vmax.f32 %v7310, 0.0
    %v7349 = vmax.f32 %v7313, 0.0
    %v7350 = vmax.f32 %v7318, 0.0
    %v7351 = vmax.f32 %v7321, 0.0
    %v7352 = vmax.f32 %v7326, 0.0
    %v7353 = vmax.f32 %v7329, 0.0
    %v7354 = vmax.f32 %v7334, 0.0
    %v7355 = vmax.f32 %v7337, 0.0
    %s7356 = scalar_lea.vmem %s11, 640
    %v7357 = vld [vmem:[%s7356] sm:$0xf]
    %v7358 = vld [vmem:[%s7356 + $0x4] sm:$0xf]
    %v7359 = vld [vmem:[%s7356 + $0x8] sm:$0xf]
    %v7360 = vld [vmem:[%s7356 + $0xc] sm:$0xf]
    %v7361 = vld [vmem:[%s7356 + $0x10] sm:$0xf]
    %v7362 = vld [vmem:[%s7356 + $0x14] sm:$0xf]
    %v7363 = vld [vmem:[%s7356 + $0x18] sm:$0xf]
    %v7364 = vld [vmem:[%s7356 + $0x1c] sm:$0xf]
    %v7365 = vld [vmem:[%s7356 + $0x20] sm:$0xf]
    %v7366 = vld [vmem:[%s7356 + $0x24] sm:$0xf]
    %v7367 = vld [vmem:[%s7356 + $0x28] sm:$0xf]
    %v7368 = vld [vmem:[%s7356 + $0x2c] sm:$0xf]
    %v7369 = vld [vmem:[%s7356 + $0x30] sm:$0xf]
    %v7370 = vld [vmem:[%s7356 + $0x34] sm:$0xf]
    %v7371 = vld [vmem:[%s7356 + $0x38] sm:$0xf]
    %v7372 = vld [vmem:[%s7356 + $0x3c] sm:$0xf]
    %v7373 = vpack.c.bf16 %v7341, %v7340
    %v7374 = vpack.c.bf16 %v7343, %v7342
    %v7375 = vpack.c.bf16 %v7345, %v7344
    %v7376 = vpack.c.bf16 %v7347, %v7346
    %v7377 = vpack.c.bf16 %v7349, %v7348
    %v7378 = vpack.c.bf16 %v7351, %v7350
    %v7379 = vpack.c.bf16 %v7353, %v7352
    %v7380 = vpack.c.bf16 %v7355, %v7354
    %s7381 = scalar_lea.vmem %s12, 1280
    %v7382 = vld [vmem:[%s7381] sm:$0xff]
    %v7383 = vld [vmem:[%s7381 + $0x8] sm:$0xff]
    %v7384 = vld [vmem:[%s7381 + $0x10] sm:$0xff]
    %v7385 = vld [vmem:[%s7381 + $0x18] sm:$0xff]
    %v7386 = vld [vmem:[%s7381 + $0x20] sm:$0xff]
    %v7387 = vld [vmem:[%s7381 + $0x28] sm:$0xff]
    %v7388 = vld [vmem:[%s7381 + $0x30] sm:$0xff]
    %v7389 = vld [vmem:[%s7381 + $0x38] sm:$0xff]
    %v7390 = vld [vmem:[%s7381 + $0x40] sm:$0xff]
    %v7391 = vld [vmem:[%s7381 + $0x48] sm:$0xff]
    %v7392 = vld [vmem:[%s7381 + $0x50] sm:$0xff]
    %v7393 = vld [vmem:[%s7381 + $0x58] sm:$0xff]
    %v7394 = vld [vmem:[%s7381 + $0x60] sm:$0xff]
    %v7395 = vld [vmem:[%s7381 + $0x68] sm:$0xff]
    %v7396 = vld [vmem:[%s7381 + $0x70] sm:$0xff]
    %v7397 = vld [vmem:[%s7381 + $0x78] sm:$0xff]
    %7399 = vset.pattern.permute.xlu0 0
    %7400 = vperm.xlu0 %7399, %v7382
    %v7401 = vpop.permute.xlu0 %7400
    %7404 = vset.pattern.permute.xlu0 0
    %7405 = vperm.xlu0 %7404, %v7383
    %v7406 = vpop.permute.xlu0 %7405
    %7409 = vset.pattern.permute.xlu0 0
    %7410 = vperm.xlu0 %7409, %v7384
    %v7411 = vpop.permute.xlu0 %7410
    %7414 = vset.pattern.permute.xlu0 0
    %7415 = vperm.xlu0 %7414, %v7385
    %v7416 = vpop.permute.xlu0 %7415
    %7419 = vset.pattern.permute.xlu0 0
    %7420 = vperm.xlu0 %7419, %v7386
    %v7421 = vpop.permute.xlu0 %7420
    %7424 = vset.pattern.permute.xlu0 0
    %7425 = vperm.xlu0 %7424, %v7387
    %v7426 = vpop.permute.xlu0 %7425
    %7429 = vset.pattern.permute.xlu0 0
    %7430 = vperm.xlu0 %7429, %v7388
    %v7431 = vpop.permute.xlu0 %7430
    %7434 = vset.pattern.permute.xlu0 0
    %7435 = vperm.xlu0 %7434, %v7389
    %v7436 = vpop.permute.xlu0 %7435
    %7439 = vset.pattern.permute.xlu0 0
    %7440 = vperm.xlu0 %7439, %v7390
    %v7441 = vpop.permute.xlu0 %7440
    %7444 = vset.pattern.permute.xlu0 0
    %7445 = vperm.xlu0 %7444, %v7391
    %v7446 = vpop.permute.xlu0 %7445
    %7449 = vset.pattern.permute.xlu0 0
    %7450 = vperm.xlu0 %7449, %v7392
    %v7451 = vpop.permute.xlu0 %7450
    %7454 = vset.pattern.permute.xlu0 0
    %7455 = vperm.xlu0 %7454, %v7393
    %v7456 = vpop.permute.xlu0 %7455
    %7459 = vset.pattern.permute.xlu0 0
    %7460 = vperm.xlu0 %7459, %v7394
    %v7461 = vpop.permute.xlu0 %7460
    %7464 = vset.pattern.permute.xlu0 0
    %7465 = vperm.xlu0 %7464, %v7395
    %v7466 = vpop.permute.xlu0 %7465
    %7469 = vset.pattern.permute.xlu0 0
    %7470 = vperm.xlu0 %7469, %v7396
    %v7471 = vpop.permute.xlu0 %7470
    %7474 = vset.pattern.permute.xlu0 0
    %7475 = vperm.xlu0 %7474, %v7397
    %v7476 = vpop.permute.xlu0 %7475
    %v7494 = vunpack.c.l.b16 %v7357
    %v7495 = vunpack.c.l.b16 %v7358
    %v7496 = vunpack.c.l.b16 %v7359
    %v7497 = vunpack.c.l.b16 %v7360
    %v7498 = vunpack.c.l.b16 %v7361
    %v7499 = vunpack.c.l.b16 %v7362
    %v7500 = vunpack.c.l.b16 %v7363
    %v7501 = vunpack.c.l.b16 %v7364
    %v7502 = vunpack.c.l.b16 %v7365
    %v7503 = vunpack.c.l.b16 %v7366
    %v7504 = vunpack.c.l.b16 %v7367
    %v7505 = vunpack.c.l.b16 %v7368
    %v7506 = vunpack.c.l.b16 %v7369
    %v7507 = vunpack.c.l.b16 %v7370
    %v7508 = vunpack.c.l.b16 %v7371
    %v7509 = vunpack.c.l.b16 %v7372
    %v7510 = vpack.c.b16 %v7495, %v7494
    %v7511 = vpack.c.b16 %v7497, %v7496
    %v7512 = vpack.c.b16 %v7499, %v7498
    %v7513 = vpack.c.b16 %v7501, %v7500
    %v7514 = vpack.c.b16 %v7503, %v7502
    %v7515 = vpack.c.b16 %v7505, %v7504
    %v7516 = vpack.c.b16 %v7507, %v7506
    %v7517 = vpack.c.b16 %v7509, %v7508
    %7526 = vmatprep.subr.bf16.mxu0 0
    %7527 = vmatpush1.bf16.msra.mxu0 %v7373
    %7528 = vmatprep.subr.bf16.mxu0 0
    %7529 = vmatpush1.bf16.msra.mxu0 %v7374
    %7530 = vmatprep.subr.bf16.mxu0 0
    %7531 = vmatpush1.bf16.msra.mxu0 %v7375
    %7532 = vmatprep.subr.bf16.mxu0 0
    %7533 = vmatpush1.bf16.msra.mxu0 %v7376
    %7534 = vmatprep.subr.bf16.mxu0 0
    %7535 = vmatpush1.bf16.msra.mxu0 %v7377
    %7536 = vmatprep.subr.bf16.mxu0 0
    %7537 = vmatpush1.bf16.msra.mxu0 %v7378
    %7538 = vmatprep.subr.bf16.mxu0 0
    %7539 = vmatpush1.bf16.msra.mxu0 %v7379
    %7540 = vmatprep.subr.bf16.mxu0 0
    %7541 = vmatpush1.bf16.msra.mxu0 %v7380
    %7542 = vmatprep.subr.bf16.mxu0 0
    %7543 = vmatpush1.bf16.msra.mxu0 0
    %7544 = vmatprep.subr.bf16.mxu0 0
    %7545 = vmatpush1.bf16.msra.mxu0 0
    %7546 = vmatprep.subr.bf16.mxu0 0
    %7547 = vmatpush1.bf16.msra.mxu0 0
    %7548 = vmatprep.subr.bf16.mxu0 0
    %7549 = vmatpush1.bf16.msra.mxu0 0
    %7550 = vmatprep.subr.bf16.mxu0 0
    %7551 = vmatpush1.bf16.msra.mxu0 0
    %7552 = vmatprep.subr.bf16.mxu0 0
    %7553 = vmatpush1.bf16.msra.mxu0 0
    %7554 = vmatprep.subr.bf16.mxu0 0
    %7555 = vmatpush1.bf16.msra.mxu0 0
    %7556 = vmatprep.subr.bf16.mxu0 0
    %7557 = vmatpush1.bf16.msra.mxu0 0
    %7558 = vmatprep.mubr.bf16.mxu0 0
    %7559 = vmatmul.mubr.bf16.gmra.mrb[0].mxu0 %v7510
    %v7560 = vpop.f32.mrb[0].mxu0
    %v7561 = vadd.f32 %v7401, %v7560
    %v7562 = vpop.f32.mrb[0].mxu0
    %v7563 = vpop.f32.mrb[0].mxu0
    %v7564 = vadd.f32 %v7406, %v7563
    %v7565 = vpop.f32.mrb[0].mxu0
    %7566 = vmatprep.mubr.bf16.mxu0 0
    %7567 = vmatmul.mubr.bf16.gmra.mrb[0].mxu0 %v7511
    %v7568 = vpop.f32.mrb[0].mxu0
    %v7569 = vadd.f32 %v7411, %v7568
    %v7570 = vpop.f32.mrb[0].mxu0
    %v7571 = vpop.f32.mrb[0].mxu0
    %v7572 = vadd.f32 %v7416, %v7571
    %v7573 = vpop.f32.mrb[0].mxu0
    %7574 = vmatprep.mubr.bf16.mxu0 0
    %7575 = vmatmul.mubr.bf16.gmra.mrb[0].mxu0 %v7512
    %v7576 = vpop.f32.mrb[0].mxu0
    %v7577 = vadd.f32 %v7421, %v7576
    %v7578 = vpop.f32.mrb[0].mxu0
    %v7579 = vpop.f32.mrb[0].mxu0
    %v7580 = vadd.f32 %v7426, %v7579
    %v7581 = vpop.f32.mrb[0].mxu0
    %7582 = vmatprep.mubr.bf16.mxu0 0
    %7583 = vmatmul.mubr.bf16.gmra.mrb[0].mxu0 %v7513
    %v7584 = vpop.f32.mrb[0].mxu0
    %v7585 = vadd.f32 %v7431, %v7584
    %v7586 = vpop.f32.mrb[0].mxu0
    %v7587 = vpop.f32.mrb[0].mxu0
    %v7588 = vadd.f32 %v7436, %v7587
    %v7589 = vpop.f32.mrb[0].mxu0
    %7590 = vmatprep.mubr.bf16.mxu0 0
    %7591 = vmatmul.mubr.bf16.gmra.mrb[0].mxu0 %v7514
    %v7592 = vpop.f32.mrb[0].mxu0
    %v7593 = vadd.f32 %v7441, %v7592
    %v7594 = vpop.f32.mrb[0].mxu0
    %v7595 = vpop.f32.mrb[0].mxu0
    %v7596 = vadd.f32 %v7446, %v7595
    %v7597 = vpop.f32.mrb[0].mxu0
    %7598 = vmatprep.mubr.bf16.mxu0 0
    %7599 = vmatmul.mubr.bf16.gmra.mrb[0].mxu0 %v7515
    %v7600 = vpop.f32.mrb[0].mxu0
    %v7601 = vadd.f32 %v7451, %v7600
    %v7602 = vpop.f32.mrb[0].mxu0
    %v7603 = vpop.f32.mrb[0].mxu0
    %v7604 = vadd.f32 %v7456, %v7603
    %v7605 = vpop.f32.mrb[0].mxu0
    %7606 = vmatprep.mubr.bf16.mxu0 0
    %7607 = vmatmul.mubr.bf16.gmra.mrb[0].mxu0 %v7516
    %v7608 = vpop.f32.mrb[0].mxu0
    %v7609 = vadd.f32 %v7461, %v7608
    %v7610 = vpop.f32.mrb[0].mxu0
    %v7611 = vpop.f32.mrb[0].mxu0
    %v7612 = vadd.f32 %v7466, %v7611
    %v7613 = vpop.f32.mrb[0].mxu0
    %7614 = vmatprep.mubr.bf16.mxu0 0
    %7615 = vmatmul.mubr.bf16.gmra.mrb[0].mxu0 %v7517
    %v7616 = vpop.f32.mrb[0].mxu0
    %v7617 = vadd.f32 %v7471, %v7616
    %v7618 = vpop.f32.mrb[0].mxu0
    %v7619 = vpop.f32.mrb[0].mxu0
    %v7620 = vadd.f32 %v7476, %v7619
    %v7621 = vpop.f32.mrb[0].mxu0
    %7622 = vdwg.mxu0
    %v7623 = vmax.f32 %v7561, 0.0
    %v7624 = vmax.f32 %v7564, 0.0
    %v7625 = vmax.f32 %v7569, 0.0
    %v7626 = vmax.f32 %v7572, 0.0
    %v7627 = vmax.f32 %v7577, 0.0
    %v7628 = vmax.f32 %v7580, 0.0
    %v7629 = vmax.f32 %v7585, 0.0
    %v7630 = vmax.f32 %v7588, 0.0
    %v7631 = vmax.f32 %v7593, 0.0
    %v7632 = vmax.f32 %v7596, 0.0
    %v7633 = vmax.f32 %v7601, 0.0
    %v7634 = vmax.f32 %v7604, 0.0
    %v7635 = vmax.f32 %v7609, 0.0
    %v7636 = vmax.f32 %v7612, 0.0
    %v7637 = vmax.f32 %v7617, 0.0
    %v7638 = vmax.f32 %v7620, 0.0
    %v7639 = vld [vmem:[%s13 + $0x28] sm:$0xf]
    %v7640 = vld [vmem:[%s13 + $0x60] sm:$0xf]
    %v7641 = vld [vmem:[%s13 + $0x98] sm:$0xf]
    %v7642 = vld [vmem:[%s13 + $0xd0] sm:$0xf]
    %v7643 = vpack.c.bf16 %v7624, %v7623
    %v7644 = vpack.c.bf16 %v7626, %v7625
    %v7645 = vpack.c.bf16 %v7628, %v7627
    %v7646 = vpack.c.bf16 %v7630, %v7629
    %v7647 = vpack.c.bf16 %v7632, %v7631
    %v7648 = vpack.c.bf16 %v7634, %v7633
    %v7649 = vpack.c.bf16 %v7636, %v7635
    %v7650 = vpack.c.bf16 %v7638, %v7637
    %v7655 = vunpack.c.l.b16 %v7639
    %v7656 = vunpack.c.l.b16 %v7640
    %v7657 = vunpack.c.l.b16 %v7641
    %v7658 = vunpack.c.l.b16 %v7642
    %v7659 = vpack.c.b16 %v7656, %v7655
    %v7660 = vpack.c.b16 %v7658, %v7657
    %7663 = vmatprep.subr.bf16.mxu0 0
    %7664 = vmatpush1.bf16.msra.mxu0 %v7643
    %7665 = vmatprep.subr.bf16.mxu0 0
    %7666 = vmatpush1.bf16.msra.mxu0 %v7644
    %7667 = vmatprep.subr.bf16.mxu0 0
    %7668 = vmatpush1.bf16.msra.mxu0 %v7645
    %7669 = vmatprep.subr.bf16.mxu0 0
    %7670 = vmatpush1.bf16.msra.mxu0 %v7646
    %7671 = vmatprep.subr.bf16.mxu0 0
    %7672 = vmatpush1.bf16.msra.mxu0 %v7647
    %7673 = vmatprep.subr.bf16.mxu0 0
    %7674 = vmatpush1.bf16.msra.mxu0 %v7648
    %7675 = vmatprep.subr.bf16.mxu0 0
    %7676 = vmatpush1.bf16.msra.mxu0 %v7649
    %7677 = vmatprep.subr.bf16.mxu0 0
    %7678 = vmatpush1.bf16.msra.mxu0 %v7650
    %7679 = vmatprep.subr.bf16.mxu0 0
    %7680 = vmatpush1.bf16.msra.mxu0 0
    %7681 = vmatprep.subr.bf16.mxu0 0
    %7682 = vmatpush1.bf16.msra.mxu0 0
    %7683 = vmatprep.subr.bf16.mxu0 0
    %7684 = vmatpush1.bf16.msra.mxu0 0
    %7685 = vmatprep.subr.bf16.mxu0 0
    %7686 = vmatpush1.bf16.msra.mxu0 0
    %7687 = vmatprep.subr.bf16.mxu0 0
    %7688 = vmatpush1.bf16.msra.mxu0 0
    %7689 = vmatprep.subr.bf16.mxu0 0
    %7690 = vmatpush1.bf16.msra.mxu0 0
    %7691 = vmatprep.subr.bf16.mxu0 0
    %7692 = vmatpush1.bf16.msra.mxu0 0
    %7693 = vmatprep.subr.bf16.mxu0 0
    %7694 = vmatpush1.bf16.msra.mxu0 0
    %7695 = vmatprep.mubr.bf16.mxu0 0
    %7696 = vmatmul.mubr.bf16.gmra.mrb[0].mxu0 %v7659
    %v7697 = vpop.f32.mrb[0].mxu0
    %v7698 = vadd.f32 0.0, %v7697
    %v7699 = vpop.f32.mrb[0].mxu0
    %v7700 = vpop.f32.mrb[0].mxu0
    %v7701 = vadd.f32 0.0, %v7700
    %v7702 = vpop.f32.mrb[0].mxu0
    %7703 = vmatprep.mubr.bf16.mxu0 0
    %7704 = vmatmul.mubr.bf16.gmra.mrb[0].mxu0 %v7660
    %v7705 = vpop.f32.mrb[0].mxu0
    %v7706 = vadd.f32 0.0, %v7705
    %v7707 = vpop.f32.mrb[0].mxu0
    %v7708 = vpop.f32.mrb[0].mxu0
    %v7709 = vadd.f32 0.0, %v7708
    %v7710 = vpop.f32.mrb[0].mxu0
    %7711 = vdwg.mxu0
    %v7712 = vadd.f32 %v7063, %v7698
    %v7713 = vadd.f32 %v7064, %v7701
    %v7714 = vadd.f32 %v7065, %v7706
    %v7715 = vadd.f32 %v7066, %v7709
    %v7716 = vld [vmem:[%s9 + $0x2c0] sm:$0xf]
    %v7717 = vld [vmem:[%s9 + $0x2c4] sm:$0xf]
    %v7718 = vld [vmem:[%s9 + $0x2c8] sm:$0xf]
    %v7719 = vld [vmem:[%s9 + $0x2cc] sm:$0xf]
    %v7720 = vld [vmem:[%s9 + $0x2d0] sm:$0xf]
    %v7721 = vld [vmem:[%s9 + $0x2d4] sm:$0xf]
    %v7722 = vld [vmem:[%s9 + $0x2d8] sm:$0xf]
    %v7723 = vld [vmem:[%s9 + $0x2dc] sm:$0xf]
    %v7724 = vld [vmem:[%s9 + $0x2e0] sm:$0xf]
    %v7725 = vld [vmem:[%s9 + $0x2e4] sm:$0xf]
    %v7726 = vld [vmem:[%s9 + $0x2e8] sm:$0xf]
    %v7727 = vld [vmem:[%s9 + $0x2ec] sm:$0xf]
    %v7728 = vld [vmem:[%s9 + $0x2f0] sm:$0xf]
    %v7729 = vld [vmem:[%s9 + $0x2f4] sm:$0xf]
    %v7730 = vld [vmem:[%s9 + $0x2f8] sm:$0xf]
    %v7731 = vld [vmem:[%s9 + $0x2fc] sm:$0xf]
    %v7732 = vld [vmem:[%s10 + $0x580] sm:$0xff]
    %v7733 = vld [vmem:[%s10 + $0x588] sm:$0xff]
    %v7734 = vld [vmem:[%s10 + $0x590] sm:$0xff]
    %v7735 = vld [vmem:[%s10 + $0x598] sm:$0xff]
    %v7736 = vld [vmem:[%s10 + $0x5a0] sm:$0xff]
    %v7737 = vld [vmem:[%s10 + $0x5a8] sm:$0xff]
    %v7738 = vld [vmem:[%s10 + $0x5b0] sm:$0xff]
    %v7739 = vld [vmem:[%s10 + $0x5b8] sm:$0xff]
    %v7740 = vld [vmem:[%s10 + $0x5c0] sm:$0xff]
    %v7741 = vld [vmem:[%s10 + $0x5c8] sm:$0xff]
    %v7742 = vld [vmem:[%s10 + $0x5d0] sm:$0xff]
    %v7743 = vld [vmem:[%s10 + $0x5d8] sm:$0xff]
    %v7744 = vld [vmem:[%s10 + $0x5e0] sm:$0xff]
    %v7745 = vld [vmem:[%s10 + $0x5e8] sm:$0xff]
    %v7746 = vld [vmem:[%s10 + $0x5f0] sm:$0xff]
    %v7747 = vld [vmem:[%s10 + $0x5f8] sm:$0xff]
    %7749 = vset.pattern.permute.xlu0 0
    %7750 = vperm.xlu0 %7749, %v7732
    %v7751 = vpop.permute.xlu0 %7750
    %7754 = vset.pattern.permute.xlu0 0
    %7755 = vperm.xlu0 %7754, %v7733
    %v7756 = vpop.permute.xlu0 %7755
    %7759 = vset.pattern.permute.xlu0 0
    %7760 = vperm.xlu0 %7759, %v7734
    %v7761 = vpop.permute.xlu0 %7760
    %7764 = vset.pattern.permute.xlu0 0
    %7765 = vperm.xlu0 %7764, %v7735
    %v7766 = vpop.permute.xlu0 %7765
    %7769 = vset.pattern.permute.xlu0 0
    %7770 = vperm.xlu0 %7769, %v7736
    %v7771 = vpop.permute.xlu0 %7770
    %7774 = vset.pattern.permute.xlu0 0
    %7775 = vperm.xlu0 %7774, %v7737
    %v7776 = vpop.permute.xlu0 %7775
    %7779 = vset.pattern.permute.xlu0 0
    %7780 = vperm.xlu0 %7779, %v7738
    %v7781 = vpop.permute.xlu0 %7780
    %7784 = vset.pattern.permute.xlu0 0
    %7785 = vperm.xlu0 %7784, %v7739
    %v7786 = vpop.permute.xlu0 %7785
    %7789 = vset.pattern.permute.xlu0 0
    %7790 = vperm.xlu0 %7789, %v7740
    %v7791 = vpop.permute.xlu0 %7790
    %7794 = vset.pattern.permute.xlu0 0
    %7795 = vperm.xlu0 %7794, %v7741
    %v7796 = vpop.permute.xlu0 %7795
    %7799 = vset.pattern.permute.xlu0 0
    %7800 = vperm.xlu0 %7799, %v7742
    %v7801 = vpop.permute.xlu0 %7800
    %7804 = vset.pattern.permute.xlu0 0
    %7805 = vperm.xlu0 %7804, %v7743
    %v7806 = vpop.permute.xlu0 %7805
    %7809 = vset.pattern.permute.xlu0 0
    %7810 = vperm.xlu0 %7809, %v7744
    %v7811 = vpop.permute.xlu0 %7810
    %7814 = vset.pattern.permute.xlu0 0
    %7815 = vperm.xlu0 %7814, %v7745
    %v7816 = vpop.permute.xlu0 %7815
    %7819 = vset.pattern.permute.xlu0 0
    %7820 = vperm.xlu0 %7819, %v7746
    %v7821 = vpop.permute.xlu0 %7820
    %7824 = vset.pattern.permute.xlu0 0
    %7825 = vperm.xlu0 %7824, %v7747
    %v7826 = vpop.permute.xlu0 %7825
    %v7844 = vunpack.c.l.b16 %v7716
    %v7845 = vunpack.c.l.b16 %v7717
    %v7846 = vunpack.c.l.b16 %v7718
    %v7847 = vunpack.c.l.b16 %v7719
    %v7848 = vunpack.c.l.b16 %v7720
    %v7849 = vunpack.c.l.b16 %v7721
    %v7850 = vunpack.c.l.b16 %v7722
    %v7851 = vunpack.c.l.b16 %v7723
    %v7852 = vunpack.c.l.b16 %v7724
    %v7853 = vunpack.c.l.b16 %v7725
    %v7854 = vunpack.c.l.b16 %v7726
    %v7855 = vunpack.c.l.b16 %v7727
    %v7856 = vunpack.c.l.b16 %v7728
    %v7857 = vunpack.c.l.b16 %v7729
    %v7858 = vunpack.c.l.b16 %v7730
    %v7859 = vunpack.c.l.b16 %v7731
    %v7860 = vpack.c.b16 %v7845, %v7844
    %v7861 = vpack.c.b16 %v7847, %v7846
    %v7862 = vpack.c.b16 %v7849, %v7848
    %v7863 = vpack.c.b16 %v7851, %v7850
    %v7864 = vpack.c.b16 %v7853, %v7852
    %v7865 = vpack.c.b16 %v7855, %v7854
    %v7866 = vpack.c.b16 %v7857, %v7856
    %v7867 = vpack.c.b16 %v7859, %v7858
    %v7869 = vsel %vm346, %v7860, 0
    %v7872 = vsel %vm346, %v7861, 0
    %v7875 = vsel %vm346, %v7862, 0
    %v7878 = vsel %vm346, %v7863, 0
    %v7881 = vsel %vm346, %v7864, 0
    %v7884 = vsel %vm346, %v7865, 0
    %v7887 = vsel %vm346, %v7866, 0
    %v7890 = vsel %vm346, %v7867, 0
    %7892 = vmatprep.subr.bf16.mxu0 0
    %7893 = vmatpush1.bf16.msra.mxu0 %v434
    %7894 = vmatprep.subr.bf16.mxu0 0
    %7895 = vmatpush1.bf16.msra.mxu0 %v435
    %7896 = vmatprep.subr.bf16.mxu0 0
    %7897 = vmatpush1.bf16.msra.mxu0 %v436
    %7898 = vmatprep.subr.bf16.mxu0 0
    %7899 = vmatpush1.bf16.msra.mxu0 %v474
    %7900 = vmatprep.subr.bf16.mxu0 0
    %7901 = vmatpush1.bf16.msra.mxu0 0
    %7902 = vmatprep.subr.bf16.mxu0 0
    %7903 = vmatpush1.bf16.msra.mxu0 0
    %7904 = vmatprep.subr.bf16.mxu0 0
    %7905 = vmatpush1.bf16.msra.mxu0 0
    %7906 = vmatprep.subr.bf16.mxu0 0
    %7907 = vmatpush1.bf16.msra.mxu0 0
    %7908 = vmatprep.subr.bf16.mxu0 0
    %7909 = vmatpush1.bf16.msra.mxu0 0
    %7910 = vmatprep.subr.bf16.mxu0 0
    %7911 = vmatpush1.bf16.msra.mxu0 0
    %7912 = vmatprep.subr.bf16.mxu0 0
    %7913 = vmatpush1.bf16.msra.mxu0 0
    %7914 = vmatprep.subr.bf16.mxu0 0
    %7915 = vmatpush1.bf16.msra.mxu0 0
    %7916 = vmatprep.subr.bf16.mxu0 0
    %7917 = vmatpush1.bf16.msra.mxu0 0
    %7918 = vmatprep.subr.bf16.mxu0 0
    %7919 = vmatpush1.bf16.msra.mxu0 0
    %7920 = vmatprep.subr.bf16.mxu0 0
    %7921 = vmatpush1.bf16.msra.mxu0 0
    %7922 = vmatprep.subr.bf16.mxu0 0
    %7923 = vmatpush1.bf16.msra.mxu0 0
    %7924 = vmatprep.mubr.bf16.mxu0 0
    %7925 = vmatmul.mubr.bf16.gmra.mrb[0].mxu0 %v7869
    %v7926 = vpop.f32.mrb[0].mxu0
    %v7927 = vadd.f32 %v7751, %v7926
    %v7928 = vpop.f32.mrb[0].mxu0
    %v7929 = vpop.f32.mrb[0].mxu0
    %v7930 = vadd.f32 %v7756, %v7929
    %v7931 = vpop.f32.mrb[0].mxu0
    %7932 = vmatprep.mubr.bf16.mxu0 0
    %7933 = vmatmul.mubr.bf16.gmra.mrb[0].mxu0 %v7872
    %v7934 = vpop.f32.mrb[0].mxu0
    %v7935 = vadd.f32 %v7761, %v7934
    %v7936 = vpop.f32.mrb[0].mxu0
    %v7937 = vpop.f32.mrb[0].mxu0
    %v7938 = vadd.f32 %v7766, %v7937
    %v7939 = vpop.f32.mrb[0].mxu0
    %7940 = vmatprep.mubr.bf16.mxu0 0
    %7941 = vmatmul.mubr.bf16.gmra.mrb[0].mxu0 %v7875
    %v7942 = vpop.f32.mrb[0].mxu0
    %v7943 = vadd.f32 %v7771, %v7942
    %v7944 = vpop.f32.mrb[0].mxu0
    %v7945 = vpop.f32.mrb[0].mxu0
    %v7946 = vadd.f32 %v7776, %v7945
    %v7947 = vpop.f32.mrb[0].mxu0
    %7948 = vmatprep.mubr.bf16.mxu0 0
    %7949 = vmatmul.mubr.bf16.gmra.mrb[0].mxu0 %v7878
    %v7950 = vpop.f32.mrb[0].mxu0
    %v7951 = vadd.f32 %v7781, %v7950
    %v7952 = vpop.f32.mrb[0].mxu0
    %v7953 = vpop.f32.mrb[0].mxu0
    %v7954 = vadd.f32 %v7786, %v7953
    %v7955 = vpop.f32.mrb[0].mxu0
    %7956 = vmatprep.mubr.bf16.mxu0 0
    %7957 = vmatmul.mubr.bf16.gmra.mrb[0].mxu0 %v7881
    %v7958 = vpop.f32.mrb[0].mxu0
    %v7959 = vadd.f32 %v7791, %v7958
    %v7960 = vpop.f32.mrb[0].mxu0
    %v7961 = vpop.f32.mrb[0].mxu0
    %v7962 = vadd.f32 %v7796, %v7961
    %v7963 = vpop.f32.mrb[0].mxu0
    %7964 = vmatprep.mubr.bf16.mxu0 0
    %7965 = vmatmul.mubr.bf16.gmra.mrb[0].mxu0 %v7884
    %v7966 = vpop.f32.mrb[0].mxu0
    %v7967 = vadd.f32 %v7801, %v7966
    %v7968 = vpop.f32.mrb[0].mxu0
    %v7969 = vpop.f32.mrb[0].mxu0
    %v7970 = vadd.f32 %v7806, %v7969
    %v7971 = vpop.f32.mrb[0].mxu0
    %7972 = vmatprep.mubr.bf16.mxu0 0
    %7973 = vmatmul.mubr.bf16.gmra.mrb[0].mxu0 %v7887
    %v7974 = vpop.f32.mrb[0].mxu0
    %v7975 = vadd.f32 %v7811, %v7974
    %v7976 = vpop.f32.mrb[0].mxu0
    %v7977 = vpop.f32.mrb[0].mxu0
    %v7978 = vadd.f32 %v7816, %v7977
    %v7979 = vpop.f32.mrb[0].mxu0
    %7980 = vmatprep.mubr.bf16.mxu0 0
    %7981 = vmatmul.mubr.bf16.gmra.mrb[0].mxu0 %v7890
    %v7982 = vpop.f32.mrb[0].mxu0
    %v7983 = vadd.f32 %v7821, %v7982
    %v7984 = vpop.f32.mrb[0].mxu0
    %v7985 = vpop.f32.mrb[0].mxu0
    %v7986 = vadd.f32 %v7826, %v7985
    %v7987 = vpop.f32.mrb[0].mxu0
    %7988 = vdwg.mxu0
    %v7989 = vmax.f32 %v7927, 0.0
    %v7990 = vmax.f32 %v7930, 0.0
    %v7991 = vmax.f32 %v7935, 0.0
    %v7992 = vmax.f32 %v7938, 0.0
    %v7993 = vmax.f32 %v7943, 0.0
    %v7994 = vmax.f32 %v7946, 0.0
    %v7995 = vmax.f32 %v7951, 0.0
    %v7996 = vmax.f32 %v7954, 0.0
    %v7997 = vmax.f32 %v7959, 0.0
    %v7998 = vmax.f32 %v7962, 0.0
    %v7999 = vmax.f32 %v7967, 0.0
    %v8000 = vmax.f32 %v7970, 0.0
    %v8001 = vmax.f32 %v7975, 0.0
    %v8002 = vmax.f32 %v7978, 0.0
    %v8003 = vmax.f32 %v7983, 0.0
    %v8004 = vmax.f32 %v7986, 0.0
    %s8005 = scalar_lea.vmem %s11, 704
    %v8006 = vld [vmem:[%s8005] sm:$0xf]
    %v8007 = vld [vmem:[%s8005 + $0x4] sm:$0xf]
    %v8008 = vld [vmem:[%s8005 + $0x8] sm:$0xf]
    %v8009 = vld [vmem:[%s8005 + $0xc] sm:$0xf]
    %v8010 = vld [vmem:[%s8005 + $0x10] sm:$0xf]
    %v8011 = vld [vmem:[%s8005 + $0x14] sm:$0xf]
    %v8012 = vld [vmem:[%s8005 + $0x18] sm:$0xf]
    %v8013 = vld [vmem:[%s8005 + $0x1c] sm:$0xf]
    %v8014 = vld [vmem:[%s8005 + $0x20] sm:$0xf]
    %v8015 = vld [vmem:[%s8005 + $0x24] sm:$0xf]
    %v8016 = vld [vmem:[%s8005 + $0x28] sm:$0xf]
    %v8017 = vld [vmem:[%s8005 + $0x2c] sm:$0xf]
    %v8018 = vld [vmem:[%s8005 + $0x30] sm:$0xf]
    %v8019 = vld [vmem:[%s8005 + $0x34] sm:$0xf]
    %v8020 = vld [vmem:[%s8005 + $0x38] sm:$0xf]
    %v8021 = vld [vmem:[%s8005 + $0x3c] sm:$0xf]
    %v8022 = vpack.c.bf16 %v7990, %v7989
    %v8023 = vpack.c.bf16 %v7992, %v7991
    %v8024 = vpack.c.bf16 %v7994, %v7993
    %v8025 = vpack.c.bf16 %v7996, %v7995
    %v8026 = vpack.c.bf16 %v7998, %v7997
    %v8027 = vpack.c.bf16 %v8000, %v7999
    %v8028 = vpack.c.bf16 %v8002, %v8001
    %v8029 = vpack.c.bf16 %v8004, %v8003
    %s8030 = scalar_lea.vmem %s12, 1408
    %v8031 = vld [vmem:[%s8030] sm:$0xff]
    %v8032 = vld [vmem:[%s8030 + $0x8] sm:$0xff]
    %v8033 = vld [vmem:[%s8030 + $0x10] sm:$0xff]
    %v8034 = vld [vmem:[%s8030 + $0x18] sm:$0xff]
    %v8035 = vld [vmem:[%s8030 + $0x20] sm:$0xff]
    %v8036 = vld [vmem:[%s8030 + $0x28] sm:$0xff]
    %v8037 = vld [vmem:[%s8030 + $0x30] sm:$0xff]
    %v8038 = vld [vmem:[%s8030 + $0x38] sm:$0xff]
    %v8039 = vld [vmem:[%s8030 + $0x40] sm:$0xff]
    %v8040 = vld [vmem:[%s8030 + $0x48] sm:$0xff]
    %v8041 = vld [vmem:[%s8030 + $0x50] sm:$0xff]
    %v8042 = vld [vmem:[%s8030 + $0x58] sm:$0xff]
    %v8043 = vld [vmem:[%s8030 + $0x60] sm:$0xff]
    %v8044 = vld [vmem:[%s8030 + $0x68] sm:$0xff]
    %v8045 = vld [vmem:[%s8030 + $0x70] sm:$0xff]
    %v8046 = vld [vmem:[%s8030 + $0x78] sm:$0xff]
    %8048 = vset.pattern.permute.xlu0 0
    %8049 = vperm.xlu0 %8048, %v8031
    %v8050 = vpop.permute.xlu0 %8049
    %8053 = vset.pattern.permute.xlu0 0
    %8054 = vperm.xlu0 %8053, %v8032
    %v8055 = vpop.permute.xlu0 %8054
    %8058 = vset.pattern.permute.xlu0 0
    %8059 = vperm.xlu0 %8058, %v8033
    %v8060 = vpop.permute.xlu0 %8059
    %8063 = vset.pattern.permute.xlu0 0
    %8064 = vperm.xlu0 %8063, %v8034
    %v8065 = vpop.permute.xlu0 %8064
    %8068 = vset.pattern.permute.xlu0 0
    %8069 = vperm.xlu0 %8068, %v8035
    %v8070 = vpop.permute.xlu0 %8069
    %8073 = vset.pattern.permute.xlu0 0
    %8074 = vperm.xlu0 %8073, %v8036
    %v8075 = vpop.permute.xlu0 %8074
    %8078 = vset.pattern.permute.xlu0 0
    %8079 = vperm.xlu0 %8078, %v8037
    %v8080 = vpop.permute.xlu0 %8079
    %8083 = vset.pattern.permute.xlu0 0
    %8084 = vperm.xlu0 %8083, %v8038
    %v8085 = vpop.permute.xlu0 %8084
    %8088 = vset.pattern.permute.xlu0 0
    %8089 = vperm.xlu0 %8088, %v8039
    %v8090 = vpop.permute.xlu0 %8089
    %8093 = vset.pattern.permute.xlu0 0
    %8094 = vperm.xlu0 %8093, %v8040
    %v8095 = vpop.permute.xlu0 %8094
    %8098 = vset.pattern.permute.xlu0 0
    %8099 = vperm.xlu0 %8098, %v8041
    %v8100 = vpop.permute.xlu0 %8099
    %8103 = vset.pattern.permute.xlu0 0
    %8104 = vperm.xlu0 %8103, %v8042
    %v8105 = vpop.permute.xlu0 %8104
    %8108 = vset.pattern.permute.xlu0 0
    %8109 = vperm.xlu0 %8108, %v8043
    %v8110 = vpop.permute.xlu0 %8109
    %8113 = vset.pattern.permute.xlu0 0
    %8114 = vperm.xlu0 %8113, %v8044
    %v8115 = vpop.permute.xlu0 %8114
    %8118 = vset.pattern.permute.xlu0 0
    %8119 = vperm.xlu0 %8118, %v8045
    %v8120 = vpop.permute.xlu0 %8119
    %8123 = vset.pattern.permute.xlu0 0
    %8124 = vperm.xlu0 %8123, %v8046
    %v8125 = vpop.permute.xlu0 %8124
    %v8143 = vunpack.c.l.b16 %v8006
    %v8144 = vunpack.c.l.b16 %v8007
    %v8145 = vunpack.c.l.b16 %v8008
    %v8146 = vunpack.c.l.b16 %v8009
    %v8147 = vunpack.c.l.b16 %v8010
    %v8148 = vunpack.c.l.b16 %v8011
    %v8149 = vunpack.c.l.b16 %v8012
    %v8150 = vunpack.c.l.b16 %v8013
    %v8151 = vunpack.c.l.b16 %v8014
    %v8152 = vunpack.c.l.b16 %v8015
    %v8153 = vunpack.c.l.b16 %v8016
    %v8154 = vunpack.c.l.b16 %v8017
    %v8155 = vunpack.c.l.b16 %v8018
    %v8156 = vunpack.c.l.b16 %v8019
    %v8157 = vunpack.c.l.b16 %v8020
    %v8158 = vunpack.c.l.b16 %v8021
    %v8159 = vpack.c.b16 %v8144, %v8143
    %v8160 = vpack.c.b16 %v8146, %v8145
    %v8161 = vpack.c.b16 %v8148, %v8147
    %v8162 = vpack.c.b16 %v8150, %v8149
    %v8163 = vpack.c.b16 %v8152, %v8151
    %v8164 = vpack.c.b16 %v8154, %v8153
    %v8165 = vpack.c.b16 %v8156, %v8155
    %v8166 = vpack.c.b16 %v8158, %v8157
    %8175 = vmatprep.subr.bf16.mxu0 0
    %8176 = vmatpush1.bf16.msra.mxu0 %v8022
    %8177 = vmatprep.subr.bf16.mxu0 0
    %8178 = vmatpush1.bf16.msra.mxu0 %v8023
    %8179 = vmatprep.subr.bf16.mxu0 0
    %8180 = vmatpush1.bf16.msra.mxu0 %v8024
    %8181 = vmatprep.subr.bf16.mxu0 0
    %8182 = vmatpush1.bf16.msra.mxu0 %v8025
    %8183 = vmatprep.subr.bf16.mxu0 0
    %8184 = vmatpush1.bf16.msra.mxu0 %v8026
    %8185 = vmatprep.subr.bf16.mxu0 0
    %8186 = vmatpush1.bf16.msra.mxu0 %v8027
    %8187 = vmatprep.subr.bf16.mxu0 0
    %8188 = vmatpush1.bf16.msra.mxu0 %v8028
    %8189 = vmatprep.subr.bf16.mxu0 0
    %8190 = vmatpush1.bf16.msra.mxu0 %v8029
    %8191 = vmatprep.subr.bf16.mxu0 0
    %8192 = vmatpush1.bf16.msra.mxu0 0
    %8193 = vmatprep.subr.bf16.mxu0 0
    %8194 = vmatpush1.bf16.msra.mxu0 0
    %8195 = vmatprep.subr.bf16.mxu0 0
    %8196 = vmatpush1.bf16.msra.mxu0 0
    %8197 = vmatprep.subr.bf16.mxu0 0
    %8198 = vmatpush1.bf16.msra.mxu0 0
    %8199 = vmatprep.subr.bf16.mxu0 0
    %8200 = vmatpush1.bf16.msra.mxu0 0
    %8201 = vmatprep.subr.bf16.mxu0 0
    %8202 = vmatpush1.bf16.msra.mxu0 0
    %8203 = vmatprep.subr.bf16.mxu0 0
    %8204 = vmatpush1.bf16.msra.mxu0 0
    %8205 = vmatprep.subr.bf16.mxu0 0
    %8206 = vmatpush1.bf16.msra.mxu0 0
    %8207 = vmatprep.mubr.bf16.mxu0 0
    %8208 = vmatmul.mubr.bf16.gmra.mrb[0].mxu0 %v8159
    %v8209 = vpop.f32.mrb[0].mxu0
    %v8210 = vadd.f32 %v8050, %v8209
    %v8211 = vpop.f32.mrb[0].mxu0
    %v8212 = vpop.f32.mrb[0].mxu0
    %v8213 = vadd.f32 %v8055, %v8212
    %v8214 = vpop.f32.mrb[0].mxu0
    %8215 = vmatprep.mubr.bf16.mxu0 0
    %8216 = vmatmul.mubr.bf16.gmra.mrb[0].mxu0 %v8160
    %v8217 = vpop.f32.mrb[0].mxu0
    %v8218 = vadd.f32 %v8060, %v8217
    %v8219 = vpop.f32.mrb[0].mxu0
    %v8220 = vpop.f32.mrb[0].mxu0
    %v8221 = vadd.f32 %v8065, %v8220
    %v8222 = vpop.f32.mrb[0].mxu0
    %8223 = vmatprep.mubr.bf16.mxu0 0
    %8224 = vmatmul.mubr.bf16.gmra.mrb[0].mxu0 %v8161
    %v8225 = vpop.f32.mrb[0].mxu0
    %v8226 = vadd.f32 %v8070, %v8225
    %v8227 = vpop.f32.mrb[0].mxu0
    %v8228 = vpop.f32.mrb[0].mxu0
    %v8229 = vadd.f32 %v8075, %v8228
    %v8230 = vpop.f32.mrb[0].mxu0
    %8231 = vmatprep.mubr.bf16.mxu0 0
    %8232 = vmatmul.mubr.bf16.gmra.mrb[0].mxu0 %v8162
    %v8233 = vpop.f32.mrb[0].mxu0
    %v8234 = vadd.f32 %v8080, %v8233
    %v8235 = vpop.f32.mrb[0].mxu0
    %v8236 = vpop.f32.mrb[0].mxu0
    %v8237 = vadd.f32 %v8085, %v8236
    %v8238 = vpop.f32.mrb[0].mxu0
    %8239 = vmatprep.mubr.bf16.mxu0 0
    %8240 = vmatmul.mubr.bf16.gmra.mrb[0].mxu0 %v8163
    %v8241 = vpop.f32.mrb[0].mxu0
    %v8242 = vadd.f32 %v8090, %v8241
    %v8243 = vpop.f32.mrb[0].mxu0
    %v8244 = vpop.f32.mrb[0].mxu0
    %v8245 = vadd.f32 %v8095, %v8244
    %v8246 = vpop.f32.mrb[0].mxu0
    %8247 = vmatprep.mubr.bf16.mxu0 0
    %8248 = vmatmul.mubr.bf16.gmra.mrb[0].mxu0 %v8164
    %v8249 = vpop.f32.mrb[0].mxu0
    %v8250 = vadd.f32 %v8100, %v8249
    %v8251 = vpop.f32.mrb[0].mxu0
    %v8252 = vpop.f32.mrb[0].mxu0
    %v8253 = vadd.f32 %v8105, %v8252
    %v8254 = vpop.f32.mrb[0].mxu0
    %8255 = vmatprep.mubr.bf16.mxu0 0
    %8256 = vmatmul.mubr.bf16.gmra.mrb[0].mxu0 %v8165
    %v8257 = vpop.f32.mrb[0].mxu0
    %v8258 = vadd.f32 %v8110, %v8257
    %v8259 = vpop.f32.mrb[0].mxu0
    %v8260 = vpop.f32.mrb[0].mxu0
    %v8261 = vadd.f32 %v8115, %v8260
    %v8262 = vpop.f32.mrb[0].mxu0
    %8263 = vmatprep.mubr.bf16.mxu0 0
    %8264 = vmatmul.mubr.bf16.gmra.mrb[0].mxu0 %v8166
    %v8265 = vpop.f32.mrb[0].mxu0
    %v8266 = vadd.f32 %v8120, %v8265
    %v8267 = vpop.f32.mrb[0].mxu0
    %v8268 = vpop.f32.mrb[0].mxu0
    %v8269 = vadd.f32 %v8125, %v8268
    %v8270 = vpop.f32.mrb[0].mxu0
    %8271 = vdwg.mxu0
    %v8272 = vmax.f32 %v8210, 0.0
    %v8273 = vmax.f32 %v8213, 0.0
    %v8274 = vmax.f32 %v8218, 0.0
    %v8275 = vmax.f32 %v8221, 0.0
    %v8276 = vmax.f32 %v8226, 0.0
    %v8277 = vmax.f32 %v8229, 0.0
    %v8278 = vmax.f32 %v8234, 0.0
    %v8279 = vmax.f32 %v8237, 0.0
    %v8280 = vmax.f32 %v8242, 0.0
    %v8281 = vmax.f32 %v8245, 0.0
    %v8282 = vmax.f32 %v8250, 0.0
    %v8283 = vmax.f32 %v8253, 0.0
    %v8284 = vmax.f32 %v8258, 0.0
    %v8285 = vmax.f32 %v8261, 0.0
    %v8286 = vmax.f32 %v8266, 0.0
    %v8287 = vmax.f32 %v8269, 0.0
    %v8288 = vld [vmem:[%s13 + $0x2c] sm:$0xf]
    %v8289 = vld [vmem:[%s13 + $0x64] sm:$0xf]
    %v8290 = vld [vmem:[%s13 + $0x9c] sm:$0xf]
    %v8291 = vld [vmem:[%s13 + $0xd4] sm:$0xf]
    %v8292 = vpack.c.bf16 %v8273, %v8272
    %v8293 = vpack.c.bf16 %v8275, %v8274
    %v8294 = vpack.c.bf16 %v8277, %v8276
    %v8295 = vpack.c.bf16 %v8279, %v8278
    %v8296 = vpack.c.bf16 %v8281, %v8280
    %v8297 = vpack.c.bf16 %v8283, %v8282
    %v8298 = vpack.c.bf16 %v8285, %v8284
    %v8299 = vpack.c.bf16 %v8287, %v8286
    %v8304 = vunpack.c.l.b16 %v8288
    %v8305 = vunpack.c.l.b16 %v8289
    %v8306 = vunpack.c.l.b16 %v8290
    %v8307 = vunpack.c.l.b16 %v8291
    %v8308 = vpack.c.b16 %v8305, %v8304
    %v8309 = vpack.c.b16 %v8307, %v8306
    %8312 = vmatprep.subr.bf16.mxu0 0
    %8313 = vmatpush1.bf16.msra.mxu0 %v8292
    %8314 = vmatprep.subr.bf16.mxu0 0
    %8315 = vmatpush1.bf16.msra.mxu0 %v8293
    %8316 = vmatprep.subr.bf16.mxu0 0
    %8317 = vmatpush1.bf16.msra.mxu0 %v8294
    %8318 = vmatprep.subr.bf16.mxu0 0
    %8319 = vmatpush1.bf16.msra.mxu0 %v8295
    %8320 = vmatprep.subr.bf16.mxu0 0
    %8321 = vmatpush1.bf16.msra.mxu0 %v8296
    %8322 = vmatprep.subr.bf16.mxu0 0
    %8323 = vmatpush1.bf16.msra.mxu0 %v8297
    %8324 = vmatprep.subr.bf16.mxu0 0
    %8325 = vmatpush1.bf16.msra.mxu0 %v8298
    %8326 = vmatprep.subr.bf16.mxu0 0
    %8327 = vmatpush1.bf16.msra.mxu0 %v8299
    %8328 = vmatprep.subr.bf16.mxu0 0
    %8329 = vmatpush1.bf16.msra.mxu0 0
    %8330 = vmatprep.subr.bf16.mxu0 0
    %8331 = vmatpush1.bf16.msra.mxu0 0
    %8332 = vmatprep.subr.bf16.mxu0 0
    %8333 = vmatpush1.bf16.msra.mxu0 0
    %8334 = vmatprep.subr.bf16.mxu0 0
    %8335 = vmatpush1.bf16.msra.mxu0 0
    %8336 = vmatprep.subr.bf16.mxu0 0
    %8337 = vmatpush1.bf16.msra.mxu0 0
    %8338 = vmatprep.subr.bf16.mxu0 0
    %8339 = vmatpush1.bf16.msra.mxu0 0
    %8340 = vmatprep.subr.bf16.mxu0 0
    %8341 = vmatpush1.bf16.msra.mxu0 0
    %8342 = vmatprep.subr.bf16.mxu0 0
    %8343 = vmatpush1.bf16.msra.mxu0 0
    %8344 = vmatprep.mubr.bf16.mxu0 0
    %8345 = vmatmul.mubr.bf16.gmra.mrb[0].mxu0 %v8308
    %v8346 = vpop.f32.mrb[0].mxu0
    %v8347 = vadd.f32 0.0, %v8346
    %v8348 = vpop.f32.mrb[0].mxu0
    %v8349 = vpop.f32.mrb[0].mxu0
    %v8350 = vadd.f32 0.0, %v8349
    %v8351 = vpop.f32.mrb[0].mxu0
    %8352 = vmatprep.mubr.bf16.mxu0 0
    %8353 = vmatmul.mubr.bf16.gmra.mrb[0].mxu0 %v8309
    %v8354 = vpop.f32.mrb[0].mxu0
    %v8355 = vadd.f32 0.0, %v8354
    %v8356 = vpop.f32.mrb[0].mxu0
    %v8357 = vpop.f32.mrb[0].mxu0
    %v8358 = vadd.f32 0.0, %v8357
    %v8359 = vpop.f32.mrb[0].mxu0
    %8360 = vdwg.mxu0
    %v8361 = vadd.f32 %v7712, %v8347
    %v8362 = vadd.f32 %v7713, %v8350
    %v8363 = vadd.f32 %v7714, %v8355
    %v8364 = vadd.f32 %v7715, %v8358
    %v8365 = vld [vmem:[%s9 + $0x300] sm:$0xf]
    %v8366 = vld [vmem:[%s9 + $0x304] sm:$0xf]
    %v8367 = vld [vmem:[%s9 + $0x308] sm:$0xf]
    %v8368 = vld [vmem:[%s9 + $0x30c] sm:$0xf]
    %v8369 = vld [vmem:[%s9 + $0x310] sm:$0xf]
    %v8370 = vld [vmem:[%s9 + $0x314] sm:$0xf]
    %v8371 = vld [vmem:[%s9 + $0x318] sm:$0xf]
    %v8372 = vld [vmem:[%s9 + $0x31c] sm:$0xf]
    %v8373 = vld [vmem:[%s9 + $0x320] sm:$0xf]
    %v8374 = vld [vmem:[%s9 + $0x324] sm:$0xf]
    %v8375 = vld [vmem:[%s9 + $0x328] sm:$0xf]
    %v8376 = vld [vmem:[%s9 + $0x32c] sm:$0xf]
    %v8377 = vld [vmem:[%s9 + $0x330] sm:$0xf]
    %v8378 = vld [vmem:[%s9 + $0x334] sm:$0xf]
    %v8379 = vld [vmem:[%s9 + $0x338] sm:$0xf]
    %v8380 = vld [vmem:[%s9 + $0x33c] sm:$0xf]
    %v8381 = vld [vmem:[%s10 + $0x600] sm:$0xff]
    %v8382 = vld [vmem:[%s10 + $0x608] sm:$0xff]
    %v8383 = vld [vmem:[%s10 + $0x610] sm:$0xff]
    %v8384 = vld [vmem:[%s10 + $0x618] sm:$0xff]
    %v8385 = vld [vmem:[%s10 + $0x620] sm:$0xff]
    %v8386 = vld [vmem:[%s10 + $0x628] sm:$0xff]
    %v8387 = vld [vmem:[%s10 + $0x630] sm:$0xff]
    %v8388 = vld [vmem:[%s10 + $0x638] sm:$0xff]
    %v8389 = vld [vmem:[%s10 + $0x640] sm:$0xff]
    %v8390 = vld [vmem:[%s10 + $0x648] sm:$0xff]
    %v8391 = vld [vmem:[%s10 + $0x650] sm:$0xff]
    %v8392 = vld [vmem:[%s10 + $0x658] sm:$0xff]
    %v8393 = vld [vmem:[%s10 + $0x660] sm:$0xff]
    %v8394 = vld [vmem:[%s10 + $0x668] sm:$0xff]
    %v8395 = vld [vmem:[%s10 + $0x670] sm:$0xff]
    %v8396 = vld [vmem:[%s10 + $0x678] sm:$0xff]
    %8398 = vset.pattern.permute.xlu0 0
    %8399 = vperm.xlu0 %8398, %v8381
    %v8400 = vpop.permute.xlu0 %8399
    %8403 = vset.pattern.permute.xlu0 0
    %8404 = vperm.xlu0 %8403, %v8382
    %v8405 = vpop.permute.xlu0 %8404
    %8408 = vset.pattern.permute.xlu0 0
    %8409 = vperm.xlu0 %8408, %v8383
    %v8410 = vpop.permute.xlu0 %8409
    %8413 = vset.pattern.permute.xlu0 0
    %8414 = vperm.xlu0 %8413, %v8384
    %v8415 = vpop.permute.xlu0 %8414
    %8418 = vset.pattern.permute.xlu0 0
    %8419 = vperm.xlu0 %8418, %v8385
    %v8420 = vpop.permute.xlu0 %8419
    %8423 = vset.pattern.permute.xlu0 0
    %8424 = vperm.xlu0 %8423, %v8386
    %v8425 = vpop.permute.xlu0 %8424
    %8428 = vset.pattern.permute.xlu0 0
    %8429 = vperm.xlu0 %8428, %v8387
    %v8430 = vpop.permute.xlu0 %8429
    %8433 = vset.pattern.permute.xlu0 0
    %8434 = vperm.xlu0 %8433, %v8388
    %v8435 = vpop.permute.xlu0 %8434
    %8438 = vset.pattern.permute.xlu0 0
    %8439 = vperm.xlu0 %8438, %v8389
    %v8440 = vpop.permute.xlu0 %8439
    %8443 = vset.pattern.permute.xlu0 0
    %8444 = vperm.xlu0 %8443, %v8390
    %v8445 = vpop.permute.xlu0 %8444
    %8448 = vset.pattern.permute.xlu0 0
    %8449 = vperm.xlu0 %8448, %v8391
    %v8450 = vpop.permute.xlu0 %8449
    %8453 = vset.pattern.permute.xlu0 0
    %8454 = vperm.xlu0 %8453, %v8392
    %v8455 = vpop.permute.xlu0 %8454
    %8458 = vset.pattern.permute.xlu0 0
    %8459 = vperm.xlu0 %8458, %v8393
    %v8460 = vpop.permute.xlu0 %8459
    %8463 = vset.pattern.permute.xlu0 0
    %8464 = vperm.xlu0 %8463, %v8394
    %v8465 = vpop.permute.xlu0 %8464
    %8468 = vset.pattern.permute.xlu0 0
    %8469 = vperm.xlu0 %8468, %v8395
    %v8470 = vpop.permute.xlu0 %8469
    %8473 = vset.pattern.permute.xlu0 0
    %8474 = vperm.xlu0 %8473, %v8396
    %v8475 = vpop.permute.xlu0 %8474
    %v8493 = vunpack.c.l.b16 %v8365
    %v8494 = vunpack.c.l.b16 %v8366
    %v8495 = vunpack.c.l.b16 %v8367
    %v8496 = vunpack.c.l.b16 %v8368
    %v8497 = vunpack.c.l.b16 %v8369
    %v8498 = vunpack.c.l.b16 %v8370
    %v8499 = vunpack.c.l.b16 %v8371
    %v8500 = vunpack.c.l.b16 %v8372
    %v8501 = vunpack.c.l.b16 %v8373
    %v8502 = vunpack.c.l.b16 %v8374
    %v8503 = vunpack.c.l.b16 %v8375
    %v8504 = vunpack.c.l.b16 %v8376
    %v8505 = vunpack.c.l.b16 %v8377
    %v8506 = vunpack.c.l.b16 %v8378
    %v8507 = vunpack.c.l.b16 %v8379
    %v8508 = vunpack.c.l.b16 %v8380
    %v8509 = vpack.c.b16 %v8494, %v8493
    %v8510 = vpack.c.b16 %v8496, %v8495
    %v8511 = vpack.c.b16 %v8498, %v8497
    %v8512 = vpack.c.b16 %v8500, %v8499
    %v8513 = vpack.c.b16 %v8502, %v8501
    %v8514 = vpack.c.b16 %v8504, %v8503
    %v8515 = vpack.c.b16 %v8506, %v8505
    %v8516 = vpack.c.b16 %v8508, %v8507
    %v8518 = vsel %vm346, %v8509, 0
    %v8521 = vsel %vm346, %v8510, 0
    %v8524 = vsel %vm346, %v8511, 0
    %v8527 = vsel %vm346, %v8512, 0
    %v8530 = vsel %vm346, %v8513, 0
    %v8533 = vsel %vm346, %v8514, 0
    %v8536 = vsel %vm346, %v8515, 0
    %v8539 = vsel %vm346, %v8516, 0
    %8541 = vmatprep.subr.bf16.mxu0 0
    %8542 = vmatpush1.bf16.msra.mxu0 %v434
    %8543 = vmatprep.subr.bf16.mxu0 0
    %8544 = vmatpush1.bf16.msra.mxu0 %v435
    %8545 = vmatprep.subr.bf16.mxu0 0
    %8546 = vmatpush1.bf16.msra.mxu0 %v436
    %8547 = vmatprep.subr.bf16.mxu0 0
    %8548 = vmatpush1.bf16.msra.mxu0 %v474
    %8549 = vmatprep.subr.bf16.mxu0 0
    %8550 = vmatpush1.bf16.msra.mxu0 0
    %8551 = vmatprep.subr.bf16.mxu0 0
    %8552 = vmatpush1.bf16.msra.mxu0 0
    %8553 = vmatprep.subr.bf16.mxu0 0
    %8554 = vmatpush1.bf16.msra.mxu0 0
    %8555 = vmatprep.subr.bf16.mxu0 0
    %8556 = vmatpush1.bf16.msra.mxu0 0
    %8557 = vmatprep.subr.bf16.mxu0 0
    %8558 = vmatpush1.bf16.msra.mxu0 0
    %8559 = vmatprep.subr.bf16.mxu0 0
    %8560 = vmatpush1.bf16.msra.mxu0 0
    %8561 = vmatprep.subr.bf16.mxu0 0
    %8562 = vmatpush1.bf16.msra.mxu0 0
    %8563 = vmatprep.subr.bf16.mxu0 0
    %8564 = vmatpush1.bf16.msra.mxu0 0
    %8565 = vmatprep.subr.bf16.mxu0 0
    %8566 = vmatpush1.bf16.msra.mxu0 0
    %8567 = vmatprep.subr.bf16.mxu0 0
    %8568 = vmatpush1.bf16.msra.mxu0 0
    %8569 = vmatprep.subr.bf16.mxu0 0
    %8570 = vmatpush1.bf16.msra.mxu0 0
    %8571 = vmatprep.subr.bf16.mxu0 0
    %8572 = vmatpush1.bf16.msra.mxu0 0
    %8573 = vmatprep.mubr.bf16.mxu0 0
    %8574 = vmatmul.mubr.bf16.gmra.mrb[0].mxu0 %v8518
    %v8575 = vpop.f32.mrb[0].mxu0
    %v8576 = vadd.f32 %v8400, %v8575
    %v8577 = vpop.f32.mrb[0].mxu0
    %v8578 = vpop.f32.mrb[0].mxu0
    %v8579 = vadd.f32 %v8405, %v8578
    %v8580 = vpop.f32.mrb[0].mxu0
    %8581 = vmatprep.mubr.bf16.mxu0 0
    %8582 = vmatmul.mubr.bf16.gmra.mrb[0].mxu0 %v8521
    %v8583 = vpop.f32.mrb[0].mxu0
    %v8584 = vadd.f32 %v8410, %v8583
    %v8585 = vpop.f32.mrb[0].mxu0
    %v8586 = vpop.f32.mrb[0].mxu0
    %v8587 = vadd.f32 %v8415, %v8586
    %v8588 = vpop.f32.mrb[0].mxu0
    %8589 = vmatprep.mubr.bf16.mxu0 0
    %8590 = vmatmul.mubr.bf16.gmra.mrb[0].mxu0 %v8524
    %v8591 = vpop.f32.mrb[0].mxu0
    %v8592 = vadd.f32 %v8420, %v8591
    %v8593 = vpop.f32.mrb[0].mxu0
    %v8594 = vpop.f32.mrb[0].mxu0
    %v8595 = vadd.f32 %v8425, %v8594
    %v8596 = vpop.f32.mrb[0].mxu0
    %8597 = vmatprep.mubr.bf16.mxu0 0
    %8598 = vmatmul.mubr.bf16.gmra.mrb[0].mxu0 %v8527
    %v8599 = vpop.f32.mrb[0].mxu0
    %v8600 = vadd.f32 %v8430, %v8599
    %v8601 = vpop.f32.mrb[0].mxu0
    %v8602 = vpop.f32.mrb[0].mxu0
    %v8603 = vadd.f32 %v8435, %v8602
    %v8604 = vpop.f32.mrb[0].mxu0
    %8605 = vmatprep.mubr.bf16.mxu0 0
    %8606 = vmatmul.mubr.bf16.gmra.mrb[0].mxu0 %v8530
    %v8607 = vpop.f32.mrb[0].mxu0
    %v8608 = vadd.f32 %v8440, %v8607
    %v8609 = vpop.f32.mrb[0].mxu0
    %v8610 = vpop.f32.mrb[0].mxu0
    %v8611 = vadd.f32 %v8445, %v8610
    %v8612 = vpop.f32.mrb[0].mxu0
    %8613 = vmatprep.mubr.bf16.mxu0 0
    %8614 = vmatmul.mubr.bf16.gmra.mrb[0].mxu0 %v8533
    %v8615 = vpop.f32.mrb[0].mxu0
    %v8616 = vadd.f32 %v8450, %v8615
    %v8617 = vpop.f32.mrb[0].mxu0
    %v8618 = vpop.f32.mrb[0].mxu0
    %v8619 = vadd.f32 %v8455, %v8618
    %v8620 = vpop.f32.mrb[0].mxu0
    %8621 = vmatprep.mubr.bf16.mxu0 0
    %8622 = vmatmul.mubr.bf16.gmra.mrb[0].mxu0 %v8536
    %v8623 = vpop.f32.mrb[0].mxu0
    %v8624 = vadd.f32 %v8460, %v8623
    %v8625 = vpop.f32.mrb[0].mxu0
    %v8626 = vpop.f32.mrb[0].mxu0
    %v8627 = vadd.f32 %v8465, %v8626
    %v8628 = vpop.f32.mrb[0].mxu0
    %8629 = vmatprep.mubr.bf16.mxu0 0
    %8630 = vmatmul.mubr.bf16.gmra.mrb[0].mxu0 %v8539
    %v8631 = vpop.f32.mrb[0].mxu0
    %v8632 = vadd.f32 %v8470, %v8631
    %v8633 = vpop.f32.mrb[0].mxu0
    %v8634 = vpop.f32.mrb[0].mxu0
    %v8635 = vadd.f32 %v8475, %v8634
    %v8636 = vpop.f32.mrb[0].mxu0
    %8637 = vdwg.mxu0
    %v8638 = vmax.f32 %v8576, 0.0
    %v8639 = vmax.f32 %v8579, 0.0
    %v8640 = vmax.f32 %v8584, 0.0
    %v8641 = vmax.f32 %v8587, 0.0
    %v8642 = vmax.f32 %v8592, 0.0
    %v8643 = vmax.f32 %v8595, 0.0
    %v8644 = vmax.f32 %v8600, 0.0
    %v8645 = vmax.f32 %v8603, 0.0
    %v8646 = vmax.f32 %v8608, 0.0
    %v8647 = vmax.f32 %v8611, 0.0
    %v8648 = vmax.f32 %v8616, 0.0
    %v8649 = vmax.f32 %v8619, 0.0
    %v8650 = vmax.f32 %v8624, 0.0
    %v8651 = vmax.f32 %v8627, 0.0
    %v8652 = vmax.f32 %v8632, 0.0
    %v8653 = vmax.f32 %v8635, 0.0
    %s8654 = scalar_lea.vmem %s11, 768
    %v8655 = vld [vmem:[%s8654] sm:$0xf]
    %v8656 = vld [vmem:[%s8654 + $0x4] sm:$0xf]
    %v8657 = vld [vmem:[%s8654 + $0x8] sm:$0xf]
    %v8658 = vld [vmem:[%s8654 + $0xc] sm:$0xf]
    %v8659 = vld [vmem:[%s8654 + $0x10] sm:$0xf]
    %v8660 = vld [vmem:[%s8654 + $0x14] sm:$0xf]
    %v8661 = vld [vmem:[%s8654 + $0x18] sm:$0xf]
    %v8662 = vld [vmem:[%s8654 + $0x1c] sm:$0xf]
    %v8663 = vld [vmem:[%s8654 + $0x20] sm:$0xf]
    %v8664 = vld [vmem:[%s8654 + $0x24] sm:$0xf]
    %v8665 = vld [vmem:[%s8654 + $0x28] sm:$0xf]
    %v8666 = vld [vmem:[%s8654 + $0x2c] sm:$0xf]
    %v8667 = vld [vmem:[%s8654 + $0x30] sm:$0xf]
    %v8668 = vld [vmem:[%s8654 + $0x34] sm:$0xf]
    %v8669 = vld [vmem:[%s8654 + $0x38] sm:$0xf]
    %v8670 = vld [vmem:[%s8654 + $0x3c] sm:$0xf]
    %v8671 = vpack.c.bf16 %v8639, %v8638
    %v8672 = vpack.c.bf16 %v8641, %v8640
    %v8673 = vpack.c.bf16 %v8643, %v8642
    %v8674 = vpack.c.bf16 %v8645, %v8644
    %v8675 = vpack.c.bf16 %v8647, %v8646
    %v8676 = vpack.c.bf16 %v8649, %v8648
    %v8677 = vpack.c.bf16 %v8651, %v8650
    %v8678 = vpack.c.bf16 %v8653, %v8652
    %s8679 = scalar_lea.vmem %s12, 1536
    %v8680 = vld [vmem:[%s8679] sm:$0xff]
    %v8681 = vld [vmem:[%s8679 + $0x8] sm:$0xff]
    %v8682 = vld [vmem:[%s8679 + $0x10] sm:$0xff]
    %v8683 = vld [vmem:[%s8679 + $0x18] sm:$0xff]
    %v8684 = vld [vmem:[%s8679 + $0x20] sm:$0xff]
    %v8685 = vld [vmem:[%s8679 + $0x28] sm:$0xff]
    %v8686 = vld [vmem:[%s8679 + $0x30] sm:$0xff]
    %v8687 = vld [vmem:[%s8679 + $0x38] sm:$0xff]
    %v8688 = vld [vmem:[%s8679 + $0x40] sm:$0xff]
    %v8689 = vld [vmem:[%s8679 + $0x48] sm:$0xff]
    %v8690 = vld [vmem:[%s8679 + $0x50] sm:$0xff]
    %v8691 = vld [vmem:[%s8679 + $0x58] sm:$0xff]
    %v8692 = vld [vmem:[%s8679 + $0x60] sm:$0xff]
    %v8693 = vld [vmem:[%s8679 + $0x68] sm:$0xff]
    %v8694 = vld [vmem:[%s8679 + $0x70] sm:$0xff]
    %v8695 = vld [vmem:[%s8679 + $0x78] sm:$0xff]
    %8697 = vset.pattern.permute.xlu0 0
    %8698 = vperm.xlu0 %8697, %v8680
    %v8699 = vpop.permute.xlu0 %8698
    %8702 = vset.pattern.permute.xlu0 0
    %8703 = vperm.xlu0 %8702, %v8681
    %v8704 = vpop.permute.xlu0 %8703
    %8707 = vset.pattern.permute.xlu0 0
    %8708 = vperm.xlu0 %8707, %v8682
    %v8709 = vpop.permute.xlu0 %8708
    %8712 = vset.pattern.permute.xlu0 0
    %8713 = vperm.xlu0 %8712, %v8683
    %v8714 = vpop.permute.xlu0 %8713
    %8717 = vset.pattern.permute.xlu0 0
    %8718 = vperm.xlu0 %8717, %v8684
    %v8719 = vpop.permute.xlu0 %8718
    %8722 = vset.pattern.permute.xlu0 0
    %8723 = vperm.xlu0 %8722, %v8685
    %v8724 = vpop.permute.xlu0 %8723
    %8727 = vset.pattern.permute.xlu0 0
    %8728 = vperm.xlu0 %8727, %v8686
    %v8729 = vpop.permute.xlu0 %8728
    %8732 = vset.pattern.permute.xlu0 0
    %8733 = vperm.xlu0 %8732, %v8687
    %v8734 = vpop.permute.xlu0 %8733
    %8737 = vset.pattern.permute.xlu0 0
    %8738 = vperm.xlu0 %8737, %v8688
    %v8739 = vpop.permute.xlu0 %8738
    %8742 = vset.pattern.permute.xlu0 0
    %8743 = vperm.xlu0 %8742, %v8689
    %v8744 = vpop.permute.xlu0 %8743
    %8747 = vset.pattern.permute.xlu0 0
    %8748 = vperm.xlu0 %8747, %v8690
    %v8749 = vpop.permute.xlu0 %8748
    %8752 = vset.pattern.permute.xlu0 0
    %8753 = vperm.xlu0 %8752, %v8691
    %v8754 = vpop.permute.xlu0 %8753
    %8757 = vset.pattern.permute.xlu0 0
    %8758 = vperm.xlu0 %8757, %v8692
    %v8759 = vpop.permute.xlu0 %8758
    %8762 = vset.pattern.permute.xlu0 0
    %8763 = vperm.xlu0 %8762, %v8693
    %v8764 = vpop.permute.xlu0 %8763
    %8767 = vset.pattern.permute.xlu0 0
    %8768 = vperm.xlu0 %8767, %v8694
    %v8769 = vpop.permute.xlu0 %8768
    %8772 = vset.pattern.permute.xlu0 0
    %8773 = vperm.xlu0 %8772, %v8695
    %v8774 = vpop.permute.xlu0 %8773
    %v8792 = vunpack.c.l.b16 %v8655
    %v8793 = vunpack.c.l.b16 %v8656
    %v8794 = vunpack.c.l.b16 %v8657
    %v8795 = vunpack.c.l.b16 %v8658
    %v8796 = vunpack.c.l.b16 %v8659
    %v8797 = vunpack.c.l.b16 %v8660
    %v8798 = vunpack.c.l.b16 %v8661
    %v8799 = vunpack.c.l.b16 %v8662
    %v8800 = vunpack.c.l.b16 %v8663
    %v8801 = vunpack.c.l.b16 %v8664
    %v8802 = vunpack.c.l.b16 %v8665
    %v8803 = vunpack.c.l.b16 %v8666
    %v8804 = vunpack.c.l.b16 %v8667
    %v8805 = vunpack.c.l.b16 %v8668
    %v8806 = vunpack.c.l.b16 %v8669
    %v8807 = vunpack.c.l.b16 %v8670
    %v8808 = vpack.c.b16 %v8793, %v8792
    %v8809 = vpack.c.b16 %v8795, %v8794
    %v8810 = vpack.c.b16 %v8797, %v8796
    %v8811 = vpack.c.b16 %v8799, %v8798
    %v8812 = vpack.c.b16 %v8801, %v8800
    %v8813 = vpack.c.b16 %v8803, %v8802
    %v8814 = vpack.c.b16 %v8805, %v8804
    %v8815 = vpack.c.b16 %v8807, %v8806
    %8824 = vmatprep.subr.bf16.mxu0 0
    %8825 = vmatpush1.bf16.msra.mxu0 %v8671
    %8826 = vmatprep.subr.bf16.mxu0 0
    %8827 = vmatpush1.bf16.msra.mxu0 %v8672
    %8828 = vmatprep.subr.bf16.mxu0 0
    %8829 = vmatpush1.bf16.msra.mxu0 %v8673
    %8830 = vmatprep.subr.bf16.mxu0 0
    %8831 = vmatpush1.bf16.msra.mxu0 %v8674
    %8832 = vmatprep.subr.bf16.mxu0 0
    %8833 = vmatpush1.bf16.msra.mxu0 %v8675
    %8834 = vmatprep.subr.bf16.mxu0 0
    %8835 = vmatpush1.bf16.msra.mxu0 %v8676
    %8836 = vmatprep.subr.bf16.mxu0 0
    %8837 = vmatpush1.bf16.msra.mxu0 %v8677
    %8838 = vmatprep.subr.bf16.mxu0 0
    %8839 = vmatpush1.bf16.msra.mxu0 %v8678
    %8840 = vmatprep.subr.bf16.mxu0 0
    %8841 = vmatpush1.bf16.msra.mxu0 0
    %8842 = vmatprep.subr.bf16.mxu0 0
    %8843 = vmatpush1.bf16.msra.mxu0 0
    %8844 = vmatprep.subr.bf16.mxu0 0
    %8845 = vmatpush1.bf16.msra.mxu0 0
    %8846 = vmatprep.subr.bf16.mxu0 0
    %8847 = vmatpush1.bf16.msra.mxu0 0
    %8848 = vmatprep.subr.bf16.mxu0 0
    %8849 = vmatpush1.bf16.msra.mxu0 0
    %8850 = vmatprep.subr.bf16.mxu0 0
    %8851 = vmatpush1.bf16.msra.mxu0 0
    %8852 = vmatprep.subr.bf16.mxu0 0
    %8853 = vmatpush1.bf16.msra.mxu0 0
    %8854 = vmatprep.subr.bf16.mxu0 0
    %8855 = vmatpush1.bf16.msra.mxu0 0
    %8856 = vmatprep.mubr.bf16.mxu0 0
    %8857 = vmatmul.mubr.bf16.gmra.mrb[0].mxu0 %v8808
    %v8858 = vpop.f32.mrb[0].mxu0
    %v8859 = vadd.f32 %v8699, %v8858
    %v8860 = vpop.f32.mrb[0].mxu0
    %v8861 = vpop.f32.mrb[0].mxu0
    %v8862 = vadd.f32 %v8704, %v8861
    %v8863 = vpop.f32.mrb[0].mxu0
    %8864 = vmatprep.mubr.bf16.mxu0 0
    %8865 = vmatmul.mubr.bf16.gmra.mrb[0].mxu0 %v8809
    %v8866 = vpop.f32.mrb[0].mxu0
    %v8867 = vadd.f32 %v8709, %v8866
    %v8868 = vpop.f32.mrb[0].mxu0
    %v8869 = vpop.f32.mrb[0].mxu0
    %v8870 = vadd.f32 %v8714, %v8869
    %v8871 = vpop.f32.mrb[0].mxu0
    %8872 = vmatprep.mubr.bf16.mxu0 0
    %8873 = vmatmul.mubr.bf16.gmra.mrb[0].mxu0 %v8810
    %v8874 = vpop.f32.mrb[0].mxu0
    %v8875 = vadd.f32 %v8719, %v8874
    %v8876 = vpop.f32.mrb[0].mxu0
    %v8877 = vpop.f32.mrb[0].mxu0
    %v8878 = vadd.f32 %v8724, %v8877
    %v8879 = vpop.f32.mrb[0].mxu0
    %8880 = vmatprep.mubr.bf16.mxu0 0
    %8881 = vmatmul.mubr.bf16.gmra.mrb[0].mxu0 %v8811
    %v8882 = vpop.f32.mrb[0].mxu0
    %v8883 = vadd.f32 %v8729, %v8882
    %v8884 = vpop.f32.mrb[0].mxu0
    %v8885 = vpop.f32.mrb[0].mxu0
    %v8886 = vadd.f32 %v8734, %v8885
    %v8887 = vpop.f32.mrb[0].mxu0
    %8888 = vmatprep.mubr.bf16.mxu0 0
    %8889 = vmatmul.mubr.bf16.gmra.mrb[0].mxu0 %v8812
    %v8890 = vpop.f32.mrb[0].mxu0
    %v8891 = vadd.f32 %v8739, %v8890
    %v8892 = vpop.f32.mrb[0].mxu0
    %v8893 = vpop.f32.mrb[0].mxu0
    %v8894 = vadd.f32 %v8744, %v8893
    %v8895 = vpop.f32.mrb[0].mxu0
    %8896 = vmatprep.mubr.bf16.mxu0 0
    %8897 = vmatmul.mubr.bf16.gmra.mrb[0].mxu0 %v8813
    %v8898 = vpop.f32.mrb[0].mxu0
    %v8899 = vadd.f32 %v8749, %v8898
    %v8900 = vpop.f32.mrb[0].mxu0
    %v8901 = vpop.f32.mrb[0].mxu0
    %v8902 = vadd.f32 %v8754, %v8901
    %v8903 = vpop.f32.mrb[0].mxu0
    %8904 = vmatprep.mubr.bf16.mxu0 0
    %8905 = vmatmul.mubr.bf16.gmra.mrb[0].mxu0 %v8814
    %v8906 = vpop.f32.mrb[0].mxu0
    %v8907 = vadd.f32 %v8759, %v8906
    %v8908 = vpop.f32.mrb[0].mxu0
    %v8909 = vpop.f32.mrb[0].mxu0
    %v8910 = vadd.f32 %v8764, %v8909
    %v8911 = vpop.f32.mrb[0].mxu0
    %8912 = vmatprep.mubr.bf16.mxu0 0
    %8913 = vmatmul.mubr.bf16.gmra.mrb[0].mxu0 %v8815
    %v8914 = vpop.f32.mrb[0].mxu0
    %v8915 = vadd.f32 %v8769, %v8914
    %v8916 = vpop.f32.mrb[0].mxu0
    %v8917 = vpop.f32.mrb[0].mxu0
    %v8918 = vadd.f32 %v8774, %v8917
    %v8919 = vpop.f32.mrb[0].mxu0
    %8920 = vdwg.mxu0
    %v8921 = vmax.f32 %v8859, 0.0
    %v8922 = vmax.f32 %v8862, 0.0
    %v8923 = vmax.f32 %v8867, 0.0
    %v8924 = vmax.f32 %v8870, 0.0
    %v8925 = vmax.f32 %v8875, 0.0
    %v8926 = vmax.f32 %v8878, 0.0
    %v8927 = vmax.f32 %v8883, 0.0
    %v8928 = vmax.f32 %v8886, 0.0
    %v8929 = vmax.f32 %v8891, 0.0
    %v8930 = vmax.f32 %v8894, 0.0
    %v8931 = vmax.f32 %v8899, 0.0
    %v8932 = vmax.f32 %v8902, 0.0
    %v8933 = vmax.f32 %v8907, 0.0
    %v8934 = vmax.f32 %v8910, 0.0
    %v8935 = vmax.f32 %v8915, 0.0
    %v8936 = vmax.f32 %v8918, 0.0
    %v8937 = vld [vmem:[%s13 + $0x30] sm:$0xf]
    %v8938 = vld [vmem:[%s13 + $0x68] sm:$0xf]
    %v8939 = vld [vmem:[%s13 + $0xa0] sm:$0xf]
    %v8940 = vld [vmem:[%s13 + $0xd8] sm:$0xf]
    %v8941 = vpack.c.bf16 %v8922, %v8921
    %v8942 = vpack.c.bf16 %v8924, %v8923
    %v8943 = vpack.c.bf16 %v8926, %v8925
    %v8944 = vpack.c.bf16 %v8928, %v8927
    %v8945 = vpack.c.bf16 %v8930, %v8929
    %v8946 = vpack.c.bf16 %v8932, %v8931
    %v8947 = vpack.c.bf16 %v8934, %v8933
    %v8948 = vpack.c.bf16 %v8936, %v8935
    %v8953 = vunpack.c.l.b16 %v8937
    %v8954 = vunpack.c.l.b16 %v8938
    %v8955 = vunpack.c.l.b16 %v8939
    %v8956 = vunpack.c.l.b16 %v8940
    %v8957 = vpack.c.b16 %v8954, %v8953
    %v8958 = vpack.c.b16 %v8956, %v8955
    %8961 = vmatprep.subr.bf16.mxu0 0
    %8962 = vmatpush1.bf16.msra.mxu0 %v8941
    %8963 = vmatprep.subr.bf16.mxu0 0
    %8964 = vmatpush1.bf16.msra.mxu0 %v8942
    %8965 = vmatprep.subr.bf16.mxu0 0
    %8966 = vmatpush1.bf16.msra.mxu0 %v8943
    %8967 = vmatprep.subr.bf16.mxu0 0
    %8968 = vmatpush1.bf16.msra.mxu0 %v8944
    %8969 = vmatprep.subr.bf16.mxu0 0
    %8970 = vmatpush1.bf16.msra.mxu0 %v8945
    %8971 = vmatprep.subr.bf16.mxu0 0
    %8972 = vmatpush1.bf16.msra.mxu0 %v8946
    %8973 = vmatprep.subr.bf16.mxu0 0
    %8974 = vmatpush1.bf16.msra.mxu0 %v8947
    %8975 = vmatprep.subr.bf16.mxu0 0
    %8976 = vmatpush1.bf16.msra.mxu0 %v8948
    %8977 = vmatprep.subr.bf16.mxu0 0
    %8978 = vmatpush1.bf16.msra.mxu0 0
    %8979 = vmatprep.subr.bf16.mxu0 0
    %8980 = vmatpush1.bf16.msra.mxu0 0
    %8981 = vmatprep.subr.bf16.mxu0 0
    %8982 = vmatpush1.bf16.msra.mxu0 0
    %8983 = vmatprep.subr.bf16.mxu0 0
    %8984 = vmatpush1.bf16.msra.mxu0 0
    %8985 = vmatprep.subr.bf16.mxu0 0
    %8986 = vmatpush1.bf16.msra.mxu0 0
    %8987 = vmatprep.subr.bf16.mxu0 0
    %8988 = vmatpush1.bf16.msra.mxu0 0
    %8989 = vmatprep.subr.bf16.mxu0 0
    %8990 = vmatpush1.bf16.msra.mxu0 0
    %8991 = vmatprep.subr.bf16.mxu0 0
    %8992 = vmatpush1.bf16.msra.mxu0 0
    %8993 = vmatprep.mubr.bf16.mxu0 0
    %8994 = vmatmul.mubr.bf16.gmra.mrb[0].mxu0 %v8957
    %v8995 = vpop.f32.mrb[0].mxu0
    %v8996 = vadd.f32 0.0, %v8995
    %v8997 = vpop.f32.mrb[0].mxu0
    %v8998 = vpop.f32.mrb[0].mxu0
    %v8999 = vadd.f32 0.0, %v8998
    %v9000 = vpop.f32.mrb[0].mxu0
    %9001 = vmatprep.mubr.bf16.mxu0 0
    %9002 = vmatmul.mubr.bf16.gmra.mrb[0].mxu0 %v8958
    %v9003 = vpop.f32.mrb[0].mxu0
    %v9004 = vadd.f32 0.0, %v9003
    %v9005 = vpop.f32.mrb[0].mxu0
    %v9006 = vpop.f32.mrb[0].mxu0
    %v9007 = vadd.f32 0.0, %v9006
    %v9008 = vpop.f32.mrb[0].mxu0
    %9009 = vdwg.mxu0
    %v9010 = vadd.f32 %v8361, %v8996
    %v9011 = vadd.f32 %v8362, %v8999
    %v9012 = vadd.f32 %v8363, %v9004
    %v9013 = vadd.f32 %v8364, %v9007
    %v9014 = vld [vmem:[%s9 + $0x340] sm:$0xf]
    %v9015 = vld [vmem:[%s9 + $0x344] sm:$0xf]
    %v9016 = vld [vmem:[%s9 + $0x348] sm:$0xf]
    %v9017 = vld [vmem:[%s9 + $0x34c] sm:$0xf]
    %v9018 = vld [vmem:[%s9 + $0x350] sm:$0xf]
    %v9019 = vld [vmem:[%s9 + $0x354] sm:$0xf]
    %v9020 = vld [vmem:[%s9 + $0x358] sm:$0xf]
    %v9021 = vld [vmem:[%s9 + $0x35c] sm:$0xf]
    %v9022 = vld [vmem:[%s9 + $0x360] sm:$0xf]
    %v9023 = vld [vmem:[%s9 + $0x364] sm:$0xf]
    %v9024 = vld [vmem:[%s9 + $0x368] sm:$0xf]
    %v9025 = vld [vmem:[%s9 + $0x36c] sm:$0xf]
    %v9026 = vld [vmem:[%s9 + $0x370] sm:$0xf]
    %v9027 = vld [vmem:[%s9 + $0x374] sm:$0xf]
    %v9028 = vld [vmem:[%s9 + $0x378] sm:$0xf]
    %v9029 = vld [vmem:[%s9 + $0x37c] sm:$0xf]
    %v9030 = vld [vmem:[%s10 + $0x680] sm:$0xff]
    %v9031 = vld [vmem:[%s10 + $0x688] sm:$0xff]
    %v9032 = vld [vmem:[%s10 + $0x690] sm:$0xff]
    %v9033 = vld [vmem:[%s10 + $0x698] sm:$0xff]
    %v9034 = vld [vmem:[%s10 + $0x6a0] sm:$0xff]
    %v9035 = vld [vmem:[%s10 + $0x6a8] sm:$0xff]
    %v9036 = vld [vmem:[%s10 + $0x6b0] sm:$0xff]
    %v9037 = vld [vmem:[%s10 + $0x6b8] sm:$0xff]
    %v9038 = vld [vmem:[%s10 + $0x6c0] sm:$0xff]
    %v9039 = vld [vmem:[%s10 + $0x6c8] sm:$0xff]
    %v9040 = vld [vmem:[%s10 + $0x6d0] sm:$0xff]
    %v9041 = vld [vmem:[%s10 + $0x6d8] sm:$0xff]
    %v9042 = vld [vmem:[%s10 + $0x6e0] sm:$0xff]
    %v9043 = vld [vmem:[%s10 + $0x6e8] sm:$0xff]
    %v9044 = vld [vmem:[%s10 + $0x6f0] sm:$0xff]
    %v9045 = vld [vmem:[%s10 + $0x6f8] sm:$0xff]
    %9047 = vset.pattern.permute.xlu0 0
    %9048 = vperm.xlu0 %9047, %v9030
    %v9049 = vpop.permute.xlu0 %9048
    %9052 = vset.pattern.permute.xlu0 0
    %9053 = vperm.xlu0 %9052, %v9031
    %v9054 = vpop.permute.xlu0 %9053
    %9057 = vset.pattern.permute.xlu0 0
    %9058 = vperm.xlu0 %9057, %v9032
    %v9059 = vpop.permute.xlu0 %9058
    %9062 = vset.pattern.permute.xlu0 0
    %9063 = vperm.xlu0 %9062, %v9033
    %v9064 = vpop.permute.xlu0 %9063
    %9067 = vset.pattern.permute.xlu0 0
    %9068 = vperm.xlu0 %9067, %v9034
    %v9069 = vpop.permute.xlu0 %9068
    %9072 = vset.pattern.permute.xlu0 0
    %9073 = vperm.xlu0 %9072, %v9035
    %v9074 = vpop.permute.xlu0 %9073
    %9077 = vset.pattern.permute.xlu0 0
    %9078 = vperm.xlu0 %9077, %v9036
    %v9079 = vpop.permute.xlu0 %9078
    %9082 = vset.pattern.permute.xlu0 0
    %9083 = vperm.xlu0 %9082, %v9037
    %v9084 = vpop.permute.xlu0 %9083
    %9087 = vset.pattern.permute.xlu0 0
    %9088 = vperm.xlu0 %9087, %v9038
    %v9089 = vpop.permute.xlu0 %9088
    %9092 = vset.pattern.permute.xlu0 0
    %9093 = vperm.xlu0 %9092, %v9039
    %v9094 = vpop.permute.xlu0 %9093
    %9097 = vset.pattern.permute.xlu0 0
    %9098 = vperm.xlu0 %9097, %v9040
    %v9099 = vpop.permute.xlu0 %9098
    %9102 = vset.pattern.permute.xlu0 0
    %9103 = vperm.xlu0 %9102, %v9041
    %v9104 = vpop.permute.xlu0 %9103
    %9107 = vset.pattern.permute.xlu0 0
    %9108 = vperm.xlu0 %9107, %v9042
    %v9109 = vpop.permute.xlu0 %9108
    %9112 = vset.pattern.permute.xlu0 0
    %9113 = vperm.xlu0 %9112, %v9043
    %v9114 = vpop.permute.xlu0 %9113
    %9117 = vset.pattern.permute.xlu0 0
    %9118 = vperm.xlu0 %9117, %v9044
    %v9119 = vpop.permute.xlu0 %9118
    %9122 = vset.pattern.permute.xlu0 0
    %9123 = vperm.xlu0 %9122, %v9045
    %v9124 = vpop.permute.xlu0 %9123
    %v9142 = vunpack.c.l.b16 %v9014
    %v9143 = vunpack.c.l.b16 %v9015
    %v9144 = vunpack.c.l.b16 %v9016
    %v9145 = vunpack.c.l.b16 %v9017
    %v9146 = vunpack.c.l.b16 %v9018
    %v9147 = vunpack.c.l.b16 %v9019
    %v9148 = vunpack.c.l.b16 %v9020
    %v9149 = vunpack.c.l.b16 %v9021
    %v9150 = vunpack.c.l.b16 %v9022
    %v9151 = vunpack.c.l.b16 %v9023
    %v9152 = vunpack.c.l.b16 %v9024
    %v9153 = vunpack.c.l.b16 %v9025
    %v9154 = vunpack.c.l.b16 %v9026
    %v9155 = vunpack.c.l.b16 %v9027
    %v9156 = vunpack.c.l.b16 %v9028
    %v9157 = vunpack.c.l.b16 %v9029
    %v9158 = vpack.c.b16 %v9143, %v9142
    %v9159 = vpack.c.b16 %v9145, %v9144
    %v9160 = vpack.c.b16 %v9147, %v9146
    %v9161 = vpack.c.b16 %v9149, %v9148
    %v9162 = vpack.c.b16 %v9151, %v9150
    %v9163 = vpack.c.b16 %v9153, %v9152
    %v9164 = vpack.c.b16 %v9155, %v9154
    %v9165 = vpack.c.b16 %v9157, %v9156
    %v9167 = vsel %vm346, %v9158, 0
    %v9170 = vsel %vm346, %v9159, 0
    %v9173 = vsel %vm346, %v9160, 0
    %v9176 = vsel %vm346, %v9161, 0
    %v9179 = vsel %vm346, %v9162, 0
    %v9182 = vsel %vm346, %v9163, 0
    %v9185 = vsel %vm346, %v9164, 0
    %v9188 = vsel %vm346, %v9165, 0
    %9190 = vmatprep.subr.bf16.mxu0 0
    %9191 = vmatpush1.bf16.msra.mxu0 %v434
    %9192 = vmatprep.subr.bf16.mxu0 0
    %9193 = vmatpush1.bf16.msra.mxu0 %v435
    %9194 = vmatprep.subr.bf16.mxu0 0
    %9195 = vmatpush1.bf16.msra.mxu0 %v436
    %9196 = vmatprep.subr.bf16.mxu0 0
    %9197 = vmatpush1.bf16.msra.mxu0 %v474
    %9198 = vmatprep.subr.bf16.mxu0 0
    %9199 = vmatpush1.bf16.msra.mxu0 0
    %9200 = vmatprep.subr.bf16.mxu0 0
    %9201 = vmatpush1.bf16.msra.mxu0 0
    %9202 = vmatprep.subr.bf16.mxu0 0
    %9203 = vmatpush1.bf16.msra.mxu0 0
    %9204 = vmatprep.subr.bf16.mxu0 0
    %9205 = vmatpush1.bf16.msra.mxu0 0
    %9206 = vmatprep.subr.bf16.mxu0 0
    %9207 = vmatpush1.bf16.msra.mxu0 0
    %9208 = vmatprep.subr.bf16.mxu0 0
    %9209 = vmatpush1.bf16.msra.mxu0 0
    %9210 = vmatprep.subr.bf16.mxu0 0
    %9211 = vmatpush1.bf16.msra.mxu0 0
    %9212 = vmatprep.subr.bf16.mxu0 0
    %9213 = vmatpush1.bf16.msra.mxu0 0
    %9214 = vmatprep.subr.bf16.mxu0 0
    %9215 = vmatpush1.bf16.msra.mxu0 0
    %9216 = vmatprep.subr.bf16.mxu0 0
    %9217 = vmatpush1.bf16.msra.mxu0 0
    %9218 = vmatprep.subr.bf16.mxu0 0
    %9219 = vmatpush1.bf16.msra.mxu0 0
    %9220 = vmatprep.subr.bf16.mxu0 0
    %9221 = vmatpush1.bf16.msra.mxu0 0
    %9222 = vmatprep.mubr.bf16.mxu0 0
    %9223 = vmatmul.mubr.bf16.gmra.mrb[0].mxu0 %v9167
    %v9224 = vpop.f32.mrb[0].mxu0
    %v9225 = vadd.f32 %v9049, %v9224
    %v9226 = vpop.f32.mrb[0].mxu0
    %v9227 = vpop.f32.mrb[0].mxu0
    %v9228 = vadd.f32 %v9054, %v9227
    %v9229 = vpop.f32.mrb[0].mxu0
    %9230 = vmatprep.mubr.bf16.mxu0 0
    %9231 = vmatmul.mubr.bf16.gmra.mrb[0].mxu0 %v9170
    %v9232 = vpop.f32.mrb[0].mxu0
    %v9233 = vadd.f32 %v9059, %v9232
    %v9234 = vpop.f32.mrb[0].mxu0
    %v9235 = vpop.f32.mrb[0].mxu0
    %v9236 = vadd.f32 %v9064, %v9235
    %v9237 = vpop.f32.mrb[0].mxu0
    %9238 = vmatprep.mubr.bf16.mxu0 0
    %9239 = vmatmul.mubr.bf16.gmra.mrb[0].mxu0 %v9173
    %v9240 = vpop.f32.mrb[0].mxu0
    %v9241 = vadd.f32 %v9069, %v9240
    %v9242 = vpop.f32.mrb[0].mxu0
    %v9243 = vpop.f32.mrb[0].mxu0
    %v9244 = vadd.f32 %v9074, %v9243
    %v9245 = vpop.f32.mrb[0].mxu0
    %9246 = vmatprep.mubr.bf16.mxu0 0
    %9247 = vmatmul.mubr.bf16.gmra.mrb[0].mxu0 %v9176
    %v9248 = vpop.f32.mrb[0].mxu0
    %v9249 = vadd.f32 %v9079, %v9248
    %v9250 = vpop.f32.mrb[0].mxu0
    %v9251 = vpop.f32.mrb[0].mxu0
    %v9252 = vadd.f32 %v9084, %v9251
    %v9253 = vpop.f32.mrb[0].mxu0
    %9254 = vmatprep.mubr.bf16.mxu0 0
    %9255 = vmatmul.mubr.bf16.gmra.mrb[0].mxu0 %v9179
    %v9256 = vpop.f32.mrb[0].mxu0
    %v9257 = vadd.f32 %v9089, %v9256
    %v9258 = vpop.f32.mrb[0].mxu0
    %v9259 = vpop.f32.mrb[0].mxu0
    %v9260 = vadd.f32 %v9094, %v9259
    %v9261 = vpop.f32.mrb[0].mxu0
    %9262 = vmatprep.mubr.bf16.mxu0 0
    %9263 = vmatmul.mubr.bf16.gmra.mrb[0].mxu0 %v9182
    %v9264 = vpop.f32.mrb[0].mxu0
    %v9265 = vadd.f32 %v9099, %v9264
    %v9266 = vpop.f32.mrb[0].mxu0
    %v9267 = vpop.f32.mrb[0].mxu0
    %v9268 = vadd.f32 %v9104, %v9267
    %v9269 = vpop.f32.mrb[0].mxu0
    %9270 = vmatprep.mubr.bf16.mxu0 0
    %9271 = vmatmul.mubr.bf16.gmra.mrb[0].mxu0 %v9185
    %v9272 = vpop.f32.mrb[0].mxu0
    %v9273 = vadd.f32 %v9109, %v9272
    %v9274 = vpop.f32.mrb[0].mxu0
    %v9275 = vpop.f32.mrb[0].mxu0
    %v9276 = vadd.f32 %v9114, %v9275
    %v9277 = vpop.f32.mrb[0].mxu0
    %9278 = vmatprep.mubr.bf16.mxu0 0
    %9279 = vmatmul.mubr.bf16.gmra.mrb[0].mxu0 %v9188
    %v9280 = vpop.f32.mrb[0].mxu0
    %v9281 = vadd.f32 %v9119, %v9280
    %v9282 = vpop.f32.mrb[0].mxu0
    %v9283 = vpop.f32.mrb[0].mxu0
    %v9284 = vadd.f32 %v9124, %v9283
    %v9285 = vpop.f32.mrb[0].mxu0
    %9286 = vdwg.mxu0
    %v9287 = vmax.f32 %v9225, 0.0
    %v9288 = vmax.f32 %v9228, 0.0
    %v9289 = vmax.f32 %v9233, 0.0
    %v9290 = vmax.f32 %v9236, 0.0
    %v9291 = vmax.f32 %v9241, 0.0
    %v9292 = vmax.f32 %v9244, 0.0
    %v9293 = vmax.f32 %v9249, 0.0
    %v9294 = vmax.f32 %v9252, 0.0
    %v9295 = vmax.f32 %v9257, 0.0
    %v9296 = vmax.f32 %v9260, 0.0
    %v9297 = vmax.f32 %v9265, 0.0
    %v9298 = vmax.f32 %v9268, 0.0
    %v9299 = vmax.f32 %v9273, 0.0
    %v9300 = vmax.f32 %v9276, 0.0
    %v9301 = vmax.f32 %v9281, 0.0
    %v9302 = vmax.f32 %v9284, 0.0
    %s9303 = scalar_lea.vmem %s11, 832
    %v9304 = vld [vmem:[%s9303] sm:$0xf]
    %v9305 = vld [vmem:[%s9303 + $0x4] sm:$0xf]
    %v9306 = vld [vmem:[%s9303 + $0x8] sm:$0xf]
    %v9307 = vld [vmem:[%s9303 + $0xc] sm:$0xf]
    %v9308 = vld [vmem:[%s9303 + $0x10] sm:$0xf]
    %v9309 = vld [vmem:[%s9303 + $0x14] sm:$0xf]
    %v9310 = vld [vmem:[%s9303 + $0x18] sm:$0xf]
    %v9311 = vld [vmem:[%s9303 + $0x1c] sm:$0xf]
    %v9312 = vld [vmem:[%s9303 + $0x20] sm:$0xf]
    %v9313 = vld [vmem:[%s9303 + $0x24] sm:$0xf]
    %v9314 = vld [vmem:[%s9303 + $0x28] sm:$0xf]
    %v9315 = vld [vmem:[%s9303 + $0x2c] sm:$0xf]
    %v9316 = vld [vmem:[%s9303 + $0x30] sm:$0xf]
    %v9317 = vld [vmem:[%s9303 + $0x34] sm:$0xf]
    %v9318 = vld [vmem:[%s9303 + $0x38] sm:$0xf]
    %v9319 = vld [vmem:[%s9303 + $0x3c] sm:$0xf]
    %v9320 = vpack.c.bf16 %v9288, %v9287
    %v9321 = vpack.c.bf16 %v9290, %v9289
    %v9322 = vpack.c.bf16 %v9292, %v9291
    %v9323 = vpack.c.bf16 %v9294, %v9293
    %v9324 = vpack.c.bf16 %v9296, %v9295
    %v9325 = vpack.c.bf16 %v9298, %v9297
    %v9326 = vpack.c.bf16 %v9300, %v9299
    %v9327 = vpack.c.bf16 %v9302, %v9301
    %s9328 = scalar_lea.vmem %s12, 1664
    %v9329 = vld [vmem:[%s9328] sm:$0xff]
    %v9330 = vld [vmem:[%s9328 + $0x8] sm:$0xff]
    %v9331 = vld [vmem:[%s9328 + $0x10] sm:$0xff]
    %v9332 = vld [vmem:[%s9328 + $0x18] sm:$0xff]
    %v9333 = vld [vmem:[%s9328 + $0x20] sm:$0xff]
    %v9334 = vld [vmem:[%s9328 + $0x28] sm:$0xff]
    %v9335 = vld [vmem:[%s9328 + $0x30] sm:$0xff]
    %v9336 = vld [vmem:[%s9328 + $0x38] sm:$0xff]
    %v9337 = vld [vmem:[%s9328 + $0x40] sm:$0xff]
    %v9338 = vld [vmem:[%s9328 + $0x48] sm:$0xff]
    %v9339 = vld [vmem:[%s9328 + $0x50] sm:$0xff]
    %v9340 = vld [vmem:[%s9328 + $0x58] sm:$0xff]
    %v9341 = vld [vmem:[%s9328 + $0x60] sm:$0xff]
    %v9342 = vld [vmem:[%s9328 + $0x68] sm:$0xff]
    %v9343 = vld [vmem:[%s9328 + $0x70] sm:$0xff]
    %v9344 = vld [vmem:[%s9328 + $0x78] sm:$0xff]
    %9346 = vset.pattern.permute.xlu0 0
    %9347 = vperm.xlu0 %9346, %v9329
    %v9348 = vpop.permute.xlu0 %9347
    %9351 = vset.pattern.permute.xlu0 0
    %9352 = vperm.xlu0 %9351, %v9330
    %v9353 = vpop.permute.xlu0 %9352
    %9356 = vset.pattern.permute.xlu0 0
    %9357 = vperm.xlu0 %9356, %v9331
    %v9358 = vpop.permute.xlu0 %9357
    %9361 = vset.pattern.permute.xlu0 0
    %9362 = vperm.xlu0 %9361, %v9332
    %v9363 = vpop.permute.xlu0 %9362
    %9366 = vset.pattern.permute.xlu0 0
    %9367 = vperm.xlu0 %9366, %v9333
    %v9368 = vpop.permute.xlu0 %9367
    %9371 = vset.pattern.permute.xlu0 0
    %9372 = vperm.xlu0 %9371, %v9334
    %v9373 = vpop.permute.xlu0 %9372
    %9376 = vset.pattern.permute.xlu0 0
    %9377 = vperm.xlu0 %9376, %v9335
    %v9378 = vpop.permute.xlu0 %9377
    %9381 = vset.pattern.permute.xlu0 0
    %9382 = vperm.xlu0 %9381, %v9336
    %v9383 = vpop.permute.xlu0 %9382
    %9386 = vset.pattern.permute.xlu0 0
    %9387 = vperm.xlu0 %9386, %v9337
    %v9388 = vpop.permute.xlu0 %9387
    %9391 = vset.pattern.permute.xlu0 0
    %9392 = vperm.xlu0 %9391, %v9338
    %v9393 = vpop.permute.xlu0 %9392
    %9396 = vset.pattern.permute.xlu0 0
    %9397 = vperm.xlu0 %9396, %v9339
    %v9398 = vpop.permute.xlu0 %9397
    %9401 = vset.pattern.permute.xlu0 0
    %9402 = vperm.xlu0 %9401, %v9340
    %v9403 = vpop.permute.xlu0 %9402
    %9406 = vset.pattern.permute.xlu0 0
    %9407 = vperm.xlu0 %9406, %v9341
    %v9408 = vpop.permute.xlu0 %9407
    %9411 = vset.pattern.permute.xlu0 0
    %9412 = vperm.xlu0 %9411, %v9342
    %v9413 = vpop.permute.xlu0 %9412
    %9416 = vset.pattern.permute.xlu0 0
    %9417 = vperm.xlu0 %9416, %v9343
    %v9418 = vpop.permute.xlu0 %9417
    %9421 = vset.pattern.permute.xlu0 0
    %9422 = vperm.xlu0 %9421, %v9344
    %v9423 = vpop.permute.xlu0 %9422
    %v9441 = vunpack.c.l.b16 %v9304
    %v9442 = vunpack.c.l.b16 %v9305
    %v9443 = vunpack.c.l.b16 %v9306
    %v9444 = vunpack.c.l.b16 %v9307
    %v9445 = vunpack.c.l.b16 %v9308
    %v9446 = vunpack.c.l.b16 %v9309
    %v9447 = vunpack.c.l.b16 %v9310
    %v9448 = vunpack.c.l.b16 %v9311
    %v9449 = vunpack.c.l.b16 %v9312
    %v9450 = vunpack.c.l.b16 %v9313
    %v9451 = vunpack.c.l.b16 %v9314
    %v9452 = vunpack.c.l.b16 %v9315
    %v9453 = vunpack.c.l.b16 %v9316
    %v9454 = vunpack.c.l.b16 %v9317
    %v9455 = vunpack.c.l.b16 %v9318
    %v9456 = vunpack.c.l.b16 %v9319
    %v9457 = vpack.c.b16 %v9442, %v9441
    %v9458 = vpack.c.b16 %v9444, %v9443
    %v9459 = vpack.c.b16 %v9446, %v9445
    %v9460 = vpack.c.b16 %v9448, %v9447
    %v9461 = vpack.c.b16 %v9450, %v9449
    %v9462 = vpack.c.b16 %v9452, %v9451
    %v9463 = vpack.c.b16 %v9454, %v9453
    %v9464 = vpack.c.b16 %v9456, %v9455
    %9473 = vmatprep.subr.bf16.mxu0 0
    %9474 = vmatpush1.bf16.msra.mxu0 %v9320
    %9475 = vmatprep.subr.bf16.mxu0 0
    %9476 = vmatpush1.bf16.msra.mxu0 %v9321
    %9477 = vmatprep.subr.bf16.mxu0 0
    %9478 = vmatpush1.bf16.msra.mxu0 %v9322
    %9479 = vmatprep.subr.bf16.mxu0 0
    %9480 = vmatpush1.bf16.msra.mxu0 %v9323
    %9481 = vmatprep.subr.bf16.mxu0 0
    %9482 = vmatpush1.bf16.msra.mxu0 %v9324
    %9483 = vmatprep.subr.bf16.mxu0 0
    %9484 = vmatpush1.bf16.msra.mxu0 %v9325
    %9485 = vmatprep.subr.bf16.mxu0 0
    %9486 = vmatpush1.bf16.msra.mxu0 %v9326
    %9487 = vmatprep.subr.bf16.mxu0 0
    %9488 = vmatpush1.bf16.msra.mxu0 %v9327
    %9489 = vmatprep.subr.bf16.mxu0 0
    %9490 = vmatpush1.bf16.msra.mxu0 0
    %9491 = vmatprep.subr.bf16.mxu0 0
    %9492 = vmatpush1.bf16.msra.mxu0 0
    %9493 = vmatprep.subr.bf16.mxu0 0
    %9494 = vmatpush1.bf16.msra.mxu0 0
    %9495 = vmatprep.subr.bf16.mxu0 0
    %9496 = vmatpush1.bf16.msra.mxu0 0
    %9497 = vmatprep.subr.bf16.mxu0 0
    %9498 = vmatpush1.bf16.msra.mxu0 0
    %9499 = vmatprep.subr.bf16.mxu0 0
    %9500 = vmatpush1.bf16.msra.mxu0 0
    %9501 = vmatprep.subr.bf16.mxu0 0
    %9502 = vmatpush1.bf16.msra.mxu0 0
    %9503 = vmatprep.subr.bf16.mxu0 0
    %9504 = vmatpush1.bf16.msra.mxu0 0
    %9505 = vmatprep.mubr.bf16.mxu0 0
    %9506 = vmatmul.mubr.bf16.gmra.mrb[0].mxu0 %v9457
    %v9507 = vpop.f32.mrb[0].mxu0
    %v9508 = vadd.f32 %v9348, %v9507
    %v9509 = vpop.f32.mrb[0].mxu0
    %v9510 = vpop.f32.mrb[0].mxu0
    %v9511 = vadd.f32 %v9353, %v9510
    %v9512 = vpop.f32.mrb[0].mxu0
    %9513 = vmatprep.mubr.bf16.mxu0 0
    %9514 = vmatmul.mubr.bf16.gmra.mrb[0].mxu0 %v9458
    %v9515 = vpop.f32.mrb[0].mxu0
    %v9516 = vadd.f32 %v9358, %v9515
    %v9517 = vpop.f32.mrb[0].mxu0
    %v9518 = vpop.f32.mrb[0].mxu0
    %v9519 = vadd.f32 %v9363, %v9518
    %v9520 = vpop.f32.mrb[0].mxu0
    %9521 = vmatprep.mubr.bf16.mxu0 0
    %9522 = vmatmul.mubr.bf16.gmra.mrb[0].mxu0 %v9459
    %v9523 = vpop.f32.mrb[0].mxu0
    %v9524 = vadd.f32 %v9368, %v9523
    %v9525 = vpop.f32.mrb[0].mxu0
    %v9526 = vpop.f32.mrb[0].mxu0
    %v9527 = vadd.f32 %v9373, %v9526
    %v9528 = vpop.f32.mrb[0].mxu0
    %9529 = vmatprep.mubr.bf16.mxu0 0
    %9530 = vmatmul.mubr.bf16.gmra.mrb[0].mxu0 %v9460
    %v9531 = vpop.f32.mrb[0].mxu0
    %v9532 = vadd.f32 %v9378, %v9531
    %v9533 = vpop.f32.mrb[0].mxu0
    %v9534 = vpop.f32.mrb[0].mxu0
    %v9535 = vadd.f32 %v9383, %v9534
    %v9536 = vpop.f32.mrb[0].mxu0
    %9537 = vmatprep.mubr.bf16.mxu0 0
    %9538 = vmatmul.mubr.bf16.gmra.mrb[0].mxu0 %v9461
    %v9539 = vpop.f32.mrb[0].mxu0
    %v9540 = vadd.f32 %v9388, %v9539
    %v9541 = vpop.f32.mrb[0].mxu0
    %v9542 = vpop.f32.mrb[0].mxu0
    %v9543 = vadd.f32 %v9393, %v9542
    %v9544 = vpop.f32.mrb[0].mxu0
    %9545 = vmatprep.mubr.bf16.mxu0 0
    %9546 = vmatmul.mubr.bf16.gmra.mrb[0].mxu0 %v9462
    %v9547 = vpop.f32.mrb[0].mxu0
    %v9548 = vadd.f32 %v9398, %v9547
    %v9549 = vpop.f32.mrb[0].mxu0
    %v9550 = vpop.f32.mrb[0].mxu0
    %v9551 = vadd.f32 %v9403, %v9550
    %v9552 = vpop.f32.mrb[0].mxu0
    %9553 = vmatprep.mubr.bf16.mxu0 0
    %9554 = vmatmul.mubr.bf16.gmra.mrb[0].mxu0 %v9463
    %v9555 = vpop.f32.mrb[0].mxu0
    %v9556 = vadd.f32 %v9408, %v9555
    %v9557 = vpop.f32.mrb[0].mxu0
    %v9558 = vpop.f32.mrb[0].mxu0
    %v9559 = vadd.f32 %v9413, %v9558
    %v9560 = vpop.f32.mrb[0].mxu0
    %9561 = vmatprep.mubr.bf16.mxu0 0
    %9562 = vmatmul.mubr.bf16.gmra.mrb[0].mxu0 %v9464
    %v9563 = vpop.f32.mrb[0].mxu0
    %v9564 = vadd.f32 %v9418, %v9563
    %v9565 = vpop.f32.mrb[0].mxu0
    %v9566 = vpop.f32.mrb[0].mxu0
    %v9567 = vadd.f32 %v9423, %v9566
    %v9568 = vpop.f32.mrb[0].mxu0
    %9569 = vdwg.mxu0
    %v9570 = vmax.f32 %v9508, 0.0
    %v9571 = vmax.f32 %v9511, 0.0
    %v9572 = vmax.f32 %v9516, 0.0
    %v9573 = vmax.f32 %v9519, 0.0
    %v9574 = vmax.f32 %v9524, 0.0
    %v9575 = vmax.f32 %v9527, 0.0
    %v9576 = vmax.f32 %v9532, 0.0
    %v9577 = vmax.f32 %v9535, 0.0
    %v9578 = vmax.f32 %v9540, 0.0
    %v9579 = vmax.f32 %v9543, 0.0
    %v9580 = vmax.f32 %v9548, 0.0
    %v9581 = vmax.f32 %v9551, 0.0
    %v9582 = vmax.f32 %v9556, 0.0
    %v9583 = vmax.f32 %v9559, 0.0
    %v9584 = vmax.f32 %v9564, 0.0
    %v9585 = vmax.f32 %v9567, 0.0
    %v9586 = vld [vmem:[%s13 + $0x34] sm:$0xf]
    %v9587 = vld [vmem:[%s13 + $0x6c] sm:$0xf]
    %v9588 = vld [vmem:[%s13 + $0xa4] sm:$0xf]
    %v9589 = vld [vmem:[%s13 + $0xdc] sm:$0xf]
    %v9590 = vpack.c.bf16 %v9571, %v9570
    %v9591 = vpack.c.bf16 %v9573, %v9572
    %v9592 = vpack.c.bf16 %v9575, %v9574
    %v9593 = vpack.c.bf16 %v9577, %v9576
    %v9594 = vpack.c.bf16 %v9579, %v9578
    %v9595 = vpack.c.bf16 %v9581, %v9580
    %v9596 = vpack.c.bf16 %v9583, %v9582
    %v9597 = vpack.c.bf16 %v9585, %v9584
    %v9602 = vunpack.c.l.b16 %v9586
    %v9603 = vunpack.c.l.b16 %v9587
    %v9604 = vunpack.c.l.b16 %v9588
    %v9605 = vunpack.c.l.b16 %v9589
    %v9606 = vpack.c.b16 %v9603, %v9602
    %v9607 = vpack.c.b16 %v9605, %v9604
    %9610 = vmatprep.subr.bf16.mxu0 0
    %9611 = vmatpush1.bf16.msra.mxu0 %v9590
    %9612 = vmatprep.subr.bf16.mxu0 0
    %9613 = vmatpush1.bf16.msra.mxu0 %v9591
    %9614 = vmatprep.subr.bf16.mxu0 0
    %9615 = vmatpush1.bf16.msra.mxu0 %v9592
    %9616 = vmatprep.subr.bf16.mxu0 0
    %9617 = vmatpush1.bf16.msra.mxu0 %v9593
    %9618 = vmatprep.subr.bf16.mxu0 0
    %9619 = vmatpush1.bf16.msra.mxu0 %v9594
    %9620 = vmatprep.subr.bf16.mxu0 0
    %9621 = vmatpush1.bf16.msra.mxu0 %v9595
    %9622 = vmatprep.subr.bf16.mxu0 0
    %9623 = vmatpush1.bf16.msra.mxu0 %v9596
    %9624 = vmatprep.subr.bf16.mxu0 0
    %9625 = vmatpush1.bf16.msra.mxu0 %v9597
    %9626 = vmatprep.subr.bf16.mxu0 0
    %9627 = vmatpush1.bf16.msra.mxu0 0
    %9628 = vmatprep.subr.bf16.mxu0 0
    %9629 = vmatpush1.bf16.msra.mxu0 0
    %9630 = vmatprep.subr.bf16.mxu0 0
    %9631 = vmatpush1.bf16.msra.mxu0 0
    %9632 = vmatprep.subr.bf16.mxu0 0
    %9633 = vmatpush1.bf16.msra.mxu0 0
    %9634 = vmatprep.subr.bf16.mxu0 0
    %9635 = vmatpush1.bf16.msra.mxu0 0
    %9636 = vmatprep.subr.bf16.mxu0 0
    %9637 = vmatpush1.bf16.msra.mxu0 0
    %9638 = vmatprep.subr.bf16.mxu0 0
    %9639 = vmatpush1.bf16.msra.mxu0 0
    %9640 = vmatprep.subr.bf16.mxu0 0
    %9641 = vmatpush1.bf16.msra.mxu0 0
    %9642 = vmatprep.mubr.bf16.mxu0 0
    %9643 = vmatmul.mubr.bf16.gmra.mrb[0].mxu0 %v9606
    %v9644 = vpop.f32.mrb[0].mxu0
    %v9645 = vadd.f32 0.0, %v9644
    %v9646 = vpop.f32.mrb[0].mxu0
    %v9647 = vpop.f32.mrb[0].mxu0
    %v9648 = vadd.f32 0.0, %v9647
    %v9649 = vpop.f32.mrb[0].mxu0
    %9650 = vmatprep.mubr.bf16.mxu0 0
    %9651 = vmatmul.mubr.bf16.gmra.mrb[0].mxu0 %v9607
    %v9652 = vpop.f32.mrb[0].mxu0
    %v9653 = vadd.f32 0.0, %v9652
    %v9654 = vpop.f32.mrb[0].mxu0
    %v9655 = vpop.f32.mrb[0].mxu0
    %v9656 = vadd.f32 0.0, %v9655
    %v9657 = vpop.f32.mrb[0].mxu0
    %9658 = vdwg.mxu0
    %v9659 = vadd.f32 %v9010, %v9645
    %v9660 = vadd.f32 %v9011, %v9648
    %v9661 = vadd.f32 %v9012, %v9653
    %v9662 = vadd.f32 %v9013, %v9656
    %v9663 = vld [vmem:[%s14] sm:$0xff]
    %v9664 = vld [vmem:[%s14 + $0x8] sm:$0xff]
    %v9665 = vld [vmem:[%s14 + $0x10] sm:$0xff]
    %v9666 = vld [vmem:[%s14 + $0x18] sm:$0xff]
    %9668 = vset.pattern.permute.xlu0 0
    %9669 = vperm.xlu0 %9668, %v9663
    %v9670 = vpop.permute.xlu0 %9669
    %9673 = vset.pattern.permute.xlu0 0
    %9674 = vperm.xlu0 %9673, %v9664
    %v9675 = vpop.permute.xlu0 %9674
    %9678 = vset.pattern.permute.xlu0 0
    %9679 = vperm.xlu0 %9678, %v9665
    %v9680 = vpop.permute.xlu0 %9679
    %9683 = vset.pattern.permute.xlu0 0
    %9684 = vperm.xlu0 %9683, %v9666
    %v9685 = vpop.permute.xlu0 %9684
    %v9687 = vadd.f32 %v9659, %v9670
    %v9688 = vadd.f32 %v9660, %v9675
    %v9689 = vadd.f32 %v9661, %v9680
    %v9690 = vadd.f32 %v9662, %v9685
    %v9691 = vmax.f32 %v9687, 0.0
    %v9692 = vmax.f32 %v9688, 0.0
    %v9693 = vmax.f32 %v9689, 0.0
    %v9694 = vmax.f32 %v9690, 0.0
    %v9695 = vld [vmem:[%s15] sm:$0xf]
    %v9696 = vld [vmem:[%s15 + $0x4] sm:$0xf]
    %v9697 = vld [vmem:[%s15 + $0x8] sm:$0xf]
    %v9698 = vld [vmem:[%s15 + $0xc] sm:$0xf]
    %v9699 = vpack.c.bf16 %v9692, %v9691
    %v9700 = vpack.c.bf16 %v9694, %v9693
    %v9701 = vld [vmem:[%s16] sm:$0xff]
    %v9702 = vld [vmem:[%s16 + $0x8] sm:$0xff]
    %v9703 = vld [vmem:[%s16 + $0x10] sm:$0xff]
    %v9704 = vld [vmem:[%s16 + $0x18] sm:$0xff]
    %9706 = vset.pattern.permute.xlu0 0
    %9707 = vperm.xlu0 %9706, %v9701
    %v9708 = vpop.permute.xlu0 %9707
    %9711 = vset.pattern.permute.xlu0 0
    %9712 = vperm.xlu0 %9711, %v9702
    %v9713 = vpop.permute.xlu0 %9712
    %9716 = vset.pattern.permute.xlu0 0
    %9717 = vperm.xlu0 %9716, %v9703
    %v9718 = vpop.permute.xlu0 %9717
    %9721 = vset.pattern.permute.xlu0 0
    %9722 = vperm.xlu0 %9721, %v9704
    %v9723 = vpop.permute.xlu0 %9722
    %v9729 = vunpack.c.l.b16 %v9695
    %v9730 = vunpack.c.l.b16 %v9696
    %v9731 = vunpack.c.l.b16 %v9697
    %v9732 = vunpack.c.l.b16 %v9698
    %v9733 = vpack.c.b16 %v9730, %v9729
    %v9734 = vpack.c.b16 %v9732, %v9731
    %vm9735 = vcmask 261120
    %v9737 = vsel %vm9735, %v9733, 0
    %v9740 = vsel %vm9735, %v9734, 0
    %9742 = vmatprep.subr.bf16.mxu0 0
    %9743 = vmatpush1.bf16.msra.mxu0 %v9699
    %9744 = vmatprep.subr.bf16.mxu0 0
    %9745 = vmatpush1.bf16.msra.mxu0 %v9700
    %9746 = vmatprep.subr.bf16.mxu0 0
    %9747 = vmatpush1.bf16.msra.mxu0 0
    %9748 = vmatprep.subr.bf16.mxu0 0
    %9749 = vmatpush1.bf16.msra.mxu0 0
    %9750 = vmatprep.subr.bf16.mxu0 0
    %9751 = vmatpush1.bf16.msra.mxu0 0
    %9752 = vmatprep.subr.bf16.mxu0 0
    %9753 = vmatpush1.bf16.msra.mxu0 0
    %9754 = vmatprep.subr.bf16.mxu0 0
    %9755 = vmatpush1.bf16.msra.mxu0 0
    %9756 = vmatprep.subr.bf16.mxu0 0
    %9757 = vmatpush1.bf16.msra.mxu0 0
    %9758 = vmatprep.subr.bf16.mxu0 0
    %9759 = vmatpush1.bf16.msra.mxu0 0
    %9760 = vmatprep.subr.bf16.mxu0 0
    %9761 = vmatpush1.bf16.msra.mxu0 0
    %9762 = vmatprep.subr.bf16.mxu0 0
    %9763 = vmatpush1.bf16.msra.mxu0 0
    %9764 = vmatprep.subr.bf16.mxu0 0
    %9765 = vmatpush1.bf16.msra.mxu0 0
    %9766 = vmatprep.subr.bf16.mxu0 0
    %9767 = vmatpush1.bf16.msra.mxu0 0
    %9768 = vmatprep.subr.bf16.mxu0 0
    %9769 = vmatpush1.bf16.msra.mxu0 0
    %9770 = vmatprep.subr.bf16.mxu0 0
    %9771 = vmatpush1.bf16.msra.mxu0 0
    %9772 = vmatprep.subr.bf16.mxu0 0
    %9773 = vmatpush1.bf16.msra.mxu0 0
    %9774 = vmatprep.mubr.bf16.mxu0 0
    %9775 = vmatmul.mubr.bf16.gmra.mrb[0].mxu0 %v9737
    %v9776 = vpop.f32.mrb[0].mxu0
    %v9777 = vadd.f32 %v9708, %v9776
    %v9778 = vpop.f32.mrb[0].mxu0
    %v9779 = vpop.f32.mrb[0].mxu0
    %v9780 = vadd.f32 %v9713, %v9779
    %v9781 = vpop.f32.mrb[0].mxu0
    %9782 = vmatprep.mubr.bf16.mxu0 0
    %9783 = vmatmul.mubr.bf16.gmra.mrb[0].mxu0 %v9740
    %v9784 = vpop.f32.mrb[0].mxu0
    %v9785 = vadd.f32 %v9718, %v9784
    %v9786 = vpop.f32.mrb[0].mxu0
    %v9787 = vpop.f32.mrb[0].mxu0
    %v9788 = vadd.f32 %v9723, %v9787
    %v9789 = vpop.f32.mrb[0].mxu0
    %9790 = vdwg.mxu0
    %v9791 = vmax.f32 %v9777, 0.0
    %v9792 = vmax.f32 %v9780, 0.0
    %v9793 = vmax.f32 %v9785, 0.0
    %v9794 = vmax.f32 %v9788, 0.0
    %v9795 = vld [vmem:[%s17] sm:$0x1]
    %v9796 = vpack.c.bf16 %v9792, %v9791
    %v9797 = vpack.c.bf16 %v9794, %v9793
    %v9798 = vld [vmem:[#allocation3] sm:$0x1]
    %9800 = vset.pattern.permute.xlu0 0
    %9801 = vperm.xlu0 %9800, %v9798
    %v9802 = vpop.permute.xlu0 %9801
    %v9804 = vlaneseq
    %v9805 = vshrl.u32 %v9804, 7
    %v9806 = vsub.s32 0, %v9805
    %v9807 = vrot.slane %v9802, %v9806
    %v9809 = vsel %vm9735, %v9795, 0
    %9811 = vmatprep.subr.bf16.mxu0 0
    %9812 = vmatpush1.bf16.msra.mxu0 %v9796
    %9813 = vmatprep.subr.bf16.mxu0 0
    %9814 = vmatpush1.bf16.msra.mxu0 %v9797
    %9815 = vmatprep.subr.bf16.mxu0 0
    %9816 = vmatpush1.bf16.msra.mxu0 0
    %9817 = vmatprep.subr.bf16.mxu0 0
    %9818 = vmatpush1.bf16.msra.mxu0 0
    %9819 = vmatprep.subr.bf16.mxu0 0
    %9820 = vmatpush1.bf16.msra.mxu0 0
    %9821 = vmatprep.subr.bf16.mxu0 0
    %9822 = vmatpush1.bf16.msra.mxu0 0
    %9823 = vmatprep.subr.bf16.mxu0 0
    %9824 = vmatpush1.bf16.msra.mxu0 0
    %9825 = vmatprep.subr.bf16.mxu0 0
    %9826 = vmatpush1.bf16.msra.mxu0 0
    %9827 = vmatprep.subr.bf16.mxu0 0
    %9828 = vmatpush1.bf16.msra.mxu0 0
    %9829 = vmatprep.subr.bf16.mxu0 0
    %9830 = vmatpush1.bf16.msra.mxu0 0
    %9831 = vmatprep.subr.bf16.mxu0 0
    %9832 = vmatpush1.bf16.msra.mxu0 0
    %9833 = vmatprep.subr.bf16.mxu0 0
    %9834 = vmatpush1.bf16.msra.mxu0 0
    %9835 = vmatprep.subr.bf16.mxu0 0
    %9836 = vmatpush1.bf16.msra.mxu0 0
    %9837 = vmatprep.subr.bf16.mxu0 0
    %9838 = vmatpush1.bf16.msra.mxu0 0
    %9839 = vmatprep.subr.bf16.mxu0 0
    %9840 = vmatpush1.bf16.msra.mxu0 0
    %9841 = vmatprep.subr.bf16.mxu0 0
    %9842 = vmatpush1.bf16.msra.mxu0 0
    %9843 = vmatprep.mubr.bf16.mxu0 0
    %9844 = vmatmul.mubr.bf16.gmra.mrb[0].mxu0 %v9809
    %v9845 = vpop.f32.mrb[0].mxu0
    %v9846 = vadd.f32 %v9807, %v9845
    %v9847 = vpop.f32.mrb[0].mxu0
    %v9848 = vpop.f32.mrb[0].mxu0
    %v9849 = vpop.f32.mrb[0].mxu0
    %9850 = vdwg.mxu0
    %v9851 = vadd.f32 %v582, %v9846
    %v9852 = vmul.f32 %v9851, 0.5
    %vm9853 = vcmask 8192
    %9854 = vst.msk [vmem:[#allocation4] sm:$0x1] %vm9853, %v9852
    // Predicated region
    $region78: #{tpu_custom_call.1} parent=1 // pred_check
      _
    $region79: #{tpu_custom_call.1} parent=1 // pred_check_branch
      %9856 = sbr.rel (0) target = $region81
    $region80: #{tpu_custom_call.1} parent=1 // pred_region
      %s9858 = ssub.s32 16, 16
      %9859 = vsyncadd [#allocation5], %s9858
      %s9861 = sshll.u32 [#allocation4], 4
      %s9862 = int_to_ptr.vmem [resolvable:$true] %s9861
      %9864 = dma.vmem_to_hbm [thread:$0]  %s9862, 16, %s19, [#allocation5]
    $region81: #{tpu_custom_call.1} parent=1 // pred_fallthru
      _
    // Predicated region
    $region82: #{tpu_custom_call.1} parent=1 // pred_check
      _
    $region83: #{tpu_custom_call.1} parent=1 // pred_check_branch
      %9866 = sbr.rel (0) target = $region85
    $region84: #{tpu_custom_call.1} parent=1 // pred_region
      %9867 = dma.done [#allocation5], 16
    $region85: #{tpu_custom_call.1} parent=1 // pred_fallthru
      _
    %9868 = vsyncpa [#allocation5], 1

</llo_original>
